<compile_context>
chip_gen: v7x
topology: tpu7x:2x2x1
jax: 0.10.0
libtpu: 0.0.40
codegen_flags: <defaults>
</compile_context>

<pallas_src>
import jax
import jax.numpy as jnp
from jax import lax
from jax.experimental import pallas as pl
from jax.experimental.pallas import tpu as pltpu

# ---------------------------------------------------------------------------
# Model dimensions (synthetic small ResNet standing in for `base_model`).
# ---------------------------------------------------------------------------
N_BATCH, H_IN, W_IN = 2, 16, 16
C_IN, C1, C2, N_CLASSES = 4, 8, 16, 3
HO, WO = H_IN // 2, W_IN // 2

W_BASE = 8      # sublane-aligned column where the valid region starts
PW_FULL = 32    # padded width for 16-wide activations
PW_HALF = 24    # padded width for  8-wide activations
M_MAX = N_BATCH * H_IN * W_IN       # 512 im2col rows max
K_MAX = 9 * C2                      # 144 im2col cols max


# ---------------------------------------------------------------------------
# In-kernel helpers
# ---------------------------------------------------------------------------
def _zero_halo(p_ref, h, w):
    """Zero only the halo strips of a padded activation buffer that the conv
    taps actually read (left/right column blocks + top/bottom pad rows)."""
    n, hp, pw, c = p_ref.shape
    dt = p_ref.dtype
    p_ref[:, :, 0:W_BASE, :] = jnp.zeros((n, hp, W_BASE, c), dt)
    p_ref[:, :, W_BASE + w:, :] = jnp.zeros((n, hp, pw - W_BASE - w, c), dt)
    p_ref[:, 0:1, W_BASE:W_BASE + w, :] = jnp.zeros((n, 1, w, c), dt)
    p_ref[:, h + 1:h + 2, W_BASE:W_BASE + w, :] = jnp.zeros((n, 1, w, c), dt)


def _store_interior(p_ref, val_nhwc):
    """Write the valid activation into the padded buffer (interior only)."""
    n, h, w, _ = val_nhwc.shape
    p_ref[:, 1:1 + h, W_BASE:W_BASE + w, :] = val_nhwc.astype(p_ref.dtype)


def _build_im2col(p_ref, im_ref, n, h, w, cin, stride):
    """Scatter the 9 conv taps into the shared bf16 im2col scratch and return
    the (M, 9*cin) bf16 block ready for a single MXU GEMM.

    p_ref : (n, h+2, PW, cin) f32 zero-haloed padded activation.
    stride: 1 -> full-resolution conv; 2 -> stride-2 conv (reads only the
            needed even taps: sublane-strided columns + even rows via a free
            leading-dim reshape).
    """
    ho, wo = h // stride, w // stride
    m = n * ho * wo
    for di in range(3):
        for dj in range(3):
            if stride == 1:
                tap = p_ref[:, di:di + h,
                            W_BASE - 1 + dj:W_BASE - 1 + dj + w, :]
            else:
                # columns: padded col (W_BASE-1+dj) + 2*wo'  (sublane stride 2)
                tap = p_ref[:, di:di + h,
                            pl.ds(W_BASE - 1 + dj, wo, stride=2), :]
                # rows: padded row di + 2*ho'  (leading-dim split, zero cost)
                tap = tap.reshape(n, ho, 2, wo, cin)[:, :, 0]
            k = di * 3 + dj
            im_ref[0:m, k * cin:(k + 1) * cin] = (
                tap.reshape(m, cin).astype(jnp.bfloat16))
    return im_ref[0:m, 0:9 * cin]


# ---------------------------------------------------------------------------
# The fused kernel: entire ResNetWithSigmoid forward in one invocation.
# ---------------------------------------------------------------------------
def _resnet_sigmoid_kernel(x_ref,
                           sw_ref, sb_ref,
                           w11_ref, b11_ref, w12_ref, b12_ref,
                           w21f_ref, b21_ref, db_ref,
                           w22_ref, b22_ref,
                           fcw_ref, fcb_ref,
                           o_ref,
                           pA, pB, pC, im_ref):
    n, h, w, _ = x_ref.shape
    ho, wo = h // 2, w // 2
    relu = lambda v: jnp.maximum(v, 0.0)

    def gemm(im_bf16, w_ref):
        return jnp.dot(im_bf16, w_ref[...], preferred_element_type=jnp.float32)

    # ---- stem: conv3x3 (C_IN -> C1) + ReLU ---------------------------------
    _zero_halo(pA, h, w)
    _store_interior(pA, x_ref[...])
    im = _build_im2col(pA, im_ref, n, h, w, C_IN, 1)            # (512, 36)
    a1 = relu(gemm(im, sw_ref) + sb_ref[...])                   # (512, C1) f32

    # ---- residual block 1 (identity skip) ----------------------------------
    _zero_halo(pB, h, w)
    _store_interior(pB, a1.reshape(n, h, w, C1))
    im = _build_im2col(pB, im_ref, n, h, w, C1, 1)              # (512, 72)
    y1 = relu(gemm(im, w11_ref) + b11_ref[...])
    _store_interior(pB, y1.reshape(n, h, w, C1))                # halo stays zero
    im = _build_im2col(pB, im_ref, n, h, w, C1, 1)
    a2 = relu(gemm(im, w12_ref) + b12_ref[...] + a1)

    # ---- residual block 2: stride-2 conv fused with the 1x1 projection -----
    _store_interior(pB, a2.reshape(n, h, w, C1))                # halo stays zero
    im = _build_im2col(pB, im_ref, n, h, w, C1, 2)              # (128, 72)
    yz = gemm(im, w21f_ref)                                     # (128, 2*C2)
    y2 = relu(yz[:, 0:C2] + b21_ref[...])                       # stride-2 conv
    skip = yz[:, C2:2 * C2] + db_ref[...]                       # 1x1 projection
    _zero_halo(pC, ho, wo)
    _store_interior(pC, y2.reshape(n, ho, wo, C2))
    im = _build_im2col(pC, im_ref, n, ho, wo, C2, 1)            # (128, 144)
    a3 = relu(gemm(im, w22_ref) + b22_ref[...] + skip)          # (128, C2)

    # ---- global average pool (reshape + mean) + FC + sigmoid ---------------
    pooled = jnp.mean(a3.reshape(n, ho * wo, C2), axis=1)       # (n, C2) f32
    logits = jnp.dot(pooled.astype(jnp.bfloat16), fcw_ref[...],
                     preferred_element_type=jnp.float32) + fcb_ref[...]
    # exp on the EUP; exact divide keeps outputs inside [0, 1].
    o_ref[...] = 1.0 / (1.0 + jnp.exp(-logits))


# ---------------------------------------------------------------------------
# Wrapper: one gridless pallas_call, everything resident in VMEM.
# ---------------------------------------------------------------------------
def _vmem():
    return pl.BlockSpec(memory_space=pltpu.MemorySpace.VMEM)


@jax.jit
def forward(params, x_nchw):
    """ResNetWithSigmoid.forward: sigmoid(resnet(x)), one fused Pallas kernel."""
    n = x_nchw.shape[0]
    x = jnp.transpose(x_nchw, (0, 2, 3, 1)).astype(jnp.float32)   # NCHW -> NHWC

    def conv_w(wt):   # (3,3,cin,cout) -> (9*cin, cout) bf16, (di,dj,cin) rows
        kh, kw, ci, co = wt.shape
        return wt.reshape(kh * kw * ci, co).astype(jnp.bfloat16)

    def vec(b):       # (c,) -> (1, c) f32
        return b.reshape(1, -1).astype(jnp.float32)

    # Fuse the 1x1 stride-2 projection into the stride-2 conv weight: its
    # input is exactly the centre tap (di=dj=1 -> k=4) of the im2col.
    w21 = params["b2_w1"].reshape(9 * C1, C2).astype(jnp.float32)
    dw = params["b2_dw"].reshape(C1, C2).astype(jnp.float32)
    w21_fused = jnp.zeros((9 * C1, 2 * C2), jnp.float32)
    w21_fused = w21_fused.at[:, :C2].set(w21)
    w21_fused = w21_fused.at[4 * C1:5 * C1, C2:].set(dw)
    w21_fused = w21_fused.astype(jnp.bfloat16)

    args = (
        x,
        conv_w(params["stem_w"]), vec(params["stem_b"]),
        conv_w(params["b1_w1"]), vec(params["b1_b1"]),
        conv_w(params["b1_w2"]), vec(params["b1_b2"]),
        w21_fused, vec(params["b2_b1"]), vec(params["b2_db"]),
        conv_w(params["b2_w2"]), vec(params["b2_b2"]),
        params["fc_w"].astype(jnp.bfloat16), vec(params["fc_b"]),
    )

    # Gridless: batch=2 is microsecond-scale, so a grid step would be pure
    # overhead on single-TC v5e/v6e.  For v7x / larger batches, switch to
    # grid=(n,) with dimension_semantics=("parallel",) and per-slice scratch.
    return pl.pallas_call(
        _resnet_sigmoid_kernel,
        out_shape=jax.ShapeDtypeStruct((n, N_CLASSES), jnp.float32),
        in_specs=[_vmem() for _ in args],
        out_specs=_vmem(),
        scratch_shapes=[
            pltpu.VMEM((n, H_IN + 2, PW_FULL, C_IN), jnp.float32),   # pA
            pltpu.VMEM((n, H_IN + 2, PW_FULL, C1), jnp.float32),     # pB (x3)
            pltpu.VMEM((n, HO + 2, PW_HALF, C2), jnp.float32),       # pC
            pltpu.VMEM((M_MAX, K_MAX), jnp.bfloat16),                # im2col
        ],
    )(*args)


# ---------------------------------------------------------------------------
# Pure-JAX (XLA, f32) reference of the same forward pass.
# ---------------------------------------------------------------------------
def reference_forward(params, x_nchw):
    x = jnp.transpose(x_nchw, (0, 2, 3, 1)).astype(jnp.float32)
    relu = lambda v: jnp.maximum(v, 0.0)

    def conv(v, w, b, stride, pad):
        y = lax.conv_general_dilated(
            v, w, window_strides=(stride, stride),
            padding=((pad, pad), (pad, pad)),
            dimension_numbers=("NHWC", "HWIO", "NHWC"))
        return y + b.reshape(1, 1, 1, -1)

    a1 = relu(conv(x, params["stem_w"], params["stem_b"], 1, 1))
    y1 = relu(conv(a1, params["b1_w1"], params["b1_b1"], 1, 1))
    a2 = relu(conv(y1, params["b1_w2"], params["b1_b2"], 1, 1) + a1)
    y2 = relu(conv(a2, params["b2_w1"], params["b2_b1"], 2, 1))
    skip = conv(a2, params["b2_dw"], params["b2_db"], 2, 0)
    a3 = relu(conv(y2, params["b2_w2"], params["b2_b2"], 1, 1) + skip)
    pooled = jnp.mean(a3, axis=(1, 2))
    logits = pooled @ params["fc_w"] + params["fc_b"]
    return jax.nn.sigmoid(logits)


# ---------------------------------------------------------------------------
# Synthetic deterministic parameters (BatchNorm folded into conv biases).
# ---------------------------------------------------------------------------
def init_params(key):
    ks = jax.random.split(key, 7)

    def winit(k, shape):
        fan_in = 1
        for s in shape[:-1]:
            fan_in *= s
        return (jax.random.normal(k, shape, jnp.float32)
                * (1.0 / jnp.sqrt(jnp.float32(fan_in))))

    return {
        "stem_w": winit(ks[0], (3, 3, C_IN, C1)), "stem_b": jnp.zeros((C1,), jnp.float32),
        "b1_w1": winit(ks[1], (3, 3, C1, C1)),    "b1_b1": jnp.zeros((C1,), jnp.float32),
        "b1_w2": winit(ks[2], (3, 3, C1, C1)),    "b1_b2": jnp.zeros((C1,), jnp.float32),
        "b2_w1": winit(ks[3], (3, 3, C1, C2)),    "b2_b1": jnp.zeros((C2,), jnp.float32),
        "b2_w2": winit(ks[4], (3, 3, C2, C2)),    "b2_b2": jnp.zeros((C2,), jnp.float32),
        "b2_dw": winit(ks[5], (1, 1, C1, C2)),    "b2_db": jnp.zeros((C2,), jnp.float32),
        "fc_w":  winit(ks[6], (C2, N_CLASSES)),
        "fc_b":  jnp.zeros((N_CLASSES,), jnp.float32),
    }


if __name__ == "__main__":
    key = jax.random.PRNGKey(0)
    k_x, k_p = jax.random.split(key)
    x = jax.random.normal(k_x, (N_BATCH, C_IN, H_IN, W_IN), jnp.float32)  # NCHW
    params = init_params(k_p)

    out = jax.block_until_ready(forward(params, x))
    ref = jax.block_until_ready(reference_forward(params, x))

    assert out.shape == (N_BATCH, N_CLASSES)
    assert bool(jnp.all((out >= 0.0) & (out <= 1.0)))          # sigmoid range
    assert bool(jnp.allclose(out, ref, atol=5e-2)), (out, ref)  # bf16 tolerance
    print("KERNEL_OK")
</pallas_src>

<mosaic_0001>
module attributes {stable_mosaic.version = 11 : i64} {
  func.func @_resnet_sigmoid_kernel(%arg0: memref<2x16x16x4xf32, #tpu.memory_space<vmem>>, %arg1: memref<36x8xbf16, #tpu.memory_space<vmem>>, %arg2: memref<1x8xf32, #tpu.memory_space<vmem>>, %arg3: memref<72x8xbf16, #tpu.memory_space<vmem>>, %arg4: memref<1x8xf32, #tpu.memory_space<vmem>>, %arg5: memref<72x8xbf16, #tpu.memory_space<vmem>>, %arg6: memref<1x8xf32, #tpu.memory_space<vmem>>, %arg7: memref<72x32xbf16, #tpu.memory_space<vmem>>, %arg8: memref<1x16xf32, #tpu.memory_space<vmem>>, %arg9: memref<1x16xf32, #tpu.memory_space<vmem>>, %arg10: memref<144x16xbf16, #tpu.memory_space<vmem>>, %arg11: memref<1x16xf32, #tpu.memory_space<vmem>>, %arg12: memref<16x3xbf16, #tpu.memory_space<vmem>>, %arg13: memref<1x3xf32, #tpu.memory_space<vmem>>, %arg14: memref<2x3xf32, #tpu.memory_space<vmem>>, %arg15: memref<2x18x32x4xf32, #tpu.memory_space<vmem>>, %arg16: memref<2x18x32x8xf32, #tpu.memory_space<vmem>>, %arg17: memref<2x10x24x16xf32, #tpu.memory_space<vmem>>, %arg18: memref<512x144xbf16, #tpu.memory_space<vmem>>) attributes {dimension_semantics = [], scalar_prefetch = 0 : i64, scratch_operands = 4 : i64, tpu.core_type = #tpu.core_type<tc>} {
    %cst = arith.constant 0.000000e+00 : f32
    %0 = vector.broadcast %cst : f32 to vector<2x18x8x4xf32>
    %c0 = arith.constant 0 : index
    %c0_0 = arith.constant 0 : index
    %c0_1 = arith.constant 0 : index
    %c0_2 = arith.constant 0 : index
    %1 = vector.load %arg15[%c0, %c0_0, %c0_1, %c0_2] : memref<2x18x32x4xf32, #tpu.memory_space<vmem>>, vector<2x18x8x4xf32>
    tpu.vector_store %arg15[%c0, %c0_0, %c0_1, %c0_2], %0 {strides = array<i32>} : memref<2x18x32x4xf32, #tpu.memory_space<vmem>>, vector<2x18x8x4xf32>,
    %cst_3 = arith.constant 0.000000e+00 : f32
    %2 = vector.broadcast %cst_3 : f32 to vector<2x18x8x4xf32>
    %c0_4 = arith.constant 0 : index
    %c0_5 = arith.constant 0 : index
    %c24 = arith.constant 24 : index
    %c0_6 = arith.constant 0 : index
    %3 = vector.load %arg15[%c0_4, %c0_5, %c24, %c0_6] : memref<2x18x32x4xf32, #tpu.memory_space<vmem>>, vector<2x18x8x4xf32>
    tpu.vector_store %arg15[%c0_4, %c0_5, %c24, %c0_6], %2 {strides = array<i32>} : memref<2x18x32x4xf32, #tpu.memory_space<vmem>>, vector<2x18x8x4xf32>,
    %cst_7 = arith.constant 0.000000e+00 : f32
    %4 = vector.broadcast %cst_7 : f32 to vector<2x1x16x4xf32>
    %c0_8 = arith.constant 0 : index
    %c0_9 = arith.constant 0 : index
    %c8 = arith.constant 8 : index
    %c0_10 = arith.constant 0 : index
    %5 = vector.load %arg15[%c0_8, %c0_9, %c8, %c0_10] : memref<2x18x32x4xf32, #tpu.memory_space<vmem>>, vector<2x1x16x4xf32>
    tpu.vector_store %arg15[%c0_8, %c0_9, %c8, %c0_10], %4 {strides = array<i32>} : memref<2x18x32x4xf32, #tpu.memory_space<vmem>>, vector<2x1x16x4xf32>,
    %cst_11 = arith.constant 0.000000e+00 : f32
    %6 = vector.broadcast %cst_11 : f32 to vector<2x1x16x4xf32>
    %c0_12 = arith.constant 0 : index
    %c17 = arith.constant 17 : index
    %c8_13 = arith.constant 8 : index
    %c0_14 = arith.constant 0 : index
    %7 = vector.load %arg15[%c0_12, %c17, %c8_13, %c0_14] : memref<2x18x32x4xf32, #tpu.memory_space<vmem>>, vector<2x1x16x4xf32>
    tpu.vector_store %arg15[%c0_12, %c17, %c8_13, %c0_14], %6 {strides = array<i32>} : memref<2x18x32x4xf32, #tpu.memory_space<vmem>>, vector<2x1x16x4xf32>,
    %c0_15 = arith.constant 0 : index
    %c0_16 = arith.constant 0 : index
    %c0_17 = arith.constant 0 : index
    %c0_18 = arith.constant 0 : index
    %8 = vector.load %arg0[%c0_15, %c0_16, %c0_17, %c0_18] : memref<2x16x16x4xf32, #tpu.memory_space<vmem>>, vector<2x16x16x4xf32>
    %c0_19 = arith.constant 0 : index
    %c1 = arith.constant 1 : index
    %c8_20 = arith.constant 8 : index
    %c0_21 = arith.constant 0 : index
    %9 = vector.load %arg15[%c0_19, %c1, %c8_20, %c0_21] : memref<2x18x32x4xf32, #tpu.memory_space<vmem>>, vector<2x16x16x4xf32>
    tpu.vector_store %arg15[%c0_19, %c1, %c8_20, %c0_21], %8 {strides = array<i32>} : memref<2x18x32x4xf32, #tpu.memory_space<vmem>>, vector<2x16x16x4xf32>,
    %c0_22 = arith.constant 0 : index
    %c0_23 = arith.constant 0 : index
    %c7 = arith.constant 7 : index
    %c0_24 = arith.constant 0 : index
    %10 = vector.load %arg15[%c0_22, %c0_23, %c7, %c0_24] : memref<2x18x32x4xf32, #tpu.memory_space<vmem>>, vector<2x16x16x4xf32>
    %11 = vector.shape_cast %10 : vector<2x16x16x4xf32> to vector<512x4xf32>
    %12 = arith.truncf %11 : vector<512x4xf32> to vector<512x4xbf16>
    %c0_25 = arith.constant 0 : index
    %c0_26 = arith.constant 0 : index
    %13 = vector.load %arg18[%c0_25, %c0_26] : memref<512x144xbf16, #tpu.memory_space<vmem>>, vector<512x4xbf16>
    tpu.vector_store %arg18[%c0_25, %c0_26], %12 {strides = array<i32>} : memref<512x144xbf16, #tpu.memory_space<vmem>>, vector<512x4xbf16>,
    %c0_27 = arith.constant 0 : index
    %c0_28 = arith.constant 0 : index
    %c8_29 = arith.constant 8 : index
    %c0_30 = arith.constant 0 : index
    %14 = vector.load %arg15[%c0_27, %c0_28, %c8_29, %c0_30] : memref<2x18x32x4xf32, #tpu.memory_space<vmem>>, vector<2x16x16x4xf32>
    %15 = vector.shape_cast %14 : vector<2x16x16x4xf32> to vector<512x4xf32>
    %16 = arith.truncf %15 : vector<512x4xf32> to vector<512x4xbf16>
    %c0_31 = arith.constant 0 : index
    %c4 = arith.constant 4 : index
    %17 = vector.load %arg18[%c0_31, %c4] : memref<512x144xbf16, #tpu.memory_space<vmem>>, vector<512x4xbf16>
    tpu.vector_store %arg18[%c0_31, %c4], %16 {strides = array<i32>} : memref<512x144xbf16, #tpu.memory_space<vmem>>, vector<512x4xbf16>,
    %c0_32 = arith.constant 0 : index
    %c0_33 = arith.constant 0 : index
    %c9 = arith.constant 9 : index
    %c0_34 = arith.constant 0 : index
    %18 = vector.load %arg15[%c0_32, %c0_33, %c9, %c0_34] : memref<2x18x32x4xf32, #tpu.memory_space<vmem>>, vector<2x16x16x4xf32>
    %19 = vector.shape_cast %18 : vector<2x16x16x4xf32> to vector<512x4xf32>
    %20 = arith.truncf %19 : vector<512x4xf32> to vector<512x4xbf16>
    %c0_35 = arith.constant 0 : index
    %c8_36 = arith.constant 8 : index
    %21 = vector.load %arg18[%c0_35, %c8_36] : memref<512x144xbf16, #tpu.memory_space<vmem>>, vector<512x4xbf16>
    tpu.vector_store %arg18[%c0_35, %c8_36], %20 {strides = array<i32>} : memref<512x144xbf16, #tpu.memory_space<vmem>>, vector<512x4xbf16>,
    %c0_37 = arith.constant 0 : index
    %c1_38 = arith.constant 1 : index
    %c7_39 = arith.constant 7 : index
    %c0_40 = arith.constant 0 : index
    %22 = vector.load %arg15[%c0_37, %c1_38, %c7_39, %c0_40] : memref<2x18x32x4xf32, #tpu.memory_space<vmem>>, vector<2x16x16x4xf32>
    %23 = vector.shape_cast %22 : vector<2x16x16x4xf32> to vector<512x4xf32>
    %24 = arith.truncf %23 : vector<512x4xf32> to vector<512x4xbf16>
    %c0_41 = arith.constant 0 : index
    %c12 = arith.constant 12 : index
    %25 = vector.load %arg18[%c0_41, %c12] : memref<512x144xbf16, #tpu.memory_space<vmem>>, vector<512x4xbf16>
    tpu.vector_store %arg18[%c0_41, %c12], %24 {strides = array<i32>} : memref<512x144xbf16, #tpu.memory_space<vmem>>, vector<512x4xbf16>,
    %c0_42 = arith.constant 0 : index
    %c1_43 = arith.constant 1 : index
    %c8_44 = arith.constant 8 : index
    %c0_45 = arith.constant 0 : index
    %26 = vector.load %arg15[%c0_42, %c1_43, %c8_44, %c0_45] : memref<2x18x32x4xf32, #tpu.memory_space<vmem>>, vector<2x16x16x4xf32>
    %27 = vector.shape_cast %26 : vector<2x16x16x4xf32> to vector<512x4xf32>
    %28 = arith.truncf %27 : vector<512x4xf32> to vector<512x4xbf16>
    %c0_46 = arith.constant 0 : index
    %c16 = arith.constant 16 : index
    %29 = vector.load %arg18[%c0_46, %c16] : memref<512x144xbf16, #tpu.memory_space<vmem>>, vector<512x4xbf16>
    tpu.vector_store %arg18[%c0_46, %c16], %28 {strides = array<i32>} : memref<512x144xbf16, #tpu.memory_space<vmem>>, vector<512x4xbf16>,
    %c0_47 = arith.constant 0 : index
    %c1_48 = arith.constant 1 : index
    %c9_49 = arith.constant 9 : index
    %c0_50 = arith.constant 0 : index
    %30 = vector.load %arg15[%c0_47, %c1_48, %c9_49, %c0_50] : memref<2x18x32x4xf32, #tpu.memory_space<vmem>>, vector<2x16x16x4xf32>
    %31 = vector.shape_cast %30 : vector<2x16x16x4xf32> to vector<512x4xf32>
    %32 = arith.truncf %31 : vector<512x4xf32> to vector<512x4xbf16>
    %c0_51 = arith.constant 0 : index
    %c20 = arith.constant 20 : index
    %33 = vector.load %arg18[%c0_51, %c20] : memref<512x144xbf16, #tpu.memory_space<vmem>>, vector<512x4xbf16>
    tpu.vector_store %arg18[%c0_51, %c20], %32 {strides = array<i32>} : memref<512x144xbf16, #tpu.memory_space<vmem>>, vector<512x4xbf16>,
    %c0_52 = arith.constant 0 : index
    %c2 = arith.constant 2 : index
    %c7_53 = arith.constant 7 : index
    %c0_54 = arith.constant 0 : index
    %34 = vector.load %arg15[%c0_52, %c2, %c7_53, %c0_54] : memref<2x18x32x4xf32, #tpu.memory_space<vmem>>, vector<2x16x16x4xf32>
    %35 = vector.shape_cast %34 : vector<2x16x16x4xf32> to vector<512x4xf32>
    %36 = arith.truncf %35 : vector<512x4xf32> to vector<512x4xbf16>
    %c0_55 = arith.constant 0 : index
    %c24_56 = arith.constant 24 : index
    %37 = vector.load %arg18[%c0_55, %c24_56] : memref<512x144xbf16, #tpu.memory_space<vmem>>, vector<512x4xbf16>
    tpu.vector_store %arg18[%c0_55, %c24_56], %36 {strides = array<i32>} : memref<512x144xbf16, #tpu.memory_space<vmem>>, vector<512x4xbf16>,
    %c0_57 = arith.constant 0 : index
    %c2_58 = arith.constant 2 : index
    %c8_59 = arith.constant 8 : index
    %c0_60 = arith.constant 0 : index
    %38 = vector.load %arg15[%c0_57, %c2_58, %c8_59, %c0_60] : memref<2x18x32x4xf32, #tpu.memory_space<vmem>>, vector<2x16x16x4xf32>
    %39 = vector.shape_cast %38 : vector<2x16x16x4xf32> to vector<512x4xf32>
    %40 = arith.truncf %39 : vector<512x4xf32> to vector<512x4xbf16>
    %c0_61 = arith.constant 0 : index
    %c28 = arith.constant 28 : index
    %41 = vector.load %arg18[%c0_61, %c28] : memref<512x144xbf16, #tpu.memory_space<vmem>>, vector<512x4xbf16>
    tpu.vector_store %arg18[%c0_61, %c28], %40 {strides = array<i32>} : memref<512x144xbf16, #tpu.memory_space<vmem>>, vector<512x4xbf16>,
    %c0_62 = arith.constant 0 : index
    %c2_63 = arith.constant 2 : index
    %c9_64 = arith.constant 9 : index
    %c0_65 = arith.constant 0 : index
    %42 = vector.load %arg15[%c0_62, %c2_63, %c9_64, %c0_65] : memref<2x18x32x4xf32, #tpu.memory_space<vmem>>, vector<2x16x16x4xf32>
    %43 = vector.shape_cast %42 : vector<2x16x16x4xf32> to vector<512x4xf32>
    %44 = arith.truncf %43 : vector<512x4xf32> to vector<512x4xbf16>
    %c0_66 = arith.constant 0 : index
    %c32 = arith.constant 32 : index
    %45 = vector.load %arg18[%c0_66, %c32] : memref<512x144xbf16, #tpu.memory_space<vmem>>, vector<512x4xbf16>
    tpu.vector_store %arg18[%c0_66, %c32], %44 {strides = array<i32>} : memref<512x144xbf16, #tpu.memory_space<vmem>>, vector<512x4xbf16>,
    %c0_67 = arith.constant 0 : index
    %c0_68 = arith.constant 0 : index
    %46 = vector.load %arg18[%c0_67, %c0_68] : memref<512x144xbf16, #tpu.memory_space<vmem>>, vector<512x36xbf16>
    %c0_69 = arith.constant 0 : index
    %c0_70 = arith.constant 0 : index
    %47 = vector.load %arg1[%c0_69, %c0_70] : memref<36x8xbf16, #tpu.memory_space<vmem>>, vector<36x8xbf16>
    %cst_71 = arith.constant dense<0.000000e+00> : vector<512x8xf32>
    %48 = tpu.matmul %46, %47, %cst_71 {dimension_numbers = #tpu.dot_dimension_numbers<[1], [0], [0], [1], [0, 0, 1, 1], [], []>} : vector<512x36xbf16>, vector<36x8xbf16>, vector<512x8xf32> -> vector<512x8xf32>
    %c0_72 = arith.constant 0 : index
    %c0_73 = arith.constant 0 : index
    %49 = vector.load %arg2[%c0_72, %c0_73] : memref<1x8xf32, #tpu.memory_space<vmem>>, vector<1x8xf32>
    %50 = vector.broadcast %49 : vector<1x8xf32> to vector<512x8xf32>
    %51 = arith.addf %48, %50 : vector<512x8xf32>
    %cst_74 = arith.constant 0.000000e+00 : f32
    %52 = vector.broadcast %cst_74 : f32 to vector<512x8xf32>
    %53 = arith.maximumf %51, %52 : vector<512x8xf32>
    %cst_75 = arith.constant 0.000000e+00 : f32
    %54 = vector.broadcast %cst_75 : f32 to vector<2x18x8x8xf32>
    %c0_76 = arith.constant 0 : index
    %c0_77 = arith.constant 0 : index
    %c0_78 = arith.constant 0 : index
    %c0_79 = arith.constant 0 : index
    %55 = vector.load %arg16[%c0_76, %c0_77, %c0_78, %c0_79] : memref<2x18x32x8xf32, #tpu.memory_space<vmem>>, vector<2x18x8x8xf32>
    tpu.vector_store %arg16[%c0_76, %c0_77, %c0_78, %c0_79], %54 {strides = array<i32>} : memref<2x18x32x8xf32, #tpu.memory_space<vmem>>, vector<2x18x8x8xf32>,
    %cst_80 = arith.constant 0.000000e+00 : f32
    %56 = vector.broadcast %cst_80 : f32 to vector<2x18x8x8xf32>
    %c0_81 = arith.constant 0 : index
    %c0_82 = arith.constant 0 : index
    %c24_83 = arith.constant 24 : index
    %c0_84 = arith.constant 0 : index
    %57 = vector.load %arg16[%c0_81, %c0_82, %c24_83, %c0_84] : memref<2x18x32x8xf32, #tpu.memory_space<vmem>>, vector<2x18x8x8xf32>
    tpu.vector_store %arg16[%c0_81, %c0_82, %c24_83, %c0_84], %56 {strides = array<i32>} : memref<2x18x32x8xf32, #tpu.memory_space<vmem>>, vector<2x18x8x8xf32>,
    %cst_85 = arith.constant 0.000000e+00 : f32
    %58 = vector.broadcast %cst_85 : f32 to vector<2x1x16x8xf32>
    %c0_86 = arith.constant 0 : index
    %c0_87 = arith.constant 0 : index
    %c8_88 = arith.constant 8 : index
    %c0_89 = arith.constant 0 : index
    %59 = vector.load %arg16[%c0_86, %c0_87, %c8_88, %c0_89] : memref<2x18x32x8xf32, #tpu.memory_space<vmem>>, vector<2x1x16x8xf32>
    tpu.vector_store %arg16[%c0_86, %c0_87, %c8_88, %c0_89], %58 {strides = array<i32>} : memref<2x18x32x8xf32, #tpu.memory_space<vmem>>, vector<2x1x16x8xf32>,
    %cst_90 = arith.constant 0.000000e+00 : f32
    %60 = vector.broadcast %cst_90 : f32 to vector<2x1x16x8xf32>
    %c0_91 = arith.constant 0 : index
    %c17_92 = arith.constant 17 : index
    %c8_93 = arith.constant 8 : index
    %c0_94 = arith.constant 0 : index
    %61 = vector.load %arg16[%c0_91, %c17_92, %c8_93, %c0_94] : memref<2x18x32x8xf32, #tpu.memory_space<vmem>>, vector<2x1x16x8xf32>
    tpu.vector_store %arg16[%c0_91, %c17_92, %c8_93, %c0_94], %60 {strides = array<i32>} : memref<2x18x32x8xf32, #tpu.memory_space<vmem>>, vector<2x1x16x8xf32>,
    %62 = vector.shape_cast %53 : vector<512x8xf32> to vector<2x16x16x8xf32>
    %c0_95 = arith.constant 0 : index
    %c1_96 = arith.constant 1 : index
    %c8_97 = arith.constant 8 : index
    %c0_98 = arith.constant 0 : index
    %63 = vector.load %arg16[%c0_95, %c1_96, %c8_97, %c0_98] : memref<2x18x32x8xf32, #tpu.memory_space<vmem>>, vector<2x16x16x8xf32>
    tpu.vector_store %arg16[%c0_95, %c1_96, %c8_97, %c0_98], %62 {strides = array<i32>} : memref<2x18x32x8xf32, #tpu.memory_space<vmem>>, vector<2x16x16x8xf32>,
    %c0_99 = arith.constant 0 : index
    %c0_100 = arith.constant 0 : index
    %c7_101 = arith.constant 7 : index
    %c0_102 = arith.constant 0 : index
    %64 = vector.load %arg16[%c0_99, %c0_100, %c7_101, %c0_102] : memref<2x18x32x8xf32, #tpu.memory_space<vmem>>, vector<2x16x16x8xf32>
    %65 = vector.shape_cast %64 : vector<2x16x16x8xf32> to vector<512x8xf32>
    %66 = arith.truncf %65 : vector<512x8xf32> to vector<512x8xbf16>
    %c0_103 = arith.constant 0 : index
    %c0_104 = arith.constant 0 : index
    %67 = vector.load %arg18[%c0_103, %c0_104] : memref<512x144xbf16, #tpu.memory_space<vmem>>, vector<512x8xbf16>
    tpu.vector_store %arg18[%c0_103, %c0_104], %66 {strides = array<i32>} : memref<512x144xbf16, #tpu.memory_space<vmem>>, vector<512x8xbf16>,
    %c0_105 = arith.constant 0 : index
    %c0_106 = arith.constant 0 : index
    %c8_107 = arith.constant 8 : index
    %c0_108 = arith.constant 0 : index
    %68 = vector.load %arg16[%c0_105, %c0_106, %c8_107, %c0_108] : memref<2x18x32x8xf32, #tpu.memory_space<vmem>>, vector<2x16x16x8xf32>
    %69 = vector.shape_cast %68 : vector<2x16x16x8xf32> to vector<512x8xf32>
    %70 = arith.truncf %69 : vector<512x8xf32> to vector<512x8xbf16>
    %c0_109 = arith.constant 0 : index
    %c8_110 = arith.constant 8 : index
    %71 = vector.load %arg18[%c0_109, %c8_110] : memref<512x144xbf16, #tpu.memory_space<vmem>>, vector<512x8xbf16>
    tpu.vector_store %arg18[%c0_109, %c8_110], %70 {strides = array<i32>} : memref<512x144xbf16, #tpu.memory_space<vmem>>, vector<512x8xbf16>,
    %c0_111 = arith.constant 0 : index
    %c0_112 = arith.constant 0 : index
    %c9_113 = arith.constant 9 : index
    %c0_114 = arith.constant 0 : index
    %72 = vector.load %arg16[%c0_111, %c0_112, %c9_113, %c0_114] : memref<2x18x32x8xf32, #tpu.memory_space<vmem>>, vector<2x16x16x8xf32>
    %73 = vector.shape_cast %72 : vector<2x16x16x8xf32> to vector<512x8xf32>
    %74 = arith.truncf %73 : vector<512x8xf32> to vector<512x8xbf16>
    %c0_115 = arith.constant 0 : index
    %c16_116 = arith.constant 16 : index
    %75 = vector.load %arg18[%c0_115, %c16_116] : memref<512x144xbf16, #tpu.memory_space<vmem>>, vector<512x8xbf16>
    tpu.vector_store %arg18[%c0_115, %c16_116], %74 {strides = array<i32>} : memref<512x144xbf16, #tpu.memory_space<vmem>>, vector<512x8xbf16>,
    %c0_117 = arith.constant 0 : index
    %c1_118 = arith.constant 1 : index
    %c7_119 = arith.constant 7 : index
    %c0_120 = arith.constant 0 : index
    %76 = vector.load %arg16[%c0_117, %c1_118, %c7_119, %c0_120] : memref<2x18x32x8xf32, #tpu.memory_space<vmem>>, vector<2x16x16x8xf32>
    %77 = vector.shape_cast %76 : vector<2x16x16x8xf32> to vector<512x8xf32>
    %78 = arith.truncf %77 : vector<512x8xf32> to vector<512x8xbf16>
    %c0_121 = arith.constant 0 : index
    %c24_122 = arith.constant 24 : index
    %79 = vector.load %arg18[%c0_121, %c24_122] : memref<512x144xbf16, #tpu.memory_space<vmem>>, vector<512x8xbf16>
    tpu.vector_store %arg18[%c0_121, %c24_122], %78 {strides = array<i32>} : memref<512x144xbf16, #tpu.memory_space<vmem>>, vector<512x8xbf16>,
    %c0_123 = arith.constant 0 : index
    %c1_124 = arith.constant 1 : index
    %c8_125 = arith.constant 8 : index
    %c0_126 = arith.constant 0 : index
    %80 = vector.load %arg16[%c0_123, %c1_124, %c8_125, %c0_126] : memref<2x18x32x8xf32, #tpu.memory_space<vmem>>, vector<2x16x16x8xf32>
    %81 = vector.shape_cast %80 : vector<2x16x16x8xf32> to vector<512x8xf32>
    %82 = arith.truncf %81 : vector<512x8xf32> to vector<512x8xbf16>
    %c0_127 = arith.constant 0 : index
    %c32_128 = arith.constant 32 : index
    %83 = vector.load %arg18[%c0_127, %c32_128] : memref<512x144xbf16, #tpu.memory_space<vmem>>, vector<512x8xbf16>
    tpu.vector_store %arg18[%c0_127, %c32_128], %82 {strides = array<i32>} : memref<512x144xbf16, #tpu.memory_space<vmem>>, vector<512x8xbf16>,
    %c0_129 = arith.constant 0 : index
    %c1_130 = arith.constant 1 : index
    %c9_131 = arith.constant 9 : index
    %c0_132 = arith.constant 0 : index
    %84 = vector.load %arg16[%c0_129, %c1_130, %c9_131, %c0_132] : memref<2x18x32x8xf32, #tpu.memory_space<vmem>>, vector<2x16x16x8xf32>
    %85 = vector.shape_cast %84 : vector<2x16x16x8xf32> to vector<512x8xf32>
    %86 = arith.truncf %85 : vector<512x8xf32> to vector<512x8xbf16>
    %c0_133 = arith.constant 0 : index
    %c40 = arith.constant 40 : index
    %87 = vector.load %arg18[%c0_133, %c40] : memref<512x144xbf16, #tpu.memory_space<vmem>>, vector<512x8xbf16>
    tpu.vector_store %arg18[%c0_133, %c40], %86 {strides = array<i32>} : memref<512x144xbf16, #tpu.memory_space<vmem>>, vector<512x8xbf16>,
    %c0_134 = arith.constant 0 : index
    %c2_135 = arith.constant 2 : index
    %c7_136 = arith.constant 7 : index
    %c0_137 = arith.constant 0 : index
    %88 = vector.load %arg16[%c0_134, %c2_135, %c7_136, %c0_137] : memref<2x18x32x8xf32, #tpu.memory_space<vmem>>, vector<2x16x16x8xf32>
    %89 = vector.shape_cast %88 : vector<2x16x16x8xf32> to vector<512x8xf32>
    %90 = arith.truncf %89 : vector<512x8xf32> to vector<512x8xbf16>
    %c0_138 = arith.constant 0 : index
    %c48 = arith.constant 48 : index
    %91 = vector.load %arg18[%c0_138, %c48] : memref<512x144xbf16, #tpu.memory_space<vmem>>, vector<512x8xbf16>
    tpu.vector_store %arg18[%c0_138, %c48], %90 {strides = array<i32>} : memref<512x144xbf16, #tpu.memory_space<vmem>>, vector<512x8xbf16>,
    %c0_139 = arith.constant 0 : index
    %c2_140 = arith.constant 2 : index
    %c8_141 = arith.constant 8 : index
    %c0_142 = arith.constant 0 : index
    %92 = vector.load %arg16[%c0_139, %c2_140, %c8_141, %c0_142] : memref<2x18x32x8xf32, #tpu.memory_space<vmem>>, vector<2x16x16x8xf32>
    %93 = vector.shape_cast %92 : vector<2x16x16x8xf32> to vector<512x8xf32>
    %94 = arith.truncf %93 : vector<512x8xf32> to vector<512x8xbf16>
    %c0_143 = arith.constant 0 : index
    %c56 = arith.constant 56 : index
    %95 = vector.load %arg18[%c0_143, %c56] : memref<512x144xbf16, #tpu.memory_space<vmem>>, vector<512x8xbf16>
    tpu.vector_store %arg18[%c0_143, %c56], %94 {strides = array<i32>} : memref<512x144xbf16, #tpu.memory_space<vmem>>, vector<512x8xbf16>,
    %c0_144 = arith.constant 0 : index
    %c2_145 = arith.constant 2 : index
    %c9_146 = arith.constant 9 : index
    %c0_147 = arith.constant 0 : index
    %96 = vector.load %arg16[%c0_144, %c2_145, %c9_146, %c0_147] : memref<2x18x32x8xf32, #tpu.memory_space<vmem>>, vector<2x16x16x8xf32>
    %97 = vector.shape_cast %96 : vector<2x16x16x8xf32> to vector<512x8xf32>
    %98 = arith.truncf %97 : vector<512x8xf32> to vector<512x8xbf16>
    %c0_148 = arith.constant 0 : index
    %c64 = arith.constant 64 : index
    %99 = vector.load %arg18[%c0_148, %c64] : memref<512x144xbf16, #tpu.memory_space<vmem>>, vector<512x8xbf16>
    tpu.vector_store %arg18[%c0_148, %c64], %98 {strides = array<i32>} : memref<512x144xbf16, #tpu.memory_space<vmem>>, vector<512x8xbf16>,
    %c0_149 = arith.constant 0 : index
    %c0_150 = arith.constant 0 : index
    %100 = vector.load %arg18[%c0_149, %c0_150] : memref<512x144xbf16, #tpu.memory_space<vmem>>, vector<512x72xbf16>
    %c0_151 = arith.constant 0 : index
    %c0_152 = arith.constant 0 : index
    %101 = vector.load %arg3[%c0_151, %c0_152] : memref<72x8xbf16, #tpu.memory_space<vmem>>, vector<72x8xbf16>
    %cst_153 = arith.constant dense<0.000000e+00> : vector<512x8xf32>
    %102 = tpu.matmul %100, %101, %cst_153 {dimension_numbers = #tpu.dot_dimension_numbers<[1], [0], [0], [1], [0, 0, 1, 1], [], []>} : vector<512x72xbf16>, vector<72x8xbf16>, vector<512x8xf32> -> vector<512x8xf32>
    %c0_154 = arith.constant 0 : index
    %c0_155 = arith.constant 0 : index
    %103 = vector.load %arg4[%c0_154, %c0_155] : memref<1x8xf32, #tpu.memory_space<vmem>>, vector<1x8xf32>
    %104 = vector.broadcast %103 : vector<1x8xf32> to vector<512x8xf32>
    %105 = arith.addf %102, %104 : vector<512x8xf32>
    %cst_156 = arith.constant 0.000000e+00 : f32
    %106 = vector.broadcast %cst_156 : f32 to vector<512x8xf32>
    %107 = arith.maximumf %105, %106 : vector<512x8xf32>
    %108 = vector.shape_cast %107 : vector<512x8xf32> to vector<2x16x16x8xf32>
    %c0_157 = arith.constant 0 : index
    %c1_158 = arith.constant 1 : index
    %c8_159 = arith.constant 8 : index
    %c0_160 = arith.constant 0 : index
    %109 = vector.load %arg16[%c0_157, %c1_158, %c8_159, %c0_160] : memref<2x18x32x8xf32, #tpu.memory_space<vmem>>, vector<2x16x16x8xf32>
    tpu.vector_store %arg16[%c0_157, %c1_158, %c8_159, %c0_160], %108 {strides = array<i32>} : memref<2x18x32x8xf32, #tpu.memory_space<vmem>>, vector<2x16x16x8xf32>,
    %c0_161 = arith.constant 0 : index
    %c0_162 = arith.constant 0 : index
    %c7_163 = arith.constant 7 : index
    %c0_164 = arith.constant 0 : index
    %110 = vector.load %arg16[%c0_161, %c0_162, %c7_163, %c0_164] : memref<2x18x32x8xf32, #tpu.memory_space<vmem>>, vector<2x16x16x8xf32>
    %111 = vector.shape_cast %110 : vector<2x16x16x8xf32> to vector<512x8xf32>
    %112 = arith.truncf %111 : vector<512x8xf32> to vector<512x8xbf16>
    %c0_165 = arith.constant 0 : index
    %c0_166 = arith.constant 0 : index
    %113 = vector.load %arg18[%c0_165, %c0_166] : memref<512x144xbf16, #tpu.memory_space<vmem>>, vector<512x8xbf16>
    tpu.vector_store %arg18[%c0_165, %c0_166], %112 {strides = array<i32>} : memref<512x144xbf16, #tpu.memory_space<vmem>>, vector<512x8xbf16>,
    %c0_167 = arith.constant 0 : index
    %c0_168 = arith.constant 0 : index
    %c8_169 = arith.constant 8 : index
    %c0_170 = arith.constant 0 : index
    %114 = vector.load %arg16[%c0_167, %c0_168, %c8_169, %c0_170] : memref<2x18x32x8xf32, #tpu.memory_space<vmem>>, vector<2x16x16x8xf32>
    %115 = vector.shape_cast %114 : vector<2x16x16x8xf32> to vector<512x8xf32>
    %116 = arith.truncf %115 : vector<512x8xf32> to vector<512x8xbf16>
    %c0_171 = arith.constant 0 : index
    %c8_172 = arith.constant 8 : index
    %117 = vector.load %arg18[%c0_171, %c8_172] : memref<512x144xbf16, #tpu.memory_space<vmem>>, vector<512x8xbf16>
    tpu.vector_store %arg18[%c0_171, %c8_172], %116 {strides = array<i32>} : memref<512x144xbf16, #tpu.memory_space<vmem>>, vector<512x8xbf16>,
    %c0_173 = arith.constant 0 : index
    %c0_174 = arith.constant 0 : index
    %c9_175 = arith.constant 9 : index
    %c0_176 = arith.constant 0 : index
    %118 = vector.load %arg16[%c0_173, %c0_174, %c9_175, %c0_176] : memref<2x18x32x8xf32, #tpu.memory_space<vmem>>, vector<2x16x16x8xf32>
    %119 = vector.shape_cast %118 : vector<2x16x16x8xf32> to vector<512x8xf32>
    %120 = arith.truncf %119 : vector<512x8xf32> to vector<512x8xbf16>
    %c0_177 = arith.constant 0 : index
    %c16_178 = arith.constant 16 : index
    %121 = vector.load %arg18[%c0_177, %c16_178] : memref<512x144xbf16, #tpu.memory_space<vmem>>, vector<512x8xbf16>
    tpu.vector_store %arg18[%c0_177, %c16_178], %120 {strides = array<i32>} : memref<512x144xbf16, #tpu.memory_space<vmem>>, vector<512x8xbf16>,
    %c0_179 = arith.constant 0 : index
    %c1_180 = arith.constant 1 : index
    %c7_181 = arith.constant 7 : index
    %c0_182 = arith.constant 0 : index
    %122 = vector.load %arg16[%c0_179, %c1_180, %c7_181, %c0_182] : memref<2x18x32x8xf32, #tpu.memory_space<vmem>>, vector<2x16x16x8xf32>
    %123 = vector.shape_cast %122 : vector<2x16x16x8xf32> to vector<512x8xf32>
    %124 = arith.truncf %123 : vector<512x8xf32> to vector<512x8xbf16>
    %c0_183 = arith.constant 0 : index
    %c24_184 = arith.constant 24 : index
    %125 = vector.load %arg18[%c0_183, %c24_184] : memref<512x144xbf16, #tpu.memory_space<vmem>>, vector<512x8xbf16>
    tpu.vector_store %arg18[%c0_183, %c24_184], %124 {strides = array<i32>} : memref<512x144xbf16, #tpu.memory_space<vmem>>, vector<512x8xbf16>,
    %c0_185 = arith.constant 0 : index
    %c1_186 = arith.constant 1 : index
    %c8_187 = arith.constant 8 : index
    %c0_188 = arith.constant 0 : index
    %126 = vector.load %arg16[%c0_185, %c1_186, %c8_187, %c0_188] : memref<2x18x32x8xf32, #tpu.memory_space<vmem>>, vector<2x16x16x8xf32>
    %127 = vector.shape_cast %126 : vector<2x16x16x8xf32> to vector<512x8xf32>
    %128 = arith.truncf %127 : vector<512x8xf32> to vector<512x8xbf16>
    %c0_189 = arith.constant 0 : index
    %c32_190 = arith.constant 32 : index
    %129 = vector.load %arg18[%c0_189, %c32_190] : memref<512x144xbf16, #tpu.memory_space<vmem>>, vector<512x8xbf16>
    tpu.vector_store %arg18[%c0_189, %c32_190], %128 {strides = array<i32>} : memref<512x144xbf16, #tpu.memory_space<vmem>>, vector<512x8xbf16>,
    %c0_191 = arith.constant 0 : index
    %c1_192 = arith.constant 1 : index
    %c9_193 = arith.constant 9 : index
    %c0_194 = arith.constant 0 : index
    %130 = vector.load %arg16[%c0_191, %c1_192, %c9_193, %c0_194] : memref<2x18x32x8xf32, #tpu.memory_space<vmem>>, vector<2x16x16x8xf32>
    %131 = vector.shape_cast %130 : vector<2x16x16x8xf32> to vector<512x8xf32>
    %132 = arith.truncf %131 : vector<512x8xf32> to vector<512x8xbf16>
    %c0_195 = arith.constant 0 : index
    %c40_196 = arith.constant 40 : index
    %133 = vector.load %arg18[%c0_195, %c40_196] : memref<512x144xbf16, #tpu.memory_space<vmem>>, vector<512x8xbf16>
    tpu.vector_store %arg18[%c0_195, %c40_196], %132 {strides = array<i32>} : memref<512x144xbf16, #tpu.memory_space<vmem>>, vector<512x8xbf16>,
    %c0_197 = arith.constant 0 : index
    %c2_198 = arith.constant 2 : index
    %c7_199 = arith.constant 7 : index
    %c0_200 = arith.constant 0 : index
    %134 = vector.load %arg16[%c0_197, %c2_198, %c7_199, %c0_200] : memref<2x18x32x8xf32, #tpu.memory_space<vmem>>, vector<2x16x16x8xf32>
    %135 = vector.shape_cast %134 : vector<2x16x16x8xf32> to vector<512x8xf32>
    %136 = arith.truncf %135 : vector<512x8xf32> to vector<512x8xbf16>
    %c0_201 = arith.constant 0 : index
    %c48_202 = arith.constant 48 : index
    %137 = vector.load %arg18[%c0_201, %c48_202] : memref<512x144xbf16, #tpu.memory_space<vmem>>, vector<512x8xbf16>
    tpu.vector_store %arg18[%c0_201, %c48_202], %136 {strides = array<i32>} : memref<512x144xbf16, #tpu.memory_space<vmem>>, vector<512x8xbf16>,
    %c0_203 = arith.constant 0 : index
    %c2_204 = arith.constant 2 : index
    %c8_205 = arith.constant 8 : index
    %c0_206 = arith.constant 0 : index
    %138 = vector.load %arg16[%c0_203, %c2_204, %c8_205, %c0_206] : memref<2x18x32x8xf32, #tpu.memory_space<vmem>>, vector<2x16x16x8xf32>
    %139 = vector.shape_cast %138 : vector<2x16x16x8xf32> to vector<512x8xf32>
    %140 = arith.truncf %139 : vector<512x8xf32> to vector<512x8xbf16>
    %c0_207 = arith.constant 0 : index
    %c56_208 = arith.constant 56 : index
    %141 = vector.load %arg18[%c0_207, %c56_208] : memref<512x144xbf16, #tpu.memory_space<vmem>>, vector<512x8xbf16>
    tpu.vector_store %arg18[%c0_207, %c56_208], %140 {strides = array<i32>} : memref<512x144xbf16, #tpu.memory_space<vmem>>, vector<512x8xbf16>,
    %c0_209 = arith.constant 0 : index
    %c2_210 = arith.constant 2 : index
    %c9_211 = arith.constant 9 : index
    %c0_212 = arith.constant 0 : index
    %142 = vector.load %arg16[%c0_209, %c2_210, %c9_211, %c0_212] : memref<2x18x32x8xf32, #tpu.memory_space<vmem>>, vector<2x16x16x8xf32>
    %143 = vector.shape_cast %142 : vector<2x16x16x8xf32> to vector<512x8xf32>
    %144 = arith.truncf %143 : vector<512x8xf32> to vector<512x8xbf16>
    %c0_213 = arith.constant 0 : index
    %c64_214 = arith.constant 64 : index
    %145 = vector.load %arg18[%c0_213, %c64_214] : memref<512x144xbf16, #tpu.memory_space<vmem>>, vector<512x8xbf16>
    tpu.vector_store %arg18[%c0_213, %c64_214], %144 {strides = array<i32>} : memref<512x144xbf16, #tpu.memory_space<vmem>>, vector<512x8xbf16>,
    %c0_215 = arith.constant 0 : index
    %c0_216 = arith.constant 0 : index
    %146 = vector.load %arg18[%c0_215, %c0_216] : memref<512x144xbf16, #tpu.memory_space<vmem>>, vector<512x72xbf16>
    %c0_217 = arith.constant 0 : index
    %c0_218 = arith.constant 0 : index
    %147 = vector.load %arg5[%c0_217, %c0_218] : memref<72x8xbf16, #tpu.memory_space<vmem>>, vector<72x8xbf16>
    %cst_219 = arith.constant dense<0.000000e+00> : vector<512x8xf32>
    %148 = tpu.matmul %146, %147, %cst_219 {dimension_numbers = #tpu.dot_dimension_numbers<[1], [0], [0], [1], [0, 0, 1, 1], [], []>} : vector<512x72xbf16>, vector<72x8xbf16>, vector<512x8xf32> -> vector<512x8xf32>
    %c0_220 = arith.constant 0 : index
    %c0_221 = arith.constant 0 : index
    %149 = vector.load %arg6[%c0_220, %c0_221] : memref<1x8xf32, #tpu.memory_space<vmem>>, vector<1x8xf32>
    %150 = vector.broadcast %149 : vector<1x8xf32> to vector<512x8xf32>
    %151 = arith.addf %148, %150 : vector<512x8xf32>
    %152 = arith.addf %151, %53 : vector<512x8xf32>
    %cst_222 = arith.constant 0.000000e+00 : f32
    %153 = vector.broadcast %cst_222 : f32 to vector<512x8xf32>
    %154 = arith.maximumf %152, %153 : vector<512x8xf32>
    %155 = vector.shape_cast %154 : vector<512x8xf32> to vector<2x16x16x8xf32>
    %c0_223 = arith.constant 0 : index
    %c1_224 = arith.constant 1 : index
    %c8_225 = arith.constant 8 : index
    %c0_226 = arith.constant 0 : index
    %156 = vector.load %arg16[%c0_223, %c1_224, %c8_225, %c0_226] : memref<2x18x32x8xf32, #tpu.memory_space<vmem>>, vector<2x16x16x8xf32>
    tpu.vector_store %arg16[%c0_223, %c1_224, %c8_225, %c0_226], %155 {strides = array<i32>} : memref<2x18x32x8xf32, #tpu.memory_space<vmem>>, vector<2x16x16x8xf32>,
    %c0_227 = arith.constant 0 : index
    %c0_228 = arith.constant 0 : index
    %c7_229 = arith.constant 7 : index
    %c0_230 = arith.constant 0 : index
    %157 = tpu.strided_load %arg16[%c0_227, %c0_228, %c7_229, %c0_230] {strides = array<i32: 1, 1, 2, 1>} : memref<2x18x32x8xf32, #tpu.memory_space<vmem>>, vector<2x16x8x8xf32>
    %158 = vector.shape_cast %157 : vector<2x16x8x8xf32> to vector<2x8x2x8x8xf32>
    %159 = vector.extract_strided_slice %158 {offsets = [0, 0, 0, 0, 0], sizes = [2, 8, 1, 8, 8], strides = [1, 1, 1, 1, 1]} : vector<2x8x2x8x8xf32> to vector<2x8x1x8x8xf32>
    %160 = vector.shape_cast %159 : vector<2x8x1x8x8xf32> to vector<2x8x8x8xf32>
    %161 = vector.shape_cast %160 : vector<2x8x8x8xf32> to vector<128x8xf32>
    %162 = arith.truncf %161 : vector<128x8xf32> to vector<128x8xbf16>
    %c0_231 = arith.constant 0 : index
    %c0_232 = arith.constant 0 : index
    %163 = vector.load %arg18[%c0_231, %c0_232] : memref<512x144xbf16, #tpu.memory_space<vmem>>, vector<128x8xbf16>
    tpu.vector_store %arg18[%c0_231, %c0_232], %162 {strides = array<i32>} : memref<512x144xbf16, #tpu.memory_space<vmem>>, vector<128x8xbf16>,
    %c0_233 = arith.constant 0 : index
    %c0_234 = arith.constant 0 : index
    %c8_235 = arith.constant 8 : index
    %c0_236 = arith.constant 0 : index
    %164 = tpu.strided_load %arg16[%c0_233, %c0_234, %c8_235, %c0_236] {strides = array<i32: 1, 1, 2, 1>} : memref<2x18x32x8xf32, #tpu.memory_space<vmem>>, vector<2x16x8x8xf32>
    %165 = vector.shape_cast %164 : vector<2x16x8x8xf32> to vector<2x8x2x8x8xf32>
    %166 = vector.extract_strided_slice %165 {offsets = [0, 0, 0, 0, 0], sizes = [2, 8, 1, 8, 8], strides = [1, 1, 1, 1, 1]} : vector<2x8x2x8x8xf32> to vector<2x8x1x8x8xf32>
    %167 = vector.shape_cast %166 : vector<2x8x1x8x8xf32> to vector<2x8x8x8xf32>
    %168 = vector.shape_cast %167 : vector<2x8x8x8xf32> to vector<128x8xf32>
    %169 = arith.truncf %168 : vector<128x8xf32> to vector<128x8xbf16>
    %c0_237 = arith.constant 0 : index
    %c8_238 = arith.constant 8 : index
    %170 = vector.load %arg18[%c0_237, %c8_238] : memref<512x144xbf16, #tpu.memory_space<vmem>>, vector<128x8xbf16>
    tpu.vector_store %arg18[%c0_237, %c8_238], %169 {strides = array<i32>} : memref<512x144xbf16, #tpu.memory_space<vmem>>, vector<128x8xbf16>,
    %c0_239 = arith.constant 0 : index
    %c0_240 = arith.constant 0 : index
    %c9_241 = arith.constant 9 : index
    %c0_242 = arith.constant 0 : index
    %171 = tpu.strided_load %arg16[%c0_239, %c0_240, %c9_241, %c0_242] {strides = array<i32: 1, 1, 2, 1>} : memref<2x18x32x8xf32, #tpu.memory_space<vmem>>, vector<2x16x8x8xf32>
    %172 = vector.shape_cast %171 : vector<2x16x8x8xf32> to vector<2x8x2x8x8xf32>
    %173 = vector.extract_strided_slice %172 {offsets = [0, 0, 0, 0, 0], sizes = [2, 8, 1, 8, 8], strides = [1, 1, 1, 1, 1]} : vector<2x8x2x8x8xf32> to vector<2x8x1x8x8xf32>
    %174 = vector.shape_cast %173 : vector<2x8x1x8x8xf32> to vector<2x8x8x8xf32>
    %175 = vector.shape_cast %174 : vector<2x8x8x8xf32> to vector<128x8xf32>
    %176 = arith.truncf %175 : vector<128x8xf32> to vector<128x8xbf16>
    %c0_243 = arith.constant 0 : index
    %c16_244 = arith.constant 16 : index
    %177 = vector.load %arg18[%c0_243, %c16_244] : memref<512x144xbf16, #tpu.memory_space<vmem>>, vector<128x8xbf16>
    tpu.vector_store %arg18[%c0_243, %c16_244], %176 {strides = array<i32>} : memref<512x144xbf16, #tpu.memory_space<vmem>>, vector<128x8xbf16>,
    %c0_245 = arith.constant 0 : index
    %c1_246 = arith.constant 1 : index
    %c7_247 = arith.constant 7 : index
    %c0_248 = arith.constant 0 : index
    %178 = tpu.strided_load %arg16[%c0_245, %c1_246, %c7_247, %c0_248] {strides = array<i32: 1, 1, 2, 1>} : memref<2x18x32x8xf32, #tpu.memory_space<vmem>>, vector<2x16x8x8xf32>
    %179 = vector.shape_cast %178 : vector<2x16x8x8xf32> to vector<2x8x2x8x8xf32>
    %180 = vector.extract_strided_slice %179 {offsets = [0, 0, 0, 0, 0], sizes = [2, 8, 1, 8, 8], strides = [1, 1, 1, 1, 1]} : vector<2x8x2x8x8xf32> to vector<2x8x1x8x8xf32>
    %181 = vector.shape_cast %180 : vector<2x8x1x8x8xf32> to vector<2x8x8x8xf32>
    %182 = vector.shape_cast %181 : vector<2x8x8x8xf32> to vector<128x8xf32>
    %183 = arith.truncf %182 : vector<128x8xf32> to vector<128x8xbf16>
    %c0_249 = arith.constant 0 : index
    %c24_250 = arith.constant 24 : index
    %184 = vector.load %arg18[%c0_249, %c24_250] : memref<512x144xbf16, #tpu.memory_space<vmem>>, vector<128x8xbf16>
    tpu.vector_store %arg18[%c0_249, %c24_250], %183 {strides = array<i32>} : memref<512x144xbf16, #tpu.memory_space<vmem>>, vector<128x8xbf16>,
    %c0_251 = arith.constant 0 : index
    %c1_252 = arith.constant 1 : index
    %c8_253 = arith.constant 8 : index
    %c0_254 = arith.constant 0 : index
    %185 = tpu.strided_load %arg16[%c0_251, %c1_252, %c8_253, %c0_254] {strides = array<i32: 1, 1, 2, 1>} : memref<2x18x32x8xf32, #tpu.memory_space<vmem>>, vector<2x16x8x8xf32>
    %186 = vector.shape_cast %185 : vector<2x16x8x8xf32> to vector<2x8x2x8x8xf32>
    %187 = vector.extract_strided_slice %186 {offsets = [0, 0, 0, 0, 0], sizes = [2, 8, 1, 8, 8], strides = [1, 1, 1, 1, 1]} : vector<2x8x2x8x8xf32> to vector<2x8x1x8x8xf32>
    %188 = vector.shape_cast %187 : vector<2x8x1x8x8xf32> to vector<2x8x8x8xf32>
    %189 = vector.shape_cast %188 : vector<2x8x8x8xf32> to vector<128x8xf32>
    %190 = arith.truncf %189 : vector<128x8xf32> to vector<128x8xbf16>
    %c0_255 = arith.constant 0 : index
    %c32_256 = arith.constant 32 : index
    %191 = vector.load %arg18[%c0_255, %c32_256] : memref<512x144xbf16, #tpu.memory_space<vmem>>, vector<128x8xbf16>
    tpu.vector_store %arg18[%c0_255, %c32_256], %190 {strides = array<i32>} : memref<512x144xbf16, #tpu.memory_space<vmem>>, vector<128x8xbf16>,
    %c0_257 = arith.constant 0 : index
    %c1_258 = arith.constant 1 : index
    %c9_259 = arith.constant 9 : index
    %c0_260 = arith.constant 0 : index
    %192 = tpu.strided_load %arg16[%c0_257, %c1_258, %c9_259, %c0_260] {strides = array<i32: 1, 1, 2, 1>} : memref<2x18x32x8xf32, #tpu.memory_space<vmem>>, vector<2x16x8x8xf32>
    %193 = vector.shape_cast %192 : vector<2x16x8x8xf32> to vector<2x8x2x8x8xf32>
    %194 = vector.extract_strided_slice %193 {offsets = [0, 0, 0, 0, 0], sizes = [2, 8, 1, 8, 8], strides = [1, 1, 1, 1, 1]} : vector<2x8x2x8x8xf32> to vector<2x8x1x8x8xf32>
    %195 = vector.shape_cast %194 : vector<2x8x1x8x8xf32> to vector<2x8x8x8xf32>
    %196 = vector.shape_cast %195 : vector<2x8x8x8xf32> to vector<128x8xf32>
    %197 = arith.truncf %196 : vector<128x8xf32> to vector<128x8xbf16>
    %c0_261 = arith.constant 0 : index
    %c40_262 = arith.constant 40 : index
    %198 = vector.load %arg18[%c0_261, %c40_262] : memref<512x144xbf16, #tpu.memory_space<vmem>>, vector<128x8xbf16>
    tpu.vector_store %arg18[%c0_261, %c40_262], %197 {strides = array<i32>} : memref<512x144xbf16, #tpu.memory_space<vmem>>, vector<128x8xbf16>,
    %c0_263 = arith.constant 0 : index
    %c2_264 = arith.constant 2 : index
    %c7_265 = arith.constant 7 : index
    %c0_266 = arith.constant 0 : index
    %199 = tpu.strided_load %arg16[%c0_263, %c2_264, %c7_265, %c0_266] {strides = array<i32: 1, 1, 2, 1>} : memref<2x18x32x8xf32, #tpu.memory_space<vmem>>, vector<2x16x8x8xf32>
    %200 = vector.shape_cast %199 : vector<2x16x8x8xf32> to vector<2x8x2x8x8xf32>
    %201 = vector.extract_strided_slice %200 {offsets = [0, 0, 0, 0, 0], sizes = [2, 8, 1, 8, 8], strides = [1, 1, 1, 1, 1]} : vector<2x8x2x8x8xf32> to vector<2x8x1x8x8xf32>
    %202 = vector.shape_cast %201 : vector<2x8x1x8x8xf32> to vector<2x8x8x8xf32>
    %203 = vector.shape_cast %202 : vector<2x8x8x8xf32> to vector<128x8xf32>
    %204 = arith.truncf %203 : vector<128x8xf32> to vector<128x8xbf16>
    %c0_267 = arith.constant 0 : index
    %c48_268 = arith.constant 48 : index
    %205 = vector.load %arg18[%c0_267, %c48_268] : memref<512x144xbf16, #tpu.memory_space<vmem>>, vector<128x8xbf16>
    tpu.vector_store %arg18[%c0_267, %c48_268], %204 {strides = array<i32>} : memref<512x144xbf16, #tpu.memory_space<vmem>>, vector<128x8xbf16>,
    %c0_269 = arith.constant 0 : index
    %c2_270 = arith.constant 2 : index
    %c8_271 = arith.constant 8 : index
    %c0_272 = arith.constant 0 : index
    %206 = tpu.strided_load %arg16[%c0_269, %c2_270, %c8_271, %c0_272] {strides = array<i32: 1, 1, 2, 1>} : memref<2x18x32x8xf32, #tpu.memory_space<vmem>>, vector<2x16x8x8xf32>
    %207 = vector.shape_cast %206 : vector<2x16x8x8xf32> to vector<2x8x2x8x8xf32>
    %208 = vector.extract_strided_slice %207 {offsets = [0, 0, 0, 0, 0], sizes = [2, 8, 1, 8, 8], strides = [1, 1, 1, 1, 1]} : vector<2x8x2x8x8xf32> to vector<2x8x1x8x8xf32>
    %209 = vector.shape_cast %208 : vector<2x8x1x8x8xf32> to vector<2x8x8x8xf32>
    %210 = vector.shape_cast %209 : vector<2x8x8x8xf32> to vector<128x8xf32>
    %211 = arith.truncf %210 : vector<128x8xf32> to vector<128x8xbf16>
    %c0_273 = arith.constant 0 : index
    %c56_274 = arith.constant 56 : index
    %212 = vector.load %arg18[%c0_273, %c56_274] : memref<512x144xbf16, #tpu.memory_space<vmem>>, vector<128x8xbf16>
    tpu.vector_store %arg18[%c0_273, %c56_274], %211 {strides = array<i32>} : memref<512x144xbf16, #tpu.memory_space<vmem>>, vector<128x8xbf16>,
    %c0_275 = arith.constant 0 : index
    %c2_276 = arith.constant 2 : index
    %c9_277 = arith.constant 9 : index
    %c0_278 = arith.constant 0 : index
    %213 = tpu.strided_load %arg16[%c0_275, %c2_276, %c9_277, %c0_278] {strides = array<i32: 1, 1, 2, 1>} : memref<2x18x32x8xf32, #tpu.memory_space<vmem>>, vector<2x16x8x8xf32>
    %214 = vector.shape_cast %213 : vector<2x16x8x8xf32> to vector<2x8x2x8x8xf32>
    %215 = vector.extract_strided_slice %214 {offsets = [0, 0, 0, 0, 0], sizes = [2, 8, 1, 8, 8], strides = [1, 1, 1, 1, 1]} : vector<2x8x2x8x8xf32> to vector<2x8x1x8x8xf32>
    %216 = vector.shape_cast %215 : vector<2x8x1x8x8xf32> to vector<2x8x8x8xf32>
    %217 = vector.shape_cast %216 : vector<2x8x8x8xf32> to vector<128x8xf32>
    %218 = arith.truncf %217 : vector<128x8xf32> to vector<128x8xbf16>
    %c0_279 = arith.constant 0 : index
    %c64_280 = arith.constant 64 : index
    %219 = vector.load %arg18[%c0_279, %c64_280] : memref<512x144xbf16, #tpu.memory_space<vmem>>, vector<128x8xbf16>
    tpu.vector_store %arg18[%c0_279, %c64_280], %218 {strides = array<i32>} : memref<512x144xbf16, #tpu.memory_space<vmem>>, vector<128x8xbf16>,
    %c0_281 = arith.constant 0 : index
    %c0_282 = arith.constant 0 : index
    %220 = vector.load %arg18[%c0_281, %c0_282] : memref<512x144xbf16, #tpu.memory_space<vmem>>, vector<128x72xbf16>
    %c0_283 = arith.constant 0 : index
    %c0_284 = arith.constant 0 : index
    %221 = vector.load %arg7[%c0_283, %c0_284] : memref<72x32xbf16, #tpu.memory_space<vmem>>, vector<72x32xbf16>
    %cst_285 = arith.constant dense<0.000000e+00> : vector<128x32xf32>
    %222 = tpu.matmul %220, %221, %cst_285 {dimension_numbers = #tpu.dot_dimension_numbers<[1], [0], [0], [1], [0, 0, 1, 1], [], []>} : vector<128x72xbf16>, vector<72x32xbf16>, vector<128x32xf32> -> vector<128x32xf32>
    %223 = vector.extract_strided_slice %222 {offsets = [0, 0], sizes = [128, 16], strides = [1, 1]} : vector<128x32xf32> to vector<128x16xf32>
    %c0_286 = arith.constant 0 : index
    %c0_287 = arith.constant 0 : index
    %224 = vector.load %arg8[%c0_286, %c0_287] : memref<1x16xf32, #tpu.memory_space<vmem>>, vector<1x16xf32>
    %225 = vector.broadcast %224 : vector<1x16xf32> to vector<128x16xf32>
    %226 = arith.addf %223, %225 : vector<128x16xf32>
    %cst_288 = arith.constant 0.000000e+00 : f32
    %227 = vector.broadcast %cst_288 : f32 to vector<128x16xf32>
    %228 = arith.maximumf %226, %227 : vector<128x16xf32>
    %229 = vector.extract_strided_slice %222 {offsets = [0, 16], sizes = [128, 16], strides = [1, 1]} : vector<128x32xf32> to vector<128x16xf32>
    %c0_289 = arith.constant 0 : index
    %c0_290 = arith.constant 0 : index
    %230 = vector.load %arg9[%c0_289, %c0_290] : memref<1x16xf32, #tpu.memory_space<vmem>>, vector<1x16xf32>
    %231 = vector.broadcast %230 : vector<1x16xf32> to vector<128x16xf32>
    %232 = arith.addf %229, %231 : vector<128x16xf32>
    %cst_291 = arith.constant 0.000000e+00 : f32
    %233 = vector.broadcast %cst_291 : f32 to vector<2x10x8x16xf32>
    %c0_292 = arith.constant 0 : index
    %c0_293 = arith.constant 0 : index
    %c0_294 = arith.constant 0 : index
    %c0_295 = arith.constant 0 : index
    %234 = vector.load %arg17[%c0_292, %c0_293, %c0_294, %c0_295] : memref<2x10x24x16xf32, #tpu.memory_space<vmem>>, vector<2x10x8x16xf32>
    tpu.vector_store %arg17[%c0_292, %c0_293, %c0_294, %c0_295], %233 {strides = array<i32>} : memref<2x10x24x16xf32, #tpu.memory_space<vmem>>, vector<2x10x8x16xf32>,
    %cst_296 = arith.constant 0.000000e+00 : f32
    %235 = vector.broadcast %cst_296 : f32 to vector<2x10x8x16xf32>
    %c0_297 = arith.constant 0 : index
    %c0_298 = arith.constant 0 : index
    %c16_299 = arith.constant 16 : index
    %c0_300 = arith.constant 0 : index
    %236 = vector.load %arg17[%c0_297, %c0_298, %c16_299, %c0_300] : memref<2x10x24x16xf32, #tpu.memory_space<vmem>>, vector<2x10x8x16xf32>
    tpu.vector_store %arg17[%c0_297, %c0_298, %c16_299, %c0_300], %235 {strides = array<i32>} : memref<2x10x24x16xf32, #tpu.memory_space<vmem>>, vector<2x10x8x16xf32>,
    %cst_301 = arith.constant 0.000000e+00 : f32
    %237 = vector.broadcast %cst_301 : f32 to vector<2x1x8x16xf32>
    %c0_302 = arith.constant 0 : index
    %c0_303 = arith.constant 0 : index
    %c8_304 = arith.constant 8 : index
    %c0_305 = arith.constant 0 : index
    %238 = vector.load %arg17[%c0_302, %c0_303, %c8_304, %c0_305] : memref<2x10x24x16xf32, #tpu.memory_space<vmem>>, vector<2x1x8x16xf32>
    tpu.vector_store %arg17[%c0_302, %c0_303, %c8_304, %c0_305], %237 {strides = array<i32>} : memref<2x10x24x16xf32, #tpu.memory_space<vmem>>, vector<2x1x8x16xf32>,
    %cst_306 = arith.constant 0.000000e+00 : f32
    %239 = vector.broadcast %cst_306 : f32 to vector<2x1x8x16xf32>
    %c0_307 = arith.constant 0 : index
    %c9_308 = arith.constant 9 : index
    %c8_309 = arith.constant 8 : index
    %c0_310 = arith.constant 0 : index
    %240 = vector.load %arg17[%c0_307, %c9_308, %c8_309, %c0_310] : memref<2x10x24x16xf32, #tpu.memory_space<vmem>>, vector<2x1x8x16xf32>
    tpu.vector_store %arg17[%c0_307, %c9_308, %c8_309, %c0_310], %239 {strides = array<i32>} : memref<2x10x24x16xf32, #tpu.memory_space<vmem>>, vector<2x1x8x16xf32>,
    %241 = vector.shape_cast %228 : vector<128x16xf32> to vector<2x8x8x16xf32>
    %c0_311 = arith.constant 0 : index
    %c1_312 = arith.constant 1 : index
    %c8_313 = arith.constant 8 : index
    %c0_314 = arith.constant 0 : index
    %242 = vector.load %arg17[%c0_311, %c1_312, %c8_313, %c0_314] : memref<2x10x24x16xf32, #tpu.memory_space<vmem>>, vector<2x8x8x16xf32>
    tpu.vector_store %arg17[%c0_311, %c1_312, %c8_313, %c0_314], %241 {strides = array<i32>} : memref<2x10x24x16xf32, #tpu.memory_space<vmem>>, vector<2x8x8x16xf32>,
    %c0_315 = arith.constant 0 : index
    %c0_316 = arith.constant 0 : index
    %c7_317 = arith.constant 7 : index
    %c0_318 = arith.constant 0 : index
    %243 = vector.load %arg17[%c0_315, %c0_316, %c7_317, %c0_318] : memref<2x10x24x16xf32, #tpu.memory_space<vmem>>, vector<2x8x8x16xf32>
    %244 = vector.shape_cast %243 : vector<2x8x8x16xf32> to vector<128x16xf32>
    %245 = arith.truncf %244 : vector<128x16xf32> to vector<128x16xbf16>
    %c0_319 = arith.constant 0 : index
    %c0_320 = arith.constant 0 : index
    %246 = vector.load %arg18[%c0_319, %c0_320] : memref<512x144xbf16, #tpu.memory_space<vmem>>, vector<128x16xbf16>
    tpu.vector_store %arg18[%c0_319, %c0_320], %245 {strides = array<i32>} : memref<512x144xbf16, #tpu.memory_space<vmem>>, vector<128x16xbf16>,
    %c0_321 = arith.constant 0 : index
    %c0_322 = arith.constant 0 : index
    %c8_323 = arith.constant 8 : index
    %c0_324 = arith.constant 0 : index
    %247 = vector.load %arg17[%c0_321, %c0_322, %c8_323, %c0_324] : memref<2x10x24x16xf32, #tpu.memory_space<vmem>>, vector<2x8x8x16xf32>
    %248 = vector.shape_cast %247 : vector<2x8x8x16xf32> to vector<128x16xf32>
    %249 = arith.truncf %248 : vector<128x16xf32> to vector<128x16xbf16>
    %c0_325 = arith.constant 0 : index
    %c16_326 = arith.constant 16 : index
    %250 = vector.load %arg18[%c0_325, %c16_326] : memref<512x144xbf16, #tpu.memory_space<vmem>>, vector<128x16xbf16>
    tpu.vector_store %arg18[%c0_325, %c16_326], %249 {strides = array<i32>} : memref<512x144xbf16, #tpu.memory_space<vmem>>, vector<128x16xbf16>,
    %c0_327 = arith.constant 0 : index
    %c0_328 = arith.constant 0 : index
    %c9_329 = arith.constant 9 : index
    %c0_330 = arith.constant 0 : index
    %251 = vector.load %arg17[%c0_327, %c0_328, %c9_329, %c0_330] : memref<2x10x24x16xf32, #tpu.memory_space<vmem>>, vector<2x8x8x16xf32>
    %252 = vector.shape_cast %251 : vector<2x8x8x16xf32> to vector<128x16xf32>
    %253 = arith.truncf %252 : vector<128x16xf32> to vector<128x16xbf16>
    %c0_331 = arith.constant 0 : index
    %c32_332 = arith.constant 32 : index
    %254 = vector.load %arg18[%c0_331, %c32_332] : memref<512x144xbf16, #tpu.memory_space<vmem>>, vector<128x16xbf16>
    tpu.vector_store %arg18[%c0_331, %c32_332], %253 {strides = array<i32>} : memref<512x144xbf16, #tpu.memory_space<vmem>>, vector<128x16xbf16>,
    %c0_333 = arith.constant 0 : index
    %c1_334 = arith.constant 1 : index
    %c7_335 = arith.constant 7 : index
    %c0_336 = arith.constant 0 : index
    %255 = vector.load %arg17[%c0_333, %c1_334, %c7_335, %c0_336] : memref<2x10x24x16xf32, #tpu.memory_space<vmem>>, vector<2x8x8x16xf32>
    %256 = vector.shape_cast %255 : vector<2x8x8x16xf32> to vector<128x16xf32>
    %257 = arith.truncf %256 : vector<128x16xf32> to vector<128x16xbf16>
    %c0_337 = arith.constant 0 : index
    %c48_338 = arith.constant 48 : index
    %258 = vector.load %arg18[%c0_337, %c48_338] : memref<512x144xbf16, #tpu.memory_space<vmem>>, vector<128x16xbf16>
    tpu.vector_store %arg18[%c0_337, %c48_338], %257 {strides = array<i32>} : memref<512x144xbf16, #tpu.memory_space<vmem>>, vector<128x16xbf16>,
    %c0_339 = arith.constant 0 : index
    %c1_340 = arith.constant 1 : index
    %c8_341 = arith.constant 8 : index
    %c0_342 = arith.constant 0 : index
    %259 = vector.load %arg17[%c0_339, %c1_340, %c8_341, %c0_342] : memref<2x10x24x16xf32, #tpu.memory_space<vmem>>, vector<2x8x8x16xf32>
    %260 = vector.shape_cast %259 : vector<2x8x8x16xf32> to vector<128x16xf32>
    %261 = arith.truncf %260 : vector<128x16xf32> to vector<128x16xbf16>
    %c0_343 = arith.constant 0 : index
    %c64_344 = arith.constant 64 : index
    %262 = vector.load %arg18[%c0_343, %c64_344] : memref<512x144xbf16, #tpu.memory_space<vmem>>, vector<128x16xbf16>
    tpu.vector_store %arg18[%c0_343, %c64_344], %261 {strides = array<i32>} : memref<512x144xbf16, #tpu.memory_space<vmem>>, vector<128x16xbf16>,
    %c0_345 = arith.constant 0 : index
    %c1_346 = arith.constant 1 : index
    %c9_347 = arith.constant 9 : index
    %c0_348 = arith.constant 0 : index
    %263 = vector.load %arg17[%c0_345, %c1_346, %c9_347, %c0_348] : memref<2x10x24x16xf32, #tpu.memory_space<vmem>>, vector<2x8x8x16xf32>
    %264 = vector.shape_cast %263 : vector<2x8x8x16xf32> to vector<128x16xf32>
    %265 = arith.truncf %264 : vector<128x16xf32> to vector<128x16xbf16>
    %c0_349 = arith.constant 0 : index
    %c80 = arith.constant 80 : index
    %266 = vector.load %arg18[%c0_349, %c80] : memref<512x144xbf16, #tpu.memory_space<vmem>>, vector<128x16xbf16>
    tpu.vector_store %arg18[%c0_349, %c80], %265 {strides = array<i32>} : memref<512x144xbf16, #tpu.memory_space<vmem>>, vector<128x16xbf16>,
    %c0_350 = arith.constant 0 : index
    %c2_351 = arith.constant 2 : index
    %c7_352 = arith.constant 7 : index
    %c0_353 = arith.constant 0 : index
    %267 = vector.load %arg17[%c0_350, %c2_351, %c7_352, %c0_353] : memref<2x10x24x16xf32, #tpu.memory_space<vmem>>, vector<2x8x8x16xf32>
    %268 = vector.shape_cast %267 : vector<2x8x8x16xf32> to vector<128x16xf32>
    %269 = arith.truncf %268 : vector<128x16xf32> to vector<128x16xbf16>
    %c0_354 = arith.constant 0 : index
    %c96 = arith.constant 96 : index
    %270 = vector.load %arg18[%c0_354, %c96] : memref<512x144xbf16, #tpu.memory_space<vmem>>, vector<128x16xbf16>
    tpu.vector_store %arg18[%c0_354, %c96], %269 {strides = array<i32>} : memref<512x144xbf16, #tpu.memory_space<vmem>>, vector<128x16xbf16>,
    %c0_355 = arith.constant 0 : index
    %c2_356 = arith.constant 2 : index
    %c8_357 = arith.constant 8 : index
    %c0_358 = arith.constant 0 : index
    %271 = vector.load %arg17[%c0_355, %c2_356, %c8_357, %c0_358] : memref<2x10x24x16xf32, #tpu.memory_space<vmem>>, vector<2x8x8x16xf32>
    %272 = vector.shape_cast %271 : vector<2x8x8x16xf32> to vector<128x16xf32>
    %273 = arith.truncf %272 : vector<128x16xf32> to vector<128x16xbf16>
    %c0_359 = arith.constant 0 : index
    %c112 = arith.constant 112 : index
    %274 = vector.load %arg18[%c0_359, %c112] : memref<512x144xbf16, #tpu.memory_space<vmem>>, vector<128x16xbf16>
    tpu.vector_store %arg18[%c0_359, %c112], %273 {strides = array<i32>} : memref<512x144xbf16, #tpu.memory_space<vmem>>, vector<128x16xbf16>,
    %c0_360 = arith.constant 0 : index
    %c2_361 = arith.constant 2 : index
    %c9_362 = arith.constant 9 : index
    %c0_363 = arith.constant 0 : index
    %275 = vector.load %arg17[%c0_360, %c2_361, %c9_362, %c0_363] : memref<2x10x24x16xf32, #tpu.memory_space<vmem>>, vector<2x8x8x16xf32>
    %276 = vector.shape_cast %275 : vector<2x8x8x16xf32> to vector<128x16xf32>
    %277 = arith.truncf %276 : vector<128x16xf32> to vector<128x16xbf16>
    %c0_364 = arith.constant 0 : index
    %c128 = arith.constant 128 : index
    %278 = vector.load %arg18[%c0_364, %c128] : memref<512x144xbf16, #tpu.memory_space<vmem>>, vector<128x16xbf16>
    tpu.vector_store %arg18[%c0_364, %c128], %277 {strides = array<i32>} : memref<512x144xbf16, #tpu.memory_space<vmem>>, vector<128x16xbf16>,
    %c0_365 = arith.constant 0 : index
    %c0_366 = arith.constant 0 : index
    %279 = vector.load %arg18[%c0_365, %c0_366] : memref<512x144xbf16, #tpu.memory_space<vmem>>, vector<128x144xbf16>
    %c0_367 = arith.constant 0 : index
    %c0_368 = arith.constant 0 : index
    %280 = vector.load %arg10[%c0_367, %c0_368] : memref<144x16xbf16, #tpu.memory_space<vmem>>, vector<144x16xbf16>
    %cst_369 = arith.constant dense<0.000000e+00> : vector<128x16xf32>
    %281 = tpu.matmul %279, %280, %cst_369 {dimension_numbers = #tpu.dot_dimension_numbers<[1], [0], [0], [1], [0, 0, 1, 1], [], []>} : vector<128x144xbf16>, vector<144x16xbf16>, vector<128x16xf32> -> vector<128x16xf32>
    %c0_370 = arith.constant 0 : index
    %c0_371 = arith.constant 0 : index
    %282 = vector.load %arg11[%c0_370, %c0_371] : memref<1x16xf32, #tpu.memory_space<vmem>>, vector<1x16xf32>
    %283 = vector.broadcast %282 : vector<1x16xf32> to vector<128x16xf32>
    %284 = arith.addf %281, %283 : vector<128x16xf32>
    %285 = arith.addf %284, %232 : vector<128x16xf32>
    %cst_372 = arith.constant 0.000000e+00 : f32
    %286 = vector.broadcast %cst_372 : f32 to vector<128x16xf32>
    %287 = arith.maximumf %285, %286 : vector<128x16xf32>
    %288 = vector.shape_cast %287 : vector<128x16xf32> to vector<2x64x16xf32>
    %cst_373 = arith.constant dense<0.000000e+00> : vector<2x16xf32>
    %289 = vector.multi_reduction <add>, %288, %cst_373 [1] : vector<2x64x16xf32> to vector<2x16xf32>
    %cst_374 = arith.constant 6.400000e+01 : f32
    %290 = vector.broadcast %cst_374 : f32 to vector<2x16xf32>
    %291 = arith.divf %289, %290 : vector<2x16xf32>
    %292 = arith.truncf %291 : vector<2x16xf32> to vector<2x16xbf16>
    %c0_375 = arith.constant 0 : index
    %c0_376 = arith.constant 0 : index
    %293 = vector.load %arg12[%c0_375, %c0_376] : memref<16x3xbf16, #tpu.memory_space<vmem>>, vector<16x3xbf16>
    %cst_377 = arith.constant dense<0.000000e+00> : vector<2x3xf32>
    %294 = tpu.matmul %292, %293, %cst_377 {dimension_numbers = #tpu.dot_dimension_numbers<[1], [0], [0], [1], [0, 0, 1, 1], [], []>} : vector<2x16xbf16>, vector<16x3xbf16>, vector<2x3xf32> -> vector<2x3xf32>
    %c0_378 = arith.constant 0 : index
    %c0_379 = arith.constant 0 : index
    %295 = vector.load %arg13[%c0_378, %c0_379] : memref<1x3xf32, #tpu.memory_space<vmem>>, vector<1x3xf32>
    %296 = vector.broadcast %295 : vector<1x3xf32> to vector<2x3xf32>
    %297 = arith.addf %294, %296 : vector<2x3xf32>
    %cst_380 = arith.constant 0.000000e+00 : f32
    %298 = vector.broadcast %cst_380 : f32 to vector<2x3xf32>
    %299 = arith.subf %298, %297 : vector<2x3xf32>
    %300 = math.exp %299 : vector<2x3xf32>
    %cst_381 = arith.constant 1.000000e+00 : f32
    %301 = vector.broadcast %cst_381 : f32 to vector<2x3xf32>
    %302 = arith.addf %301, %300 : vector<2x3xf32>
    %cst_382 = arith.constant 1.000000e+00 : f32
    %303 = vector.broadcast %cst_382 : f32 to vector<2x3xf32>
    %304 = arith.divf %303, %302 : vector<2x3xf32>
    %c0_383 = arith.constant 0 : index
    %c0_384 = arith.constant 0 : index
    %305 = vector.load %arg14[%c0_383, %c0_384] : memref<2x3xf32, #tpu.memory_space<vmem>>, vector<2x3xf32>
    tpu.vector_store %arg14[%c0_383, %c0_384], %304 {strides = array<i32>} : memref<2x3xf32, #tpu.memory_space<vmem>>, vector<2x3xf32>,
    return
  }
}

</mosaic_0001>

<llo_original>
// kernel: forward.1
$region0: #{forward.1}
  #allocation0 [shape = 'u32[]', space=smem, size = 0x4, offset = 0x4, fixed_abs, tag = 'smem constant byte address 0x4 - core index']
  #allocation1 [shape = 'u32[144,128]{1,0:T(1,128)}', space=vmem, size = 0x12000, scoped, tag = 'internal scratch']
  #allocation2 [shape = 'f32[2,18,32,4]{3,2,1,0:T(8,128)}', space=vmem, size = 0x90000, scoped, tag = 'scratch operand']
  #allocation3 [shape = 'f32[2,18,32,8]{3,2,1,0:T(8,128)}', space=vmem, size = 0x90000, scoped, tag = 'scratch operand']
  #allocation4 [shape = 'f32[2,10,24,16]{3,2,1,0:T(8,128)}', space=vmem, size = 0x3c000, scoped, tag = 'scratch operand']
  #allocation5 [shape = 'bf16[512,144]{1,0:T(16,128)(2,1)}', space=vmem, size = 0x40000, scoped, tag = 'scratch operand']
  %s0 = inlined_call_operand.vmem [shape: f32[2,16,16,4], index: 0, kind: input, shape index: {}]
  %s1 = inlined_call_operand.vmem [shape: bf16[36,8], index: 1, kind: input, shape index: {}]
  %s2 = inlined_call_operand.vmem [shape: f32[1,8], index: 2, kind: input, shape index: {}]
  %s3 = inlined_call_operand.vmem [shape: bf16[72,8], index: 3, kind: input, shape index: {}]
  %s4 = inlined_call_operand.vmem [shape: f32[1,8], index: 4, kind: input, shape index: {}]
  %s5 = inlined_call_operand.vmem [shape: bf16[72,8], index: 5, kind: input, shape index: {}]
  %s6 = inlined_call_operand.vmem [shape: f32[1,8], index: 6, kind: input, shape index: {}]
  %s7 = inlined_call_operand.vmem [shape: bf16[72,32], index: 7, kind: input, shape index: {}]
  %s8 = inlined_call_operand.vmem [shape: f32[1,16], index: 8, kind: input, shape index: {}]
  %s9 = inlined_call_operand.vmem [shape: f32[1,16], index: 9, kind: input, shape index: {}]
  %s10 = inlined_call_operand.vmem [shape: bf16[144,16], index: 10, kind: input, shape index: {}]
  %s11 = inlined_call_operand.vmem [shape: f32[1,16], index: 11, kind: input, shape index: {}]
  %s12 = inlined_call_operand.vmem [shape: bf16[16,3], index: 12, kind: input, shape index: {}]
  %s13 = inlined_call_operand.vmem [shape: f32[1,3], index: 13, kind: input, shape index: {}]
  %s14 = inlined_call_operand.hbm [shape: f32[2,3], index: 14, kind: output, shape index: {}]
  %s15 = sld [smem:[#allocation0]]
  $region66: #{forward.1} parent=0
    _
  %s17 = ssub.s32 1, %s15
  %s18 = scalar_select 0, %s17, %s15
  $region1: #{forward.1} parent=0
    #allocation6 [shape = 'u8[1024]{0}', space=vmem, size = 0x400, scoped, tag = 'output window, operand 0, single buffered']
    #allocation7 [shape = 's32[1]{0}', space=sflag, size = 0x4, scoped, tag = 'scoped memory for forward.1']
    %19 = vsyncpa [#allocation7], 0
    // Predicated region
    $region2: #{forward.1} parent=1 // pred_check
      _
    $region3: #{forward.1} parent=1 // pred_check_branch
      %21 = sbr.rel (0) target = $region5
    $region4: #{forward.1} parent=1 // pred_region
      _
    $region5: #{forward.1} parent=1 // pred_fallthru
      _
    // Predicated region
    $region6: #{forward.1} parent=1 // pred_check
      _
    $region7: #{forward.1} parent=1 // pred_check_branch
      %23 = sbr.rel (0) target = $region9
    $region8: #{forward.1} parent=1 // pred_region
      _
    $region9: #{forward.1} parent=1 // pred_fallthru
      _
    // Predicated region
    $region10: #{forward.1} parent=1 // pred_check
      _
    $region11: #{forward.1} parent=1 // pred_check_branch
      %25 = sbr.rel (0) target = $region13
    $region12: #{forward.1} parent=1 // pred_region
      _
    $region13: #{forward.1} parent=1 // pred_fallthru
      _
    // Predicated region
    $region14: #{forward.1} parent=1 // pred_check
      _
    $region15: #{forward.1} parent=1 // pred_check_branch
      %27 = sbr.rel (0) target = $region17
    $region16: #{forward.1} parent=1 // pred_region
      _
    $region17: #{forward.1} parent=1 // pred_fallthru
      _
    // Predicated region
    $region18: #{forward.1} parent=1 // pred_check
      _
    $region19: #{forward.1} parent=1 // pred_check_branch
      %29 = sbr.rel (0) target = $region21
    $region20: #{forward.1} parent=1 // pred_region
      _
    $region21: #{forward.1} parent=1 // pred_fallthru
      _
    // Predicated region
    $region22: #{forward.1} parent=1 // pred_check
      _
    $region23: #{forward.1} parent=1 // pred_check_branch
      %31 = sbr.rel (0) target = $region25
    $region24: #{forward.1} parent=1 // pred_region
      _
    $region25: #{forward.1} parent=1 // pred_fallthru
      _
    // Predicated region
    $region26: #{forward.1} parent=1 // pred_check
      _
    $region27: #{forward.1} parent=1 // pred_check_branch
      %33 = sbr.rel (0) target = $region29
    $region28: #{forward.1} parent=1 // pred_region
      _
    $region29: #{forward.1} parent=1 // pred_fallthru
      _
    // Predicated region
    $region30: #{forward.1} parent=1 // pred_check
      _
    $region31: #{forward.1} parent=1 // pred_check_branch
      %35 = sbr.rel (0) target = $region33
    $region32: #{forward.1} parent=1 // pred_region
      _
    $region33: #{forward.1} parent=1 // pred_fallthru
      _
    // Predicated region
    $region34: #{forward.1} parent=1 // pred_check
      _
    $region35: #{forward.1} parent=1 // pred_check_branch
      %37 = sbr.rel (0) target = $region37
    $region36: #{forward.1} parent=1 // pred_region
      _
    $region37: #{forward.1} parent=1 // pred_fallthru
      _
    // Predicated region
    $region38: #{forward.1} parent=1 // pred_check
      _
    $region39: #{forward.1} parent=1 // pred_check_branch
      %39 = sbr.rel (0) target = $region41
    $region40: #{forward.1} parent=1 // pred_region
      _
    $region41: #{forward.1} parent=1 // pred_fallthru
      _
    // Predicated region
    $region42: #{forward.1} parent=1 // pred_check
      _
    $region43: #{forward.1} parent=1 // pred_check_branch
      %41 = sbr.rel (0) target = $region45
    $region44: #{forward.1} parent=1 // pred_region
      _
    $region45: #{forward.1} parent=1 // pred_fallthru
      _
    // Predicated region
    $region46: #{forward.1} parent=1 // pred_check
      _
    $region47: #{forward.1} parent=1 // pred_check_branch
      %43 = sbr.rel (0) target = $region49
    $region48: #{forward.1} parent=1 // pred_region
      _
    $region49: #{forward.1} parent=1 // pred_fallthru
      _
    // Predicated region
    $region50: #{forward.1} parent=1 // pred_check
      _
    $region51: #{forward.1} parent=1 // pred_check_branch
      %45 = sbr.rel (0) target = $region53
    $region52: #{forward.1} parent=1 // pred_region
      _
    $region53: #{forward.1} parent=1 // pred_fallthru
      _
    // Predicated region
    $region54: #{forward.1} parent=1 // pred_check
      _
    $region55: #{forward.1} parent=1 // pred_check_branch
      %47 = sbr.rel (0) target = $region57
    $region56: #{forward.1} parent=1 // pred_region
      _
    $region57: #{forward.1} parent=1 // pred_fallthru
      _
    %vm49 = vcmask 31744
    %50 = vst.msk [vmem:[#allocation2] sm:$0xff] %vm49, 0.0
    %51 = vst.msk [vmem:[#allocation2 + $0x20] sm:$0xff] %vm49, 0.0
    %52 = vst.msk [vmem:[#allocation2 + $0x40] sm:$0xff] %vm49, 0.0
    %53 = vst.msk [vmem:[#allocation2 + $0x60] sm:$0xff] %vm49, 0.0
    %54 = vst.msk [vmem:[#allocation2 + $0x80] sm:$0xff] %vm49, 0.0
    %55 = vst.msk [vmem:[#allocation2 + $0xa0] sm:$0xff] %vm49, 0.0
    %56 = vst.msk [vmem:[#allocation2 + $0xc0] sm:$0xff] %vm49, 0.0
    %57 = vst.msk [vmem:[#allocation2 + $0xe0] sm:$0xff] %vm49, 0.0
    %58 = vst.msk [vmem:[#allocation2 + $0x100] sm:$0xff] %vm49, 0.0
    %59 = vst.msk [vmem:[#allocation2 + $0x120] sm:$0xff] %vm49, 0.0
    %60 = vst.msk [vmem:[#allocation2 + $0x140] sm:$0xff] %vm49, 0.0
    %61 = vst.msk [vmem:[#allocation2 + $0x160] sm:$0xff] %vm49, 0.0
    %62 = vst.msk [vmem:[#allocation2 + $0x180] sm:$0xff] %vm49, 0.0
    %63 = vst.msk [vmem:[#allocation2 + $0x1a0] sm:$0xff] %vm49, 0.0
    %64 = vst.msk [vmem:[#allocation2 + $0x1c0] sm:$0xff] %vm49, 0.0
    %65 = vst.msk [vmem:[#allocation2 + $0x1e0] sm:$0xff] %vm49, 0.0
    %66 = vst.msk [vmem:[#allocation2 + $0x200] sm:$0xff] %vm49, 0.0
    %67 = vst.msk [vmem:[#allocation2 + $0x220] sm:$0xff] %vm49, 0.0
    %68 = vst.msk [vmem:[#allocation2 + $0x240] sm:$0xff] %vm49, 0.0
    %69 = vst.msk [vmem:[#allocation2 + $0x260] sm:$0xff] %vm49, 0.0
    %70 = vst.msk [vmem:[#allocation2 + $0x280] sm:$0xff] %vm49, 0.0
    %71 = vst.msk [vmem:[#allocation2 + $0x2a0] sm:$0xff] %vm49, 0.0
    %72 = vst.msk [vmem:[#allocation2 + $0x2c0] sm:$0xff] %vm49, 0.0
    %73 = vst.msk [vmem:[#allocation2 + $0x2e0] sm:$0xff] %vm49, 0.0
    %74 = vst.msk [vmem:[#allocation2 + $0x300] sm:$0xff] %vm49, 0.0
    %75 = vst.msk [vmem:[#allocation2 + $0x320] sm:$0xff] %vm49, 0.0
    %76 = vst.msk [vmem:[#allocation2 + $0x340] sm:$0xff] %vm49, 0.0
    %77 = vst.msk [vmem:[#allocation2 + $0x360] sm:$0xff] %vm49, 0.0
    %78 = vst.msk [vmem:[#allocation2 + $0x380] sm:$0xff] %vm49, 0.0
    %79 = vst.msk [vmem:[#allocation2 + $0x3a0] sm:$0xff] %vm49, 0.0
    %80 = vst.msk [vmem:[#allocation2 + $0x3c0] sm:$0xff] %vm49, 0.0
    %81 = vst.msk [vmem:[#allocation2 + $0x3e0] sm:$0xff] %vm49, 0.0
    %82 = vst.msk [vmem:[#allocation2 + $0x400] sm:$0xff] %vm49, 0.0
    %83 = vst.msk [vmem:[#allocation2 + $0x420] sm:$0xff] %vm49, 0.0
    %84 = vst.msk [vmem:[#allocation2 + $0x440] sm:$0xff] %vm49, 0.0
    %85 = vst.msk [vmem:[#allocation2 + $0x460] sm:$0xff] %vm49, 0.0
    %86 = vst.msk [vmem:[#allocation2 + $0x18] sm:$0xff] %vm49, 0.0
    %87 = vst.msk [vmem:[#allocation2 + $0x38] sm:$0xff] %vm49, 0.0
    %88 = vst.msk [vmem:[#allocation2 + $0x58] sm:$0xff] %vm49, 0.0
    %89 = vst.msk [vmem:[#allocation2 + $0x78] sm:$0xff] %vm49, 0.0
    %90 = vst.msk [vmem:[#allocation2 + $0x98] sm:$0xff] %vm49, 0.0
    %91 = vst.msk [vmem:[#allocation2 + $0xb8] sm:$0xff] %vm49, 0.0
    %92 = vst.msk [vmem:[#allocation2 + $0xd8] sm:$0xff] %vm49, 0.0
    %93 = vst.msk [vmem:[#allocation2 + $0xf8] sm:$0xff] %vm49, 0.0
    %94 = vst.msk [vmem:[#allocation2 + $0x118] sm:$0xff] %vm49, 0.0
    %95 = vst.msk [vmem:[#allocation2 + $0x138] sm:$0xff] %vm49, 0.0
    %96 = vst.msk [vmem:[#allocation2 + $0x158] sm:$0xff] %vm49, 0.0
    %97 = vst.msk [vmem:[#allocation2 + $0x178] sm:$0xff] %vm49, 0.0
    %98 = vst.msk [vmem:[#allocation2 + $0x198] sm:$0xff] %vm49, 0.0
    %99 = vst.msk [vmem:[#allocation2 + $0x1b8] sm:$0xff] %vm49, 0.0
    %100 = vst.msk [vmem:[#allocation2 + $0x1d8] sm:$0xff] %vm49, 0.0
    %101 = vst.msk [vmem:[#allocation2 + $0x1f8] sm:$0xff] %vm49, 0.0
    %102 = vst.msk [vmem:[#allocation2 + $0x218] sm:$0xff] %vm49, 0.0
    %103 = vst.msk [vmem:[#allocation2 + $0x238] sm:$0xff] %vm49, 0.0
    %104 = vst.msk [vmem:[#allocation2 + $0x258] sm:$0xff] %vm49, 0.0
    %105 = vst.msk [vmem:[#allocation2 + $0x278] sm:$0xff] %vm49, 0.0
    %106 = vst.msk [vmem:[#allocation2 + $0x298] sm:$0xff] %vm49, 0.0
    %107 = vst.msk [vmem:[#allocation2 + $0x2b8] sm:$0xff] %vm49, 0.0
    %108 = vst.msk [vmem:[#allocation2 + $0x2d8] sm:$0xff] %vm49, 0.0
    %109 = vst.msk [vmem:[#allocation2 + $0x2f8] sm:$0xff] %vm49, 0.0
    %110 = vst.msk [vmem:[#allocation2 + $0x318] sm:$0xff] %vm49, 0.0
    %111 = vst.msk [vmem:[#allocation2 + $0x338] sm:$0xff] %vm49, 0.0
    %112 = vst.msk [vmem:[#allocation2 + $0x358] sm:$0xff] %vm49, 0.0
    %113 = vst.msk [vmem:[#allocation2 + $0x378] sm:$0xff] %vm49, 0.0
    %114 = vst.msk [vmem:[#allocation2 + $0x398] sm:$0xff] %vm49, 0.0
    %115 = vst.msk [vmem:[#allocation2 + $0x3b8] sm:$0xff] %vm49, 0.0
    %116 = vst.msk [vmem:[#allocation2 + $0x3d8] sm:$0xff] %vm49, 0.0
    %117 = vst.msk [vmem:[#allocation2 + $0x3f8] sm:$0xff] %vm49, 0.0
    %118 = vst.msk [vmem:[#allocation2 + $0x418] sm:$0xff] %vm49, 0.0
    %119 = vst.msk [vmem:[#allocation2 + $0x438] sm:$0xff] %vm49, 0.0
    %120 = vst.msk [vmem:[#allocation2 + $0x458] sm:$0xff] %vm49, 0.0
    %121 = vst.msk [vmem:[#allocation2 + $0x478] sm:$0xff] %vm49, 0.0
    %122 = vst.msk [vmem:[#allocation2 + $0x8] sm:$0xff] %vm49, 0.0
    %123 = vst.msk [vmem:[#allocation2 + $0x10] sm:$0xff] %vm49, 0.0
    %124 = vst.msk [vmem:[#allocation2 + $0x248] sm:$0xff] %vm49, 0.0
    %125 = vst.msk [vmem:[#allocation2 + $0x250] sm:$0xff] %vm49, 0.0
    %s126 = scalar_lea.vmem [#allocation2], 544
    %127 = vst.msk [vmem:[%s126 + $0x8] sm:$0xff] %vm49, 0.0
    %128 = vst.msk [vmem:[%s126 + $0x10] sm:$0xff] %vm49, 0.0
    %129 = vst.msk [vmem:[%s126 + $0x248] sm:$0xff] %vm49, 0.0
    %130 = vst.msk [vmem:[%s126 + $0x250] sm:$0xff] %vm49, 0.0
    %v131 = vld [vmem:[%s0] sm:$0xff]
    %v132 = vld [vmem:[%s0 + $0x8] sm:$0xff]
    %v133 = vld [vmem:[%s0 + $0x10] sm:$0xff]
    %v134 = vld [vmem:[%s0 + $0x18] sm:$0xff]
    %v135 = vld [vmem:[%s0 + $0x20] sm:$0xff]
    %v136 = vld [vmem:[%s0 + $0x28] sm:$0xff]
    %v137 = vld [vmem:[%s0 + $0x30] sm:$0xff]
    %v138 = vld [vmem:[%s0 + $0x38] sm:$0xff]
    %v139 = vld [vmem:[%s0 + $0x40] sm:$0xff]
    %v140 = vld [vmem:[%s0 + $0x48] sm:$0xff]
    %v141 = vld [vmem:[%s0 + $0x50] sm:$0xff]
    %v142 = vld [vmem:[%s0 + $0x58] sm:$0xff]
    %v143 = vld [vmem:[%s0 + $0x60] sm:$0xff]
    %v144 = vld [vmem:[%s0 + $0x68] sm:$0xff]
    %v145 = vld [vmem:[%s0 + $0x70] sm:$0xff]
    %v146 = vld [vmem:[%s0 + $0x78] sm:$0xff]
    %v147 = vld [vmem:[%s0 + $0x80] sm:$0xff]
    %v148 = vld [vmem:[%s0 + $0x88] sm:$0xff]
    %v149 = vld [vmem:[%s0 + $0x90] sm:$0xff]
    %v150 = vld [vmem:[%s0 + $0x98] sm:$0xff]
    %v151 = vld [vmem:[%s0 + $0xa0] sm:$0xff]
    %v152 = vld [vmem:[%s0 + $0xa8] sm:$0xff]
    %v153 = vld [vmem:[%s0 + $0xb0] sm:$0xff]
    %v154 = vld [vmem:[%s0 + $0xb8] sm:$0xff]
    %v155 = vld [vmem:[%s0 + $0xc0] sm:$0xff]
    %v156 = vld [vmem:[%s0 + $0xc8] sm:$0xff]
    %v157 = vld [vmem:[%s0 + $0xd0] sm:$0xff]
    %v158 = vld [vmem:[%s0 + $0xd8] sm:$0xff]
    %v159 = vld [vmem:[%s0 + $0xe0] sm:$0xff]
    %v160 = vld [vmem:[%s0 + $0xe8] sm:$0xff]
    %v161 = vld [vmem:[%s0 + $0xf0] sm:$0xff]
    %v162 = vld [vmem:[%s0 + $0xf8] sm:$0xff]
    %v163 = vld [vmem:[%s0 + $0x100] sm:$0xff]
    %v164 = vld [vmem:[%s0 + $0x108] sm:$0xff]
    %v165 = vld [vmem:[%s0 + $0x110] sm:$0xff]
    %v166 = vld [vmem:[%s0 + $0x118] sm:$0xff]
    %v167 = vld [vmem:[%s0 + $0x120] sm:$0xff]
    %v168 = vld [vmem:[%s0 + $0x128] sm:$0xff]
    %v169 = vld [vmem:[%s0 + $0x130] sm:$0xff]
    %v170 = vld [vmem:[%s0 + $0x138] sm:$0xff]
    %v171 = vld [vmem:[%s0 + $0x140] sm:$0xff]
    %v172 = vld [vmem:[%s0 + $0x148] sm:$0xff]
    %v173 = vld [vmem:[%s0 + $0x150] sm:$0xff]
    %v174 = vld [vmem:[%s0 + $0x158] sm:$0xff]
    %v175 = vld [vmem:[%s0 + $0x160] sm:$0xff]
    %v176 = vld [vmem:[%s0 + $0x168] sm:$0xff]
    %v177 = vld [vmem:[%s0 + $0x170] sm:$0xff]
    %v178 = vld [vmem:[%s0 + $0x178] sm:$0xff]
    %v179 = vld [vmem:[%s0 + $0x180] sm:$0xff]
    %v180 = vld [vmem:[%s0 + $0x188] sm:$0xff]
    %v181 = vld [vmem:[%s0 + $0x190] sm:$0xff]
    %v182 = vld [vmem:[%s0 + $0x198] sm:$0xff]
    %v183 = vld [vmem:[%s0 + $0x1a0] sm:$0xff]
    %v184 = vld [vmem:[%s0 + $0x1a8] sm:$0xff]
    %v185 = vld [vmem:[%s0 + $0x1b0] sm:$0xff]
    %v186 = vld [vmem:[%s0 + $0x1b8] sm:$0xff]
    %v187 = vld [vmem:[%s0 + $0x1c0] sm:$0xff]
    %v188 = vld [vmem:[%s0 + $0x1c8] sm:$0xff]
    %v189 = vld [vmem:[%s0 + $0x1d0] sm:$0xff]
    %v190 = vld [vmem:[%s0 + $0x1d8] sm:$0xff]
    %v191 = vld [vmem:[%s0 + $0x1e0] sm:$0xff]
    %v192 = vld [vmem:[%s0 + $0x1e8] sm:$0xff]
    %v193 = vld [vmem:[%s0 + $0x1f0] sm:$0xff]
    %v194 = vld [vmem:[%s0 + $0x1f8] sm:$0xff]
    %s195 = scalar_lea.vmem [#allocation2], 32
    %196 = vst.msk [vmem:[%s195 + $0x8] sm:$0xff] %vm49, %v131
    %197 = vst.msk [vmem:[%s195 + $0x10] sm:$0xff] %vm49, %v132
    %198 = vst.msk [vmem:[%s195 + $0x28] sm:$0xff] %vm49, %v133
    %199 = vst.msk [vmem:[%s195 + $0x30] sm:$0xff] %vm49, %v134
    %200 = vst.msk [vmem:[%s195 + $0x48] sm:$0xff] %vm49, %v135
    %201 = vst.msk [vmem:[%s195 + $0x50] sm:$0xff] %vm49, %v136
    %202 = vst.msk [vmem:[%s195 + $0x68] sm:$0xff] %vm49, %v137
    %203 = vst.msk [vmem:[%s195 + $0x70] sm:$0xff] %vm49, %v138
    %204 = vst.msk [vmem:[%s195 + $0x88] sm:$0xff] %vm49, %v139
    %205 = vst.msk [vmem:[%s195 + $0x90] sm:$0xff] %vm49, %v140
    %206 = vst.msk [vmem:[%s195 + $0xa8] sm:$0xff] %vm49, %v141
    %207 = vst.msk [vmem:[%s195 + $0xb0] sm:$0xff] %vm49, %v142
    %208 = vst.msk [vmem:[%s195 + $0xc8] sm:$0xff] %vm49, %v143
    %209 = vst.msk [vmem:[%s195 + $0xd0] sm:$0xff] %vm49, %v144
    %210 = vst.msk [vmem:[%s195 + $0xe8] sm:$0xff] %vm49, %v145
    %211 = vst.msk [vmem:[%s195 + $0xf0] sm:$0xff] %vm49, %v146
    %212 = vst.msk [vmem:[%s195 + $0x108] sm:$0xff] %vm49, %v147
    %213 = vst.msk [vmem:[%s195 + $0x110] sm:$0xff] %vm49, %v148
    %214 = vst.msk [vmem:[%s195 + $0x128] sm:$0xff] %vm49, %v149
    %215 = vst.msk [vmem:[%s195 + $0x130] sm:$0xff] %vm49, %v150
    %216 = vst.msk [vmem:[%s195 + $0x148] sm:$0xff] %vm49, %v151
    %217 = vst.msk [vmem:[%s195 + $0x150] sm:$0xff] %vm49, %v152
    %218 = vst.msk [vmem:[%s195 + $0x168] sm:$0xff] %vm49, %v153
    %219 = vst.msk [vmem:[%s195 + $0x170] sm:$0xff] %vm49, %v154
    %220 = vst.msk [vmem:[%s195 + $0x188] sm:$0xff] %vm49, %v155
    %221 = vst.msk [vmem:[%s195 + $0x190] sm:$0xff] %vm49, %v156
    %222 = vst.msk [vmem:[%s195 + $0x1a8] sm:$0xff] %vm49, %v157
    %223 = vst.msk [vmem:[%s195 + $0x1b0] sm:$0xff] %vm49, %v158
    %224 = vst.msk [vmem:[%s195 + $0x1c8] sm:$0xff] %vm49, %v159
    %225 = vst.msk [vmem:[%s195 + $0x1d0] sm:$0xff] %vm49, %v160
    %226 = vst.msk [vmem:[%s195 + $0x1e8] sm:$0xff] %vm49, %v161
    %227 = vst.msk [vmem:[%s195 + $0x1f0] sm:$0xff] %vm49, %v162
    %228 = vst.msk [vmem:[%s195 + $0x248] sm:$0xff] %vm49, %v163
    %229 = vst.msk [vmem:[%s195 + $0x250] sm:$0xff] %vm49, %v164
    %230 = vst.msk [vmem:[%s195 + $0x268] sm:$0xff] %vm49, %v165
    %231 = vst.msk [vmem:[%s195 + $0x270] sm:$0xff] %vm49, %v166
    %232 = vst.msk [vmem:[%s195 + $0x288] sm:$0xff] %vm49, %v167
    %233 = vst.msk [vmem:[%s195 + $0x290] sm:$0xff] %vm49, %v168
    %234 = vst.msk [vmem:[%s195 + $0x2a8] sm:$0xff] %vm49, %v169
    %235 = vst.msk [vmem:[%s195 + $0x2b0] sm:$0xff] %vm49, %v170
    %236 = vst.msk [vmem:[%s195 + $0x2c8] sm:$0xff] %vm49, %v171
    %237 = vst.msk [vmem:[%s195 + $0x2d0] sm:$0xff] %vm49, %v172
    %238 = vst.msk [vmem:[%s195 + $0x2e8] sm:$0xff] %vm49, %v173
    %239 = vst.msk [vmem:[%s195 + $0x2f0] sm:$0xff] %vm49, %v174
    %240 = vst.msk [vmem:[%s195 + $0x308] sm:$0xff] %vm49, %v175
    %241 = vst.msk [vmem:[%s195 + $0x310] sm:$0xff] %vm49, %v176
    %242 = vst.msk [vmem:[%s195 + $0x328] sm:$0xff] %vm49, %v177
    %243 = vst.msk [vmem:[%s195 + $0x330] sm:$0xff] %vm49, %v178
    %244 = vst.msk [vmem:[%s195 + $0x348] sm:$0xff] %vm49, %v179
    %245 = vst.msk [vmem:[%s195 + $0x350] sm:$0xff] %vm49, %v180
    %246 = vst.msk [vmem:[%s195 + $0x368] sm:$0xff] %vm49, %v181
    %247 = vst.msk [vmem:[%s195 + $0x370] sm:$0xff] %vm49, %v182
    %248 = vst.msk [vmem:[%s195 + $0x388] sm:$0xff] %vm49, %v183
    %249 = vst.msk [vmem:[%s195 + $0x390] sm:$0xff] %vm49, %v184
    %250 = vst.msk [vmem:[%s195 + $0x3a8] sm:$0xff] %vm49, %v185
    %251 = vst.msk [vmem:[%s195 + $0x3b0] sm:$0xff] %vm49, %v186
    %252 = vst.msk [vmem:[%s195 + $0x3c8] sm:$0xff] %vm49, %v187
    %253 = vst.msk [vmem:[%s195 + $0x3d0] sm:$0xff] %vm49, %v188
    %254 = vst.msk [vmem:[%s195 + $0x3e8] sm:$0xff] %vm49, %v189
    %255 = vst.msk [vmem:[%s195 + $0x3f0] sm:$0xff] %vm49, %v190
    %256 = vst.msk [vmem:[%s195 + $0x408] sm:$0xff] %vm49, %v191
    %257 = vst.msk [vmem:[%s195 + $0x410] sm:$0xff] %vm49, %v192
    %258 = vst.msk [vmem:[%s195 + $0x428] sm:$0xff] %vm49, %v193
    %259 = vst.msk [vmem:[%s195 + $0x430] sm:$0xff] %vm49, %v194
    %v260 = vld [vmem:[#allocation2 + $0x7] sm:$0xff]
    %v261 = vld [vmem:[#allocation2 + $0xf] sm:$0xff]
    %v262 = vld [vmem:[#allocation2 + $0x27] sm:$0xff]
    %v263 = vld [vmem:[#allocation2 + $0x2f] sm:$0xff]
    %v264 = vld [vmem:[#allocation2 + $0x47] sm:$0xff]
    %v265 = vld [vmem:[#allocation2 + $0x4f] sm:$0xff]
    %v266 = vld [vmem:[#allocation2 + $0x67] sm:$0xff]
    %v267 = vld [vmem:[#allocation2 + $0x6f] sm:$0xff]
    %v268 = vld [vmem:[#allocation2 + $0x87] sm:$0xff]
    %v269 = vld [vmem:[#allocation2 + $0x8f] sm:$0xff]
    %v270 = vld [vmem:[#allocation2 + $0xa7] sm:$0xff]
    %v271 = vld [vmem:[#allocation2 + $0xaf] sm:$0xff]
    %v272 = vld [vmem:[#allocation2 + $0xc7] sm:$0xff]
    %v273 = vld [vmem:[#allocation2 + $0xcf] sm:$0xff]
    %v274 = vld [vmem:[#allocation2 + $0xe7] sm:$0xff]
    %v275 = vld [vmem:[#allocation2 + $0xef] sm:$0xff]
    %v276 = vld [vmem:[#allocation2 + $0x107] sm:$0xff]
    %v277 = vld [vmem:[#allocation2 + $0x10f] sm:$0xff]
    %v278 = vld [vmem:[#allocation2 + $0x127] sm:$0xff]
    %v279 = vld [vmem:[#allocation2 + $0x12f] sm:$0xff]
    %v280 = vld [vmem:[#allocation2 + $0x147] sm:$0xff]
    %v281 = vld [vmem:[#allocation2 + $0x14f] sm:$0xff]
    %v282 = vld [vmem:[#allocation2 + $0x167] sm:$0xff]
    %v283 = vld [vmem:[#allocation2 + $0x16f] sm:$0xff]
    %v284 = vld [vmem:[#allocation2 + $0x187] sm:$0xff]
    %v285 = vld [vmem:[#allocation2 + $0x18f] sm:$0xff]
    %v286 = vld [vmem:[#allocation2 + $0x1a7] sm:$0xff]
    %v287 = vld [vmem:[#allocation2 + $0x1af] sm:$0xff]
    %v288 = vld [vmem:[#allocation2 + $0x1c7] sm:$0xff]
    %v289 = vld [vmem:[#allocation2 + $0x1cf] sm:$0xff]
    %v290 = vld [vmem:[#allocation2 + $0x1e7] sm:$0xff]
    %v291 = vld [vmem:[#allocation2 + $0x1ef] sm:$0xff]
    %v292 = vld [vmem:[#allocation2 + $0x247] sm:$0xff]
    %v293 = vld [vmem:[#allocation2 + $0x24f] sm:$0xff]
    %v294 = vld [vmem:[#allocation2 + $0x267] sm:$0xff]
    %v295 = vld [vmem:[#allocation2 + $0x26f] sm:$0xff]
    %v296 = vld [vmem:[#allocation2 + $0x287] sm:$0xff]
    %v297 = vld [vmem:[#allocation2 + $0x28f] sm:$0xff]
    %v298 = vld [vmem:[#allocation2 + $0x2a7] sm:$0xff]
    %v299 = vld [vmem:[#allocation2 + $0x2af] sm:$0xff]
    %v300 = vld [vmem:[#allocation2 + $0x2c7] sm:$0xff]
    %v301 = vld [vmem:[#allocation2 + $0x2cf] sm:$0xff]
    %v302 = vld [vmem:[#allocation2 + $0x2e7] sm:$0xff]
    %v303 = vld [vmem:[#allocation2 + $0x2ef] sm:$0xff]
    %v304 = vld [vmem:[#allocation2 + $0x307] sm:$0xff]
    %v305 = vld [vmem:[#allocation2 + $0x30f] sm:$0xff]
    %v306 = vld [vmem:[#allocation2 + $0x327] sm:$0xff]
    %v307 = vld [vmem:[#allocation2 + $0x32f] sm:$0xff]
    %v308 = vld [vmem:[#allocation2 + $0x347] sm:$0xff]
    %v309 = vld [vmem:[#allocation2 + $0x34f] sm:$0xff]
    %v310 = vld [vmem:[#allocation2 + $0x367] sm:$0xff]
    %v311 = vld [vmem:[#allocation2 + $0x36f] sm:$0xff]
    %v312 = vld [vmem:[#allocation2 + $0x387] sm:$0xff]
    %v313 = vld [vmem:[#allocation2 + $0x38f] sm:$0xff]
    %v314 = vld [vmem:[#allocation2 + $0x3a7] sm:$0xff]
    %v315 = vld [vmem:[#allocation2 + $0x3af] sm:$0xff]
    %v316 = vld [vmem:[#allocation2 + $0x3c7] sm:$0xff]
    %v317 = vld [vmem:[#allocation2 + $0x3cf] sm:$0xff]
    %v318 = vld [vmem:[#allocation2 + $0x3e7] sm:$0xff]
    %v319 = vld [vmem:[#allocation2 + $0x3ef] sm:$0xff]
    %v320 = vld [vmem:[#allocation2 + $0x407] sm:$0xff]
    %v321 = vld [vmem:[#allocation2 + $0x40f] sm:$0xff]
    %v322 = vld [vmem:[#allocation2 + $0x427] sm:$0xff]
    %v323 = vld [vmem:[#allocation2 + $0x42f] sm:$0xff]
    %v324 = vpack.c.bf16 %v261, %v260
    %v325 = vpack.c.bf16 %v263, %v262
    %v326 = vpack.c.bf16 %v265, %v264
    %v327 = vpack.c.bf16 %v267, %v266
    %v328 = vpack.c.bf16 %v269, %v268
    %v329 = vpack.c.bf16 %v271, %v270
    %v330 = vpack.c.bf16 %v273, %v272
    %v331 = vpack.c.bf16 %v275, %v274
    %v332 = vpack.c.bf16 %v277, %v276
    %v333 = vpack.c.bf16 %v279, %v278
    %v334 = vpack.c.bf16 %v281, %v280
    %v335 = vpack.c.bf16 %v283, %v282
    %v336 = vpack.c.bf16 %v285, %v284
    %v337 = vpack.c.bf16 %v287, %v286
    %v338 = vpack.c.bf16 %v289, %v288
    %v339 = vpack.c.bf16 %v291, %v290
    %v340 = vpack.c.bf16 %v293, %v292
    %v341 = vpack.c.bf16 %v295, %v294
    %v342 = vpack.c.bf16 %v297, %v296
    %v343 = vpack.c.bf16 %v299, %v298
    %v344 = vpack.c.bf16 %v301, %v300
    %v345 = vpack.c.bf16 %v303, %v302
    %v346 = vpack.c.bf16 %v305, %v304
    %v347 = vpack.c.bf16 %v307, %v306
    %v348 = vpack.c.bf16 %v309, %v308
    %v349 = vpack.c.bf16 %v311, %v310
    %v350 = vpack.c.bf16 %v313, %v312
    %v351 = vpack.c.bf16 %v315, %v314
    %v352 = vpack.c.bf16 %v317, %v316
    %v353 = vpack.c.bf16 %v319, %v318
    %v354 = vpack.c.bf16 %v321, %v320
    %v355 = vpack.c.bf16 %v323, %v322
    %356 = vst.msk [vmem:[#allocation5] sm:$0xff] %vm49, %v324
    %357 = vst.msk [vmem:[#allocation5 + $0x10] sm:$0xff] %vm49, %v325
    %358 = vst.msk [vmem:[#allocation5 + $0x20] sm:$0xff] %vm49, %v326
    %359 = vst.msk [vmem:[#allocation5 + $0x30] sm:$0xff] %vm49, %v327
    %360 = vst.msk [vmem:[#allocation5 + $0x40] sm:$0xff] %vm49, %v328
    %361 = vst.msk [vmem:[#allocation5 + $0x50] sm:$0xff] %vm49, %v329
    %362 = vst.msk [vmem:[#allocation5 + $0x60] sm:$0xff] %vm49, %v330
    %363 = vst.msk [vmem:[#allocation5 + $0x70] sm:$0xff] %vm49, %v331
    %364 = vst.msk [vmem:[#allocation5 + $0x80] sm:$0xff] %vm49, %v332
    %365 = vst.msk [vmem:[#allocation5 + $0x90] sm:$0xff] %vm49, %v333
    %366 = vst.msk [vmem:[#allocation5 + $0xa0] sm:$0xff] %vm49, %v334
    %367 = vst.msk [vmem:[#allocation5 + $0xb0] sm:$0xff] %vm49, %v335
    %368 = vst.msk [vmem:[#allocation5 + $0xc0] sm:$0xff] %vm49, %v336
    %369 = vst.msk [vmem:[#allocation5 + $0xd0] sm:$0xff] %vm49, %v337
    %370 = vst.msk [vmem:[#allocation5 + $0xe0] sm:$0xff] %vm49, %v338
    %371 = vst.msk [vmem:[#allocation5 + $0xf0] sm:$0xff] %vm49, %v339
    %372 = vst.msk [vmem:[#allocation5 + $0x100] sm:$0xff] %vm49, %v340
    %373 = vst.msk [vmem:[#allocation5 + $0x110] sm:$0xff] %vm49, %v341
    %374 = vst.msk [vmem:[#allocation5 + $0x120] sm:$0xff] %vm49, %v342
    %375 = vst.msk [vmem:[#allocation5 + $0x130] sm:$0xff] %vm49, %v343
    %376 = vst.msk [vmem:[#allocation5 + $0x140] sm:$0xff] %vm49, %v344
    %377 = vst.msk [vmem:[#allocation5 + $0x150] sm:$0xff] %vm49, %v345
    %378 = vst.msk [vmem:[#allocation5 + $0x160] sm:$0xff] %vm49, %v346
    %379 = vst.msk [vmem:[#allocation5 + $0x170] sm:$0xff] %vm49, %v347
    %380 = vst.msk [vmem:[#allocation5 + $0x180] sm:$0xff] %vm49, %v348
    %381 = vst.msk [vmem:[#allocation5 + $0x190] sm:$0xff] %vm49, %v349
    %382 = vst.msk [vmem:[#allocation5 + $0x1a0] sm:$0xff] %vm49, %v350
    %383 = vst.msk [vmem:[#allocation5 + $0x1b0] sm:$0xff] %vm49, %v351
    %384 = vst.msk [vmem:[#allocation5 + $0x1c0] sm:$0xff] %vm49, %v352
    %385 = vst.msk [vmem:[#allocation5 + $0x1d0] sm:$0xff] %vm49, %v353
    %386 = vst.msk [vmem:[#allocation5 + $0x1e0] sm:$0xff] %vm49, %v354
    %387 = vst.msk [vmem:[#allocation5 + $0x1f0] sm:$0xff] %vm49, %v355
    %v388 = vld [vmem:[#allocation2 + $0x8] sm:$0xff]
    %v389 = vld [vmem:[#allocation2 + $0x10] sm:$0xff]
    %v390 = vld [vmem:[#allocation2 + $0x28] sm:$0xff]
    %v391 = vld [vmem:[#allocation2 + $0x30] sm:$0xff]
    %v392 = vld [vmem:[#allocation2 + $0x48] sm:$0xff]
    %v393 = vld [vmem:[#allocation2 + $0x50] sm:$0xff]
    %v394 = vld [vmem:[#allocation2 + $0x68] sm:$0xff]
    %v395 = vld [vmem:[#allocation2 + $0x70] sm:$0xff]
    %v396 = vld [vmem:[#allocation2 + $0x88] sm:$0xff]
    %v397 = vld [vmem:[#allocation2 + $0x90] sm:$0xff]
    %v398 = vld [vmem:[#allocation2 + $0xa8] sm:$0xff]
    %v399 = vld [vmem:[#allocation2 + $0xb0] sm:$0xff]
    %v400 = vld [vmem:[#allocation2 + $0xc8] sm:$0xff]
    %v401 = vld [vmem:[#allocation2 + $0xd0] sm:$0xff]
    %v402 = vld [vmem:[#allocation2 + $0xe8] sm:$0xff]
    %v403 = vld [vmem:[#allocation2 + $0xf0] sm:$0xff]
    %v404 = vld [vmem:[#allocation2 + $0x108] sm:$0xff]
    %v405 = vld [vmem:[#allocation2 + $0x110] sm:$0xff]
    %v406 = vld [vmem:[#allocation2 + $0x128] sm:$0xff]
    %v407 = vld [vmem:[#allocation2 + $0x130] sm:$0xff]
    %v408 = vld [vmem:[#allocation2 + $0x148] sm:$0xff]
    %v409 = vld [vmem:[#allocation2 + $0x150] sm:$0xff]
    %v410 = vld [vmem:[#allocation2 + $0x168] sm:$0xff]
    %v411 = vld [vmem:[#allocation2 + $0x170] sm:$0xff]
    %v412 = vld [vmem:[#allocation2 + $0x188] sm:$0xff]
    %v413 = vld [vmem:[#allocation2 + $0x190] sm:$0xff]
    %v414 = vld [vmem:[#allocation2 + $0x1a8] sm:$0xff]
    %v415 = vld [vmem:[#allocation2 + $0x1b0] sm:$0xff]
    %v416 = vld [vmem:[#allocation2 + $0x1c8] sm:$0xff]
    %v417 = vld [vmem:[#allocation2 + $0x1d0] sm:$0xff]
    %v418 = vld [vmem:[#allocation2 + $0x1e8] sm:$0xff]
    %v419 = vld [vmem:[#allocation2 + $0x1f0] sm:$0xff]
    %v420 = vld [vmem:[#allocation2 + $0x248] sm:$0xff]
    %v421 = vld [vmem:[#allocation2 + $0x250] sm:$0xff]
    %v422 = vld [vmem:[#allocation2 + $0x268] sm:$0xff]
    %v423 = vld [vmem:[#allocation2 + $0x270] sm:$0xff]
    %v424 = vld [vmem:[#allocation2 + $0x288] sm:$0xff]
    %v425 = vld [vmem:[#allocation2 + $0x290] sm:$0xff]
    %v426 = vld [vmem:[#allocation2 + $0x2a8] sm:$0xff]
    %v427 = vld [vmem:[#allocation2 + $0x2b0] sm:$0xff]
    %v428 = vld [vmem:[#allocation2 + $0x2c8] sm:$0xff]
    %v429 = vld [vmem:[#allocation2 + $0x2d0] sm:$0xff]
    %v430 = vld [vmem:[#allocation2 + $0x2e8] sm:$0xff]
    %v431 = vld [vmem:[#allocation2 + $0x2f0] sm:$0xff]
    %v432 = vld [vmem:[#allocation2 + $0x308] sm:$0xff]
    %v433 = vld [vmem:[#allocation2 + $0x310] sm:$0xff]
    %v434 = vld [vmem:[#allocation2 + $0x328] sm:$0xff]
    %v435 = vld [vmem:[#allocation2 + $0x330] sm:$0xff]
    %v436 = vld [vmem:[#allocation2 + $0x348] sm:$0xff]
    %v437 = vld [vmem:[#allocation2 + $0x350] sm:$0xff]
    %v438 = vld [vmem:[#allocation2 + $0x368] sm:$0xff]
    %v439 = vld [vmem:[#allocation2 + $0x370] sm:$0xff]
    %v440 = vld [vmem:[#allocation2 + $0x388] sm:$0xff]
    %v441 = vld [vmem:[#allocation2 + $0x390] sm:$0xff]
    %v442 = vld [vmem:[#allocation2 + $0x3a8] sm:$0xff]
    %v443 = vld [vmem:[#allocation2 + $0x3b0] sm:$0xff]
    %v444 = vld [vmem:[#allocation2 + $0x3c8] sm:$0xff]
    %v445 = vld [vmem:[#allocation2 + $0x3d0] sm:$0xff]
    %v446 = vld [vmem:[#allocation2 + $0x3e8] sm:$0xff]
    %v447 = vld [vmem:[#allocation2 + $0x3f0] sm:$0xff]
    %v448 = vld [vmem:[#allocation2 + $0x408] sm:$0xff]
    %v449 = vld [vmem:[#allocation2 + $0x410] sm:$0xff]
    %v450 = vld [vmem:[#allocation2 + $0x428] sm:$0xff]
    %v451 = vld [vmem:[#allocation2 + $0x430] sm:$0xff]
    %v452 = vpack.c.bf16 %v389, %v388
    %v453 = vpack.c.bf16 %v391, %v390
    %v454 = vpack.c.bf16 %v393, %v392
    %v455 = vpack.c.bf16 %v395, %v394
    %v456 = vpack.c.bf16 %v397, %v396
    %v457 = vpack.c.bf16 %v399, %v398
    %v458 = vpack.c.bf16 %v401, %v400
    %v459 = vpack.c.bf16 %v403, %v402
    %v460 = vpack.c.bf16 %v405, %v404
    %v461 = vpack.c.bf16 %v407, %v406
    %v462 = vpack.c.bf16 %v409, %v408
    %v463 = vpack.c.bf16 %v411, %v410
    %v464 = vpack.c.bf16 %v413, %v412
    %v465 = vpack.c.bf16 %v415, %v414
    %v466 = vpack.c.bf16 %v417, %v416
    %v467 = vpack.c.bf16 %v419, %v418
    %v468 = vpack.c.bf16 %v421, %v420
    %v469 = vpack.c.bf16 %v423, %v422
    %v470 = vpack.c.bf16 %v425, %v424
    %v471 = vpack.c.bf16 %v427, %v426
    %v472 = vpack.c.bf16 %v429, %v428
    %v473 = vpack.c.bf16 %v431, %v430
    %v474 = vpack.c.bf16 %v433, %v432
    %v475 = vpack.c.bf16 %v435, %v434
    %v476 = vpack.c.bf16 %v437, %v436
    %v477 = vpack.c.bf16 %v439, %v438
    %v478 = vpack.c.bf16 %v441, %v440
    %v479 = vpack.c.bf16 %v443, %v442
    %v480 = vpack.c.bf16 %v445, %v444
    %v481 = vpack.c.bf16 %v447, %v446
    %v482 = vpack.c.bf16 %v449, %v448
    %v483 = vpack.c.bf16 %v451, %v450
    %516 = vrot.lane.b32.xlu0 %v452, 4
    %v517 = vpop.permute.xlu0 %516
    %518 = vrot.lane.b32.xlu0 %v453, 4
    %v519 = vpop.permute.xlu0 %518
    %520 = vrot.lane.b32.xlu0 %v454, 4
    %v521 = vpop.permute.xlu0 %520
    %522 = vrot.lane.b32.xlu0 %v455, 4
    %v523 = vpop.permute.xlu0 %522
    %524 = vrot.lane.b32.xlu0 %v456, 4
    %v525 = vpop.permute.xlu0 %524
    %526 = vrot.lane.b32.xlu0 %v457, 4
    %v527 = vpop.permute.xlu0 %526
    %528 = vrot.lane.b32.xlu0 %v458, 4
    %v529 = vpop.permute.xlu0 %528
    %530 = vrot.lane.b32.xlu0 %v459, 4
    %v531 = vpop.permute.xlu0 %530
    %532 = vrot.lane.b32.xlu0 %v460, 4
    %v533 = vpop.permute.xlu0 %532
    %534 = vrot.lane.b32.xlu0 %v461, 4
    %v535 = vpop.permute.xlu0 %534
    %536 = vrot.lane.b32.xlu0 %v462, 4
    %v537 = vpop.permute.xlu0 %536
    %538 = vrot.lane.b32.xlu0 %v463, 4
    %v539 = vpop.permute.xlu0 %538
    %540 = vrot.lane.b32.xlu0 %v464, 4
    %v541 = vpop.permute.xlu0 %540
    %542 = vrot.lane.b32.xlu0 %v465, 4
    %v543 = vpop.permute.xlu0 %542
    %544 = vrot.lane.b32.xlu0 %v466, 4
    %v545 = vpop.permute.xlu0 %544
    %546 = vrot.lane.b32.xlu0 %v467, 4
    %v547 = vpop.permute.xlu0 %546
    %548 = vrot.lane.b32.xlu0 %v468, 4
    %v549 = vpop.permute.xlu0 %548
    %550 = vrot.lane.b32.xlu0 %v469, 4
    %v551 = vpop.permute.xlu0 %550
    %552 = vrot.lane.b32.xlu0 %v470, 4
    %v553 = vpop.permute.xlu0 %552
    %554 = vrot.lane.b32.xlu0 %v471, 4
    %v555 = vpop.permute.xlu0 %554
    %556 = vrot.lane.b32.xlu0 %v472, 4
    %v557 = vpop.permute.xlu0 %556
    %558 = vrot.lane.b32.xlu0 %v473, 4
    %v559 = vpop.permute.xlu0 %558
    %560 = vrot.lane.b32.xlu0 %v474, 4
    %v561 = vpop.permute.xlu0 %560
    %562 = vrot.lane.b32.xlu0 %v475, 4
    %v563 = vpop.permute.xlu0 %562
    %564 = vrot.lane.b32.xlu0 %v476, 4
    %v565 = vpop.permute.xlu0 %564
    %566 = vrot.lane.b32.xlu0 %v477, 4
    %v567 = vpop.permute.xlu0 %566
    %568 = vrot.lane.b32.xlu0 %v478, 4
    %v569 = vpop.permute.xlu0 %568
    %570 = vrot.lane.b32.xlu0 %v479, 4
    %v571 = vpop.permute.xlu0 %570
    %572 = vrot.lane.b32.xlu0 %v480, 4
    %v573 = vpop.permute.xlu0 %572
    %574 = vrot.lane.b32.xlu0 %v481, 4
    %v575 = vpop.permute.xlu0 %574
    %576 = vrot.lane.b32.xlu0 %v482, 4
    %v577 = vpop.permute.xlu0 %576
    %578 = vrot.lane.b32.xlu0 %v483, 4
    %v579 = vpop.permute.xlu0 %578
    %vm612 = vcmask 64544
    %613 = vst.msk [vmem:[#allocation5] sm:$0xff] %vm612, %v517
    %614 = vst.msk [vmem:[#allocation5 + $0x10] sm:$0xff] %vm612, %v519
    %615 = vst.msk [vmem:[#allocation5 + $0x20] sm:$0xff] %vm612, %v521
    %616 = vst.msk [vmem:[#allocation5 + $0x30] sm:$0xff] %vm612, %v523
    %617 = vst.msk [vmem:[#allocation5 + $0x40] sm:$0xff] %vm612, %v525
    %618 = vst.msk [vmem:[#allocation5 + $0x50] sm:$0xff] %vm612, %v527
    %619 = vst.msk [vmem:[#allocation5 + $0x60] sm:$0xff] %vm612, %v529
    %620 = vst.msk [vmem:[#allocation5 + $0x70] sm:$0xff] %vm612, %v531
    %621 = vst.msk [vmem:[#allocation5 + $0x80] sm:$0xff] %vm612, %v533
    %622 = vst.msk [vmem:[#allocation5 + $0x90] sm:$0xff] %vm612, %v535
    %623 = vst.msk [vmem:[#allocation5 + $0xa0] sm:$0xff] %vm612, %v537
    %624 = vst.msk [vmem:[#allocation5 + $0xb0] sm:$0xff] %vm612, %v539
    %625 = vst.msk [vmem:[#allocation5 + $0xc0] sm:$0xff] %vm612, %v541
    %626 = vst.msk [vmem:[#allocation5 + $0xd0] sm:$0xff] %vm612, %v543
    %627 = vst.msk [vmem:[#allocation5 + $0xe0] sm:$0xff] %vm612, %v545
    %628 = vst.msk [vmem:[#allocation5 + $0xf0] sm:$0xff] %vm612, %v547
    %629 = vst.msk [vmem:[#allocation5 + $0x100] sm:$0xff] %vm612, %v549
    %630 = vst.msk [vmem:[#allocation5 + $0x110] sm:$0xff] %vm612, %v551
    %631 = vst.msk [vmem:[#allocation5 + $0x120] sm:$0xff] %vm612, %v553
    %632 = vst.msk [vmem:[#allocation5 + $0x130] sm:$0xff] %vm612, %v555
    %633 = vst.msk [vmem:[#allocation5 + $0x140] sm:$0xff] %vm612, %v557
    %634 = vst.msk [vmem:[#allocation5 + $0x150] sm:$0xff] %vm612, %v559
    %635 = vst.msk [vmem:[#allocation5 + $0x160] sm:$0xff] %vm612, %v561
    %636 = vst.msk [vmem:[#allocation5 + $0x170] sm:$0xff] %vm612, %v563
    %637 = vst.msk [vmem:[#allocation5 + $0x180] sm:$0xff] %vm612, %v565
    %638 = vst.msk [vmem:[#allocation5 + $0x190] sm:$0xff] %vm612, %v567
    %639 = vst.msk [vmem:[#allocation5 + $0x1a0] sm:$0xff] %vm612, %v569
    %640 = vst.msk [vmem:[#allocation5 + $0x1b0] sm:$0xff] %vm612, %v571
    %641 = vst.msk [vmem:[#allocation5 + $0x1c0] sm:$0xff] %vm612, %v573
    %642 = vst.msk [vmem:[#allocation5 + $0x1d0] sm:$0xff] %vm612, %v575
    %643 = vst.msk [vmem:[#allocation5 + $0x1e0] sm:$0xff] %vm612, %v577
    %644 = vst.msk [vmem:[#allocation5 + $0x1f0] sm:$0xff] %vm612, %v579
    %v645 = vld [vmem:[#allocation2 + $0x9] sm:$0xff]
    %v646 = vld [vmem:[#allocation2 + $0x11] sm:$0xff]
    %v647 = vld [vmem:[#allocation2 + $0x29] sm:$0xff]
    %v648 = vld [vmem:[#allocation2 + $0x31] sm:$0xff]
    %v649 = vld [vmem:[#allocation2 + $0x49] sm:$0xff]
    %v650 = vld [vmem:[#allocation2 + $0x51] sm:$0xff]
    %v651 = vld [vmem:[#allocation2 + $0x69] sm:$0xff]
    %v652 = vld [vmem:[#allocation2 + $0x71] sm:$0xff]
    %v653 = vld [vmem:[#allocation2 + $0x89] sm:$0xff]
    %v654 = vld [vmem:[#allocation2 + $0x91] sm:$0xff]
    %v655 = vld [vmem:[#allocation2 + $0xa9] sm:$0xff]
    %v656 = vld [vmem:[#allocation2 + $0xb1] sm:$0xff]
    %v657 = vld [vmem:[#allocation2 + $0xc9] sm:$0xff]
    %v658 = vld [vmem:[#allocation2 + $0xd1] sm:$0xff]
    %v659 = vld [vmem:[#allocation2 + $0xe9] sm:$0xff]
    %v660 = vld [vmem:[#allocation2 + $0xf1] sm:$0xff]
    %v661 = vld [vmem:[#allocation2 + $0x109] sm:$0xff]
    %v662 = vld [vmem:[#allocation2 + $0x111] sm:$0xff]
    %v663 = vld [vmem:[#allocation2 + $0x129] sm:$0xff]
    %v664 = vld [vmem:[#allocation2 + $0x131] sm:$0xff]
    %v665 = vld [vmem:[#allocation2 + $0x149] sm:$0xff]
    %v666 = vld [vmem:[#allocation2 + $0x151] sm:$0xff]
    %v667 = vld [vmem:[#allocation2 + $0x169] sm:$0xff]
    %v668 = vld [vmem:[#allocation2 + $0x171] sm:$0xff]
    %v669 = vld [vmem:[#allocation2 + $0x189] sm:$0xff]
    %v670 = vld [vmem:[#allocation2 + $0x191] sm:$0xff]
    %v671 = vld [vmem:[#allocation2 + $0x1a9] sm:$0xff]
    %v672 = vld [vmem:[#allocation2 + $0x1b1] sm:$0xff]
    %v673 = vld [vmem:[#allocation2 + $0x1c9] sm:$0xff]
    %v674 = vld [vmem:[#allocation2 + $0x1d1] sm:$0xff]
    %v675 = vld [vmem:[#allocation2 + $0x1e9] sm:$0xff]
    %v676 = vld [vmem:[#allocation2 + $0x1f1] sm:$0xff]
    %v677 = vld [vmem:[#allocation2 + $0x249] sm:$0xff]
    %v678 = vld [vmem:[#allocation2 + $0x251] sm:$0xff]
    %v679 = vld [vmem:[#allocation2 + $0x269] sm:$0xff]
    %v680 = vld [vmem:[#allocation2 + $0x271] sm:$0xff]
    %v681 = vld [vmem:[#allocation2 + $0x289] sm:$0xff]
    %v682 = vld [vmem:[#allocation2 + $0x291] sm:$0xff]
    %v683 = vld [vmem:[#allocation2 + $0x2a9] sm:$0xff]
    %v684 = vld [vmem:[#allocation2 + $0x2b1] sm:$0xff]
    %v685 = vld [vmem:[#allocation2 + $0x2c9] sm:$0xff]
    %v686 = vld [vmem:[#allocation2 + $0x2d1] sm:$0xff]
    %v687 = vld [vmem:[#allocation2 + $0x2e9] sm:$0xff]
    %v688 = vld [vmem:[#allocation2 + $0x2f1] sm:$0xff]
    %v689 = vld [vmem:[#allocation2 + $0x309] sm:$0xff]
    %v690 = vld [vmem:[#allocation2 + $0x311] sm:$0xff]
    %v691 = vld [vmem:[#allocation2 + $0x329] sm:$0xff]
    %v692 = vld [vmem:[#allocation2 + $0x331] sm:$0xff]
    %v693 = vld [vmem:[#allocation2 + $0x349] sm:$0xff]
    %v694 = vld [vmem:[#allocation2 + $0x351] sm:$0xff]
    %v695 = vld [vmem:[#allocation2 + $0x369] sm:$0xff]
    %v696 = vld [vmem:[#allocation2 + $0x371] sm:$0xff]
    %v697 = vld [vmem:[#allocation2 + $0x389] sm:$0xff]
    %v698 = vld [vmem:[#allocation2 + $0x391] sm:$0xff]
    %v699 = vld [vmem:[#allocation2 + $0x3a9] sm:$0xff]
    %v700 = vld [vmem:[#allocation2 + $0x3b1] sm:$0xff]
    %v701 = vld [vmem:[#allocation2 + $0x3c9] sm:$0xff]
    %v702 = vld [vmem:[#allocation2 + $0x3d1] sm:$0xff]
    %v703 = vld [vmem:[#allocation2 + $0x3e9] sm:$0xff]
    %v704 = vld [vmem:[#allocation2 + $0x3f1] sm:$0xff]
    %v705 = vld [vmem:[#allocation2 + $0x409] sm:$0xff]
    %v706 = vld [vmem:[#allocation2 + $0x411] sm:$0xff]
    %v707 = vld [vmem:[#allocation2 + $0x429] sm:$0xff]
    %v708 = vld [vmem:[#allocation2 + $0x431] sm:$0xff]
    %v709 = vpack.c.bf16 %v646, %v645
    %v710 = vpack.c.bf16 %v648, %v647
    %v711 = vpack.c.bf16 %v650, %v649
    %v712 = vpack.c.bf16 %v652, %v651
    %v713 = vpack.c.bf16 %v654, %v653
    %v714 = vpack.c.bf16 %v656, %v655
    %v715 = vpack.c.bf16 %v658, %v657
    %v716 = vpack.c.bf16 %v660, %v659
    %v717 = vpack.c.bf16 %v662, %v661
    %v718 = vpack.c.bf16 %v664, %v663
    %v719 = vpack.c.bf16 %v666, %v665
    %v720 = vpack.c.bf16 %v668, %v667
    %v721 = vpack.c.bf16 %v670, %v669
    %v722 = vpack.c.bf16 %v672, %v671
    %v723 = vpack.c.bf16 %v674, %v673
    %v724 = vpack.c.bf16 %v676, %v675
    %v725 = vpack.c.bf16 %v678, %v677
    %v726 = vpack.c.bf16 %v680, %v679
    %v727 = vpack.c.bf16 %v682, %v681
    %v728 = vpack.c.bf16 %v684, %v683
    %v729 = vpack.c.bf16 %v686, %v685
    %v730 = vpack.c.bf16 %v688, %v687
    %v731 = vpack.c.bf16 %v690, %v689
    %v732 = vpack.c.bf16 %v692, %v691
    %v733 = vpack.c.bf16 %v694, %v693
    %v734 = vpack.c.bf16 %v696, %v695
    %v735 = vpack.c.bf16 %v698, %v697
    %v736 = vpack.c.bf16 %v700, %v699
    %v737 = vpack.c.bf16 %v702, %v701
    %v738 = vpack.c.bf16 %v704, %v703
    %v739 = vpack.c.bf16 %v706, %v705
    %v740 = vpack.c.bf16 %v708, %v707
    %773 = vrot.lane.b32.xlu0 %v709, 8
    %v774 = vpop.permute.xlu0 %773
    %775 = vrot.lane.b32.xlu0 %v710, 8
    %v776 = vpop.permute.xlu0 %775
    %777 = vrot.lane.b32.xlu0 %v711, 8
    %v778 = vpop.permute.xlu0 %777
    %779 = vrot.lane.b32.xlu0 %v712, 8
    %v780 = vpop.permute.xlu0 %779
    %781 = vrot.lane.b32.xlu0 %v713, 8
    %v782 = vpop.permute.xlu0 %781
    %783 = vrot.lane.b32.xlu0 %v714, 8
    %v784 = vpop.permute.xlu0 %783
    %785 = vrot.lane.b32.xlu0 %v715, 8
    %v786 = vpop.permute.xlu0 %785
    %787 = vrot.lane.b32.xlu0 %v716, 8
    %v788 = vpop.permute.xlu0 %787
    %789 = vrot.lane.b32.xlu0 %v717, 8
    %v790 = vpop.permute.xlu0 %789
    %791 = vrot.lane.b32.xlu0 %v718, 8
    %v792 = vpop.permute.xlu0 %791
    %793 = vrot.lane.b32.xlu0 %v719, 8
    %v794 = vpop.permute.xlu0 %793
    %795 = vrot.lane.b32.xlu0 %v720, 8
    %v796 = vpop.permute.xlu0 %795
    %797 = vrot.lane.b32.xlu0 %v721, 8
    %v798 = vpop.permute.xlu0 %797
    %799 = vrot.lane.b32.xlu0 %v722, 8
    %v800 = vpop.permute.xlu0 %799
    %801 = vrot.lane.b32.xlu0 %v723, 8
    %v802 = vpop.permute.xlu0 %801
    %803 = vrot.lane.b32.xlu0 %v724, 8
    %v804 = vpop.permute.xlu0 %803
    %805 = vrot.lane.b32.xlu0 %v725, 8
    %v806 = vpop.permute.xlu0 %805
    %807 = vrot.lane.b32.xlu0 %v726, 8
    %v808 = vpop.permute.xlu0 %807
    %809 = vrot.lane.b32.xlu0 %v727, 8
    %v810 = vpop.permute.xlu0 %809
    %811 = vrot.lane.b32.xlu0 %v728, 8
    %v812 = vpop.permute.xlu0 %811
    %813 = vrot.lane.b32.xlu0 %v729, 8
    %v814 = vpop.permute.xlu0 %813
    %815 = vrot.lane.b32.xlu0 %v730, 8
    %v816 = vpop.permute.xlu0 %815
    %817 = vrot.lane.b32.xlu0 %v731, 8
    %v818 = vpop.permute.xlu0 %817
    %819 = vrot.lane.b32.xlu0 %v732, 8
    %v820 = vpop.permute.xlu0 %819
    %821 = vrot.lane.b32.xlu0 %v733, 8
    %v822 = vpop.permute.xlu0 %821
    %823 = vrot.lane.b32.xlu0 %v734, 8
    %v824 = vpop.permute.xlu0 %823
    %825 = vrot.lane.b32.xlu0 %v735, 8
    %v826 = vpop.permute.xlu0 %825
    %827 = vrot.lane.b32.xlu0 %v736, 8
    %v828 = vpop.permute.xlu0 %827
    %829 = vrot.lane.b32.xlu0 %v737, 8
    %v830 = vpop.permute.xlu0 %829
    %831 = vrot.lane.b32.xlu0 %v738, 8
    %v832 = vpop.permute.xlu0 %831
    %833 = vrot.lane.b32.xlu0 %v739, 8
    %v834 = vpop.permute.xlu0 %833
    %835 = vrot.lane.b32.xlu0 %v740, 8
    %v836 = vpop.permute.xlu0 %835
    %vm869 = vcmask 97344
    %870 = vst.msk [vmem:[#allocation5] sm:$0xff] %vm869, %v774
    %871 = vst.msk [vmem:[#allocation5 + $0x10] sm:$0xff] %vm869, %v776
    %872 = vst.msk [vmem:[#allocation5 + $0x20] sm:$0xff] %vm869, %v778
    %873 = vst.msk [vmem:[#allocation5 + $0x30] sm:$0xff] %vm869, %v780
    %874 = vst.msk [vmem:[#allocation5 + $0x40] sm:$0xff] %vm869, %v782
    %875 = vst.msk [vmem:[#allocation5 + $0x50] sm:$0xff] %vm869, %v784
    %876 = vst.msk [vmem:[#allocation5 + $0x60] sm:$0xff] %vm869, %v786
    %877 = vst.msk [vmem:[#allocation5 + $0x70] sm:$0xff] %vm869, %v788
    %878 = vst.msk [vmem:[#allocation5 + $0x80] sm:$0xff] %vm869, %v790
    %879 = vst.msk [vmem:[#allocation5 + $0x90] sm:$0xff] %vm869, %v792
    %880 = vst.msk [vmem:[#allocation5 + $0xa0] sm:$0xff] %vm869, %v794
    %881 = vst.msk [vmem:[#allocation5 + $0xb0] sm:$0xff] %vm869, %v796
    %882 = vst.msk [vmem:[#allocation5 + $0xc0] sm:$0xff] %vm869, %v798
    %883 = vst.msk [vmem:[#allocation5 + $0xd0] sm:$0xff] %vm869, %v800
    %884 = vst.msk [vmem:[#allocation5 + $0xe0] sm:$0xff] %vm869, %v802
    %885 = vst.msk [vmem:[#allocation5 + $0xf0] sm:$0xff] %vm869, %v804
    %886 = vst.msk [vmem:[#allocation5 + $0x100] sm:$0xff] %vm869, %v806
    %887 = vst.msk [vmem:[#allocation5 + $0x110] sm:$0xff] %vm869, %v808
    %888 = vst.msk [vmem:[#allocation5 + $0x120] sm:$0xff] %vm869, %v810
    %889 = vst.msk [vmem:[#allocation5 + $0x130] sm:$0xff] %vm869, %v812
    %890 = vst.msk [vmem:[#allocation5 + $0x140] sm:$0xff] %vm869, %v814
    %891 = vst.msk [vmem:[#allocation5 + $0x150] sm:$0xff] %vm869, %v816
    %892 = vst.msk [vmem:[#allocation5 + $0x160] sm:$0xff] %vm869, %v818
    %893 = vst.msk [vmem:[#allocation5 + $0x170] sm:$0xff] %vm869, %v820
    %894 = vst.msk [vmem:[#allocation5 + $0x180] sm:$0xff] %vm869, %v822
    %895 = vst.msk [vmem:[#allocation5 + $0x190] sm:$0xff] %vm869, %v824
    %896 = vst.msk [vmem:[#allocation5 + $0x1a0] sm:$0xff] %vm869, %v826
    %897 = vst.msk [vmem:[#allocation5 + $0x1b0] sm:$0xff] %vm869, %v828
    %898 = vst.msk [vmem:[#allocation5 + $0x1c0] sm:$0xff] %vm869, %v830
    %899 = vst.msk [vmem:[#allocation5 + $0x1d0] sm:$0xff] %vm869, %v832
    %900 = vst.msk [vmem:[#allocation5 + $0x1e0] sm:$0xff] %vm869, %v834
    %901 = vst.msk [vmem:[#allocation5 + $0x1f0] sm:$0xff] %vm869, %v836
    %v902 = vld [vmem:[%s195 + $0x7] sm:$0xff]
    %v903 = vld [vmem:[%s195 + $0xf] sm:$0xff]
    %v904 = vld [vmem:[%s195 + $0x27] sm:$0xff]
    %v905 = vld [vmem:[%s195 + $0x2f] sm:$0xff]
    %v906 = vld [vmem:[%s195 + $0x47] sm:$0xff]
    %v907 = vld [vmem:[%s195 + $0x4f] sm:$0xff]
    %v908 = vld [vmem:[%s195 + $0x67] sm:$0xff]
    %v909 = vld [vmem:[%s195 + $0x6f] sm:$0xff]
    %v910 = vld [vmem:[%s195 + $0x87] sm:$0xff]
    %v911 = vld [vmem:[%s195 + $0x8f] sm:$0xff]
    %v912 = vld [vmem:[%s195 + $0xa7] sm:$0xff]
    %v913 = vld [vmem:[%s195 + $0xaf] sm:$0xff]
    %v914 = vld [vmem:[%s195 + $0xc7] sm:$0xff]
    %v915 = vld [vmem:[%s195 + $0xcf] sm:$0xff]
    %v916 = vld [vmem:[%s195 + $0xe7] sm:$0xff]
    %v917 = vld [vmem:[%s195 + $0xef] sm:$0xff]
    %v918 = vld [vmem:[%s195 + $0x107] sm:$0xff]
    %v919 = vld [vmem:[%s195 + $0x10f] sm:$0xff]
    %v920 = vld [vmem:[%s195 + $0x127] sm:$0xff]
    %v921 = vld [vmem:[%s195 + $0x12f] sm:$0xff]
    %v922 = vld [vmem:[%s195 + $0x147] sm:$0xff]
    %v923 = vld [vmem:[%s195 + $0x14f] sm:$0xff]
    %v924 = vld [vmem:[%s195 + $0x167] sm:$0xff]
    %v925 = vld [vmem:[%s195 + $0x16f] sm:$0xff]
    %v926 = vld [vmem:[%s195 + $0x187] sm:$0xff]
    %v927 = vld [vmem:[%s195 + $0x18f] sm:$0xff]
    %v928 = vld [vmem:[%s195 + $0x1a7] sm:$0xff]
    %v929 = vld [vmem:[%s195 + $0x1af] sm:$0xff]
    %v930 = vld [vmem:[%s195 + $0x1c7] sm:$0xff]
    %v931 = vld [vmem:[%s195 + $0x1cf] sm:$0xff]
    %v932 = vld [vmem:[%s195 + $0x1e7] sm:$0xff]
    %v933 = vld [vmem:[%s195 + $0x1ef] sm:$0xff]
    %v934 = vld [vmem:[%s195 + $0x247] sm:$0xff]
    %v935 = vld [vmem:[%s195 + $0x24f] sm:$0xff]
    %v936 = vld [vmem:[%s195 + $0x267] sm:$0xff]
    %v937 = vld [vmem:[%s195 + $0x26f] sm:$0xff]
    %v938 = vld [vmem:[%s195 + $0x287] sm:$0xff]
    %v939 = vld [vmem:[%s195 + $0x28f] sm:$0xff]
    %v940 = vld [vmem:[%s195 + $0x2a7] sm:$0xff]
    %v941 = vld [vmem:[%s195 + $0x2af] sm:$0xff]
    %v942 = vld [vmem:[%s195 + $0x2c7] sm:$0xff]
    %v943 = vld [vmem:[%s195 + $0x2cf] sm:$0xff]
    %v944 = vld [vmem:[%s195 + $0x2e7] sm:$0xff]
    %v945 = vld [vmem:[%s195 + $0x2ef] sm:$0xff]
    %v946 = vld [vmem:[%s195 + $0x307] sm:$0xff]
    %v947 = vld [vmem:[%s195 + $0x30f] sm:$0xff]
    %v948 = vld [vmem:[%s195 + $0x327] sm:$0xff]
    %v949 = vld [vmem:[%s195 + $0x32f] sm:$0xff]
    %v950 = vld [vmem:[%s195 + $0x347] sm:$0xff]
    %v951 = vld [vmem:[%s195 + $0x34f] sm:$0xff]
    %v952 = vld [vmem:[%s195 + $0x367] sm:$0xff]
    %v953 = vld [vmem:[%s195 + $0x36f] sm:$0xff]
    %v954 = vld [vmem:[%s195 + $0x387] sm:$0xff]
    %v955 = vld [vmem:[%s195 + $0x38f] sm:$0xff]
    %v956 = vld [vmem:[%s195 + $0x3a7] sm:$0xff]
    %v957 = vld [vmem:[%s195 + $0x3af] sm:$0xff]
    %v958 = vld [vmem:[%s195 + $0x3c7] sm:$0xff]
    %v959 = vld [vmem:[%s195 + $0x3cf] sm:$0xff]
    %v960 = vld [vmem:[%s195 + $0x3e7] sm:$0xff]
    %v961 = vld [vmem:[%s195 + $0x3ef] sm:$0xff]
    %v962 = vld [vmem:[%s195 + $0x407] sm:$0xff]
    %v963 = vld [vmem:[%s195 + $0x40f] sm:$0xff]
    %v964 = vld [vmem:[%s195 + $0x427] sm:$0xff]
    %v965 = vld [vmem:[%s195 + $0x42f] sm:$0xff]
    %v966 = vpack.c.bf16 %v903, %v902
    %v967 = vpack.c.bf16 %v905, %v904
    %v968 = vpack.c.bf16 %v907, %v906
    %v969 = vpack.c.bf16 %v909, %v908
    %v970 = vpack.c.bf16 %v911, %v910
    %v971 = vpack.c.bf16 %v913, %v912
    %v972 = vpack.c.bf16 %v915, %v914
    %v973 = vpack.c.bf16 %v917, %v916
    %v974 = vpack.c.bf16 %v919, %v918
    %v975 = vpack.c.bf16 %v921, %v920
    %v976 = vpack.c.bf16 %v923, %v922
    %v977 = vpack.c.bf16 %v925, %v924
    %v978 = vpack.c.bf16 %v927, %v926
    %v979 = vpack.c.bf16 %v929, %v928
    %v980 = vpack.c.bf16 %v931, %v930
    %v981 = vpack.c.bf16 %v933, %v932
    %v982 = vpack.c.bf16 %v935, %v934
    %v983 = vpack.c.bf16 %v937, %v936
    %v984 = vpack.c.bf16 %v939, %v938
    %v985 = vpack.c.bf16 %v941, %v940
    %v986 = vpack.c.bf16 %v943, %v942
    %v987 = vpack.c.bf16 %v945, %v944
    %v988 = vpack.c.bf16 %v947, %v946
    %v989 = vpack.c.bf16 %v949, %v948
    %v990 = vpack.c.bf16 %v951, %v950
    %v991 = vpack.c.bf16 %v953, %v952
    %v992 = vpack.c.bf16 %v955, %v954
    %v993 = vpack.c.bf16 %v957, %v956
    %v994 = vpack.c.bf16 %v959, %v958
    %v995 = vpack.c.bf16 %v961, %v960
    %v996 = vpack.c.bf16 %v963, %v962
    %v997 = vpack.c.bf16 %v965, %v964
    %1030 = vrot.lane.b32.xlu0 %v966, 12
    %v1031 = vpop.permute.xlu0 %1030
    %1032 = vrot.lane.b32.xlu0 %v967, 12
    %v1033 = vpop.permute.xlu0 %1032
    %1034 = vrot.lane.b32.xlu0 %v968, 12
    %v1035 = vpop.permute.xlu0 %1034
    %1036 = vrot.lane.b32.xlu0 %v969, 12
    %v1037 = vpop.permute.xlu0 %1036
    %1038 = vrot.lane.b32.xlu0 %v970, 12
    %v1039 = vpop.permute.xlu0 %1038
    %1040 = vrot.lane.b32.xlu0 %v971, 12
    %v1041 = vpop.permute.xlu0 %1040
    %1042 = vrot.lane.b32.xlu0 %v972, 12
    %v1043 = vpop.permute.xlu0 %1042
    %1044 = vrot.lane.b32.xlu0 %v973, 12
    %v1045 = vpop.permute.xlu0 %1044
    %1046 = vrot.lane.b32.xlu0 %v974, 12
    %v1047 = vpop.permute.xlu0 %1046
    %1048 = vrot.lane.b32.xlu0 %v975, 12
    %v1049 = vpop.permute.xlu0 %1048
    %1050 = vrot.lane.b32.xlu0 %v976, 12
    %v1051 = vpop.permute.xlu0 %1050
    %1052 = vrot.lane.b32.xlu0 %v977, 12
    %v1053 = vpop.permute.xlu0 %1052
    %1054 = vrot.lane.b32.xlu0 %v978, 12
    %v1055 = vpop.permute.xlu0 %1054
    %1056 = vrot.lane.b32.xlu0 %v979, 12
    %v1057 = vpop.permute.xlu0 %1056
    %1058 = vrot.lane.b32.xlu0 %v980, 12
    %v1059 = vpop.permute.xlu0 %1058
    %1060 = vrot.lane.b32.xlu0 %v981, 12
    %v1061 = vpop.permute.xlu0 %1060
    %1062 = vrot.lane.b32.xlu0 %v982, 12
    %v1063 = vpop.permute.xlu0 %1062
    %1064 = vrot.lane.b32.xlu0 %v983, 12
    %v1065 = vpop.permute.xlu0 %1064
    %1066 = vrot.lane.b32.xlu0 %v984, 12
    %v1067 = vpop.permute.xlu0 %1066
    %1068 = vrot.lane.b32.xlu0 %v985, 12
    %v1069 = vpop.permute.xlu0 %1068
    %1070 = vrot.lane.b32.xlu0 %v986, 12
    %v1071 = vpop.permute.xlu0 %1070
    %1072 = vrot.lane.b32.xlu0 %v987, 12
    %v1073 = vpop.permute.xlu0 %1072
    %1074 = vrot.lane.b32.xlu0 %v988, 12
    %v1075 = vpop.permute.xlu0 %1074
    %1076 = vrot.lane.b32.xlu0 %v989, 12
    %v1077 = vpop.permute.xlu0 %1076
    %1078 = vrot.lane.b32.xlu0 %v990, 12
    %v1079 = vpop.permute.xlu0 %1078
    %1080 = vrot.lane.b32.xlu0 %v991, 12
    %v1081 = vpop.permute.xlu0 %1080
    %1082 = vrot.lane.b32.xlu0 %v992, 12
    %v1083 = vpop.permute.xlu0 %1082
    %1084 = vrot.lane.b32.xlu0 %v993, 12
    %v1085 = vpop.permute.xlu0 %1084
    %1086 = vrot.lane.b32.xlu0 %v994, 12
    %v1087 = vpop.permute.xlu0 %1086
    %1088 = vrot.lane.b32.xlu0 %v995, 12
    %v1089 = vpop.permute.xlu0 %1088
    %1090 = vrot.lane.b32.xlu0 %v996, 12
    %v1091 = vpop.permute.xlu0 %1090
    %1092 = vrot.lane.b32.xlu0 %v997, 12
    %v1093 = vpop.permute.xlu0 %1092
    %vm1126 = vcmask 130144
    %1127 = vst.msk [vmem:[#allocation5] sm:$0xff] %vm1126, %v1031
    %1128 = vst.msk [vmem:[#allocation5 + $0x10] sm:$0xff] %vm1126, %v1033
    %1129 = vst.msk [vmem:[#allocation5 + $0x20] sm:$0xff] %vm1126, %v1035
    %1130 = vst.msk [vmem:[#allocation5 + $0x30] sm:$0xff] %vm1126, %v1037
    %1131 = vst.msk [vmem:[#allocation5 + $0x40] sm:$0xff] %vm1126, %v1039
    %1132 = vst.msk [vmem:[#allocation5 + $0x50] sm:$0xff] %vm1126, %v1041
    %1133 = vst.msk [vmem:[#allocation5 + $0x60] sm:$0xff] %vm1126, %v1043
    %1134 = vst.msk [vmem:[#allocation5 + $0x70] sm:$0xff] %vm1126, %v1045
    %1135 = vst.msk [vmem:[#allocation5 + $0x80] sm:$0xff] %vm1126, %v1047
    %1136 = vst.msk [vmem:[#allocation5 + $0x90] sm:$0xff] %vm1126, %v1049
    %1137 = vst.msk [vmem:[#allocation5 + $0xa0] sm:$0xff] %vm1126, %v1051
    %1138 = vst.msk [vmem:[#allocation5 + $0xb0] sm:$0xff] %vm1126, %v1053
    %1139 = vst.msk [vmem:[#allocation5 + $0xc0] sm:$0xff] %vm1126, %v1055
    %1140 = vst.msk [vmem:[#allocation5 + $0xd0] sm:$0xff] %vm1126, %v1057
    %1141 = vst.msk [vmem:[#allocation5 + $0xe0] sm:$0xff] %vm1126, %v1059
    %1142 = vst.msk [vmem:[#allocation5 + $0xf0] sm:$0xff] %vm1126, %v1061
    %1143 = vst.msk [vmem:[#allocation5 + $0x100] sm:$0xff] %vm1126, %v1063
    %1144 = vst.msk [vmem:[#allocation5 + $0x110] sm:$0xff] %vm1126, %v1065
    %1145 = vst.msk [vmem:[#allocation5 + $0x120] sm:$0xff] %vm1126, %v1067
    %1146 = vst.msk [vmem:[#allocation5 + $0x130] sm:$0xff] %vm1126, %v1069
    %1147 = vst.msk [vmem:[#allocation5 + $0x140] sm:$0xff] %vm1126, %v1071
    %1148 = vst.msk [vmem:[#allocation5 + $0x150] sm:$0xff] %vm1126, %v1073
    %1149 = vst.msk [vmem:[#allocation5 + $0x160] sm:$0xff] %vm1126, %v1075
    %1150 = vst.msk [vmem:[#allocation5 + $0x170] sm:$0xff] %vm1126, %v1077
    %1151 = vst.msk [vmem:[#allocation5 + $0x180] sm:$0xff] %vm1126, %v1079
    %1152 = vst.msk [vmem:[#allocation5 + $0x190] sm:$0xff] %vm1126, %v1081
    %1153 = vst.msk [vmem:[#allocation5 + $0x1a0] sm:$0xff] %vm1126, %v1083
    %1154 = vst.msk [vmem:[#allocation5 + $0x1b0] sm:$0xff] %vm1126, %v1085
    %1155 = vst.msk [vmem:[#allocation5 + $0x1c0] sm:$0xff] %vm1126, %v1087
    %1156 = vst.msk [vmem:[#allocation5 + $0x1d0] sm:$0xff] %vm1126, %v1089
    %1157 = vst.msk [vmem:[#allocation5 + $0x1e0] sm:$0xff] %vm1126, %v1091
    %1158 = vst.msk [vmem:[#allocation5 + $0x1f0] sm:$0xff] %vm1126, %v1093
    %v1159 = vld [vmem:[%s195 + $0x8] sm:$0xff]
    %v1160 = vld [vmem:[%s195 + $0x10] sm:$0xff]
    %v1161 = vld [vmem:[%s195 + $0x28] sm:$0xff]
    %v1162 = vld [vmem:[%s195 + $0x30] sm:$0xff]
    %v1163 = vld [vmem:[%s195 + $0x48] sm:$0xff]
    %v1164 = vld [vmem:[%s195 + $0x50] sm:$0xff]
    %v1165 = vld [vmem:[%s195 + $0x68] sm:$0xff]
    %v1166 = vld [vmem:[%s195 + $0x70] sm:$0xff]
    %v1167 = vld [vmem:[%s195 + $0x88] sm:$0xff]
    %v1168 = vld [vmem:[%s195 + $0x90] sm:$0xff]
    %v1169 = vld [vmem:[%s195 + $0xa8] sm:$0xff]
    %v1170 = vld [vmem:[%s195 + $0xb0] sm:$0xff]
    %v1171 = vld [vmem:[%s195 + $0xc8] sm:$0xff]
    %v1172 = vld [vmem:[%s195 + $0xd0] sm:$0xff]
    %v1173 = vld [vmem:[%s195 + $0xe8] sm:$0xff]
    %v1174 = vld [vmem:[%s195 + $0xf0] sm:$0xff]
    %v1175 = vld [vmem:[%s195 + $0x108] sm:$0xff]
    %v1176 = vld [vmem:[%s195 + $0x110] sm:$0xff]
    %v1177 = vld [vmem:[%s195 + $0x128] sm:$0xff]
    %v1178 = vld [vmem:[%s195 + $0x130] sm:$0xff]
    %v1179 = vld [vmem:[%s195 + $0x148] sm:$0xff]
    %v1180 = vld [vmem:[%s195 + $0x150] sm:$0xff]
    %v1181 = vld [vmem:[%s195 + $0x168] sm:$0xff]
    %v1182 = vld [vmem:[%s195 + $0x170] sm:$0xff]
    %v1183 = vld [vmem:[%s195 + $0x188] sm:$0xff]
    %v1184 = vld [vmem:[%s195 + $0x190] sm:$0xff]
    %v1185 = vld [vmem:[%s195 + $0x1a8] sm:$0xff]
    %v1186 = vld [vmem:[%s195 + $0x1b0] sm:$0xff]
    %v1187 = vld [vmem:[%s195 + $0x1c8] sm:$0xff]
    %v1188 = vld [vmem:[%s195 + $0x1d0] sm:$0xff]
    %v1189 = vld [vmem:[%s195 + $0x1e8] sm:$0xff]
    %v1190 = vld [vmem:[%s195 + $0x1f0] sm:$0xff]
    %v1191 = vld [vmem:[%s195 + $0x248] sm:$0xff]
    %v1192 = vld [vmem:[%s195 + $0x250] sm:$0xff]
    %v1193 = vld [vmem:[%s195 + $0x268] sm:$0xff]
    %v1194 = vld [vmem:[%s195 + $0x270] sm:$0xff]
    %v1195 = vld [vmem:[%s195 + $0x288] sm:$0xff]
    %v1196 = vld [vmem:[%s195 + $0x290] sm:$0xff]
    %v1197 = vld [vmem:[%s195 + $0x2a8] sm:$0xff]
    %v1198 = vld [vmem:[%s195 + $0x2b0] sm:$0xff]
    %v1199 = vld [vmem:[%s195 + $0x2c8] sm:$0xff]
    %v1200 = vld [vmem:[%s195 + $0x2d0] sm:$0xff]
    %v1201 = vld [vmem:[%s195 + $0x2e8] sm:$0xff]
    %v1202 = vld [vmem:[%s195 + $0x2f0] sm:$0xff]
    %v1203 = vld [vmem:[%s195 + $0x308] sm:$0xff]
    %v1204 = vld [vmem:[%s195 + $0x310] sm:$0xff]
    %v1205 = vld [vmem:[%s195 + $0x328] sm:$0xff]
    %v1206 = vld [vmem:[%s195 + $0x330] sm:$0xff]
    %v1207 = vld [vmem:[%s195 + $0x348] sm:$0xff]
    %v1208 = vld [vmem:[%s195 + $0x350] sm:$0xff]
    %v1209 = vld [vmem:[%s195 + $0x368] sm:$0xff]
    %v1210 = vld [vmem:[%s195 + $0x370] sm:$0xff]
    %v1211 = vld [vmem:[%s195 + $0x388] sm:$0xff]
    %v1212 = vld [vmem:[%s195 + $0x390] sm:$0xff]
    %v1213 = vld [vmem:[%s195 + $0x3a8] sm:$0xff]
    %v1214 = vld [vmem:[%s195 + $0x3b0] sm:$0xff]
    %v1215 = vld [vmem:[%s195 + $0x3c8] sm:$0xff]
    %v1216 = vld [vmem:[%s195 + $0x3d0] sm:$0xff]
    %v1217 = vld [vmem:[%s195 + $0x3e8] sm:$0xff]
    %v1218 = vld [vmem:[%s195 + $0x3f0] sm:$0xff]
    %v1219 = vld [vmem:[%s195 + $0x408] sm:$0xff]
    %v1220 = vld [vmem:[%s195 + $0x410] sm:$0xff]
    %v1221 = vld [vmem:[%s195 + $0x428] sm:$0xff]
    %v1222 = vld [vmem:[%s195 + $0x430] sm:$0xff]
    %v1223 = vpack.c.bf16 %v1160, %v1159
    %v1224 = vpack.c.bf16 %v1162, %v1161
    %v1225 = vpack.c.bf16 %v1164, %v1163
    %v1226 = vpack.c.bf16 %v1166, %v1165
    %v1227 = vpack.c.bf16 %v1168, %v1167
    %v1228 = vpack.c.bf16 %v1170, %v1169
    %v1229 = vpack.c.bf16 %v1172, %v1171
    %v1230 = vpack.c.bf16 %v1174, %v1173
    %v1231 = vpack.c.bf16 %v1176, %v1175
    %v1232 = vpack.c.bf16 %v1178, %v1177
    %v1233 = vpack.c.bf16 %v1180, %v1179
    %v1234 = vpack.c.bf16 %v1182, %v1181
    %v1235 = vpack.c.bf16 %v1184, %v1183
    %v1236 = vpack.c.bf16 %v1186, %v1185
    %v1237 = vpack.c.bf16 %v1188, %v1187
    %v1238 = vpack.c.bf16 %v1190, %v1189
    %v1239 = vpack.c.bf16 %v1192, %v1191
    %v1240 = vpack.c.bf16 %v1194, %v1193
    %v1241 = vpack.c.bf16 %v1196, %v1195
    %v1242 = vpack.c.bf16 %v1198, %v1197
    %v1243 = vpack.c.bf16 %v1200, %v1199
    %v1244 = vpack.c.bf16 %v1202, %v1201
    %v1245 = vpack.c.bf16 %v1204, %v1203
    %v1246 = vpack.c.bf16 %v1206, %v1205
    %v1247 = vpack.c.bf16 %v1208, %v1207
    %v1248 = vpack.c.bf16 %v1210, %v1209
    %v1249 = vpack.c.bf16 %v1212, %v1211
    %v1250 = vpack.c.bf16 %v1214, %v1213
    %v1251 = vpack.c.bf16 %v1216, %v1215
    %v1252 = vpack.c.bf16 %v1218, %v1217
    %v1253 = vpack.c.bf16 %v1220, %v1219
    %v1254 = vpack.c.bf16 %v1222, %v1221
    %1287 = vrot.lane.b32.xlu0 %v1223, 16
    %v1288 = vpop.permute.xlu0 %1287
    %1289 = vrot.lane.b32.xlu0 %v1224, 16
    %v1290 = vpop.permute.xlu0 %1289
    %1291 = vrot.lane.b32.xlu0 %v1225, 16
    %v1292 = vpop.permute.xlu0 %1291
    %1293 = vrot.lane.b32.xlu0 %v1226, 16
    %v1294 = vpop.permute.xlu0 %1293
    %1295 = vrot.lane.b32.xlu0 %v1227, 16
    %v1296 = vpop.permute.xlu0 %1295
    %1297 = vrot.lane.b32.xlu0 %v1228, 16
    %v1298 = vpop.permute.xlu0 %1297
    %1299 = vrot.lane.b32.xlu0 %v1229, 16
    %v1300 = vpop.permute.xlu0 %1299
    %1301 = vrot.lane.b32.xlu0 %v1230, 16
    %v1302 = vpop.permute.xlu0 %1301
    %1303 = vrot.lane.b32.xlu0 %v1231, 16
    %v1304 = vpop.permute.xlu0 %1303
    %1305 = vrot.lane.b32.xlu0 %v1232, 16
    %v1306 = vpop.permute.xlu0 %1305
    %1307 = vrot.lane.b32.xlu0 %v1233, 16
    %v1308 = vpop.permute.xlu0 %1307
    %1309 = vrot.lane.b32.xlu0 %v1234, 16
    %v1310 = vpop.permute.xlu0 %1309
    %1311 = vrot.lane.b32.xlu0 %v1235, 16
    %v1312 = vpop.permute.xlu0 %1311
    %1313 = vrot.lane.b32.xlu0 %v1236, 16
    %v1314 = vpop.permute.xlu0 %1313
    %1315 = vrot.lane.b32.xlu0 %v1237, 16
    %v1316 = vpop.permute.xlu0 %1315
    %1317 = vrot.lane.b32.xlu0 %v1238, 16
    %v1318 = vpop.permute.xlu0 %1317
    %1319 = vrot.lane.b32.xlu0 %v1239, 16
    %v1320 = vpop.permute.xlu0 %1319
    %1321 = vrot.lane.b32.xlu0 %v1240, 16
    %v1322 = vpop.permute.xlu0 %1321
    %1323 = vrot.lane.b32.xlu0 %v1241, 16
    %v1324 = vpop.permute.xlu0 %1323
    %1325 = vrot.lane.b32.xlu0 %v1242, 16
    %v1326 = vpop.permute.xlu0 %1325
    %1327 = vrot.lane.b32.xlu0 %v1243, 16
    %v1328 = vpop.permute.xlu0 %1327
    %1329 = vrot.lane.b32.xlu0 %v1244, 16
    %v1330 = vpop.permute.xlu0 %1329
    %1331 = vrot.lane.b32.xlu0 %v1245, 16
    %v1332 = vpop.permute.xlu0 %1331
    %1333 = vrot.lane.b32.xlu0 %v1246, 16
    %v1334 = vpop.permute.xlu0 %1333
    %1335 = vrot.lane.b32.xlu0 %v1247, 16
    %v1336 = vpop.permute.xlu0 %1335
    %1337 = vrot.lane.b32.xlu0 %v1248, 16
    %v1338 = vpop.permute.xlu0 %1337
    %1339 = vrot.lane.b32.xlu0 %v1249, 16
    %v1340 = vpop.permute.xlu0 %1339
    %1341 = vrot.lane.b32.xlu0 %v1250, 16
    %v1342 = vpop.permute.xlu0 %1341
    %1343 = vrot.lane.b32.xlu0 %v1251, 16
    %v1344 = vpop.permute.xlu0 %1343
    %1345 = vrot.lane.b32.xlu0 %v1252, 16
    %v1346 = vpop.permute.xlu0 %1345
    %1347 = vrot.lane.b32.xlu0 %v1253, 16
    %v1348 = vpop.permute.xlu0 %1347
    %1349 = vrot.lane.b32.xlu0 %v1254, 16
    %v1350 = vpop.permute.xlu0 %1349
    %vm1383 = vcmask 162944
    %1384 = vst.msk [vmem:[#allocation5] sm:$0xff] %vm1383, %v1288
    %1385 = vst.msk [vmem:[#allocation5 + $0x10] sm:$0xff] %vm1383, %v1290
    %1386 = vst.msk [vmem:[#allocation5 + $0x20] sm:$0xff] %vm1383, %v1292
    %1387 = vst.msk [vmem:[#allocation5 + $0x30] sm:$0xff] %vm1383, %v1294
    %1388 = vst.msk [vmem:[#allocation5 + $0x40] sm:$0xff] %vm1383, %v1296
    %1389 = vst.msk [vmem:[#allocation5 + $0x50] sm:$0xff] %vm1383, %v1298
    %1390 = vst.msk [vmem:[#allocation5 + $0x60] sm:$0xff] %vm1383, %v1300
    %1391 = vst.msk [vmem:[#allocation5 + $0x70] sm:$0xff] %vm1383, %v1302
    %1392 = vst.msk [vmem:[#allocation5 + $0x80] sm:$0xff] %vm1383, %v1304
    %1393 = vst.msk [vmem:[#allocation5 + $0x90] sm:$0xff] %vm1383, %v1306
    %1394 = vst.msk [vmem:[#allocation5 + $0xa0] sm:$0xff] %vm1383, %v1308
    %1395 = vst.msk [vmem:[#allocation5 + $0xb0] sm:$0xff] %vm1383, %v1310
    %1396 = vst.msk [vmem:[#allocation5 + $0xc0] sm:$0xff] %vm1383, %v1312
    %1397 = vst.msk [vmem:[#allocation5 + $0xd0] sm:$0xff] %vm1383, %v1314
    %1398 = vst.msk [vmem:[#allocation5 + $0xe0] sm:$0xff] %vm1383, %v1316
    %1399 = vst.msk [vmem:[#allocation5 + $0xf0] sm:$0xff] %vm1383, %v1318
    %1400 = vst.msk [vmem:[#allocation5 + $0x100] sm:$0xff] %vm1383, %v1320
    %1401 = vst.msk [vmem:[#allocation5 + $0x110] sm:$0xff] %vm1383, %v1322
    %1402 = vst.msk [vmem:[#allocation5 + $0x120] sm:$0xff] %vm1383, %v1324
    %1403 = vst.msk [vmem:[#allocation5 + $0x130] sm:$0xff] %vm1383, %v1326
    %1404 = vst.msk [vmem:[#allocation5 + $0x140] sm:$0xff] %vm1383, %v1328
    %1405 = vst.msk [vmem:[#allocation5 + $0x150] sm:$0xff] %vm1383, %v1330
    %1406 = vst.msk [vmem:[#allocation5 + $0x160] sm:$0xff] %vm1383, %v1332
    %1407 = vst.msk [vmem:[#allocation5 + $0x170] sm:$0xff] %vm1383, %v1334
    %1408 = vst.msk [vmem:[#allocation5 + $0x180] sm:$0xff] %vm1383, %v1336
    %1409 = vst.msk [vmem:[#allocation5 + $0x190] sm:$0xff] %vm1383, %v1338
    %1410 = vst.msk [vmem:[#allocation5 + $0x1a0] sm:$0xff] %vm1383, %v1340
    %1411 = vst.msk [vmem:[#allocation5 + $0x1b0] sm:$0xff] %vm1383, %v1342
    %1412 = vst.msk [vmem:[#allocation5 + $0x1c0] sm:$0xff] %vm1383, %v1344
    %1413 = vst.msk [vmem:[#allocation5 + $0x1d0] sm:$0xff] %vm1383, %v1346
    %1414 = vst.msk [vmem:[#allocation5 + $0x1e0] sm:$0xff] %vm1383, %v1348
    %1415 = vst.msk [vmem:[#allocation5 + $0x1f0] sm:$0xff] %vm1383, %v1350
    %v1416 = vld [vmem:[%s195 + $0x9] sm:$0xff]
    %v1417 = vld [vmem:[%s195 + $0x11] sm:$0xff]
    %v1418 = vld [vmem:[%s195 + $0x29] sm:$0xff]
    %v1419 = vld [vmem:[%s195 + $0x31] sm:$0xff]
    %v1420 = vld [vmem:[%s195 + $0x49] sm:$0xff]
    %v1421 = vld [vmem:[%s195 + $0x51] sm:$0xff]
    %v1422 = vld [vmem:[%s195 + $0x69] sm:$0xff]
    %v1423 = vld [vmem:[%s195 + $0x71] sm:$0xff]
    %v1424 = vld [vmem:[%s195 + $0x89] sm:$0xff]
    %v1425 = vld [vmem:[%s195 + $0x91] sm:$0xff]
    %v1426 = vld [vmem:[%s195 + $0xa9] sm:$0xff]
    %v1427 = vld [vmem:[%s195 + $0xb1] sm:$0xff]
    %v1428 = vld [vmem:[%s195 + $0xc9] sm:$0xff]
    %v1429 = vld [vmem:[%s195 + $0xd1] sm:$0xff]
    %v1430 = vld [vmem:[%s195 + $0xe9] sm:$0xff]
    %v1431 = vld [vmem:[%s195 + $0xf1] sm:$0xff]
    %v1432 = vld [vmem:[%s195 + $0x109] sm:$0xff]
    %v1433 = vld [vmem:[%s195 + $0x111] sm:$0xff]
    %v1434 = vld [vmem:[%s195 + $0x129] sm:$0xff]
    %v1435 = vld [vmem:[%s195 + $0x131] sm:$0xff]
    %v1436 = vld [vmem:[%s195 + $0x149] sm:$0xff]
    %v1437 = vld [vmem:[%s195 + $0x151] sm:$0xff]
    %v1438 = vld [vmem:[%s195 + $0x169] sm:$0xff]
    %v1439 = vld [vmem:[%s195 + $0x171] sm:$0xff]
    %v1440 = vld [vmem:[%s195 + $0x189] sm:$0xff]
    %v1441 = vld [vmem:[%s195 + $0x191] sm:$0xff]
    %v1442 = vld [vmem:[%s195 + $0x1a9] sm:$0xff]
    %v1443 = vld [vmem:[%s195 + $0x1b1] sm:$0xff]
    %v1444 = vld [vmem:[%s195 + $0x1c9] sm:$0xff]
    %v1445 = vld [vmem:[%s195 + $0x1d1] sm:$0xff]
    %v1446 = vld [vmem:[%s195 + $0x1e9] sm:$0xff]
    %v1447 = vld [vmem:[%s195 + $0x1f1] sm:$0xff]
    %v1448 = vld [vmem:[%s195 + $0x249] sm:$0xff]
    %v1449 = vld [vmem:[%s195 + $0x251] sm:$0xff]
    %v1450 = vld [vmem:[%s195 + $0x269] sm:$0xff]
    %v1451 = vld [vmem:[%s195 + $0x271] sm:$0xff]
    %v1452 = vld [vmem:[%s195 + $0x289] sm:$0xff]
    %v1453 = vld [vmem:[%s195 + $0x291] sm:$0xff]
    %v1454 = vld [vmem:[%s195 + $0x2a9] sm:$0xff]
    %v1455 = vld [vmem:[%s195 + $0x2b1] sm:$0xff]
    %v1456 = vld [vmem:[%s195 + $0x2c9] sm:$0xff]
    %v1457 = vld [vmem:[%s195 + $0x2d1] sm:$0xff]
    %v1458 = vld [vmem:[%s195 + $0x2e9] sm:$0xff]
    %v1459 = vld [vmem:[%s195 + $0x2f1] sm:$0xff]
    %v1460 = vld [vmem:[%s195 + $0x309] sm:$0xff]
    %v1461 = vld [vmem:[%s195 + $0x311] sm:$0xff]
    %v1462 = vld [vmem:[%s195 + $0x329] sm:$0xff]
    %v1463 = vld [vmem:[%s195 + $0x331] sm:$0xff]
    %v1464 = vld [vmem:[%s195 + $0x349] sm:$0xff]
    %v1465 = vld [vmem:[%s195 + $0x351] sm:$0xff]
    %v1466 = vld [vmem:[%s195 + $0x369] sm:$0xff]
    %v1467 = vld [vmem:[%s195 + $0x371] sm:$0xff]
    %v1468 = vld [vmem:[%s195 + $0x389] sm:$0xff]
    %v1469 = vld [vmem:[%s195 + $0x391] sm:$0xff]
    %v1470 = vld [vmem:[%s195 + $0x3a9] sm:$0xff]
    %v1471 = vld [vmem:[%s195 + $0x3b1] sm:$0xff]
    %v1472 = vld [vmem:[%s195 + $0x3c9] sm:$0xff]
    %v1473 = vld [vmem:[%s195 + $0x3d1] sm:$0xff]
    %v1474 = vld [vmem:[%s195 + $0x3e9] sm:$0xff]
    %v1475 = vld [vmem:[%s195 + $0x3f1] sm:$0xff]
    %v1476 = vld [vmem:[%s195 + $0x409] sm:$0xff]
    %v1477 = vld [vmem:[%s195 + $0x411] sm:$0xff]
    %v1478 = vld [vmem:[%s195 + $0x429] sm:$0xff]
    %v1479 = vld [vmem:[%s195 + $0x431] sm:$0xff]
    %v1480 = vpack.c.bf16 %v1417, %v1416
    %v1481 = vpack.c.bf16 %v1419, %v1418
    %v1482 = vpack.c.bf16 %v1421, %v1420
    %v1483 = vpack.c.bf16 %v1423, %v1422
    %v1484 = vpack.c.bf16 %v1425, %v1424
    %v1485 = vpack.c.bf16 %v1427, %v1426
    %v1486 = vpack.c.bf16 %v1429, %v1428
    %v1487 = vpack.c.bf16 %v1431, %v1430
    %v1488 = vpack.c.bf16 %v1433, %v1432
    %v1489 = vpack.c.bf16 %v1435, %v1434
    %v1490 = vpack.c.bf16 %v1437, %v1436
    %v1491 = vpack.c.bf16 %v1439, %v1438
    %v1492 = vpack.c.bf16 %v1441, %v1440
    %v1493 = vpack.c.bf16 %v1443, %v1442
    %v1494 = vpack.c.bf16 %v1445, %v1444
    %v1495 = vpack.c.bf16 %v1447, %v1446
    %v1496 = vpack.c.bf16 %v1449, %v1448
    %v1497 = vpack.c.bf16 %v1451, %v1450
    %v1498 = vpack.c.bf16 %v1453, %v1452
    %v1499 = vpack.c.bf16 %v1455, %v1454
    %v1500 = vpack.c.bf16 %v1457, %v1456
    %v1501 = vpack.c.bf16 %v1459, %v1458
    %v1502 = vpack.c.bf16 %v1461, %v1460
    %v1503 = vpack.c.bf16 %v1463, %v1462
    %v1504 = vpack.c.bf16 %v1465, %v1464
    %v1505 = vpack.c.bf16 %v1467, %v1466
    %v1506 = vpack.c.bf16 %v1469, %v1468
    %v1507 = vpack.c.bf16 %v1471, %v1470
    %v1508 = vpack.c.bf16 %v1473, %v1472
    %v1509 = vpack.c.bf16 %v1475, %v1474
    %v1510 = vpack.c.bf16 %v1477, %v1476
    %v1511 = vpack.c.bf16 %v1479, %v1478
    %1544 = vrot.lane.b32.xlu0 %v1480, 20
    %v1545 = vpop.permute.xlu0 %1544
    %1546 = vrot.lane.b32.xlu0 %v1481, 20
    %v1547 = vpop.permute.xlu0 %1546
    %1548 = vrot.lane.b32.xlu0 %v1482, 20
    %v1549 = vpop.permute.xlu0 %1548
    %1550 = vrot.lane.b32.xlu0 %v1483, 20
    %v1551 = vpop.permute.xlu0 %1550
    %1552 = vrot.lane.b32.xlu0 %v1484, 20
    %v1553 = vpop.permute.xlu0 %1552
    %1554 = vrot.lane.b32.xlu0 %v1485, 20
    %v1555 = vpop.permute.xlu0 %1554
    %1556 = vrot.lane.b32.xlu0 %v1486, 20
    %v1557 = vpop.permute.xlu0 %1556
    %1558 = vrot.lane.b32.xlu0 %v1487, 20
    %v1559 = vpop.permute.xlu0 %1558
    %1560 = vrot.lane.b32.xlu0 %v1488, 20
    %v1561 = vpop.permute.xlu0 %1560
    %1562 = vrot.lane.b32.xlu0 %v1489, 20
    %v1563 = vpop.permute.xlu0 %1562
    %1564 = vrot.lane.b32.xlu0 %v1490, 20
    %v1565 = vpop.permute.xlu0 %1564
    %1566 = vrot.lane.b32.xlu0 %v1491, 20
    %v1567 = vpop.permute.xlu0 %1566
    %1568 = vrot.lane.b32.xlu0 %v1492, 20
    %v1569 = vpop.permute.xlu0 %1568
    %1570 = vrot.lane.b32.xlu0 %v1493, 20
    %v1571 = vpop.permute.xlu0 %1570
    %1572 = vrot.lane.b32.xlu0 %v1494, 20
    %v1573 = vpop.permute.xlu0 %1572
    %1574 = vrot.lane.b32.xlu0 %v1495, 20
    %v1575 = vpop.permute.xlu0 %1574
    %1576 = vrot.lane.b32.xlu0 %v1496, 20
    %v1577 = vpop.permute.xlu0 %1576
    %1578 = vrot.lane.b32.xlu0 %v1497, 20
    %v1579 = vpop.permute.xlu0 %1578
    %1580 = vrot.lane.b32.xlu0 %v1498, 20
    %v1581 = vpop.permute.xlu0 %1580
    %1582 = vrot.lane.b32.xlu0 %v1499, 20
    %v1583 = vpop.permute.xlu0 %1582
    %1584 = vrot.lane.b32.xlu0 %v1500, 20
    %v1585 = vpop.permute.xlu0 %1584
    %1586 = vrot.lane.b32.xlu0 %v1501, 20
    %v1587 = vpop.permute.xlu0 %1586
    %1588 = vrot.lane.b32.xlu0 %v1502, 20
    %v1589 = vpop.permute.xlu0 %1588
    %1590 = vrot.lane.b32.xlu0 %v1503, 20
    %v1591 = vpop.permute.xlu0 %1590
    %1592 = vrot.lane.b32.xlu0 %v1504, 20
    %v1593 = vpop.permute.xlu0 %1592
    %1594 = vrot.lane.b32.xlu0 %v1505, 20
    %v1595 = vpop.permute.xlu0 %1594
    %1596 = vrot.lane.b32.xlu0 %v1506, 20
    %v1597 = vpop.permute.xlu0 %1596
    %1598 = vrot.lane.b32.xlu0 %v1507, 20
    %v1599 = vpop.permute.xlu0 %1598
    %1600 = vrot.lane.b32.xlu0 %v1508, 20
    %v1601 = vpop.permute.xlu0 %1600
    %1602 = vrot.lane.b32.xlu0 %v1509, 20
    %v1603 = vpop.permute.xlu0 %1602
    %1604 = vrot.lane.b32.xlu0 %v1510, 20
    %v1605 = vpop.permute.xlu0 %1604
    %1606 = vrot.lane.b32.xlu0 %v1511, 20
    %v1607 = vpop.permute.xlu0 %1606
    %vm1640 = vcmask 195744
    %1641 = vst.msk [vmem:[#allocation5] sm:$0xff] %vm1640, %v1545
    %1642 = vst.msk [vmem:[#allocation5 + $0x10] sm:$0xff] %vm1640, %v1547
    %1643 = vst.msk [vmem:[#allocation5 + $0x20] sm:$0xff] %vm1640, %v1549
    %1644 = vst.msk [vmem:[#allocation5 + $0x30] sm:$0xff] %vm1640, %v1551
    %1645 = vst.msk [vmem:[#allocation5 + $0x40] sm:$0xff] %vm1640, %v1553
    %1646 = vst.msk [vmem:[#allocation5 + $0x50] sm:$0xff] %vm1640, %v1555
    %1647 = vst.msk [vmem:[#allocation5 + $0x60] sm:$0xff] %vm1640, %v1557
    %1648 = vst.msk [vmem:[#allocation5 + $0x70] sm:$0xff] %vm1640, %v1559
    %1649 = vst.msk [vmem:[#allocation5 + $0x80] sm:$0xff] %vm1640, %v1561
    %1650 = vst.msk [vmem:[#allocation5 + $0x90] sm:$0xff] %vm1640, %v1563
    %1651 = vst.msk [vmem:[#allocation5 + $0xa0] sm:$0xff] %vm1640, %v1565
    %1652 = vst.msk [vmem:[#allocation5 + $0xb0] sm:$0xff] %vm1640, %v1567
    %1653 = vst.msk [vmem:[#allocation5 + $0xc0] sm:$0xff] %vm1640, %v1569
    %1654 = vst.msk [vmem:[#allocation5 + $0xd0] sm:$0xff] %vm1640, %v1571
    %1655 = vst.msk [vmem:[#allocation5 + $0xe0] sm:$0xff] %vm1640, %v1573
    %1656 = vst.msk [vmem:[#allocation5 + $0xf0] sm:$0xff] %vm1640, %v1575
    %1657 = vst.msk [vmem:[#allocation5 + $0x100] sm:$0xff] %vm1640, %v1577
    %1658 = vst.msk [vmem:[#allocation5 + $0x110] sm:$0xff] %vm1640, %v1579
    %1659 = vst.msk [vmem:[#allocation5 + $0x120] sm:$0xff] %vm1640, %v1581
    %1660 = vst.msk [vmem:[#allocation5 + $0x130] sm:$0xff] %vm1640, %v1583
    %1661 = vst.msk [vmem:[#allocation5 + $0x140] sm:$0xff] %vm1640, %v1585
    %1662 = vst.msk [vmem:[#allocation5 + $0x150] sm:$0xff] %vm1640, %v1587
    %1663 = vst.msk [vmem:[#allocation5 + $0x160] sm:$0xff] %vm1640, %v1589
    %1664 = vst.msk [vmem:[#allocation5 + $0x170] sm:$0xff] %vm1640, %v1591
    %1665 = vst.msk [vmem:[#allocation5 + $0x180] sm:$0xff] %vm1640, %v1593
    %1666 = vst.msk [vmem:[#allocation5 + $0x190] sm:$0xff] %vm1640, %v1595
    %1667 = vst.msk [vmem:[#allocation5 + $0x1a0] sm:$0xff] %vm1640, %v1597
    %1668 = vst.msk [vmem:[#allocation5 + $0x1b0] sm:$0xff] %vm1640, %v1599
    %1669 = vst.msk [vmem:[#allocation5 + $0x1c0] sm:$0xff] %vm1640, %v1601
    %1670 = vst.msk [vmem:[#allocation5 + $0x1d0] sm:$0xff] %vm1640, %v1603
    %1671 = vst.msk [vmem:[#allocation5 + $0x1e0] sm:$0xff] %vm1640, %v1605
    %1672 = vst.msk [vmem:[#allocation5 + $0x1f0] sm:$0xff] %vm1640, %v1607
    %s1673 = scalar_lea.vmem [#allocation2], 64
    %v1674 = vld [vmem:[%s1673 + $0x7] sm:$0xff]
    %v1675 = vld [vmem:[%s1673 + $0xf] sm:$0xff]
    %v1676 = vld [vmem:[%s1673 + $0x27] sm:$0xff]
    %v1677 = vld [vmem:[%s1673 + $0x2f] sm:$0xff]
    %v1678 = vld [vmem:[%s1673 + $0x47] sm:$0xff]
    %v1679 = vld [vmem:[%s1673 + $0x4f] sm:$0xff]
    %v1680 = vld [vmem:[%s1673 + $0x67] sm:$0xff]
    %v1681 = vld [vmem:[%s1673 + $0x6f] sm:$0xff]
    %v1682 = vld [vmem:[%s1673 + $0x87] sm:$0xff]
    %v1683 = vld [vmem:[%s1673 + $0x8f] sm:$0xff]
    %v1684 = vld [vmem:[%s1673 + $0xa7] sm:$0xff]
    %v1685 = vld [vmem:[%s1673 + $0xaf] sm:$0xff]
    %v1686 = vld [vmem:[%s1673 + $0xc7] sm:$0xff]
    %v1687 = vld [vmem:[%s1673 + $0xcf] sm:$0xff]
    %v1688 = vld [vmem:[%s1673 + $0xe7] sm:$0xff]
    %v1689 = vld [vmem:[%s1673 + $0xef] sm:$0xff]
    %v1690 = vld [vmem:[%s1673 + $0x107] sm:$0xff]
    %v1691 = vld [vmem:[%s1673 + $0x10f] sm:$0xff]
    %v1692 = vld [vmem:[%s1673 + $0x127] sm:$0xff]
    %v1693 = vld [vmem:[%s1673 + $0x12f] sm:$0xff]
    %v1694 = vld [vmem:[%s1673 + $0x147] sm:$0xff]
    %v1695 = vld [vmem:[%s1673 + $0x14f] sm:$0xff]
    %v1696 = vld [vmem:[%s1673 + $0x167] sm:$0xff]
    %v1697 = vld [vmem:[%s1673 + $0x16f] sm:$0xff]
    %v1698 = vld [vmem:[%s1673 + $0x187] sm:$0xff]
    %v1699 = vld [vmem:[%s1673 + $0x18f] sm:$0xff]
    %v1700 = vld [vmem:[%s1673 + $0x1a7] sm:$0xff]
    %v1701 = vld [vmem:[%s1673 + $0x1af] sm:$0xff]
    %v1702 = vld [vmem:[%s1673 + $0x1c7] sm:$0xff]
    %v1703 = vld [vmem:[%s1673 + $0x1cf] sm:$0xff]
    %v1704 = vld [vmem:[%s1673 + $0x1e7] sm:$0xff]
    %v1705 = vld [vmem:[%s1673 + $0x1ef] sm:$0xff]
    %v1706 = vld [vmem:[%s1673 + $0x247] sm:$0xff]
    %v1707 = vld [vmem:[%s1673 + $0x24f] sm:$0xff]
    %v1708 = vld [vmem:[%s1673 + $0x267] sm:$0xff]
    %v1709 = vld [vmem:[%s1673 + $0x26f] sm:$0xff]
    %v1710 = vld [vmem:[%s1673 + $0x287] sm:$0xff]
    %v1711 = vld [vmem:[%s1673 + $0x28f] sm:$0xff]
    %v1712 = vld [vmem:[%s1673 + $0x2a7] sm:$0xff]
    %v1713 = vld [vmem:[%s1673 + $0x2af] sm:$0xff]
    %v1714 = vld [vmem:[%s1673 + $0x2c7] sm:$0xff]
    %v1715 = vld [vmem:[%s1673 + $0x2cf] sm:$0xff]
    %v1716 = vld [vmem:[%s1673 + $0x2e7] sm:$0xff]
    %v1717 = vld [vmem:[%s1673 + $0x2ef] sm:$0xff]
    %v1718 = vld [vmem:[%s1673 + $0x307] sm:$0xff]
    %v1719 = vld [vmem:[%s1673 + $0x30f] sm:$0xff]
    %v1720 = vld [vmem:[%s1673 + $0x327] sm:$0xff]
    %v1721 = vld [vmem:[%s1673 + $0x32f] sm:$0xff]
    %v1722 = vld [vmem:[%s1673 + $0x347] sm:$0xff]
    %v1723 = vld [vmem:[%s1673 + $0x34f] sm:$0xff]
    %v1724 = vld [vmem:[%s1673 + $0x367] sm:$0xff]
    %v1725 = vld [vmem:[%s1673 + $0x36f] sm:$0xff]
    %v1726 = vld [vmem:[%s1673 + $0x387] sm:$0xff]
    %v1727 = vld [vmem:[%s1673 + $0x38f] sm:$0xff]
    %v1728 = vld [vmem:[%s1673 + $0x3a7] sm:$0xff]
    %v1729 = vld [vmem:[%s1673 + $0x3af] sm:$0xff]
    %v1730 = vld [vmem:[%s1673 + $0x3c7] sm:$0xff]
    %v1731 = vld [vmem:[%s1673 + $0x3cf] sm:$0xff]
    %v1732 = vld [vmem:[%s1673 + $0x3e7] sm:$0xff]
    %v1733 = vld [vmem:[%s1673 + $0x3ef] sm:$0xff]
    %v1734 = vld [vmem:[%s1673 + $0x407] sm:$0xff]
    %v1735 = vld [vmem:[%s1673 + $0x40f] sm:$0xff]
    %v1736 = vld [vmem:[%s1673 + $0x427] sm:$0xff]
    %v1737 = vld [vmem:[%s1673 + $0x42f] sm:$0xff]
    %v1738 = vpack.c.bf16 %v1675, %v1674
    %v1739 = vpack.c.bf16 %v1677, %v1676
    %v1740 = vpack.c.bf16 %v1679, %v1678
    %v1741 = vpack.c.bf16 %v1681, %v1680
    %v1742 = vpack.c.bf16 %v1683, %v1682
    %v1743 = vpack.c.bf16 %v1685, %v1684
    %v1744 = vpack.c.bf16 %v1687, %v1686
    %v1745 = vpack.c.bf16 %v1689, %v1688
    %v1746 = vpack.c.bf16 %v1691, %v1690
    %v1747 = vpack.c.bf16 %v1693, %v1692
    %v1748 = vpack.c.bf16 %v1695, %v1694
    %v1749 = vpack.c.bf16 %v1697, %v1696
    %v1750 = vpack.c.bf16 %v1699, %v1698
    %v1751 = vpack.c.bf16 %v1701, %v1700
    %v1752 = vpack.c.bf16 %v1703, %v1702
    %v1753 = vpack.c.bf16 %v1705, %v1704
    %v1754 = vpack.c.bf16 %v1707, %v1706
    %v1755 = vpack.c.bf16 %v1709, %v1708
    %v1756 = vpack.c.bf16 %v1711, %v1710
    %v1757 = vpack.c.bf16 %v1713, %v1712
    %v1758 = vpack.c.bf16 %v1715, %v1714
    %v1759 = vpack.c.bf16 %v1717, %v1716
    %v1760 = vpack.c.bf16 %v1719, %v1718
    %v1761 = vpack.c.bf16 %v1721, %v1720
    %v1762 = vpack.c.bf16 %v1723, %v1722
    %v1763 = vpack.c.bf16 %v1725, %v1724
    %v1764 = vpack.c.bf16 %v1727, %v1726
    %v1765 = vpack.c.bf16 %v1729, %v1728
    %v1766 = vpack.c.bf16 %v1731, %v1730
    %v1767 = vpack.c.bf16 %v1733, %v1732
    %v1768 = vpack.c.bf16 %v1735, %v1734
    %v1769 = vpack.c.bf16 %v1737, %v1736
    %1802 = vrot.lane.b32.xlu0 %v1738, 24
    %v1803 = vpop.permute.xlu0 %1802
    %1804 = vrot.lane.b32.xlu0 %v1739, 24
    %v1805 = vpop.permute.xlu0 %1804
    %1806 = vrot.lane.b32.xlu0 %v1740, 24
    %v1807 = vpop.permute.xlu0 %1806
    %1808 = vrot.lane.b32.xlu0 %v1741, 24
    %v1809 = vpop.permute.xlu0 %1808
    %1810 = vrot.lane.b32.xlu0 %v1742, 24
    %v1811 = vpop.permute.xlu0 %1810
    %1812 = vrot.lane.b32.xlu0 %v1743, 24
    %v1813 = vpop.permute.xlu0 %1812
    %1814 = vrot.lane.b32.xlu0 %v1744, 24
    %v1815 = vpop.permute.xlu0 %1814
    %1816 = vrot.lane.b32.xlu0 %v1745, 24
    %v1817 = vpop.permute.xlu0 %1816
    %1818 = vrot.lane.b32.xlu0 %v1746, 24
    %v1819 = vpop.permute.xlu0 %1818
    %1820 = vrot.lane.b32.xlu0 %v1747, 24
    %v1821 = vpop.permute.xlu0 %1820
    %1822 = vrot.lane.b32.xlu0 %v1748, 24
    %v1823 = vpop.permute.xlu0 %1822
    %1824 = vrot.lane.b32.xlu0 %v1749, 24
    %v1825 = vpop.permute.xlu0 %1824
    %1826 = vrot.lane.b32.xlu0 %v1750, 24
    %v1827 = vpop.permute.xlu0 %1826
    %1828 = vrot.lane.b32.xlu0 %v1751, 24
    %v1829 = vpop.permute.xlu0 %1828
    %1830 = vrot.lane.b32.xlu0 %v1752, 24
    %v1831 = vpop.permute.xlu0 %1830
    %1832 = vrot.lane.b32.xlu0 %v1753, 24
    %v1833 = vpop.permute.xlu0 %1832
    %1834 = vrot.lane.b32.xlu0 %v1754, 24
    %v1835 = vpop.permute.xlu0 %1834
    %1836 = vrot.lane.b32.xlu0 %v1755, 24
    %v1837 = vpop.permute.xlu0 %1836
    %1838 = vrot.lane.b32.xlu0 %v1756, 24
    %v1839 = vpop.permute.xlu0 %1838
    %1840 = vrot.lane.b32.xlu0 %v1757, 24
    %v1841 = vpop.permute.xlu0 %1840
    %1842 = vrot.lane.b32.xlu0 %v1758, 24
    %v1843 = vpop.permute.xlu0 %1842
    %1844 = vrot.lane.b32.xlu0 %v1759, 24
    %v1845 = vpop.permute.xlu0 %1844
    %1846 = vrot.lane.b32.xlu0 %v1760, 24
    %v1847 = vpop.permute.xlu0 %1846
    %1848 = vrot.lane.b32.xlu0 %v1761, 24
    %v1849 = vpop.permute.xlu0 %1848
    %1850 = vrot.lane.b32.xlu0 %v1762, 24
    %v1851 = vpop.permute.xlu0 %1850
    %1852 = vrot.lane.b32.xlu0 %v1763, 24
    %v1853 = vpop.permute.xlu0 %1852
    %1854 = vrot.lane.b32.xlu0 %v1764, 24
    %v1855 = vpop.permute.xlu0 %1854
    %1856 = vrot.lane.b32.xlu0 %v1765, 24
    %v1857 = vpop.permute.xlu0 %1856
    %1858 = vrot.lane.b32.xlu0 %v1766, 24
    %v1859 = vpop.permute.xlu0 %1858
    %1860 = vrot.lane.b32.xlu0 %v1767, 24
    %v1861 = vpop.permute.xlu0 %1860
    %1862 = vrot.lane.b32.xlu0 %v1768, 24
    %v1863 = vpop.permute.xlu0 %1862
    %1864 = vrot.lane.b32.xlu0 %v1769, 24
    %v1865 = vpop.permute.xlu0 %1864
    %vm1898 = vcmask 228544
    %1899 = vst.msk [vmem:[#allocation5] sm:$0xff] %vm1898, %v1803
    %1900 = vst.msk [vmem:[#allocation5 + $0x10] sm:$0xff] %vm1898, %v1805
    %1901 = vst.msk [vmem:[#allocation5 + $0x20] sm:$0xff] %vm1898, %v1807
    %1902 = vst.msk [vmem:[#allocation5 + $0x30] sm:$0xff] %vm1898, %v1809
    %1903 = vst.msk [vmem:[#allocation5 + $0x40] sm:$0xff] %vm1898, %v1811
    %1904 = vst.msk [vmem:[#allocation5 + $0x50] sm:$0xff] %vm1898, %v1813
    %1905 = vst.msk [vmem:[#allocation5 + $0x60] sm:$0xff] %vm1898, %v1815
    %1906 = vst.msk [vmem:[#allocation5 + $0x70] sm:$0xff] %vm1898, %v1817
    %1907 = vst.msk [vmem:[#allocation5 + $0x80] sm:$0xff] %vm1898, %v1819
    %1908 = vst.msk [vmem:[#allocation5 + $0x90] sm:$0xff] %vm1898, %v1821
    %1909 = vst.msk [vmem:[#allocation5 + $0xa0] sm:$0xff] %vm1898, %v1823
    %1910 = vst.msk [vmem:[#allocation5 + $0xb0] sm:$0xff] %vm1898, %v1825
    %1911 = vst.msk [vmem:[#allocation5 + $0xc0] sm:$0xff] %vm1898, %v1827
    %1912 = vst.msk [vmem:[#allocation5 + $0xd0] sm:$0xff] %vm1898, %v1829
    %1913 = vst.msk [vmem:[#allocation5 + $0xe0] sm:$0xff] %vm1898, %v1831
    %1914 = vst.msk [vmem:[#allocation5 + $0xf0] sm:$0xff] %vm1898, %v1833
    %1915 = vst.msk [vmem:[#allocation5 + $0x100] sm:$0xff] %vm1898, %v1835
    %1916 = vst.msk [vmem:[#allocation5 + $0x110] sm:$0xff] %vm1898, %v1837
    %1917 = vst.msk [vmem:[#allocation5 + $0x120] sm:$0xff] %vm1898, %v1839
    %1918 = vst.msk [vmem:[#allocation5 + $0x130] sm:$0xff] %vm1898, %v1841
    %1919 = vst.msk [vmem:[#allocation5 + $0x140] sm:$0xff] %vm1898, %v1843
    %1920 = vst.msk [vmem:[#allocation5 + $0x150] sm:$0xff] %vm1898, %v1845
    %1921 = vst.msk [vmem:[#allocation5 + $0x160] sm:$0xff] %vm1898, %v1847
    %1922 = vst.msk [vmem:[#allocation5 + $0x170] sm:$0xff] %vm1898, %v1849
    %1923 = vst.msk [vmem:[#allocation5 + $0x180] sm:$0xff] %vm1898, %v1851
    %1924 = vst.msk [vmem:[#allocation5 + $0x190] sm:$0xff] %vm1898, %v1853
    %1925 = vst.msk [vmem:[#allocation5 + $0x1a0] sm:$0xff] %vm1898, %v1855
    %1926 = vst.msk [vmem:[#allocation5 + $0x1b0] sm:$0xff] %vm1898, %v1857
    %1927 = vst.msk [vmem:[#allocation5 + $0x1c0] sm:$0xff] %vm1898, %v1859
    %1928 = vst.msk [vmem:[#allocation5 + $0x1d0] sm:$0xff] %vm1898, %v1861
    %1929 = vst.msk [vmem:[#allocation5 + $0x1e0] sm:$0xff] %vm1898, %v1863
    %1930 = vst.msk [vmem:[#allocation5 + $0x1f0] sm:$0xff] %vm1898, %v1865
    %v1931 = vld [vmem:[%s1673 + $0x8] sm:$0xff]
    %v1932 = vld [vmem:[%s1673 + $0x10] sm:$0xff]
    %v1933 = vld [vmem:[%s1673 + $0x28] sm:$0xff]
    %v1934 = vld [vmem:[%s1673 + $0x30] sm:$0xff]
    %v1935 = vld [vmem:[%s1673 + $0x48] sm:$0xff]
    %v1936 = vld [vmem:[%s1673 + $0x50] sm:$0xff]
    %v1937 = vld [vmem:[%s1673 + $0x68] sm:$0xff]
    %v1938 = vld [vmem:[%s1673 + $0x70] sm:$0xff]
    %v1939 = vld [vmem:[%s1673 + $0x88] sm:$0xff]
    %v1940 = vld [vmem:[%s1673 + $0x90] sm:$0xff]
    %v1941 = vld [vmem:[%s1673 + $0xa8] sm:$0xff]
    %v1942 = vld [vmem:[%s1673 + $0xb0] sm:$0xff]
    %v1943 = vld [vmem:[%s1673 + $0xc8] sm:$0xff]
    %v1944 = vld [vmem:[%s1673 + $0xd0] sm:$0xff]
    %v1945 = vld [vmem:[%s1673 + $0xe8] sm:$0xff]
    %v1946 = vld [vmem:[%s1673 + $0xf0] sm:$0xff]
    %v1947 = vld [vmem:[%s1673 + $0x108] sm:$0xff]
    %v1948 = vld [vmem:[%s1673 + $0x110] sm:$0xff]
    %v1949 = vld [vmem:[%s1673 + $0x128] sm:$0xff]
    %v1950 = vld [vmem:[%s1673 + $0x130] sm:$0xff]
    %v1951 = vld [vmem:[%s1673 + $0x148] sm:$0xff]
    %v1952 = vld [vmem:[%s1673 + $0x150] sm:$0xff]
    %v1953 = vld [vmem:[%s1673 + $0x168] sm:$0xff]
    %v1954 = vld [vmem:[%s1673 + $0x170] sm:$0xff]
    %v1955 = vld [vmem:[%s1673 + $0x188] sm:$0xff]
    %v1956 = vld [vmem:[%s1673 + $0x190] sm:$0xff]
    %v1957 = vld [vmem:[%s1673 + $0x1a8] sm:$0xff]
    %v1958 = vld [vmem:[%s1673 + $0x1b0] sm:$0xff]
    %v1959 = vld [vmem:[%s1673 + $0x1c8] sm:$0xff]
    %v1960 = vld [vmem:[%s1673 + $0x1d0] sm:$0xff]
    %v1961 = vld [vmem:[%s1673 + $0x1e8] sm:$0xff]
    %v1962 = vld [vmem:[%s1673 + $0x1f0] sm:$0xff]
    %v1963 = vld [vmem:[%s1673 + $0x248] sm:$0xff]
    %v1964 = vld [vmem:[%s1673 + $0x250] sm:$0xff]
    %v1965 = vld [vmem:[%s1673 + $0x268] sm:$0xff]
    %v1966 = vld [vmem:[%s1673 + $0x270] sm:$0xff]
    %v1967 = vld [vmem:[%s1673 + $0x288] sm:$0xff]
    %v1968 = vld [vmem:[%s1673 + $0x290] sm:$0xff]
    %v1969 = vld [vmem:[%s1673 + $0x2a8] sm:$0xff]
    %v1970 = vld [vmem:[%s1673 + $0x2b0] sm:$0xff]
    %v1971 = vld [vmem:[%s1673 + $0x2c8] sm:$0xff]
    %v1972 = vld [vmem:[%s1673 + $0x2d0] sm:$0xff]
    %v1973 = vld [vmem:[%s1673 + $0x2e8] sm:$0xff]
    %v1974 = vld [vmem:[%s1673 + $0x2f0] sm:$0xff]
    %v1975 = vld [vmem:[%s1673 + $0x308] sm:$0xff]
    %v1976 = vld [vmem:[%s1673 + $0x310] sm:$0xff]
    %v1977 = vld [vmem:[%s1673 + $0x328] sm:$0xff]
    %v1978 = vld [vmem:[%s1673 + $0x330] sm:$0xff]
    %v1979 = vld [vmem:[%s1673 + $0x348] sm:$0xff]
    %v1980 = vld [vmem:[%s1673 + $0x350] sm:$0xff]
    %v1981 = vld [vmem:[%s1673 + $0x368] sm:$0xff]
    %v1982 = vld [vmem:[%s1673 + $0x370] sm:$0xff]
    %v1983 = vld [vmem:[%s1673 + $0x388] sm:$0xff]
    %v1984 = vld [vmem:[%s1673 + $0x390] sm:$0xff]
    %v1985 = vld [vmem:[%s1673 + $0x3a8] sm:$0xff]
    %v1986 = vld [vmem:[%s1673 + $0x3b0] sm:$0xff]
    %v1987 = vld [vmem:[%s1673 + $0x3c8] sm:$0xff]
    %v1988 = vld [vmem:[%s1673 + $0x3d0] sm:$0xff]
    %v1989 = vld [vmem:[%s1673 + $0x3e8] sm:$0xff]
    %v1990 = vld [vmem:[%s1673 + $0x3f0] sm:$0xff]
    %v1991 = vld [vmem:[%s1673 + $0x408] sm:$0xff]
    %v1992 = vld [vmem:[%s1673 + $0x410] sm:$0xff]
    %v1993 = vld [vmem:[%s1673 + $0x428] sm:$0xff]
    %v1994 = vld [vmem:[%s1673 + $0x430] sm:$0xff]
    %v1995 = vpack.c.bf16 %v1932, %v1931
    %v1996 = vpack.c.bf16 %v1934, %v1933
    %v1997 = vpack.c.bf16 %v1936, %v1935
    %v1998 = vpack.c.bf16 %v1938, %v1937
    %v1999 = vpack.c.bf16 %v1940, %v1939
    %v2000 = vpack.c.bf16 %v1942, %v1941
    %v2001 = vpack.c.bf16 %v1944, %v1943
    %v2002 = vpack.c.bf16 %v1946, %v1945
    %v2003 = vpack.c.bf16 %v1948, %v1947
    %v2004 = vpack.c.bf16 %v1950, %v1949
    %v2005 = vpack.c.bf16 %v1952, %v1951
    %v2006 = vpack.c.bf16 %v1954, %v1953
    %v2007 = vpack.c.bf16 %v1956, %v1955
    %v2008 = vpack.c.bf16 %v1958, %v1957
    %v2009 = vpack.c.bf16 %v1960, %v1959
    %v2010 = vpack.c.bf16 %v1962, %v1961
    %v2011 = vpack.c.bf16 %v1964, %v1963
    %v2012 = vpack.c.bf16 %v1966, %v1965
    %v2013 = vpack.c.bf16 %v1968, %v1967
    %v2014 = vpack.c.bf16 %v1970, %v1969
    %v2015 = vpack.c.bf16 %v1972, %v1971
    %v2016 = vpack.c.bf16 %v1974, %v1973
    %v2017 = vpack.c.bf16 %v1976, %v1975
    %v2018 = vpack.c.bf16 %v1978, %v1977
    %v2019 = vpack.c.bf16 %v1980, %v1979
    %v2020 = vpack.c.bf16 %v1982, %v1981
    %v2021 = vpack.c.bf16 %v1984, %v1983
    %v2022 = vpack.c.bf16 %v1986, %v1985
    %v2023 = vpack.c.bf16 %v1988, %v1987
    %v2024 = vpack.c.bf16 %v1990, %v1989
    %v2025 = vpack.c.bf16 %v1992, %v1991
    %v2026 = vpack.c.bf16 %v1994, %v1993
    %2059 = vrot.lane.b32.xlu0 %v1995, 28
    %v2060 = vpop.permute.xlu0 %2059
    %2061 = vrot.lane.b32.xlu0 %v1996, 28
    %v2062 = vpop.permute.xlu0 %2061
    %2063 = vrot.lane.b32.xlu0 %v1997, 28
    %v2064 = vpop.permute.xlu0 %2063
    %2065 = vrot.lane.b32.xlu0 %v1998, 28
    %v2066 = vpop.permute.xlu0 %2065
    %2067 = vrot.lane.b32.xlu0 %v1999, 28
    %v2068 = vpop.permute.xlu0 %2067
    %2069 = vrot.lane.b32.xlu0 %v2000, 28
    %v2070 = vpop.permute.xlu0 %2069
    %2071 = vrot.lane.b32.xlu0 %v2001, 28
    %v2072 = vpop.permute.xlu0 %2071
    %2073 = vrot.lane.b32.xlu0 %v2002, 28
    %v2074 = vpop.permute.xlu0 %2073
    %2075 = vrot.lane.b32.xlu0 %v2003, 28
    %v2076 = vpop.permute.xlu0 %2075
    %2077 = vrot.lane.b32.xlu0 %v2004, 28
    %v2078 = vpop.permute.xlu0 %2077
    %2079 = vrot.lane.b32.xlu0 %v2005, 28
    %v2080 = vpop.permute.xlu0 %2079
    %2081 = vrot.lane.b32.xlu0 %v2006, 28
    %v2082 = vpop.permute.xlu0 %2081
    %2083 = vrot.lane.b32.xlu0 %v2007, 28
    %v2084 = vpop.permute.xlu0 %2083
    %2085 = vrot.lane.b32.xlu0 %v2008, 28
    %v2086 = vpop.permute.xlu0 %2085
    %2087 = vrot.lane.b32.xlu0 %v2009, 28
    %v2088 = vpop.permute.xlu0 %2087
    %2089 = vrot.lane.b32.xlu0 %v2010, 28
    %v2090 = vpop.permute.xlu0 %2089
    %2091 = vrot.lane.b32.xlu0 %v2011, 28
    %v2092 = vpop.permute.xlu0 %2091
    %2093 = vrot.lane.b32.xlu0 %v2012, 28
    %v2094 = vpop.permute.xlu0 %2093
    %2095 = vrot.lane.b32.xlu0 %v2013, 28
    %v2096 = vpop.permute.xlu0 %2095
    %2097 = vrot.lane.b32.xlu0 %v2014, 28
    %v2098 = vpop.permute.xlu0 %2097
    %2099 = vrot.lane.b32.xlu0 %v2015, 28
    %v2100 = vpop.permute.xlu0 %2099
    %2101 = vrot.lane.b32.xlu0 %v2016, 28
    %v2102 = vpop.permute.xlu0 %2101
    %2103 = vrot.lane.b32.xlu0 %v2017, 28
    %v2104 = vpop.permute.xlu0 %2103
    %2105 = vrot.lane.b32.xlu0 %v2018, 28
    %v2106 = vpop.permute.xlu0 %2105
    %2107 = vrot.lane.b32.xlu0 %v2019, 28
    %v2108 = vpop.permute.xlu0 %2107
    %2109 = vrot.lane.b32.xlu0 %v2020, 28
    %v2110 = vpop.permute.xlu0 %2109
    %2111 = vrot.lane.b32.xlu0 %v2021, 28
    %v2112 = vpop.permute.xlu0 %2111
    %2113 = vrot.lane.b32.xlu0 %v2022, 28
    %v2114 = vpop.permute.xlu0 %2113
    %2115 = vrot.lane.b32.xlu0 %v2023, 28
    %v2116 = vpop.permute.xlu0 %2115
    %2117 = vrot.lane.b32.xlu0 %v2024, 28
    %v2118 = vpop.permute.xlu0 %2117
    %2119 = vrot.lane.b32.xlu0 %v2025, 28
    %v2120 = vpop.permute.xlu0 %2119
    %2121 = vrot.lane.b32.xlu0 %v2026, 28
    %v2122 = vpop.permute.xlu0 %2121
    %vm2155 = vcmask 261344
    %2156 = vst.msk [vmem:[#allocation5] sm:$0xff] %vm2155, %v2060
    %2157 = vst.msk [vmem:[#allocation5 + $0x10] sm:$0xff] %vm2155, %v2062
    %2158 = vst.msk [vmem:[#allocation5 + $0x20] sm:$0xff] %vm2155, %v2064
    %2159 = vst.msk [vmem:[#allocation5 + $0x30] sm:$0xff] %vm2155, %v2066
    %2160 = vst.msk [vmem:[#allocation5 + $0x40] sm:$0xff] %vm2155, %v2068
    %2161 = vst.msk [vmem:[#allocation5 + $0x50] sm:$0xff] %vm2155, %v2070
    %2162 = vst.msk [vmem:[#allocation5 + $0x60] sm:$0xff] %vm2155, %v2072
    %2163 = vst.msk [vmem:[#allocation5 + $0x70] sm:$0xff] %vm2155, %v2074
    %2164 = vst.msk [vmem:[#allocation5 + $0x80] sm:$0xff] %vm2155, %v2076
    %2165 = vst.msk [vmem:[#allocation5 + $0x90] sm:$0xff] %vm2155, %v2078
    %2166 = vst.msk [vmem:[#allocation5 + $0xa0] sm:$0xff] %vm2155, %v2080
    %2167 = vst.msk [vmem:[#allocation5 + $0xb0] sm:$0xff] %vm2155, %v2082
    %2168 = vst.msk [vmem:[#allocation5 + $0xc0] sm:$0xff] %vm2155, %v2084
    %2169 = vst.msk [vmem:[#allocation5 + $0xd0] sm:$0xff] %vm2155, %v2086
    %2170 = vst.msk [vmem:[#allocation5 + $0xe0] sm:$0xff] %vm2155, %v2088
    %2171 = vst.msk [vmem:[#allocation5 + $0xf0] sm:$0xff] %vm2155, %v2090
    %2172 = vst.msk [vmem:[#allocation5 + $0x100] sm:$0xff] %vm2155, %v2092
    %2173 = vst.msk [vmem:[#allocation5 + $0x110] sm:$0xff] %vm2155, %v2094
    %2174 = vst.msk [vmem:[#allocation5 + $0x120] sm:$0xff] %vm2155, %v2096
    %2175 = vst.msk [vmem:[#allocation5 + $0x130] sm:$0xff] %vm2155, %v2098
    %2176 = vst.msk [vmem:[#allocation5 + $0x140] sm:$0xff] %vm2155, %v2100
    %2177 = vst.msk [vmem:[#allocation5 + $0x150] sm:$0xff] %vm2155, %v2102
    %2178 = vst.msk [vmem:[#allocation5 + $0x160] sm:$0xff] %vm2155, %v2104
    %2179 = vst.msk [vmem:[#allocation5 + $0x170] sm:$0xff] %vm2155, %v2106
    %2180 = vst.msk [vmem:[#allocation5 + $0x180] sm:$0xff] %vm2155, %v2108
    %2181 = vst.msk [vmem:[#allocation5 + $0x190] sm:$0xff] %vm2155, %v2110
    %2182 = vst.msk [vmem:[#allocation5 + $0x1a0] sm:$0xff] %vm2155, %v2112
    %2183 = vst.msk [vmem:[#allocation5 + $0x1b0] sm:$0xff] %vm2155, %v2114
    %2184 = vst.msk [vmem:[#allocation5 + $0x1c0] sm:$0xff] %vm2155, %v2116
    %2185 = vst.msk [vmem:[#allocation5 + $0x1d0] sm:$0xff] %vm2155, %v2118
    %2186 = vst.msk [vmem:[#allocation5 + $0x1e0] sm:$0xff] %vm2155, %v2120
    %2187 = vst.msk [vmem:[#allocation5 + $0x1f0] sm:$0xff] %vm2155, %v2122
    %v2188 = vld [vmem:[%s1673 + $0x9] sm:$0xff]
    %v2189 = vld [vmem:[%s1673 + $0x11] sm:$0xff]
    %v2190 = vld [vmem:[%s1673 + $0x29] sm:$0xff]
    %v2191 = vld [vmem:[%s1673 + $0x31] sm:$0xff]
    %v2192 = vld [vmem:[%s1673 + $0x49] sm:$0xff]
    %v2193 = vld [vmem:[%s1673 + $0x51] sm:$0xff]
    %v2194 = vld [vmem:[%s1673 + $0x69] sm:$0xff]
    %v2195 = vld [vmem:[%s1673 + $0x71] sm:$0xff]
    %v2196 = vld [vmem:[%s1673 + $0x89] sm:$0xff]
    %v2197 = vld [vmem:[%s1673 + $0x91] sm:$0xff]
    %v2198 = vld [vmem:[%s1673 + $0xa9] sm:$0xff]
    %v2199 = vld [vmem:[%s1673 + $0xb1] sm:$0xff]
    %v2200 = vld [vmem:[%s1673 + $0xc9] sm:$0xff]
    %v2201 = vld [vmem:[%s1673 + $0xd1] sm:$0xff]
    %v2202 = vld [vmem:[%s1673 + $0xe9] sm:$0xff]
    %v2203 = vld [vmem:[%s1673 + $0xf1] sm:$0xff]
    %v2204 = vld [vmem:[%s1673 + $0x109] sm:$0xff]
    %v2205 = vld [vmem:[%s1673 + $0x111] sm:$0xff]
    %v2206 = vld [vmem:[%s1673 + $0x129] sm:$0xff]
    %v2207 = vld [vmem:[%s1673 + $0x131] sm:$0xff]
    %v2208 = vld [vmem:[%s1673 + $0x149] sm:$0xff]
    %v2209 = vld [vmem:[%s1673 + $0x151] sm:$0xff]
    %v2210 = vld [vmem:[%s1673 + $0x169] sm:$0xff]
    %v2211 = vld [vmem:[%s1673 + $0x171] sm:$0xff]
    %v2212 = vld [vmem:[%s1673 + $0x189] sm:$0xff]
    %v2213 = vld [vmem:[%s1673 + $0x191] sm:$0xff]
    %v2214 = vld [vmem:[%s1673 + $0x1a9] sm:$0xff]
    %v2215 = vld [vmem:[%s1673 + $0x1b1] sm:$0xff]
    %v2216 = vld [vmem:[%s1673 + $0x1c9] sm:$0xff]
    %v2217 = vld [vmem:[%s1673 + $0x1d1] sm:$0xff]
    %v2218 = vld [vmem:[%s1673 + $0x1e9] sm:$0xff]
    %v2219 = vld [vmem:[%s1673 + $0x1f1] sm:$0xff]
    %v2220 = vld [vmem:[%s1673 + $0x249] sm:$0xff]
    %v2221 = vld [vmem:[%s1673 + $0x251] sm:$0xff]
    %v2222 = vld [vmem:[%s1673 + $0x269] sm:$0xff]
    %v2223 = vld [vmem:[%s1673 + $0x271] sm:$0xff]
    %v2224 = vld [vmem:[%s1673 + $0x289] sm:$0xff]
    %v2225 = vld [vmem:[%s1673 + $0x291] sm:$0xff]
    %v2226 = vld [vmem:[%s1673 + $0x2a9] sm:$0xff]
    %v2227 = vld [vmem:[%s1673 + $0x2b1] sm:$0xff]
    %v2228 = vld [vmem:[%s1673 + $0x2c9] sm:$0xff]
    %v2229 = vld [vmem:[%s1673 + $0x2d1] sm:$0xff]
    %v2230 = vld [vmem:[%s1673 + $0x2e9] sm:$0xff]
    %v2231 = vld [vmem:[%s1673 + $0x2f1] sm:$0xff]
    %v2232 = vld [vmem:[%s1673 + $0x309] sm:$0xff]
    %v2233 = vld [vmem:[%s1673 + $0x311] sm:$0xff]
    %v2234 = vld [vmem:[%s1673 + $0x329] sm:$0xff]
    %v2235 = vld [vmem:[%s1673 + $0x331] sm:$0xff]
    %v2236 = vld [vmem:[%s1673 + $0x349] sm:$0xff]
    %v2237 = vld [vmem:[%s1673 + $0x351] sm:$0xff]
    %v2238 = vld [vmem:[%s1673 + $0x369] sm:$0xff]
    %v2239 = vld [vmem:[%s1673 + $0x371] sm:$0xff]
    %v2240 = vld [vmem:[%s1673 + $0x389] sm:$0xff]
    %v2241 = vld [vmem:[%s1673 + $0x391] sm:$0xff]
    %v2242 = vld [vmem:[%s1673 + $0x3a9] sm:$0xff]
    %v2243 = vld [vmem:[%s1673 + $0x3b1] sm:$0xff]
    %v2244 = vld [vmem:[%s1673 + $0x3c9] sm:$0xff]
    %v2245 = vld [vmem:[%s1673 + $0x3d1] sm:$0xff]
    %v2246 = vld [vmem:[%s1673 + $0x3e9] sm:$0xff]
    %v2247 = vld [vmem:[%s1673 + $0x3f1] sm:$0xff]
    %v2248 = vld [vmem:[%s1673 + $0x409] sm:$0xff]
    %v2249 = vld [vmem:[%s1673 + $0x411] sm:$0xff]
    %v2250 = vld [vmem:[%s1673 + $0x429] sm:$0xff]
    %v2251 = vld [vmem:[%s1673 + $0x431] sm:$0xff]
    %v2252 = vpack.c.bf16 %v2189, %v2188
    %v2253 = vpack.c.bf16 %v2191, %v2190
    %v2254 = vpack.c.bf16 %v2193, %v2192
    %v2255 = vpack.c.bf16 %v2195, %v2194
    %v2256 = vpack.c.bf16 %v2197, %v2196
    %v2257 = vpack.c.bf16 %v2199, %v2198
    %v2258 = vpack.c.bf16 %v2201, %v2200
    %v2259 = vpack.c.bf16 %v2203, %v2202
    %v2260 = vpack.c.bf16 %v2205, %v2204
    %v2261 = vpack.c.bf16 %v2207, %v2206
    %v2262 = vpack.c.bf16 %v2209, %v2208
    %v2263 = vpack.c.bf16 %v2211, %v2210
    %v2264 = vpack.c.bf16 %v2213, %v2212
    %v2265 = vpack.c.bf16 %v2215, %v2214
    %v2266 = vpack.c.bf16 %v2217, %v2216
    %v2267 = vpack.c.bf16 %v2219, %v2218
    %v2268 = vpack.c.bf16 %v2221, %v2220
    %v2269 = vpack.c.bf16 %v2223, %v2222
    %v2270 = vpack.c.bf16 %v2225, %v2224
    %v2271 = vpack.c.bf16 %v2227, %v2226
    %v2272 = vpack.c.bf16 %v2229, %v2228
    %v2273 = vpack.c.bf16 %v2231, %v2230
    %v2274 = vpack.c.bf16 %v2233, %v2232
    %v2275 = vpack.c.bf16 %v2235, %v2234
    %v2276 = vpack.c.bf16 %v2237, %v2236
    %v2277 = vpack.c.bf16 %v2239, %v2238
    %v2278 = vpack.c.bf16 %v2241, %v2240
    %v2279 = vpack.c.bf16 %v2243, %v2242
    %v2280 = vpack.c.bf16 %v2245, %v2244
    %v2281 = vpack.c.bf16 %v2247, %v2246
    %v2282 = vpack.c.bf16 %v2249, %v2248
    %v2283 = vpack.c.bf16 %v2251, %v2250
    %2316 = vrot.lane.b32.xlu0 %v2252, 32
    %v2317 = vpop.permute.xlu0 %2316
    %2318 = vrot.lane.b32.xlu0 %v2253, 32
    %v2319 = vpop.permute.xlu0 %2318
    %2320 = vrot.lane.b32.xlu0 %v2254, 32
    %v2321 = vpop.permute.xlu0 %2320
    %2322 = vrot.lane.b32.xlu0 %v2255, 32
    %v2323 = vpop.permute.xlu0 %2322
    %2324 = vrot.lane.b32.xlu0 %v2256, 32
    %v2325 = vpop.permute.xlu0 %2324
    %2326 = vrot.lane.b32.xlu0 %v2257, 32
    %v2327 = vpop.permute.xlu0 %2326
    %2328 = vrot.lane.b32.xlu0 %v2258, 32
    %v2329 = vpop.permute.xlu0 %2328
    %2330 = vrot.lane.b32.xlu0 %v2259, 32
    %v2331 = vpop.permute.xlu0 %2330
    %2332 = vrot.lane.b32.xlu0 %v2260, 32
    %v2333 = vpop.permute.xlu0 %2332
    %2334 = vrot.lane.b32.xlu0 %v2261, 32
    %v2335 = vpop.permute.xlu0 %2334
    %2336 = vrot.lane.b32.xlu0 %v2262, 32
    %v2337 = vpop.permute.xlu0 %2336
    %2338 = vrot.lane.b32.xlu0 %v2263, 32
    %v2339 = vpop.permute.xlu0 %2338
    %2340 = vrot.lane.b32.xlu0 %v2264, 32
    %v2341 = vpop.permute.xlu0 %2340
    %2342 = vrot.lane.b32.xlu0 %v2265, 32
    %v2343 = vpop.permute.xlu0 %2342
    %2344 = vrot.lane.b32.xlu0 %v2266, 32
    %v2345 = vpop.permute.xlu0 %2344
    %2346 = vrot.lane.b32.xlu0 %v2267, 32
    %v2347 = vpop.permute.xlu0 %2346
    %2348 = vrot.lane.b32.xlu0 %v2268, 32
    %v2349 = vpop.permute.xlu0 %2348
    %2350 = vrot.lane.b32.xlu0 %v2269, 32
    %v2351 = vpop.permute.xlu0 %2350
    %2352 = vrot.lane.b32.xlu0 %v2270, 32
    %v2353 = vpop.permute.xlu0 %2352
    %2354 = vrot.lane.b32.xlu0 %v2271, 32
    %v2355 = vpop.permute.xlu0 %2354
    %2356 = vrot.lane.b32.xlu0 %v2272, 32
    %v2357 = vpop.permute.xlu0 %2356
    %2358 = vrot.lane.b32.xlu0 %v2273, 32
    %v2359 = vpop.permute.xlu0 %2358
    %2360 = vrot.lane.b32.xlu0 %v2274, 32
    %v2361 = vpop.permute.xlu0 %2360
    %2362 = vrot.lane.b32.xlu0 %v2275, 32
    %v2363 = vpop.permute.xlu0 %2362
    %2364 = vrot.lane.b32.xlu0 %v2276, 32
    %v2365 = vpop.permute.xlu0 %2364
    %2366 = vrot.lane.b32.xlu0 %v2277, 32
    %v2367 = vpop.permute.xlu0 %2366
    %2368 = vrot.lane.b32.xlu0 %v2278, 32
    %v2369 = vpop.permute.xlu0 %2368
    %2370 = vrot.lane.b32.xlu0 %v2279, 32
    %v2371 = vpop.permute.xlu0 %2370
    %2372 = vrot.lane.b32.xlu0 %v2280, 32
    %v2373 = vpop.permute.xlu0 %2372
    %2374 = vrot.lane.b32.xlu0 %v2281, 32
    %v2375 = vpop.permute.xlu0 %2374
    %2376 = vrot.lane.b32.xlu0 %v2282, 32
    %v2377 = vpop.permute.xlu0 %2376
    %2378 = vrot.lane.b32.xlu0 %v2283, 32
    %v2379 = vpop.permute.xlu0 %2378
    %vm2412 = vcmask 294144
    %2413 = vst.msk [vmem:[#allocation5] sm:$0xff] %vm2412, %v2317
    %2414 = vst.msk [vmem:[#allocation5 + $0x10] sm:$0xff] %vm2412, %v2319
    %2415 = vst.msk [vmem:[#allocation5 + $0x20] sm:$0xff] %vm2412, %v2321
    %2416 = vst.msk [vmem:[#allocation5 + $0x30] sm:$0xff] %vm2412, %v2323
    %2417 = vst.msk [vmem:[#allocation5 + $0x40] sm:$0xff] %vm2412, %v2325
    %2418 = vst.msk [vmem:[#allocation5 + $0x50] sm:$0xff] %vm2412, %v2327
    %2419 = vst.msk [vmem:[#allocation5 + $0x60] sm:$0xff] %vm2412, %v2329
    %2420 = vst.msk [vmem:[#allocation5 + $0x70] sm:$0xff] %vm2412, %v2331
    %2421 = vst.msk [vmem:[#allocation5 + $0x80] sm:$0xff] %vm2412, %v2333
    %2422 = vst.msk [vmem:[#allocation5 + $0x90] sm:$0xff] %vm2412, %v2335
    %2423 = vst.msk [vmem:[#allocation5 + $0xa0] sm:$0xff] %vm2412, %v2337
    %2424 = vst.msk [vmem:[#allocation5 + $0xb0] sm:$0xff] %vm2412, %v2339
    %2425 = vst.msk [vmem:[#allocation5 + $0xc0] sm:$0xff] %vm2412, %v2341
    %2426 = vst.msk [vmem:[#allocation5 + $0xd0] sm:$0xff] %vm2412, %v2343
    %2427 = vst.msk [vmem:[#allocation5 + $0xe0] sm:$0xff] %vm2412, %v2345
    %2428 = vst.msk [vmem:[#allocation5 + $0xf0] sm:$0xff] %vm2412, %v2347
    %2429 = vst.msk [vmem:[#allocation5 + $0x100] sm:$0xff] %vm2412, %v2349
    %2430 = vst.msk [vmem:[#allocation5 + $0x110] sm:$0xff] %vm2412, %v2351
    %2431 = vst.msk [vmem:[#allocation5 + $0x120] sm:$0xff] %vm2412, %v2353
    %2432 = vst.msk [vmem:[#allocation5 + $0x130] sm:$0xff] %vm2412, %v2355
    %2433 = vst.msk [vmem:[#allocation5 + $0x140] sm:$0xff] %vm2412, %v2357
    %2434 = vst.msk [vmem:[#allocation5 + $0x150] sm:$0xff] %vm2412, %v2359
    %2435 = vst.msk [vmem:[#allocation5 + $0x160] sm:$0xff] %vm2412, %v2361
    %2436 = vst.msk [vmem:[#allocation5 + $0x170] sm:$0xff] %vm2412, %v2363
    %2437 = vst.msk [vmem:[#allocation5 + $0x180] sm:$0xff] %vm2412, %v2365
    %2438 = vst.msk [vmem:[#allocation5 + $0x190] sm:$0xff] %vm2412, %v2367
    %2439 = vst.msk [vmem:[#allocation5 + $0x1a0] sm:$0xff] %vm2412, %v2369
    %2440 = vst.msk [vmem:[#allocation5 + $0x1b0] sm:$0xff] %vm2412, %v2371
    %2441 = vst.msk [vmem:[#allocation5 + $0x1c0] sm:$0xff] %vm2412, %v2373
    %2442 = vst.msk [vmem:[#allocation5 + $0x1d0] sm:$0xff] %vm2412, %v2375
    %2443 = vst.msk [vmem:[#allocation5 + $0x1e0] sm:$0xff] %vm2412, %v2377
    %2444 = vst.msk [vmem:[#allocation5 + $0x1f0] sm:$0xff] %vm2412, %v2379
    %v2445 = vld [vmem:[#allocation5] sm:$0xff]
    %v2446 = vld [vmem:[#allocation5 + $0x10] sm:$0xff]
    %v2447 = vld [vmem:[#allocation5 + $0x20] sm:$0xff]
    %v2448 = vld [vmem:[#allocation5 + $0x30] sm:$0xff]
    %v2449 = vld [vmem:[#allocation5 + $0x40] sm:$0xff]
    %v2450 = vld [vmem:[#allocation5 + $0x50] sm:$0xff]
    %v2451 = vld [vmem:[#allocation5 + $0x60] sm:$0xff]
    %v2452 = vld [vmem:[#allocation5 + $0x70] sm:$0xff]
    %v2453 = vld [vmem:[#allocation5 + $0x80] sm:$0xff]
    %v2454 = vld [vmem:[#allocation5 + $0x90] sm:$0xff]
    %v2455 = vld [vmem:[#allocation5 + $0xa0] sm:$0xff]
    %v2456 = vld [vmem:[#allocation5 + $0xb0] sm:$0xff]
    %v2457 = vld [vmem:[#allocation5 + $0xc0] sm:$0xff]
    %v2458 = vld [vmem:[#allocation5 + $0xd0] sm:$0xff]
    %v2459 = vld [vmem:[#allocation5 + $0xe0] sm:$0xff]
    %v2460 = vld [vmem:[#allocation5 + $0xf0] sm:$0xff]
    %v2461 = vld [vmem:[#allocation5 + $0x100] sm:$0xff]
    %v2462 = vld [vmem:[#allocation5 + $0x110] sm:$0xff]
    %v2463 = vld [vmem:[#allocation5 + $0x120] sm:$0xff]
    %v2464 = vld [vmem:[#allocation5 + $0x130] sm:$0xff]
    %v2465 = vld [vmem:[#allocation5 + $0x140] sm:$0xff]
    %v2466 = vld [vmem:[#allocation5 + $0x150] sm:$0xff]
    %v2467 = vld [vmem:[#allocation5 + $0x160] sm:$0xff]
    %v2468 = vld [vmem:[#allocation5 + $0x170] sm:$0xff]
    %v2469 = vld [vmem:[#allocation5 + $0x180] sm:$0xff]
    %v2470 = vld [vmem:[#allocation5 + $0x190] sm:$0xff]
    %v2471 = vld [vmem:[#allocation5 + $0x1a0] sm:$0xff]
    %v2472 = vld [vmem:[#allocation5 + $0x1b0] sm:$0xff]
    %v2473 = vld [vmem:[#allocation5 + $0x1c0] sm:$0xff]
    %v2474 = vld [vmem:[#allocation5 + $0x1d0] sm:$0xff]
    %v2475 = vld [vmem:[#allocation5 + $0x1e0] sm:$0xff]
    %v2476 = vld [vmem:[#allocation5 + $0x1f0] sm:$0xff]
    %v2477 = vld [vmem:[%s1] sm:$0xf]
    %v2478 = vld [vmem:[%s1 + $0x4] sm:$0xf]
    %v2479 = vld [vmem:[%s1 + $0x8] sm:$0xf]
    %v2480 = vld [vmem:[%s1 + $0xc] sm:$0xf]
    %v2481 = vld [vmem:[%s1 + $0x10] sm:$0x3]
    %v2482 = vld [vmem:[%s2] sm:$0x1]
    %v2484 = vlaneseq
    %v2485 = vshrl.u32 %v2484, 7
    %v2486 = vsub.s32 0, %v2485
    %v2487 = vrot.slane %v2482, %v2486
    %v2494 = vunpack.c.l.b16 %v2477
    %v2495 = vunpack.c.l.b16 %v2478
    %v2496 = vunpack.c.l.b16 %v2479
    %v2497 = vunpack.c.l.b16 %v2480
    %v2498 = vunpack.c.l.b16 %v2481
    %v2499 = vpack.c.b16 %v2495, %v2494
    %v2500 = vpack.c.b16 %v2497, %v2496
    %v2501 = vpack.c.b16 %v2498, %v2498
    %vm2504 = vcmask 293888
    %v2506 = vsel %vm2504, %v2445, 0
    %v2509 = vsel %vm2504, %v2446, 0
    %v2512 = vsel %vm2504, %v2447, 0
    %v2515 = vsel %vm2504, %v2448, 0
    %v2518 = vsel %vm2504, %v2449, 0
    %v2521 = vsel %vm2504, %v2450, 0
    %v2524 = vsel %vm2504, %v2451, 0
    %v2527 = vsel %vm2504, %v2452, 0
    %v2530 = vsel %vm2504, %v2453, 0
    %v2533 = vsel %vm2504, %v2454, 0
    %v2536 = vsel %vm2504, %v2455, 0
    %v2539 = vsel %vm2504, %v2456, 0
    %v2542 = vsel %vm2504, %v2457, 0
    %v2545 = vsel %vm2504, %v2458, 0
    %v2548 = vsel %vm2504, %v2459, 0
    %v2551 = vsel %vm2504, %v2460, 0
    %v2554 = vsel %vm2504, %v2461, 0
    %v2557 = vsel %vm2504, %v2462, 0
    %v2560 = vsel %vm2504, %v2463, 0
    %v2563 = vsel %vm2504, %v2464, 0
    %v2566 = vsel %vm2504, %v2465, 0
    %v2569 = vsel %vm2504, %v2466, 0
    %v2572 = vsel %vm2504, %v2467, 0
    %v2575 = vsel %vm2504, %v2468, 0
    %v2578 = vsel %vm2504, %v2469, 0
    %v2581 = vsel %vm2504, %v2470, 0
    %v2584 = vsel %vm2504, %v2471, 0
    %v2587 = vsel %vm2504, %v2472, 0
    %v2590 = vsel %vm2504, %v2473, 0
    %v2593 = vsel %vm2504, %v2474, 0
    %v2596 = vsel %vm2504, %v2475, 0
    %v2599 = vsel %vm2504, %v2476, 0
    %vm2601 = vcmask 1041408
    %v2603 = vsel %vm2601, %v2501, 0
    %2605 = vmatprep.subr.bf16.mxu0 0
    %2606 = vmatpush1.bf16.msra.mxu0 %v2499
    %2607 = vmatprep.subr.bf16.mxu0 0
    %2608 = vmatpush1.bf16.msra.mxu0 %v2500
    %2609 = vmatprep.subr.bf16.mxu0 0
    %2610 = vmatpush1.bf16.msra.mxu0 %v2603
    %2611 = vmatprep.subr.bf16.mxu0 0
    %2612 = vmatpush1.bf16.msra.mxu0 0
    %2613 = vmatprep.subr.bf16.mxu0 0
    %2614 = vmatpush1.bf16.msra.mxu0 0
    %2615 = vmatprep.subr.bf16.mxu0 0
    %2616 = vmatpush1.bf16.msra.mxu0 0
    %2617 = vmatprep.subr.bf16.mxu0 0
    %2618 = vmatpush1.bf16.msra.mxu0 0
    %2619 = vmatprep.subr.bf16.mxu0 0
    %2620 = vmatpush1.bf16.msra.mxu0 0
    %2621 = vmatprep.subr.bf16.mxu0 0
    %2622 = vmatpush1.bf16.msra.mxu0 0
    %2623 = vmatprep.subr.bf16.mxu0 0
    %2624 = vmatpush1.bf16.msra.mxu0 0
    %2625 = vmatprep.subr.bf16.mxu0 0
    %2626 = vmatpush1.bf16.msra.mxu0 0
    %2627 = vmatprep.subr.bf16.mxu0 0
    %2628 = vmatpush1.bf16.msra.mxu0 0
    %2629 = vmatprep.subr.bf16.mxu0 0
    %2630 = vmatpush1.bf16.msra.mxu0 0
    %2631 = vmatprep.subr.bf16.mxu0 0
    %2632 = vmatpush1.bf16.msra.mxu0 0
    %2633 = vmatprep.subr.bf16.mxu0 0
    %2634 = vmatpush1.bf16.msra.mxu0 0
    %2635 = vmatprep.subr.bf16.mxu0 0
    %2636 = vmatpush1.bf16.msra.mxu0 0
    %2637 = vmatprep.mubr.bf16.mxu0 0
    %2638 = vmatmul.mubr.bf16.gmra.mrb[0].mxu0 %v2506
    %v2639 = vpop.f32.mrb[0].mxu0
    %v2640 = vadd.f32 %v2487, %v2639
    %v2641 = vpop.f32.mrb[0].mxu0
    %v2642 = vpop.f32.mrb[0].mxu0
    %v2643 = vadd.f32 %v2487, %v2642
    %v2644 = vpop.f32.mrb[0].mxu0
    %2645 = vmatprep.mubr.bf16.mxu0 0
    %2646 = vmatmul.mubr.bf16.gmra.mrb[0].mxu0 %v2509
    %v2647 = vpop.f32.mrb[0].mxu0
    %v2648 = vadd.f32 %v2487, %v2647
    %v2649 = vpop.f32.mrb[0].mxu0
    %v2650 = vpop.f32.mrb[0].mxu0
    %v2651 = vadd.f32 %v2487, %v2650
    %v2652 = vpop.f32.mrb[0].mxu0
    %2653 = vmatprep.mubr.bf16.mxu0 0
    %2654 = vmatmul.mubr.bf16.gmra.mrb[0].mxu0 %v2512
    %v2655 = vpop.f32.mrb[0].mxu0
    %v2656 = vadd.f32 %v2487, %v2655
    %v2657 = vpop.f32.mrb[0].mxu0
    %v2658 = vpop.f32.mrb[0].mxu0
    %v2659 = vadd.f32 %v2487, %v2658
    %v2660 = vpop.f32.mrb[0].mxu0
    %2661 = vmatprep.mubr.bf16.mxu0 0
    %2662 = vmatmul.mubr.bf16.gmra.mrb[0].mxu0 %v2515
    %v2663 = vpop.f32.mrb[0].mxu0
    %v2664 = vadd.f32 %v2487, %v2663
    %v2665 = vpop.f32.mrb[0].mxu0
    %v2666 = vpop.f32.mrb[0].mxu0
    %v2667 = vadd.f32 %v2487, %v2666
    %v2668 = vpop.f32.mrb[0].mxu0
    %2669 = vmatprep.mubr.bf16.mxu0 0
    %2670 = vmatmul.mubr.bf16.gmra.mrb[0].mxu0 %v2518
    %v2671 = vpop.f32.mrb[0].mxu0
    %v2672 = vadd.f32 %v2487, %v2671
    %v2673 = vpop.f32.mrb[0].mxu0
    %v2674 = vpop.f32.mrb[0].mxu0
    %v2675 = vadd.f32 %v2487, %v2674
    %v2676 = vpop.f32.mrb[0].mxu0
    %2677 = vmatprep.mubr.bf16.mxu0 0
    %2678 = vmatmul.mubr.bf16.gmra.mrb[0].mxu0 %v2521
    %v2679 = vpop.f32.mrb[0].mxu0
    %v2680 = vadd.f32 %v2487, %v2679
    %v2681 = vpop.f32.mrb[0].mxu0
    %v2682 = vpop.f32.mrb[0].mxu0
    %v2683 = vadd.f32 %v2487, %v2682
    %v2684 = vpop.f32.mrb[0].mxu0
    %2685 = vmatprep.mubr.bf16.mxu0 0
    %2686 = vmatmul.mubr.bf16.gmra.mrb[0].mxu0 %v2524
    %v2687 = vpop.f32.mrb[0].mxu0
    %v2688 = vadd.f32 %v2487, %v2687
    %v2689 = vpop.f32.mrb[0].mxu0
    %v2690 = vpop.f32.mrb[0].mxu0
    %v2691 = vadd.f32 %v2487, %v2690
    %v2692 = vpop.f32.mrb[0].mxu0
    %2693 = vmatprep.mubr.bf16.mxu0 0
    %2694 = vmatmul.mubr.bf16.gmra.mrb[0].mxu0 %v2527
    %v2695 = vpop.f32.mrb[0].mxu0
    %v2696 = vadd.f32 %v2487, %v2695
    %v2697 = vpop.f32.mrb[0].mxu0
    %v2698 = vpop.f32.mrb[0].mxu0
    %v2699 = vadd.f32 %v2487, %v2698
    %v2700 = vpop.f32.mrb[0].mxu0
    %2701 = vmatprep.mubr.bf16.mxu0 0
    %2702 = vmatmul.mubr.bf16.gmra.mrb[0].mxu0 %v2530
    %v2703 = vpop.f32.mrb[0].mxu0
    %v2704 = vadd.f32 %v2487, %v2703
    %v2705 = vpop.f32.mrb[0].mxu0
    %v2706 = vpop.f32.mrb[0].mxu0
    %v2707 = vadd.f32 %v2487, %v2706
    %v2708 = vpop.f32.mrb[0].mxu0
    %2709 = vmatprep.mubr.bf16.mxu0 0
    %2710 = vmatmul.mubr.bf16.gmra.mrb[0].mxu0 %v2533
    %v2711 = vpop.f32.mrb[0].mxu0
    %v2712 = vadd.f32 %v2487, %v2711
    %v2713 = vpop.f32.mrb[0].mxu0
    %v2714 = vpop.f32.mrb[0].mxu0
    %v2715 = vadd.f32 %v2487, %v2714
    %v2716 = vpop.f32.mrb[0].mxu0
    %2717 = vmatprep.mubr.bf16.mxu0 0
    %2718 = vmatmul.mubr.bf16.gmra.mrb[0].mxu0 %v2536
    %v2719 = vpop.f32.mrb[0].mxu0
    %v2720 = vadd.f32 %v2487, %v2719
    %v2721 = vpop.f32.mrb[0].mxu0
    %v2722 = vpop.f32.mrb[0].mxu0
    %v2723 = vadd.f32 %v2487, %v2722
    %v2724 = vpop.f32.mrb[0].mxu0
    %2725 = vmatprep.mubr.bf16.mxu0 0
    %2726 = vmatmul.mubr.bf16.gmra.mrb[0].mxu0 %v2539
    %v2727 = vpop.f32.mrb[0].mxu0
    %v2728 = vadd.f32 %v2487, %v2727
    %v2729 = vpop.f32.mrb[0].mxu0
    %v2730 = vpop.f32.mrb[0].mxu0
    %v2731 = vadd.f32 %v2487, %v2730
    %v2732 = vpop.f32.mrb[0].mxu0
    %2733 = vmatprep.mubr.bf16.mxu0 0
    %2734 = vmatmul.mubr.bf16.gmra.mrb[0].mxu0 %v2542
    %v2735 = vpop.f32.mrb[0].mxu0
    %v2736 = vadd.f32 %v2487, %v2735
    %v2737 = vpop.f32.mrb[0].mxu0
    %v2738 = vpop.f32.mrb[0].mxu0
    %v2739 = vadd.f32 %v2487, %v2738
    %v2740 = vpop.f32.mrb[0].mxu0
    %2741 = vmatprep.mubr.bf16.mxu0 0
    %2742 = vmatmul.mubr.bf16.gmra.mrb[0].mxu0 %v2545
    %v2743 = vpop.f32.mrb[0].mxu0
    %v2744 = vadd.f32 %v2487, %v2743
    %v2745 = vpop.f32.mrb[0].mxu0
    %v2746 = vpop.f32.mrb[0].mxu0
    %v2747 = vadd.f32 %v2487, %v2746
    %v2748 = vpop.f32.mrb[0].mxu0
    %2749 = vmatprep.mubr.bf16.mxu0 0
    %2750 = vmatmul.mubr.bf16.gmra.mrb[0].mxu0 %v2548
    %v2751 = vpop.f32.mrb[0].mxu0
    %v2752 = vadd.f32 %v2487, %v2751
    %v2753 = vpop.f32.mrb[0].mxu0
    %v2754 = vpop.f32.mrb[0].mxu0
    %v2755 = vadd.f32 %v2487, %v2754
    %v2756 = vpop.f32.mrb[0].mxu0
    %2757 = vmatprep.mubr.bf16.mxu0 0
    %2758 = vmatmul.mubr.bf16.gmra.mrb[0].mxu0 %v2551
    %v2759 = vpop.f32.mrb[0].mxu0
    %v2760 = vadd.f32 %v2487, %v2759
    %v2761 = vpop.f32.mrb[0].mxu0
    %v2762 = vpop.f32.mrb[0].mxu0
    %v2763 = vadd.f32 %v2487, %v2762
    %v2764 = vpop.f32.mrb[0].mxu0
    %2765 = vmatprep.mubr.bf16.mxu0 0
    %2766 = vmatmul.mubr.bf16.gmra.mrb[0].mxu0 %v2554
    %v2767 = vpop.f32.mrb[0].mxu0
    %v2768 = vadd.f32 %v2487, %v2767
    %v2769 = vpop.f32.mrb[0].mxu0
    %v2770 = vpop.f32.mrb[0].mxu0
    %v2771 = vadd.f32 %v2487, %v2770
    %v2772 = vpop.f32.mrb[0].mxu0
    %2773 = vmatprep.mubr.bf16.mxu0 0
    %2774 = vmatmul.mubr.bf16.gmra.mrb[0].mxu0 %v2557
    %v2775 = vpop.f32.mrb[0].mxu0
    %v2776 = vadd.f32 %v2487, %v2775
    %v2777 = vpop.f32.mrb[0].mxu0
    %v2778 = vpop.f32.mrb[0].mxu0
    %v2779 = vadd.f32 %v2487, %v2778
    %v2780 = vpop.f32.mrb[0].mxu0
    %2781 = vmatprep.mubr.bf16.mxu0 0
    %2782 = vmatmul.mubr.bf16.gmra.mrb[0].mxu0 %v2560
    %v2783 = vpop.f32.mrb[0].mxu0
    %v2784 = vadd.f32 %v2487, %v2783
    %v2785 = vpop.f32.mrb[0].mxu0
    %v2786 = vpop.f32.mrb[0].mxu0
    %v2787 = vadd.f32 %v2487, %v2786
    %v2788 = vpop.f32.mrb[0].mxu0
    %2789 = vmatprep.mubr.bf16.mxu0 0
    %2790 = vmatmul.mubr.bf16.gmra.mrb[0].mxu0 %v2563
    %v2791 = vpop.f32.mrb[0].mxu0
    %v2792 = vadd.f32 %v2487, %v2791
    %v2793 = vpop.f32.mrb[0].mxu0
    %v2794 = vpop.f32.mrb[0].mxu0
    %v2795 = vadd.f32 %v2487, %v2794
    %v2796 = vpop.f32.mrb[0].mxu0
    %2797 = vmatprep.mubr.bf16.mxu0 0
    %2798 = vmatmul.mubr.bf16.gmra.mrb[0].mxu0 %v2566
    %v2799 = vpop.f32.mrb[0].mxu0
    %v2800 = vadd.f32 %v2487, %v2799
    %v2801 = vpop.f32.mrb[0].mxu0
    %v2802 = vpop.f32.mrb[0].mxu0
    %v2803 = vadd.f32 %v2487, %v2802
    %v2804 = vpop.f32.mrb[0].mxu0
    %2805 = vmatprep.mubr.bf16.mxu0 0
    %2806 = vmatmul.mubr.bf16.gmra.mrb[0].mxu0 %v2569
    %v2807 = vpop.f32.mrb[0].mxu0
    %v2808 = vadd.f32 %v2487, %v2807
    %v2809 = vpop.f32.mrb[0].mxu0
    %v2810 = vpop.f32.mrb[0].mxu0
    %v2811 = vadd.f32 %v2487, %v2810
    %v2812 = vpop.f32.mrb[0].mxu0
    %2813 = vmatprep.mubr.bf16.mxu0 0
    %2814 = vmatmul.mubr.bf16.gmra.mrb[0].mxu0 %v2572
    %v2815 = vpop.f32.mrb[0].mxu0
    %v2816 = vadd.f32 %v2487, %v2815
    %v2817 = vpop.f32.mrb[0].mxu0
    %v2818 = vpop.f32.mrb[0].mxu0
    %v2819 = vadd.f32 %v2487, %v2818
    %v2820 = vpop.f32.mrb[0].mxu0
    %2821 = vmatprep.mubr.bf16.mxu0 0
    %2822 = vmatmul.mubr.bf16.gmra.mrb[0].mxu0 %v2575
    %v2823 = vpop.f32.mrb[0].mxu0
    %v2824 = vadd.f32 %v2487, %v2823
    %v2825 = vpop.f32.mrb[0].mxu0
    %v2826 = vpop.f32.mrb[0].mxu0
    %v2827 = vadd.f32 %v2487, %v2826
    %v2828 = vpop.f32.mrb[0].mxu0
    %2829 = vmatprep.mubr.bf16.mxu0 0
    %2830 = vmatmul.mubr.bf16.gmra.mrb[0].mxu0 %v2578
    %v2831 = vpop.f32.mrb[0].mxu0
    %v2832 = vadd.f32 %v2487, %v2831
    %v2833 = vpop.f32.mrb[0].mxu0
    %v2834 = vpop.f32.mrb[0].mxu0
    %v2835 = vadd.f32 %v2487, %v2834
    %v2836 = vpop.f32.mrb[0].mxu0
    %2837 = vmatprep.mubr.bf16.mxu0 0
    %2838 = vmatmul.mubr.bf16.gmra.mrb[0].mxu0 %v2581
    %v2839 = vpop.f32.mrb[0].mxu0
    %v2840 = vadd.f32 %v2487, %v2839
    %v2841 = vpop.f32.mrb[0].mxu0
    %v2842 = vpop.f32.mrb[0].mxu0
    %v2843 = vadd.f32 %v2487, %v2842
    %v2844 = vpop.f32.mrb[0].mxu0
    %2845 = vmatprep.mubr.bf16.mxu0 0
    %2846 = vmatmul.mubr.bf16.gmra.mrb[0].mxu0 %v2584
    %v2847 = vpop.f32.mrb[0].mxu0
    %v2848 = vadd.f32 %v2487, %v2847
    %v2849 = vpop.f32.mrb[0].mxu0
    %v2850 = vpop.f32.mrb[0].mxu0
    %v2851 = vadd.f32 %v2487, %v2850
    %v2852 = vpop.f32.mrb[0].mxu0
    %2853 = vmatprep.mubr.bf16.mxu0 0
    %2854 = vmatmul.mubr.bf16.gmra.mrb[0].mxu0 %v2587
    %v2855 = vpop.f32.mrb[0].mxu0
    %v2856 = vadd.f32 %v2487, %v2855
    %v2857 = vpop.f32.mrb[0].mxu0
    %v2858 = vpop.f32.mrb[0].mxu0
    %v2859 = vadd.f32 %v2487, %v2858
    %v2860 = vpop.f32.mrb[0].mxu0
    %2861 = vmatprep.mubr.bf16.mxu0 0
    %2862 = vmatmul.mubr.bf16.gmra.mrb[0].mxu0 %v2590
    %v2863 = vpop.f32.mrb[0].mxu0
    %v2864 = vadd.f32 %v2487, %v2863
    %v2865 = vpop.f32.mrb[0].mxu0
    %v2866 = vpop.f32.mrb[0].mxu0
    %v2867 = vadd.f32 %v2487, %v2866
    %v2868 = vpop.f32.mrb[0].mxu0
    %2869 = vmatprep.mubr.bf16.mxu0 0
    %2870 = vmatmul.mubr.bf16.gmra.mrb[0].mxu0 %v2593
    %v2871 = vpop.f32.mrb[0].mxu0
    %v2872 = vadd.f32 %v2487, %v2871
    %v2873 = vpop.f32.mrb[0].mxu0
    %v2874 = vpop.f32.mrb[0].mxu0
    %v2875 = vadd.f32 %v2487, %v2874
    %v2876 = vpop.f32.mrb[0].mxu0
    %2877 = vmatprep.mubr.bf16.mxu0 0
    %2878 = vmatmul.mubr.bf16.gmra.mrb[0].mxu0 %v2596
    %v2879 = vpop.f32.mrb[0].mxu0
    %v2880 = vadd.f32 %v2487, %v2879
    %v2881 = vpop.f32.mrb[0].mxu0
    %v2882 = vpop.f32.mrb[0].mxu0
    %v2883 = vadd.f32 %v2487, %v2882
    %v2884 = vpop.f32.mrb[0].mxu0
    %2885 = vmatprep.mubr.bf16.mxu0 0
    %2886 = vmatmul.mubr.bf16.gmra.mrb[0].mxu0 %v2599
    %v2887 = vpop.f32.mrb[0].mxu0
    %v2888 = vadd.f32 %v2487, %v2887
    %v2889 = vpop.f32.mrb[0].mxu0
    %v2890 = vpop.f32.mrb[0].mxu0
    %v2891 = vadd.f32 %v2487, %v2890
    %v2892 = vpop.f32.mrb[0].mxu0
    %2893 = vdwg.mxu0
    %v2894 = vmax.f32 %v2640, 0.0
    %v2895 = vmax.f32 %v2643, 0.0
    %v2896 = vmax.f32 %v2648, 0.0
    %v2897 = vmax.f32 %v2651, 0.0
    %v2898 = vmax.f32 %v2656, 0.0
    %v2899 = vmax.f32 %v2659, 0.0
    %v2900 = vmax.f32 %v2664, 0.0
    %v2901 = vmax.f32 %v2667, 0.0
    %v2902 = vmax.f32 %v2672, 0.0
    %v2903 = vmax.f32 %v2675, 0.0
    %v2904 = vmax.f32 %v2680, 0.0
    %v2905 = vmax.f32 %v2683, 0.0
    %v2906 = vmax.f32 %v2688, 0.0
    %v2907 = vmax.f32 %v2691, 0.0
    %v2908 = vmax.f32 %v2696, 0.0
    %v2909 = vmax.f32 %v2699, 0.0
    %v2910 = vmax.f32 %v2704, 0.0
    %v2911 = vmax.f32 %v2707, 0.0
    %v2912 = vmax.f32 %v2712, 0.0
    %v2913 = vmax.f32 %v2715, 0.0
    %v2914 = vmax.f32 %v2720, 0.0
    %v2915 = vmax.f32 %v2723, 0.0
    %v2916 = vmax.f32 %v2728, 0.0
    %v2917 = vmax.f32 %v2731, 0.0
    %v2918 = vmax.f32 %v2736, 0.0
    %v2919 = vmax.f32 %v2739, 0.0
    %v2920 = vmax.f32 %v2744, 0.0
    %v2921 = vmax.f32 %v2747, 0.0
    %v2922 = vmax.f32 %v2752, 0.0
    %v2923 = vmax.f32 %v2755, 0.0
    %v2924 = vmax.f32 %v2760, 0.0
    %v2925 = vmax.f32 %v2763, 0.0
    %v2926 = vmax.f32 %v2768, 0.0
    %v2927 = vmax.f32 %v2771, 0.0
    %v2928 = vmax.f32 %v2776, 0.0
    %v2929 = vmax.f32 %v2779, 0.0
    %v2930 = vmax.f32 %v2784, 0.0
    %v2931 = vmax.f32 %v2787, 0.0
    %v2932 = vmax.f32 %v2792, 0.0
    %v2933 = vmax.f32 %v2795, 0.0
    %v2934 = vmax.f32 %v2800, 0.0
    %v2935 = vmax.f32 %v2803, 0.0
    %v2936 = vmax.f32 %v2808, 0.0
    %v2937 = vmax.f32 %v2811, 0.0
    %v2938 = vmax.f32 %v2816, 0.0
    %v2939 = vmax.f32 %v2819, 0.0
    %v2940 = vmax.f32 %v2824, 0.0
    %v2941 = vmax.f32 %v2827, 0.0
    %v2942 = vmax.f32 %v2832, 0.0
    %v2943 = vmax.f32 %v2835, 0.0
    %v2944 = vmax.f32 %v2840, 0.0
    %v2945 = vmax.f32 %v2843, 0.0
    %v2946 = vmax.f32 %v2848, 0.0
    %v2947 = vmax.f32 %v2851, 0.0
    %v2948 = vmax.f32 %v2856, 0.0
    %v2949 = vmax.f32 %v2859, 0.0
    %v2950 = vmax.f32 %v2864, 0.0
    %v2951 = vmax.f32 %v2867, 0.0
    %v2952 = vmax.f32 %v2872, 0.0
    %v2953 = vmax.f32 %v2875, 0.0
    %v2954 = vmax.f32 %v2880, 0.0
    %v2955 = vmax.f32 %v2883, 0.0
    %v2956 = vmax.f32 %v2888, 0.0
    %v2957 = vmax.f32 %v2891, 0.0
    %vm2958 = vcmask 64512
    %2959 = vst.msk [vmem:[#allocation3] sm:$0xff] %vm2958, 0.0
    %2960 = vst.msk [vmem:[#allocation3 + $0x20] sm:$0xff] %vm2958, 0.0
    %2961 = vst.msk [vmem:[#allocation3 + $0x40] sm:$0xff] %vm2958, 0.0
    %2962 = vst.msk [vmem:[#allocation3 + $0x60] sm:$0xff] %vm2958, 0.0
    %2963 = vst.msk [vmem:[#allocation3 + $0x80] sm:$0xff] %vm2958, 0.0
    %2964 = vst.msk [vmem:[#allocation3 + $0xa0] sm:$0xff] %vm2958, 0.0
    %2965 = vst.msk [vmem:[#allocation3 + $0xc0] sm:$0xff] %vm2958, 0.0
    %2966 = vst.msk [vmem:[#allocation3 + $0xe0] sm:$0xff] %vm2958, 0.0
    %2967 = vst.msk [vmem:[#allocation3 + $0x100] sm:$0xff] %vm2958, 0.0
    %2968 = vst.msk [vmem:[#allocation3 + $0x120] sm:$0xff] %vm2958, 0.0
    %2969 = vst.msk [vmem:[#allocation3 + $0x140] sm:$0xff] %vm2958, 0.0
    %2970 = vst.msk [vmem:[#allocation3 + $0x160] sm:$0xff] %vm2958, 0.0
    %2971 = vst.msk [vmem:[#allocation3 + $0x180] sm:$0xff] %vm2958, 0.0
    %2972 = vst.msk [vmem:[#allocation3 + $0x1a0] sm:$0xff] %vm2958, 0.0
    %2973 = vst.msk [vmem:[#allocation3 + $0x1c0] sm:$0xff] %vm2958, 0.0
    %2974 = vst.msk [vmem:[#allocation3 + $0x1e0] sm:$0xff] %vm2958, 0.0
    %2975 = vst.msk [vmem:[#allocation3 + $0x200] sm:$0xff] %vm2958, 0.0
    %2976 = vst.msk [vmem:[#allocation3 + $0x220] sm:$0xff] %vm2958, 0.0
    %2977 = vst.msk [vmem:[#allocation3 + $0x240] sm:$0xff] %vm2958, 0.0
    %2978 = vst.msk [vmem:[#allocation3 + $0x260] sm:$0xff] %vm2958, 0.0
    %2979 = vst.msk [vmem:[#allocation3 + $0x280] sm:$0xff] %vm2958, 0.0
    %2980 = vst.msk [vmem:[#allocation3 + $0x2a0] sm:$0xff] %vm2958, 0.0
    %2981 = vst.msk [vmem:[#allocation3 + $0x2c0] sm:$0xff] %vm2958, 0.0
    %2982 = vst.msk [vmem:[#allocation3 + $0x2e0] sm:$0xff] %vm2958, 0.0
    %2983 = vst.msk [vmem:[#allocation3 + $0x300] sm:$0xff] %vm2958, 0.0
    %2984 = vst.msk [vmem:[#allocation3 + $0x320] sm:$0xff] %vm2958, 0.0
    %2985 = vst.msk [vmem:[#allocation3 + $0x340] sm:$0xff] %vm2958, 0.0
    %2986 = vst.msk [vmem:[#allocation3 + $0x360] sm:$0xff] %vm2958, 0.0
    %2987 = vst.msk [vmem:[#allocation3 + $0x380] sm:$0xff] %vm2958, 0.0
    %2988 = vst.msk [vmem:[#allocation3 + $0x3a0] sm:$0xff] %vm2958, 0.0
    %2989 = vst.msk [vmem:[#allocation3 + $0x3c0] sm:$0xff] %vm2958, 0.0
    %2990 = vst.msk [vmem:[#allocation3 + $0x3e0] sm:$0xff] %vm2958, 0.0
    %2991 = vst.msk [vmem:[#allocation3 + $0x400] sm:$0xff] %vm2958, 0.0
    %2992 = vst.msk [vmem:[#allocation3 + $0x420] sm:$0xff] %vm2958, 0.0
    %2993 = vst.msk [vmem:[#allocation3 + $0x440] sm:$0xff] %vm2958, 0.0
    %2994 = vst.msk [vmem:[#allocation3 + $0x460] sm:$0xff] %vm2958, 0.0
    %2995 = vst.msk [vmem:[#allocation3 + $0x18] sm:$0xff] %vm2958, 0.0
    %2996 = vst.msk [vmem:[#allocation3 + $0x38] sm:$0xff] %vm2958, 0.0
    %2997 = vst.msk [vmem:[#allocation3 + $0x58] sm:$0xff] %vm2958, 0.0
    %2998 = vst.msk [vmem:[#allocation3 + $0x78] sm:$0xff] %vm2958, 0.0
    %2999 = vst.msk [vmem:[#allocation3 + $0x98] sm:$0xff] %vm2958, 0.0
    %3000 = vst.msk [vmem:[#allocation3 + $0xb8] sm:$0xff] %vm2958, 0.0
    %3001 = vst.msk [vmem:[#allocation3 + $0xd8] sm:$0xff] %vm2958, 0.0
    %3002 = vst.msk [vmem:[#allocation3 + $0xf8] sm:$0xff] %vm2958, 0.0
    %3003 = vst.msk [vmem:[#allocation3 + $0x118] sm:$0xff] %vm2958, 0.0
    %3004 = vst.msk [vmem:[#allocation3 + $0x138] sm:$0xff] %vm2958, 0.0
    %3005 = vst.msk [vmem:[#allocation3 + $0x158] sm:$0xff] %vm2958, 0.0
    %3006 = vst.msk [vmem:[#allocation3 + $0x178] sm:$0xff] %vm2958, 0.0
    %3007 = vst.msk [vmem:[#allocation3 + $0x198] sm:$0xff] %vm2958, 0.0
    %3008 = vst.msk [vmem:[#allocation3 + $0x1b8] sm:$0xff] %vm2958, 0.0
    %3009 = vst.msk [vmem:[#allocation3 + $0x1d8] sm:$0xff] %vm2958, 0.0
    %3010 = vst.msk [vmem:[#allocation3 + $0x1f8] sm:$0xff] %vm2958, 0.0
    %3011 = vst.msk [vmem:[#allocation3 + $0x218] sm:$0xff] %vm2958, 0.0
    %3012 = vst.msk [vmem:[#allocation3 + $0x238] sm:$0xff] %vm2958, 0.0
    %3013 = vst.msk [vmem:[#allocation3 + $0x258] sm:$0xff] %vm2958, 0.0
    %3014 = vst.msk [vmem:[#allocation3 + $0x278] sm:$0xff] %vm2958, 0.0
    %3015 = vst.msk [vmem:[#allocation3 + $0x298] sm:$0xff] %vm2958, 0.0
    %3016 = vst.msk [vmem:[#allocation3 + $0x2b8] sm:$0xff] %vm2958, 0.0
    %3017 = vst.msk [vmem:[#allocation3 + $0x2d8] sm:$0xff] %vm2958, 0.0
    %3018 = vst.msk [vmem:[#allocation3 + $0x2f8] sm:$0xff] %vm2958, 0.0
    %3019 = vst.msk [vmem:[#allocation3 + $0x318] sm:$0xff] %vm2958, 0.0
    %3020 = vst.msk [vmem:[#allocation3 + $0x338] sm:$0xff] %vm2958, 0.0
    %3021 = vst.msk [vmem:[#allocation3 + $0x358] sm:$0xff] %vm2958, 0.0
    %3022 = vst.msk [vmem:[#allocation3 + $0x378] sm:$0xff] %vm2958, 0.0
    %3023 = vst.msk [vmem:[#allocation3 + $0x398] sm:$0xff] %vm2958, 0.0
    %3024 = vst.msk [vmem:[#allocation3 + $0x3b8] sm:$0xff] %vm2958, 0.0
    %3025 = vst.msk [vmem:[#allocation3 + $0x3d8] sm:$0xff] %vm2958, 0.0
    %3026 = vst.msk [vmem:[#allocation3 + $0x3f8] sm:$0xff] %vm2958, 0.0
    %3027 = vst.msk [vmem:[#allocation3 + $0x418] sm:$0xff] %vm2958, 0.0
    %3028 = vst.msk [vmem:[#allocation3 + $0x438] sm:$0xff] %vm2958, 0.0
    %3029 = vst.msk [vmem:[#allocation3 + $0x458] sm:$0xff] %vm2958, 0.0
    %3030 = vst.msk [vmem:[#allocation3 + $0x478] sm:$0xff] %vm2958, 0.0
    %3031 = vst.msk [vmem:[#allocation3 + $0x8] sm:$0xff] %vm2958, 0.0
    %3032 = vst.msk [vmem:[#allocation3 + $0x10] sm:$0xff] %vm2958, 0.0
    %3033 = vst.msk [vmem:[#allocation3 + $0x248] sm:$0xff] %vm2958, 0.0
    %3034 = vst.msk [vmem:[#allocation3 + $0x250] sm:$0xff] %vm2958, 0.0
    %s3035 = scalar_lea.vmem [#allocation3], 544
    %3036 = vst.msk [vmem:[%s3035 + $0x8] sm:$0xff] %vm2958, 0.0
    %3037 = vst.msk [vmem:[%s3035 + $0x10] sm:$0xff] %vm2958, 0.0
    %3038 = vst.msk [vmem:[%s3035 + $0x248] sm:$0xff] %vm2958, 0.0
    %3039 = vst.msk [vmem:[%s3035 + $0x250] sm:$0xff] %vm2958, 0.0
    %s3040 = scalar_lea.vmem [#allocation3], 32
    %3041 = vst.msk [vmem:[%s3040 + $0x8] sm:$0xff] %vm2958, %v2894
    %3042 = vst.msk [vmem:[%s3040 + $0x10] sm:$0xff] %vm2958, %v2895
    %3043 = vst.msk [vmem:[%s3040 + $0x28] sm:$0xff] %vm2958, %v2896
    %3044 = vst.msk [vmem:[%s3040 + $0x30] sm:$0xff] %vm2958, %v2897
    %3045 = vst.msk [vmem:[%s3040 + $0x48] sm:$0xff] %vm2958, %v2898
    %3046 = vst.msk [vmem:[%s3040 + $0x50] sm:$0xff] %vm2958, %v2899
    %3047 = vst.msk [vmem:[%s3040 + $0x68] sm:$0xff] %vm2958, %v2900
    %3048 = vst.msk [vmem:[%s3040 + $0x70] sm:$0xff] %vm2958, %v2901
    %3049 = vst.msk [vmem:[%s3040 + $0x88] sm:$0xff] %vm2958, %v2902
    %3050 = vst.msk [vmem:[%s3040 + $0x90] sm:$0xff] %vm2958, %v2903
    %3051 = vst.msk [vmem:[%s3040 + $0xa8] sm:$0xff] %vm2958, %v2904
    %3052 = vst.msk [vmem:[%s3040 + $0xb0] sm:$0xff] %vm2958, %v2905
    %3053 = vst.msk [vmem:[%s3040 + $0xc8] sm:$0xff] %vm2958, %v2906
    %3054 = vst.msk [vmem:[%s3040 + $0xd0] sm:$0xff] %vm2958, %v2907
    %3055 = vst.msk [vmem:[%s3040 + $0xe8] sm:$0xff] %vm2958, %v2908
    %3056 = vst.msk [vmem:[%s3040 + $0xf0] sm:$0xff] %vm2958, %v2909
    %3057 = vst.msk [vmem:[%s3040 + $0x108] sm:$0xff] %vm2958, %v2910
    %3058 = vst.msk [vmem:[%s3040 + $0x110] sm:$0xff] %vm2958, %v2911
    %3059 = vst.msk [vmem:[%s3040 + $0x128] sm:$0xff] %vm2958, %v2912
    %3060 = vst.msk [vmem:[%s3040 + $0x130] sm:$0xff] %vm2958, %v2913
    %3061 = vst.msk [vmem:[%s3040 + $0x148] sm:$0xff] %vm2958, %v2914
    %3062 = vst.msk [vmem:[%s3040 + $0x150] sm:$0xff] %vm2958, %v2915
    %3063 = vst.msk [vmem:[%s3040 + $0x168] sm:$0xff] %vm2958, %v2916
    %3064 = vst.msk [vmem:[%s3040 + $0x170] sm:$0xff] %vm2958, %v2917
    %3065 = vst.msk [vmem:[%s3040 + $0x188] sm:$0xff] %vm2958, %v2918
    %3066 = vst.msk [vmem:[%s3040 + $0x190] sm:$0xff] %vm2958, %v2919
    %3067 = vst.msk [vmem:[%s3040 + $0x1a8] sm:$0xff] %vm2958, %v2920
    %3068 = vst.msk [vmem:[%s3040 + $0x1b0] sm:$0xff] %vm2958, %v2921
    %3069 = vst.msk [vmem:[%s3040 + $0x1c8] sm:$0xff] %vm2958, %v2922
    %3070 = vst.msk [vmem:[%s3040 + $0x1d0] sm:$0xff] %vm2958, %v2923
    %3071 = vst.msk [vmem:[%s3040 + $0x1e8] sm:$0xff] %vm2958, %v2924
    %3072 = vst.msk [vmem:[%s3040 + $0x1f0] sm:$0xff] %vm2958, %v2925
    %3073 = vst.msk [vmem:[%s3040 + $0x248] sm:$0xff] %vm2958, %v2926
    %3074 = vst.msk [vmem:[%s3040 + $0x250] sm:$0xff] %vm2958, %v2927
    %3075 = vst.msk [vmem:[%s3040 + $0x268] sm:$0xff] %vm2958, %v2928
    %3076 = vst.msk [vmem:[%s3040 + $0x270] sm:$0xff] %vm2958, %v2929
    %3077 = vst.msk [vmem:[%s3040 + $0x288] sm:$0xff] %vm2958, %v2930
    %3078 = vst.msk [vmem:[%s3040 + $0x290] sm:$0xff] %vm2958, %v2931
    %3079 = vst.msk [vmem:[%s3040 + $0x2a8] sm:$0xff] %vm2958, %v2932
    %3080 = vst.msk [vmem:[%s3040 + $0x2b0] sm:$0xff] %vm2958, %v2933
    %3081 = vst.msk [vmem:[%s3040 + $0x2c8] sm:$0xff] %vm2958, %v2934
    %3082 = vst.msk [vmem:[%s3040 + $0x2d0] sm:$0xff] %vm2958, %v2935
    %3083 = vst.msk [vmem:[%s3040 + $0x2e8] sm:$0xff] %vm2958, %v2936
    %3084 = vst.msk [vmem:[%s3040 + $0x2f0] sm:$0xff] %vm2958, %v2937
    %3085 = vst.msk [vmem:[%s3040 + $0x308] sm:$0xff] %vm2958, %v2938
    %3086 = vst.msk [vmem:[%s3040 + $0x310] sm:$0xff] %vm2958, %v2939
    %3087 = vst.msk [vmem:[%s3040 + $0x328] sm:$0xff] %vm2958, %v2940
    %3088 = vst.msk [vmem:[%s3040 + $0x330] sm:$0xff] %vm2958, %v2941
    %3089 = vst.msk [vmem:[%s3040 + $0x348] sm:$0xff] %vm2958, %v2942
    %3090 = vst.msk [vmem:[%s3040 + $0x350] sm:$0xff] %vm2958, %v2943
    %3091 = vst.msk [vmem:[%s3040 + $0x368] sm:$0xff] %vm2958, %v2944
    %3092 = vst.msk [vmem:[%s3040 + $0x370] sm:$0xff] %vm2958, %v2945
    %3093 = vst.msk [vmem:[%s3040 + $0x388] sm:$0xff] %vm2958, %v2946
    %3094 = vst.msk [vmem:[%s3040 + $0x390] sm:$0xff] %vm2958, %v2947
    %3095 = vst.msk [vmem:[%s3040 + $0x3a8] sm:$0xff] %vm2958, %v2948
    %3096 = vst.msk [vmem:[%s3040 + $0x3b0] sm:$0xff] %vm2958, %v2949
    %3097 = vst.msk [vmem:[%s3040 + $0x3c8] sm:$0xff] %vm2958, %v2950
    %3098 = vst.msk [vmem:[%s3040 + $0x3d0] sm:$0xff] %vm2958, %v2951
    %3099 = vst.msk [vmem:[%s3040 + $0x3e8] sm:$0xff] %vm2958, %v2952
    %3100 = vst.msk [vmem:[%s3040 + $0x3f0] sm:$0xff] %vm2958, %v2953
    %3101 = vst.msk [vmem:[%s3040 + $0x408] sm:$0xff] %vm2958, %v2954
    %3102 = vst.msk [vmem:[%s3040 + $0x410] sm:$0xff] %vm2958, %v2955
    %3103 = vst.msk [vmem:[%s3040 + $0x428] sm:$0xff] %vm2958, %v2956
    %3104 = vst.msk [vmem:[%s3040 + $0x430] sm:$0xff] %vm2958, %v2957
    %v3105 = vld [vmem:[#allocation3 + $0x7] sm:$0xff]
    %v3106 = vld [vmem:[#allocation3 + $0xf] sm:$0xff]
    %v3107 = vld [vmem:[#allocation3 + $0x27] sm:$0xff]
    %v3108 = vld [vmem:[#allocation3 + $0x2f] sm:$0xff]
    %v3109 = vld [vmem:[#allocation3 + $0x47] sm:$0xff]
    %v3110 = vld [vmem:[#allocation3 + $0x4f] sm:$0xff]
    %v3111 = vld [vmem:[#allocation3 + $0x67] sm:$0xff]
    %v3112 = vld [vmem:[#allocation3 + $0x6f] sm:$0xff]
    %v3113 = vld [vmem:[#allocation3 + $0x87] sm:$0xff]
    %v3114 = vld [vmem:[#allocation3 + $0x8f] sm:$0xff]
    %v3115 = vld [vmem:[#allocation3 + $0xa7] sm:$0xff]
    %v3116 = vld [vmem:[#allocation3 + $0xaf] sm:$0xff]
    %v3117 = vld [vmem:[#allocation3 + $0xc7] sm:$0xff]
    %v3118 = vld [vmem:[#allocation3 + $0xcf] sm:$0xff]
    %v3119 = vld [vmem:[#allocation3 + $0xe7] sm:$0xff]
    %v3120 = vld [vmem:[#allocation3 + $0xef] sm:$0xff]
    %v3121 = vld [vmem:[#allocation3 + $0x107] sm:$0xff]
    %v3122 = vld [vmem:[#allocation3 + $0x10f] sm:$0xff]
    %v3123 = vld [vmem:[#allocation3 + $0x127] sm:$0xff]
    %v3124 = vld [vmem:[#allocation3 + $0x12f] sm:$0xff]
    %v3125 = vld [vmem:[#allocation3 + $0x147] sm:$0xff]
    %v3126 = vld [vmem:[#allocation3 + $0x14f] sm:$0xff]
    %v3127 = vld [vmem:[#allocation3 + $0x167] sm:$0xff]
    %v3128 = vld [vmem:[#allocation3 + $0x16f] sm:$0xff]
    %v3129 = vld [vmem:[#allocation3 + $0x187] sm:$0xff]
    %v3130 = vld [vmem:[#allocation3 + $0x18f] sm:$0xff]
    %v3131 = vld [vmem:[#allocation3 + $0x1a7] sm:$0xff]
    %v3132 = vld [vmem:[#allocation3 + $0x1af] sm:$0xff]
    %v3133 = vld [vmem:[#allocation3 + $0x1c7] sm:$0xff]
    %v3134 = vld [vmem:[#allocation3 + $0x1cf] sm:$0xff]
    %v3135 = vld [vmem:[#allocation3 + $0x1e7] sm:$0xff]
    %v3136 = vld [vmem:[#allocation3 + $0x1ef] sm:$0xff]
    %v3137 = vld [vmem:[#allocation3 + $0x247] sm:$0xff]
    %v3138 = vld [vmem:[#allocation3 + $0x24f] sm:$0xff]
    %v3139 = vld [vmem:[#allocation3 + $0x267] sm:$0xff]
    %v3140 = vld [vmem:[#allocation3 + $0x26f] sm:$0xff]
    %v3141 = vld [vmem:[#allocation3 + $0x287] sm:$0xff]
    %v3142 = vld [vmem:[#allocation3 + $0x28f] sm:$0xff]
    %v3143 = vld [vmem:[#allocation3 + $0x2a7] sm:$0xff]
    %v3144 = vld [vmem:[#allocation3 + $0x2af] sm:$0xff]
    %v3145 = vld [vmem:[#allocation3 + $0x2c7] sm:$0xff]
    %v3146 = vld [vmem:[#allocation3 + $0x2cf] sm:$0xff]
    %v3147 = vld [vmem:[#allocation3 + $0x2e7] sm:$0xff]
    %v3148 = vld [vmem:[#allocation3 + $0x2ef] sm:$0xff]
    %v3149 = vld [vmem:[#allocation3 + $0x307] sm:$0xff]
    %v3150 = vld [vmem:[#allocation3 + $0x30f] sm:$0xff]
    %v3151 = vld [vmem:[#allocation3 + $0x327] sm:$0xff]
    %v3152 = vld [vmem:[#allocation3 + $0x32f] sm:$0xff]
    %v3153 = vld [vmem:[#allocation3 + $0x347] sm:$0xff]
    %v3154 = vld [vmem:[#allocation3 + $0x34f] sm:$0xff]
    %v3155 = vld [vmem:[#allocation3 + $0x367] sm:$0xff]
    %v3156 = vld [vmem:[#allocation3 + $0x36f] sm:$0xff]
    %v3157 = vld [vmem:[#allocation3 + $0x387] sm:$0xff]
    %v3158 = vld [vmem:[#allocation3 + $0x38f] sm:$0xff]
    %v3159 = vld [vmem:[#allocation3 + $0x3a7] sm:$0xff]
    %v3160 = vld [vmem:[#allocation3 + $0x3af] sm:$0xff]
    %v3161 = vld [vmem:[#allocation3 + $0x3c7] sm:$0xff]
    %v3162 = vld [vmem:[#allocation3 + $0x3cf] sm:$0xff]
    %v3163 = vld [vmem:[#allocation3 + $0x3e7] sm:$0xff]
    %v3164 = vld [vmem:[#allocation3 + $0x3ef] sm:$0xff]
    %v3165 = vld [vmem:[#allocation3 + $0x407] sm:$0xff]
    %v3166 = vld [vmem:[#allocation3 + $0x40f] sm:$0xff]
    %v3167 = vld [vmem:[#allocation3 + $0x427] sm:$0xff]
    %v3168 = vld [vmem:[#allocation3 + $0x42f] sm:$0xff]
    %v3169 = vpack.c.bf16 %v3106, %v3105
    %v3170 = vpack.c.bf16 %v3108, %v3107
    %v3171 = vpack.c.bf16 %v3110, %v3109
    %v3172 = vpack.c.bf16 %v3112, %v3111
    %v3173 = vpack.c.bf16 %v3114, %v3113
    %v3174 = vpack.c.bf16 %v3116, %v3115
    %v3175 = vpack.c.bf16 %v3118, %v3117
    %v3176 = vpack.c.bf16 %v3120, %v3119
    %v3177 = vpack.c.bf16 %v3122, %v3121
    %v3178 = vpack.c.bf16 %v3124, %v3123
    %v3179 = vpack.c.bf16 %v3126, %v3125
    %v3180 = vpack.c.bf16 %v3128, %v3127
    %v3181 = vpack.c.bf16 %v3130, %v3129
    %v3182 = vpack.c.bf16 %v3132, %v3131
    %v3183 = vpack.c.bf16 %v3134, %v3133
    %v3184 = vpack.c.bf16 %v3136, %v3135
    %v3185 = vpack.c.bf16 %v3138, %v3137
    %v3186 = vpack.c.bf16 %v3140, %v3139
    %v3187 = vpack.c.bf16 %v3142, %v3141
    %v3188 = vpack.c.bf16 %v3144, %v3143
    %v3189 = vpack.c.bf16 %v3146, %v3145
    %v3190 = vpack.c.bf16 %v3148, %v3147
    %v3191 = vpack.c.bf16 %v3150, %v3149
    %v3192 = vpack.c.bf16 %v3152, %v3151
    %v3193 = vpack.c.bf16 %v3154, %v3153
    %v3194 = vpack.c.bf16 %v3156, %v3155
    %v3195 = vpack.c.bf16 %v3158, %v3157
    %v3196 = vpack.c.bf16 %v3160, %v3159
    %v3197 = vpack.c.bf16 %v3162, %v3161
    %v3198 = vpack.c.bf16 %v3164, %v3163
    %v3199 = vpack.c.bf16 %v3166, %v3165
    %v3200 = vpack.c.bf16 %v3168, %v3167
    %3201 = vst.msk [vmem:[#allocation5] sm:$0xff] %vm2958, %v3169
    %3202 = vst.msk [vmem:[#allocation5 + $0x10] sm:$0xff] %vm2958, %v3170
    %3203 = vst.msk [vmem:[#allocation5 + $0x20] sm:$0xff] %vm2958, %v3171
    %3204 = vst.msk [vmem:[#allocation5 + $0x30] sm:$0xff] %vm2958, %v3172
    %3205 = vst.msk [vmem:[#allocation5 + $0x40] sm:$0xff] %vm2958, %v3173
    %3206 = vst.msk [vmem:[#allocation5 + $0x50] sm:$0xff] %vm2958, %v3174
    %3207 = vst.msk [vmem:[#allocation5 + $0x60] sm:$0xff] %vm2958, %v3175
    %3208 = vst.msk [vmem:[#allocation5 + $0x70] sm:$0xff] %vm2958, %v3176
    %3209 = vst.msk [vmem:[#allocation5 + $0x80] sm:$0xff] %vm2958, %v3177
    %3210 = vst.msk [vmem:[#allocation5 + $0x90] sm:$0xff] %vm2958, %v3178
    %3211 = vst.msk [vmem:[#allocation5 + $0xa0] sm:$0xff] %vm2958, %v3179
    %3212 = vst.msk [vmem:[#allocation5 + $0xb0] sm:$0xff] %vm2958, %v3180
    %3213 = vst.msk [vmem:[#allocation5 + $0xc0] sm:$0xff] %vm2958, %v3181
    %3214 = vst.msk [vmem:[#allocation5 + $0xd0] sm:$0xff] %vm2958, %v3182
    %3215 = vst.msk [vmem:[#allocation5 + $0xe0] sm:$0xff] %vm2958, %v3183
    %3216 = vst.msk [vmem:[#allocation5 + $0xf0] sm:$0xff] %vm2958, %v3184
    %3217 = vst.msk [vmem:[#allocation5 + $0x100] sm:$0xff] %vm2958, %v3185
    %3218 = vst.msk [vmem:[#allocation5 + $0x110] sm:$0xff] %vm2958, %v3186
    %3219 = vst.msk [vmem:[#allocation5 + $0x120] sm:$0xff] %vm2958, %v3187
    %3220 = vst.msk [vmem:[#allocation5 + $0x130] sm:$0xff] %vm2958, %v3188
    %3221 = vst.msk [vmem:[#allocation5 + $0x140] sm:$0xff] %vm2958, %v3189
    %3222 = vst.msk [vmem:[#allocation5 + $0x150] sm:$0xff] %vm2958, %v3190
    %3223 = vst.msk [vmem:[#allocation5 + $0x160] sm:$0xff] %vm2958, %v3191
    %3224 = vst.msk [vmem:[#allocation5 + $0x170] sm:$0xff] %vm2958, %v3192
    %3225 = vst.msk [vmem:[#allocation5 + $0x180] sm:$0xff] %vm2958, %v3193
    %3226 = vst.msk [vmem:[#allocation5 + $0x190] sm:$0xff] %vm2958, %v3194
    %3227 = vst.msk [vmem:[#allocation5 + $0x1a0] sm:$0xff] %vm2958, %v3195
    %3228 = vst.msk [vmem:[#allocation5 + $0x1b0] sm:$0xff] %vm2958, %v3196
    %3229 = vst.msk [vmem:[#allocation5 + $0x1c0] sm:$0xff] %vm2958, %v3197
    %3230 = vst.msk [vmem:[#allocation5 + $0x1d0] sm:$0xff] %vm2958, %v3198
    %3231 = vst.msk [vmem:[#allocation5 + $0x1e0] sm:$0xff] %vm2958, %v3199
    %3232 = vst.msk [vmem:[#allocation5 + $0x1f0] sm:$0xff] %vm2958, %v3200
    %v3233 = vld [vmem:[#allocation3 + $0x8] sm:$0xff]
    %v3234 = vld [vmem:[#allocation3 + $0x10] sm:$0xff]
    %v3235 = vld [vmem:[#allocation3 + $0x28] sm:$0xff]
    %v3236 = vld [vmem:[#allocation3 + $0x30] sm:$0xff]
    %v3237 = vld [vmem:[#allocation3 + $0x48] sm:$0xff]
    %v3238 = vld [vmem:[#allocation3 + $0x50] sm:$0xff]
    %v3239 = vld [vmem:[#allocation3 + $0x68] sm:$0xff]
    %v3240 = vld [vmem:[#allocation3 + $0x70] sm:$0xff]
    %v3241 = vld [vmem:[#allocation3 + $0x88] sm:$0xff]
    %v3242 = vld [vmem:[#allocation3 + $0x90] sm:$0xff]
    %v3243 = vld [vmem:[#allocation3 + $0xa8] sm:$0xff]
    %v3244 = vld [vmem:[#allocation3 + $0xb0] sm:$0xff]
    %v3245 = vld [vmem:[#allocation3 + $0xc8] sm:$0xff]
    %v3246 = vld [vmem:[#allocation3 + $0xd0] sm:$0xff]
    %v3247 = vld [vmem:[#allocation3 + $0xe8] sm:$0xff]
    %v3248 = vld [vmem:[#allocation3 + $0xf0] sm:$0xff]
    %v3249 = vld [vmem:[#allocation3 + $0x108] sm:$0xff]
    %v3250 = vld [vmem:[#allocation3 + $0x110] sm:$0xff]
    %v3251 = vld [vmem:[#allocation3 + $0x128] sm:$0xff]
    %v3252 = vld [vmem:[#allocation3 + $0x130] sm:$0xff]
    %v3253 = vld [vmem:[#allocation3 + $0x148] sm:$0xff]
    %v3254 = vld [vmem:[#allocation3 + $0x150] sm:$0xff]
    %v3255 = vld [vmem:[#allocation3 + $0x168] sm:$0xff]
    %v3256 = vld [vmem:[#allocation3 + $0x170] sm:$0xff]
    %v3257 = vld [vmem:[#allocation3 + $0x188] sm:$0xff]
    %v3258 = vld [vmem:[#allocation3 + $0x190] sm:$0xff]
    %v3259 = vld [vmem:[#allocation3 + $0x1a8] sm:$0xff]
    %v3260 = vld [vmem:[#allocation3 + $0x1b0] sm:$0xff]
    %v3261 = vld [vmem:[#allocation3 + $0x1c8] sm:$0xff]
    %v3262 = vld [vmem:[#allocation3 + $0x1d0] sm:$0xff]
    %v3263 = vld [vmem:[#allocation3 + $0x1e8] sm:$0xff]
    %v3264 = vld [vmem:[#allocation3 + $0x1f0] sm:$0xff]
    %v3265 = vld [vmem:[#allocation3 + $0x248] sm:$0xff]
    %v3266 = vld [vmem:[#allocation3 + $0x250] sm:$0xff]
    %v3267 = vld [vmem:[#allocation3 + $0x268] sm:$0xff]
    %v3268 = vld [vmem:[#allocation3 + $0x270] sm:$0xff]
    %v3269 = vld [vmem:[#allocation3 + $0x288] sm:$0xff]
    %v3270 = vld [vmem:[#allocation3 + $0x290] sm:$0xff]
    %v3271 = vld [vmem:[#allocation3 + $0x2a8] sm:$0xff]
    %v3272 = vld [vmem:[#allocation3 + $0x2b0] sm:$0xff]
    %v3273 = vld [vmem:[#allocation3 + $0x2c8] sm:$0xff]
    %v3274 = vld [vmem:[#allocation3 + $0x2d0] sm:$0xff]
    %v3275 = vld [vmem:[#allocation3 + $0x2e8] sm:$0xff]
    %v3276 = vld [vmem:[#allocation3 + $0x2f0] sm:$0xff]
    %v3277 = vld [vmem:[#allocation3 + $0x308] sm:$0xff]
    %v3278 = vld [vmem:[#allocation3 + $0x310] sm:$0xff]
    %v3279 = vld [vmem:[#allocation3 + $0x328] sm:$0xff]
    %v3280 = vld [vmem:[#allocation3 + $0x330] sm:$0xff]
    %v3281 = vld [vmem:[#allocation3 + $0x348] sm:$0xff]
    %v3282 = vld [vmem:[#allocation3 + $0x350] sm:$0xff]
    %v3283 = vld [vmem:[#allocation3 + $0x368] sm:$0xff]
    %v3284 = vld [vmem:[#allocation3 + $0x370] sm:$0xff]
    %v3285 = vld [vmem:[#allocation3 + $0x388] sm:$0xff]
    %v3286 = vld [vmem:[#allocation3 + $0x390] sm:$0xff]
    %v3287 = vld [vmem:[#allocation3 + $0x3a8] sm:$0xff]
    %v3288 = vld [vmem:[#allocation3 + $0x3b0] sm:$0xff]
    %v3289 = vld [vmem:[#allocation3 + $0x3c8] sm:$0xff]
    %v3290 = vld [vmem:[#allocation3 + $0x3d0] sm:$0xff]
    %v3291 = vld [vmem:[#allocation3 + $0x3e8] sm:$0xff]
    %v3292 = vld [vmem:[#allocation3 + $0x3f0] sm:$0xff]
    %v3293 = vld [vmem:[#allocation3 + $0x408] sm:$0xff]
    %v3294 = vld [vmem:[#allocation3 + $0x410] sm:$0xff]
    %v3295 = vld [vmem:[#allocation3 + $0x428] sm:$0xff]
    %v3296 = vld [vmem:[#allocation3 + $0x430] sm:$0xff]
    %v3297 = vpack.c.bf16 %v3234, %v3233
    %v3298 = vpack.c.bf16 %v3236, %v3235
    %v3299 = vpack.c.bf16 %v3238, %v3237
    %v3300 = vpack.c.bf16 %v3240, %v3239
    %v3301 = vpack.c.bf16 %v3242, %v3241
    %v3302 = vpack.c.bf16 %v3244, %v3243
    %v3303 = vpack.c.bf16 %v3246, %v3245
    %v3304 = vpack.c.bf16 %v3248, %v3247
    %v3305 = vpack.c.bf16 %v3250, %v3249
    %v3306 = vpack.c.bf16 %v3252, %v3251
    %v3307 = vpack.c.bf16 %v3254, %v3253
    %v3308 = vpack.c.bf16 %v3256, %v3255
    %v3309 = vpack.c.bf16 %v3258, %v3257
    %v3310 = vpack.c.bf16 %v3260, %v3259
    %v3311 = vpack.c.bf16 %v3262, %v3261
    %v3312 = vpack.c.bf16 %v3264, %v3263
    %v3313 = vpack.c.bf16 %v3266, %v3265
    %v3314 = vpack.c.bf16 %v3268, %v3267
    %v3315 = vpack.c.bf16 %v3270, %v3269
    %v3316 = vpack.c.bf16 %v3272, %v3271
    %v3317 = vpack.c.bf16 %v3274, %v3273
    %v3318 = vpack.c.bf16 %v3276, %v3275
    %v3319 = vpack.c.bf16 %v3278, %v3277
    %v3320 = vpack.c.bf16 %v3280, %v3279
    %v3321 = vpack.c.bf16 %v3282, %v3281
    %v3322 = vpack.c.bf16 %v3284, %v3283
    %v3323 = vpack.c.bf16 %v3286, %v3285
    %v3324 = vpack.c.bf16 %v3288, %v3287
    %v3325 = vpack.c.bf16 %v3290, %v3289
    %v3326 = vpack.c.bf16 %v3292, %v3291
    %v3327 = vpack.c.bf16 %v3294, %v3293
    %v3328 = vpack.c.bf16 %v3296, %v3295
    %3361 = vrot.lane.b32.xlu0 %v3297, 8
    %v3362 = vpop.permute.xlu0 %3361
    %3363 = vrot.lane.b32.xlu0 %v3298, 8
    %v3364 = vpop.permute.xlu0 %3363
    %3365 = vrot.lane.b32.xlu0 %v3299, 8
    %v3366 = vpop.permute.xlu0 %3365
    %3367 = vrot.lane.b32.xlu0 %v3300, 8
    %v3368 = vpop.permute.xlu0 %3367
    %3369 = vrot.lane.b32.xlu0 %v3301, 8
    %v3370 = vpop.permute.xlu0 %3369
    %3371 = vrot.lane.b32.xlu0 %v3302, 8
    %v3372 = vpop.permute.xlu0 %3371
    %3373 = vrot.lane.b32.xlu0 %v3303, 8
    %v3374 = vpop.permute.xlu0 %3373
    %3375 = vrot.lane.b32.xlu0 %v3304, 8
    %v3376 = vpop.permute.xlu0 %3375
    %3377 = vrot.lane.b32.xlu0 %v3305, 8
    %v3378 = vpop.permute.xlu0 %3377
    %3379 = vrot.lane.b32.xlu0 %v3306, 8
    %v3380 = vpop.permute.xlu0 %3379
    %3381 = vrot.lane.b32.xlu0 %v3307, 8
    %v3382 = vpop.permute.xlu0 %3381
    %3383 = vrot.lane.b32.xlu0 %v3308, 8
    %v3384 = vpop.permute.xlu0 %3383
    %3385 = vrot.lane.b32.xlu0 %v3309, 8
    %v3386 = vpop.permute.xlu0 %3385
    %3387 = vrot.lane.b32.xlu0 %v3310, 8
    %v3388 = vpop.permute.xlu0 %3387
    %3389 = vrot.lane.b32.xlu0 %v3311, 8
    %v3390 = vpop.permute.xlu0 %3389
    %3391 = vrot.lane.b32.xlu0 %v3312, 8
    %v3392 = vpop.permute.xlu0 %3391
    %3393 = vrot.lane.b32.xlu0 %v3313, 8
    %v3394 = vpop.permute.xlu0 %3393
    %3395 = vrot.lane.b32.xlu0 %v3314, 8
    %v3396 = vpop.permute.xlu0 %3395
    %3397 = vrot.lane.b32.xlu0 %v3315, 8
    %v3398 = vpop.permute.xlu0 %3397
    %3399 = vrot.lane.b32.xlu0 %v3316, 8
    %v3400 = vpop.permute.xlu0 %3399
    %3401 = vrot.lane.b32.xlu0 %v3317, 8
    %v3402 = vpop.permute.xlu0 %3401
    %3403 = vrot.lane.b32.xlu0 %v3318, 8
    %v3404 = vpop.permute.xlu0 %3403
    %3405 = vrot.lane.b32.xlu0 %v3319, 8
    %v3406 = vpop.permute.xlu0 %3405
    %3407 = vrot.lane.b32.xlu0 %v3320, 8
    %v3408 = vpop.permute.xlu0 %3407
    %3409 = vrot.lane.b32.xlu0 %v3321, 8
    %v3410 = vpop.permute.xlu0 %3409
    %3411 = vrot.lane.b32.xlu0 %v3322, 8
    %v3412 = vpop.permute.xlu0 %3411
    %3413 = vrot.lane.b32.xlu0 %v3323, 8
    %v3414 = vpop.permute.xlu0 %3413
    %3415 = vrot.lane.b32.xlu0 %v3324, 8
    %v3416 = vpop.permute.xlu0 %3415
    %3417 = vrot.lane.b32.xlu0 %v3325, 8
    %v3418 = vpop.permute.xlu0 %3417
    %3419 = vrot.lane.b32.xlu0 %v3326, 8
    %v3420 = vpop.permute.xlu0 %3419
    %3421 = vrot.lane.b32.xlu0 %v3327, 8
    %v3422 = vpop.permute.xlu0 %3421
    %3423 = vrot.lane.b32.xlu0 %v3328, 8
    %v3424 = vpop.permute.xlu0 %3423
    %vm3457 = vcmask 130112
    %3458 = vst.msk [vmem:[#allocation5] sm:$0xff] %vm3457, %v3362
    %3459 = vst.msk [vmem:[#allocation5 + $0x10] sm:$0xff] %vm3457, %v3364
    %3460 = vst.msk [vmem:[#allocation5 + $0x20] sm:$0xff] %vm3457, %v3366
    %3461 = vst.msk [vmem:[#allocation5 + $0x30] sm:$0xff] %vm3457, %v3368
    %3462 = vst.msk [vmem:[#allocation5 + $0x40] sm:$0xff] %vm3457, %v3370
    %3463 = vst.msk [vmem:[#allocation5 + $0x50] sm:$0xff] %vm3457, %v3372
    %3464 = vst.msk [vmem:[#allocation5 + $0x60] sm:$0xff] %vm3457, %v3374
    %3465 = vst.msk [vmem:[#allocation5 + $0x70] sm:$0xff] %vm3457, %v3376
    %3466 = vst.msk [vmem:[#allocation5 + $0x80] sm:$0xff] %vm3457, %v3378
    %3467 = vst.msk [vmem:[#allocation5 + $0x90] sm:$0xff] %vm3457, %v3380
    %3468 = vst.msk [vmem:[#allocation5 + $0xa0] sm:$0xff] %vm3457, %v3382
    %3469 = vst.msk [vmem:[#allocation5 + $0xb0] sm:$0xff] %vm3457, %v3384
    %3470 = vst.msk [vmem:[#allocation5 + $0xc0] sm:$0xff] %vm3457, %v3386
    %3471 = vst.msk [vmem:[#allocation5 + $0xd0] sm:$0xff] %vm3457, %v3388
    %3472 = vst.msk [vmem:[#allocation5 + $0xe0] sm:$0xff] %vm3457, %v3390
    %3473 = vst.msk [vmem:[#allocation5 + $0xf0] sm:$0xff] %vm3457, %v3392
    %3474 = vst.msk [vmem:[#allocation5 + $0x100] sm:$0xff] %vm3457, %v3394
    %3475 = vst.msk [vmem:[#allocation5 + $0x110] sm:$0xff] %vm3457, %v3396
    %3476 = vst.msk [vmem:[#allocation5 + $0x120] sm:$0xff] %vm3457, %v3398
    %3477 = vst.msk [vmem:[#allocation5 + $0x130] sm:$0xff] %vm3457, %v3400
    %3478 = vst.msk [vmem:[#allocation5 + $0x140] sm:$0xff] %vm3457, %v3402
    %3479 = vst.msk [vmem:[#allocation5 + $0x150] sm:$0xff] %vm3457, %v3404
    %3480 = vst.msk [vmem:[#allocation5 + $0x160] sm:$0xff] %vm3457, %v3406
    %3481 = vst.msk [vmem:[#allocation5 + $0x170] sm:$0xff] %vm3457, %v3408
    %3482 = vst.msk [vmem:[#allocation5 + $0x180] sm:$0xff] %vm3457, %v3410
    %3483 = vst.msk [vmem:[#allocation5 + $0x190] sm:$0xff] %vm3457, %v3412
    %3484 = vst.msk [vmem:[#allocation5 + $0x1a0] sm:$0xff] %vm3457, %v3414
    %3485 = vst.msk [vmem:[#allocation5 + $0x1b0] sm:$0xff] %vm3457, %v3416
    %3486 = vst.msk [vmem:[#allocation5 + $0x1c0] sm:$0xff] %vm3457, %v3418
    %3487 = vst.msk [vmem:[#allocation5 + $0x1d0] sm:$0xff] %vm3457, %v3420
    %3488 = vst.msk [vmem:[#allocation5 + $0x1e0] sm:$0xff] %vm3457, %v3422
    %3489 = vst.msk [vmem:[#allocation5 + $0x1f0] sm:$0xff] %vm3457, %v3424
    %v3490 = vld [vmem:[#allocation3 + $0x9] sm:$0xff]
    %v3491 = vld [vmem:[#allocation3 + $0x11] sm:$0xff]
    %v3492 = vld [vmem:[#allocation3 + $0x29] sm:$0xff]
    %v3493 = vld [vmem:[#allocation3 + $0x31] sm:$0xff]
    %v3494 = vld [vmem:[#allocation3 + $0x49] sm:$0xff]
    %v3495 = vld [vmem:[#allocation3 + $0x51] sm:$0xff]
    %v3496 = vld [vmem:[#allocation3 + $0x69] sm:$0xff]
    %v3497 = vld [vmem:[#allocation3 + $0x71] sm:$0xff]
    %v3498 = vld [vmem:[#allocation3 + $0x89] sm:$0xff]
    %v3499 = vld [vmem:[#allocation3 + $0x91] sm:$0xff]
    %v3500 = vld [vmem:[#allocation3 + $0xa9] sm:$0xff]
    %v3501 = vld [vmem:[#allocation3 + $0xb1] sm:$0xff]
    %v3502 = vld [vmem:[#allocation3 + $0xc9] sm:$0xff]
    %v3503 = vld [vmem:[#allocation3 + $0xd1] sm:$0xff]
    %v3504 = vld [vmem:[#allocation3 + $0xe9] sm:$0xff]
    %v3505 = vld [vmem:[#allocation3 + $0xf1] sm:$0xff]
    %v3506 = vld [vmem:[#allocation3 + $0x109] sm:$0xff]
    %v3507 = vld [vmem:[#allocation3 + $0x111] sm:$0xff]
    %v3508 = vld [vmem:[#allocation3 + $0x129] sm:$0xff]
    %v3509 = vld [vmem:[#allocation3 + $0x131] sm:$0xff]
    %v3510 = vld [vmem:[#allocation3 + $0x149] sm:$0xff]
    %v3511 = vld [vmem:[#allocation3 + $0x151] sm:$0xff]
    %v3512 = vld [vmem:[#allocation3 + $0x169] sm:$0xff]
    %v3513 = vld [vmem:[#allocation3 + $0x171] sm:$0xff]
    %v3514 = vld [vmem:[#allocation3 + $0x189] sm:$0xff]
    %v3515 = vld [vmem:[#allocation3 + $0x191] sm:$0xff]
    %v3516 = vld [vmem:[#allocation3 + $0x1a9] sm:$0xff]
    %v3517 = vld [vmem:[#allocation3 + $0x1b1] sm:$0xff]
    %v3518 = vld [vmem:[#allocation3 + $0x1c9] sm:$0xff]
    %v3519 = vld [vmem:[#allocation3 + $0x1d1] sm:$0xff]
    %v3520 = vld [vmem:[#allocation3 + $0x1e9] sm:$0xff]
    %v3521 = vld [vmem:[#allocation3 + $0x1f1] sm:$0xff]
    %v3522 = vld [vmem:[#allocation3 + $0x249] sm:$0xff]
    %v3523 = vld [vmem:[#allocation3 + $0x251] sm:$0xff]
    %v3524 = vld [vmem:[#allocation3 + $0x269] sm:$0xff]
    %v3525 = vld [vmem:[#allocation3 + $0x271] sm:$0xff]
    %v3526 = vld [vmem:[#allocation3 + $0x289] sm:$0xff]
    %v3527 = vld [vmem:[#allocation3 + $0x291] sm:$0xff]
    %v3528 = vld [vmem:[#allocation3 + $0x2a9] sm:$0xff]
    %v3529 = vld [vmem:[#allocation3 + $0x2b1] sm:$0xff]
    %v3530 = vld [vmem:[#allocation3 + $0x2c9] sm:$0xff]
    %v3531 = vld [vmem:[#allocation3 + $0x2d1] sm:$0xff]
    %v3532 = vld [vmem:[#allocation3 + $0x2e9] sm:$0xff]
    %v3533 = vld [vmem:[#allocation3 + $0x2f1] sm:$0xff]
    %v3534 = vld [vmem:[#allocation3 + $0x309] sm:$0xff]
    %v3535 = vld [vmem:[#allocation3 + $0x311] sm:$0xff]
    %v3536 = vld [vmem:[#allocation3 + $0x329] sm:$0xff]
    %v3537 = vld [vmem:[#allocation3 + $0x331] sm:$0xff]
    %v3538 = vld [vmem:[#allocation3 + $0x349] sm:$0xff]
    %v3539 = vld [vmem:[#allocation3 + $0x351] sm:$0xff]
    %v3540 = vld [vmem:[#allocation3 + $0x369] sm:$0xff]
    %v3541 = vld [vmem:[#allocation3 + $0x371] sm:$0xff]
    %v3542 = vld [vmem:[#allocation3 + $0x389] sm:$0xff]
    %v3543 = vld [vmem:[#allocation3 + $0x391] sm:$0xff]
    %v3544 = vld [vmem:[#allocation3 + $0x3a9] sm:$0xff]
    %v3545 = vld [vmem:[#allocation3 + $0x3b1] sm:$0xff]
    %v3546 = vld [vmem:[#allocation3 + $0x3c9] sm:$0xff]
    %v3547 = vld [vmem:[#allocation3 + $0x3d1] sm:$0xff]
    %v3548 = vld [vmem:[#allocation3 + $0x3e9] sm:$0xff]
    %v3549 = vld [vmem:[#allocation3 + $0x3f1] sm:$0xff]
    %v3550 = vld [vmem:[#allocation3 + $0x409] sm:$0xff]
    %v3551 = vld [vmem:[#allocation3 + $0x411] sm:$0xff]
    %v3552 = vld [vmem:[#allocation3 + $0x429] sm:$0xff]
    %v3553 = vld [vmem:[#allocation3 + $0x431] sm:$0xff]
    %v3554 = vpack.c.bf16 %v3491, %v3490
    %v3555 = vpack.c.bf16 %v3493, %v3492
    %v3556 = vpack.c.bf16 %v3495, %v3494
    %v3557 = vpack.c.bf16 %v3497, %v3496
    %v3558 = vpack.c.bf16 %v3499, %v3498
    %v3559 = vpack.c.bf16 %v3501, %v3500
    %v3560 = vpack.c.bf16 %v3503, %v3502
    %v3561 = vpack.c.bf16 %v3505, %v3504
    %v3562 = vpack.c.bf16 %v3507, %v3506
    %v3563 = vpack.c.bf16 %v3509, %v3508
    %v3564 = vpack.c.bf16 %v3511, %v3510
    %v3565 = vpack.c.bf16 %v3513, %v3512
    %v3566 = vpack.c.bf16 %v3515, %v3514
    %v3567 = vpack.c.bf16 %v3517, %v3516
    %v3568 = vpack.c.bf16 %v3519, %v3518
    %v3569 = vpack.c.bf16 %v3521, %v3520
    %v3570 = vpack.c.bf16 %v3523, %v3522
    %v3571 = vpack.c.bf16 %v3525, %v3524
    %v3572 = vpack.c.bf16 %v3527, %v3526
    %v3573 = vpack.c.bf16 %v3529, %v3528
    %v3574 = vpack.c.bf16 %v3531, %v3530
    %v3575 = vpack.c.bf16 %v3533, %v3532
    %v3576 = vpack.c.bf16 %v3535, %v3534
    %v3577 = vpack.c.bf16 %v3537, %v3536
    %v3578 = vpack.c.bf16 %v3539, %v3538
    %v3579 = vpack.c.bf16 %v3541, %v3540
    %v3580 = vpack.c.bf16 %v3543, %v3542
    %v3581 = vpack.c.bf16 %v3545, %v3544
    %v3582 = vpack.c.bf16 %v3547, %v3546
    %v3583 = vpack.c.bf16 %v3549, %v3548
    %v3584 = vpack.c.bf16 %v3551, %v3550
    %v3585 = vpack.c.bf16 %v3553, %v3552
    %3618 = vrot.lane.b32.xlu0 %v3554, 16
    %v3619 = vpop.permute.xlu0 %3618
    %3620 = vrot.lane.b32.xlu0 %v3555, 16
    %v3621 = vpop.permute.xlu0 %3620
    %3622 = vrot.lane.b32.xlu0 %v3556, 16
    %v3623 = vpop.permute.xlu0 %3622
    %3624 = vrot.lane.b32.xlu0 %v3557, 16
    %v3625 = vpop.permute.xlu0 %3624
    %3626 = vrot.lane.b32.xlu0 %v3558, 16
    %v3627 = vpop.permute.xlu0 %3626
    %3628 = vrot.lane.b32.xlu0 %v3559, 16
    %v3629 = vpop.permute.xlu0 %3628
    %3630 = vrot.lane.b32.xlu0 %v3560, 16
    %v3631 = vpop.permute.xlu0 %3630
    %3632 = vrot.lane.b32.xlu0 %v3561, 16
    %v3633 = vpop.permute.xlu0 %3632
    %3634 = vrot.lane.b32.xlu0 %v3562, 16
    %v3635 = vpop.permute.xlu0 %3634
    %3636 = vrot.lane.b32.xlu0 %v3563, 16
    %v3637 = vpop.permute.xlu0 %3636
    %3638 = vrot.lane.b32.xlu0 %v3564, 16
    %v3639 = vpop.permute.xlu0 %3638
    %3640 = vrot.lane.b32.xlu0 %v3565, 16
    %v3641 = vpop.permute.xlu0 %3640
    %3642 = vrot.lane.b32.xlu0 %v3566, 16
    %v3643 = vpop.permute.xlu0 %3642
    %3644 = vrot.lane.b32.xlu0 %v3567, 16
    %v3645 = vpop.permute.xlu0 %3644
    %3646 = vrot.lane.b32.xlu0 %v3568, 16
    %v3647 = vpop.permute.xlu0 %3646
    %3648 = vrot.lane.b32.xlu0 %v3569, 16
    %v3649 = vpop.permute.xlu0 %3648
    %3650 = vrot.lane.b32.xlu0 %v3570, 16
    %v3651 = vpop.permute.xlu0 %3650
    %3652 = vrot.lane.b32.xlu0 %v3571, 16
    %v3653 = vpop.permute.xlu0 %3652
    %3654 = vrot.lane.b32.xlu0 %v3572, 16
    %v3655 = vpop.permute.xlu0 %3654
    %3656 = vrot.lane.b32.xlu0 %v3573, 16
    %v3657 = vpop.permute.xlu0 %3656
    %3658 = vrot.lane.b32.xlu0 %v3574, 16
    %v3659 = vpop.permute.xlu0 %3658
    %3660 = vrot.lane.b32.xlu0 %v3575, 16
    %v3661 = vpop.permute.xlu0 %3660
    %3662 = vrot.lane.b32.xlu0 %v3576, 16
    %v3663 = vpop.permute.xlu0 %3662
    %3664 = vrot.lane.b32.xlu0 %v3577, 16
    %v3665 = vpop.permute.xlu0 %3664
    %3666 = vrot.lane.b32.xlu0 %v3578, 16
    %v3667 = vpop.permute.xlu0 %3666
    %3668 = vrot.lane.b32.xlu0 %v3579, 16
    %v3669 = vpop.permute.xlu0 %3668
    %3670 = vrot.lane.b32.xlu0 %v3580, 16
    %v3671 = vpop.permute.xlu0 %3670
    %3672 = vrot.lane.b32.xlu0 %v3581, 16
    %v3673 = vpop.permute.xlu0 %3672
    %3674 = vrot.lane.b32.xlu0 %v3582, 16
    %v3675 = vpop.permute.xlu0 %3674
    %3676 = vrot.lane.b32.xlu0 %v3583, 16
    %v3677 = vpop.permute.xlu0 %3676
    %3678 = vrot.lane.b32.xlu0 %v3584, 16
    %v3679 = vpop.permute.xlu0 %3678
    %3680 = vrot.lane.b32.xlu0 %v3585, 16
    %v3681 = vpop.permute.xlu0 %3680
    %vm3714 = vcmask 195712
    %3715 = vst.msk [vmem:[#allocation5] sm:$0xff] %vm3714, %v3619
    %3716 = vst.msk [vmem:[#allocation5 + $0x10] sm:$0xff] %vm3714, %v3621
    %3717 = vst.msk [vmem:[#allocation5 + $0x20] sm:$0xff] %vm3714, %v3623
    %3718 = vst.msk [vmem:[#allocation5 + $0x30] sm:$0xff] %vm3714, %v3625
    %3719 = vst.msk [vmem:[#allocation5 + $0x40] sm:$0xff] %vm3714, %v3627
    %3720 = vst.msk [vmem:[#allocation5 + $0x50] sm:$0xff] %vm3714, %v3629
    %3721 = vst.msk [vmem:[#allocation5 + $0x60] sm:$0xff] %vm3714, %v3631
    %3722 = vst.msk [vmem:[#allocation5 + $0x70] sm:$0xff] %vm3714, %v3633
    %3723 = vst.msk [vmem:[#allocation5 + $0x80] sm:$0xff] %vm3714, %v3635
    %3724 = vst.msk [vmem:[#allocation5 + $0x90] sm:$0xff] %vm3714, %v3637
    %3725 = vst.msk [vmem:[#allocation5 + $0xa0] sm:$0xff] %vm3714, %v3639
    %3726 = vst.msk [vmem:[#allocation5 + $0xb0] sm:$0xff] %vm3714, %v3641
    %3727 = vst.msk [vmem:[#allocation5 + $0xc0] sm:$0xff] %vm3714, %v3643
    %3728 = vst.msk [vmem:[#allocation5 + $0xd0] sm:$0xff] %vm3714, %v3645
    %3729 = vst.msk [vmem:[#allocation5 + $0xe0] sm:$0xff] %vm3714, %v3647
    %3730 = vst.msk [vmem:[#allocation5 + $0xf0] sm:$0xff] %vm3714, %v3649
    %3731 = vst.msk [vmem:[#allocation5 + $0x100] sm:$0xff] %vm3714, %v3651
    %3732 = vst.msk [vmem:[#allocation5 + $0x110] sm:$0xff] %vm3714, %v3653
    %3733 = vst.msk [vmem:[#allocation5 + $0x120] sm:$0xff] %vm3714, %v3655
    %3734 = vst.msk [vmem:[#allocation5 + $0x130] sm:$0xff] %vm3714, %v3657
    %3735 = vst.msk [vmem:[#allocation5 + $0x140] sm:$0xff] %vm3714, %v3659
    %3736 = vst.msk [vmem:[#allocation5 + $0x150] sm:$0xff] %vm3714, %v3661
    %3737 = vst.msk [vmem:[#allocation5 + $0x160] sm:$0xff] %vm3714, %v3663
    %3738 = vst.msk [vmem:[#allocation5 + $0x170] sm:$0xff] %vm3714, %v3665
    %3739 = vst.msk [vmem:[#allocation5 + $0x180] sm:$0xff] %vm3714, %v3667
    %3740 = vst.msk [vmem:[#allocation5 + $0x190] sm:$0xff] %vm3714, %v3669
    %3741 = vst.msk [vmem:[#allocation5 + $0x1a0] sm:$0xff] %vm3714, %v3671
    %3742 = vst.msk [vmem:[#allocation5 + $0x1b0] sm:$0xff] %vm3714, %v3673
    %3743 = vst.msk [vmem:[#allocation5 + $0x1c0] sm:$0xff] %vm3714, %v3675
    %3744 = vst.msk [vmem:[#allocation5 + $0x1d0] sm:$0xff] %vm3714, %v3677
    %3745 = vst.msk [vmem:[#allocation5 + $0x1e0] sm:$0xff] %vm3714, %v3679
    %3746 = vst.msk [vmem:[#allocation5 + $0x1f0] sm:$0xff] %vm3714, %v3681
    %v3747 = vld [vmem:[%s3040 + $0x7] sm:$0xff]
    %v3748 = vld [vmem:[%s3040 + $0xf] sm:$0xff]
    %v3749 = vld [vmem:[%s3040 + $0x27] sm:$0xff]
    %v3750 = vld [vmem:[%s3040 + $0x2f] sm:$0xff]
    %v3751 = vld [vmem:[%s3040 + $0x47] sm:$0xff]
    %v3752 = vld [vmem:[%s3040 + $0x4f] sm:$0xff]
    %v3753 = vld [vmem:[%s3040 + $0x67] sm:$0xff]
    %v3754 = vld [vmem:[%s3040 + $0x6f] sm:$0xff]
    %v3755 = vld [vmem:[%s3040 + $0x87] sm:$0xff]
    %v3756 = vld [vmem:[%s3040 + $0x8f] sm:$0xff]
    %v3757 = vld [vmem:[%s3040 + $0xa7] sm:$0xff]
    %v3758 = vld [vmem:[%s3040 + $0xaf] sm:$0xff]
    %v3759 = vld [vmem:[%s3040 + $0xc7] sm:$0xff]
    %v3760 = vld [vmem:[%s3040 + $0xcf] sm:$0xff]
    %v3761 = vld [vmem:[%s3040 + $0xe7] sm:$0xff]
    %v3762 = vld [vmem:[%s3040 + $0xef] sm:$0xff]
    %v3763 = vld [vmem:[%s3040 + $0x107] sm:$0xff]
    %v3764 = vld [vmem:[%s3040 + $0x10f] sm:$0xff]
    %v3765 = vld [vmem:[%s3040 + $0x127] sm:$0xff]
    %v3766 = vld [vmem:[%s3040 + $0x12f] sm:$0xff]
    %v3767 = vld [vmem:[%s3040 + $0x147] sm:$0xff]
    %v3768 = vld [vmem:[%s3040 + $0x14f] sm:$0xff]
    %v3769 = vld [vmem:[%s3040 + $0x167] sm:$0xff]
    %v3770 = vld [vmem:[%s3040 + $0x16f] sm:$0xff]
    %v3771 = vld [vmem:[%s3040 + $0x187] sm:$0xff]
    %v3772 = vld [vmem:[%s3040 + $0x18f] sm:$0xff]
    %v3773 = vld [vmem:[%s3040 + $0x1a7] sm:$0xff]
    %v3774 = vld [vmem:[%s3040 + $0x1af] sm:$0xff]
    %v3775 = vld [vmem:[%s3040 + $0x1c7] sm:$0xff]
    %v3776 = vld [vmem:[%s3040 + $0x1cf] sm:$0xff]
    %v3777 = vld [vmem:[%s3040 + $0x1e7] sm:$0xff]
    %v3778 = vld [vmem:[%s3040 + $0x1ef] sm:$0xff]
    %v3779 = vld [vmem:[%s3040 + $0x247] sm:$0xff]
    %v3780 = vld [vmem:[%s3040 + $0x24f] sm:$0xff]
    %v3781 = vld [vmem:[%s3040 + $0x267] sm:$0xff]
    %v3782 = vld [vmem:[%s3040 + $0x26f] sm:$0xff]
    %v3783 = vld [vmem:[%s3040 + $0x287] sm:$0xff]
    %v3784 = vld [vmem:[%s3040 + $0x28f] sm:$0xff]
    %v3785 = vld [vmem:[%s3040 + $0x2a7] sm:$0xff]
    %v3786 = vld [vmem:[%s3040 + $0x2af] sm:$0xff]
    %v3787 = vld [vmem:[%s3040 + $0x2c7] sm:$0xff]
    %v3788 = vld [vmem:[%s3040 + $0x2cf] sm:$0xff]
    %v3789 = vld [vmem:[%s3040 + $0x2e7] sm:$0xff]
    %v3790 = vld [vmem:[%s3040 + $0x2ef] sm:$0xff]
    %v3791 = vld [vmem:[%s3040 + $0x307] sm:$0xff]
    %v3792 = vld [vmem:[%s3040 + $0x30f] sm:$0xff]
    %v3793 = vld [vmem:[%s3040 + $0x327] sm:$0xff]
    %v3794 = vld [vmem:[%s3040 + $0x32f] sm:$0xff]
    %v3795 = vld [vmem:[%s3040 + $0x347] sm:$0xff]
    %v3796 = vld [vmem:[%s3040 + $0x34f] sm:$0xff]
    %v3797 = vld [vmem:[%s3040 + $0x367] sm:$0xff]
    %v3798 = vld [vmem:[%s3040 + $0x36f] sm:$0xff]
    %v3799 = vld [vmem:[%s3040 + $0x387] sm:$0xff]
    %v3800 = vld [vmem:[%s3040 + $0x38f] sm:$0xff]
    %v3801 = vld [vmem:[%s3040 + $0x3a7] sm:$0xff]
    %v3802 = vld [vmem:[%s3040 + $0x3af] sm:$0xff]
    %v3803 = vld [vmem:[%s3040 + $0x3c7] sm:$0xff]
    %v3804 = vld [vmem:[%s3040 + $0x3cf] sm:$0xff]
    %v3805 = vld [vmem:[%s3040 + $0x3e7] sm:$0xff]
    %v3806 = vld [vmem:[%s3040 + $0x3ef] sm:$0xff]
    %v3807 = vld [vmem:[%s3040 + $0x407] sm:$0xff]
    %v3808 = vld [vmem:[%s3040 + $0x40f] sm:$0xff]
    %v3809 = vld [vmem:[%s3040 + $0x427] sm:$0xff]
    %v3810 = vld [vmem:[%s3040 + $0x42f] sm:$0xff]
    %v3811 = vpack.c.bf16 %v3748, %v3747
    %v3812 = vpack.c.bf16 %v3750, %v3749
    %v3813 = vpack.c.bf16 %v3752, %v3751
    %v3814 = vpack.c.bf16 %v3754, %v3753
    %v3815 = vpack.c.bf16 %v3756, %v3755
    %v3816 = vpack.c.bf16 %v3758, %v3757
    %v3817 = vpack.c.bf16 %v3760, %v3759
    %v3818 = vpack.c.bf16 %v3762, %v3761
    %v3819 = vpack.c.bf16 %v3764, %v3763
    %v3820 = vpack.c.bf16 %v3766, %v3765
    %v3821 = vpack.c.bf16 %v3768, %v3767
    %v3822 = vpack.c.bf16 %v3770, %v3769
    %v3823 = vpack.c.bf16 %v3772, %v3771
    %v3824 = vpack.c.bf16 %v3774, %v3773
    %v3825 = vpack.c.bf16 %v3776, %v3775
    %v3826 = vpack.c.bf16 %v3778, %v3777
    %v3827 = vpack.c.bf16 %v3780, %v3779
    %v3828 = vpack.c.bf16 %v3782, %v3781
    %v3829 = vpack.c.bf16 %v3784, %v3783
    %v3830 = vpack.c.bf16 %v3786, %v3785
    %v3831 = vpack.c.bf16 %v3788, %v3787
    %v3832 = vpack.c.bf16 %v3790, %v3789
    %v3833 = vpack.c.bf16 %v3792, %v3791
    %v3834 = vpack.c.bf16 %v3794, %v3793
    %v3835 = vpack.c.bf16 %v3796, %v3795
    %v3836 = vpack.c.bf16 %v3798, %v3797
    %v3837 = vpack.c.bf16 %v3800, %v3799
    %v3838 = vpack.c.bf16 %v3802, %v3801
    %v3839 = vpack.c.bf16 %v3804, %v3803
    %v3840 = vpack.c.bf16 %v3806, %v3805
    %v3841 = vpack.c.bf16 %v3808, %v3807
    %v3842 = vpack.c.bf16 %v3810, %v3809
    %3875 = vrot.lane.b32.xlu0 %v3811, 24
    %v3876 = vpop.permute.xlu0 %3875
    %3877 = vrot.lane.b32.xlu0 %v3812, 24
    %v3878 = vpop.permute.xlu0 %3877
    %3879 = vrot.lane.b32.xlu0 %v3813, 24
    %v3880 = vpop.permute.xlu0 %3879
    %3881 = vrot.lane.b32.xlu0 %v3814, 24
    %v3882 = vpop.permute.xlu0 %3881
    %3883 = vrot.lane.b32.xlu0 %v3815, 24
    %v3884 = vpop.permute.xlu0 %3883
    %3885 = vrot.lane.b32.xlu0 %v3816, 24
    %v3886 = vpop.permute.xlu0 %3885
    %3887 = vrot.lane.b32.xlu0 %v3817, 24
    %v3888 = vpop.permute.xlu0 %3887
    %3889 = vrot.lane.b32.xlu0 %v3818, 24
    %v3890 = vpop.permute.xlu0 %3889
    %3891 = vrot.lane.b32.xlu0 %v3819, 24
    %v3892 = vpop.permute.xlu0 %3891
    %3893 = vrot.lane.b32.xlu0 %v3820, 24
    %v3894 = vpop.permute.xlu0 %3893
    %3895 = vrot.lane.b32.xlu0 %v3821, 24
    %v3896 = vpop.permute.xlu0 %3895
    %3897 = vrot.lane.b32.xlu0 %v3822, 24
    %v3898 = vpop.permute.xlu0 %3897
    %3899 = vrot.lane.b32.xlu0 %v3823, 24
    %v3900 = vpop.permute.xlu0 %3899
    %3901 = vrot.lane.b32.xlu0 %v3824, 24
    %v3902 = vpop.permute.xlu0 %3901
    %3903 = vrot.lane.b32.xlu0 %v3825, 24
    %v3904 = vpop.permute.xlu0 %3903
    %3905 = vrot.lane.b32.xlu0 %v3826, 24
    %v3906 = vpop.permute.xlu0 %3905
    %3907 = vrot.lane.b32.xlu0 %v3827, 24
    %v3908 = vpop.permute.xlu0 %3907
    %3909 = vrot.lane.b32.xlu0 %v3828, 24
    %v3910 = vpop.permute.xlu0 %3909
    %3911 = vrot.lane.b32.xlu0 %v3829, 24
    %v3912 = vpop.permute.xlu0 %3911
    %3913 = vrot.lane.b32.xlu0 %v3830, 24
    %v3914 = vpop.permute.xlu0 %3913
    %3915 = vrot.lane.b32.xlu0 %v3831, 24
    %v3916 = vpop.permute.xlu0 %3915
    %3917 = vrot.lane.b32.xlu0 %v3832, 24
    %v3918 = vpop.permute.xlu0 %3917
    %3919 = vrot.lane.b32.xlu0 %v3833, 24
    %v3920 = vpop.permute.xlu0 %3919
    %3921 = vrot.lane.b32.xlu0 %v3834, 24
    %v3922 = vpop.permute.xlu0 %3921
    %3923 = vrot.lane.b32.xlu0 %v3835, 24
    %v3924 = vpop.permute.xlu0 %3923
    %3925 = vrot.lane.b32.xlu0 %v3836, 24
    %v3926 = vpop.permute.xlu0 %3925
    %3927 = vrot.lane.b32.xlu0 %v3837, 24
    %v3928 = vpop.permute.xlu0 %3927
    %3929 = vrot.lane.b32.xlu0 %v3838, 24
    %v3930 = vpop.permute.xlu0 %3929
    %3931 = vrot.lane.b32.xlu0 %v3839, 24
    %v3932 = vpop.permute.xlu0 %3931
    %3933 = vrot.lane.b32.xlu0 %v3840, 24
    %v3934 = vpop.permute.xlu0 %3933
    %3935 = vrot.lane.b32.xlu0 %v3841, 24
    %v3936 = vpop.permute.xlu0 %3935
    %3937 = vrot.lane.b32.xlu0 %v3842, 24
    %v3938 = vpop.permute.xlu0 %3937
    %vm3971 = vcmask 261312
    %3972 = vst.msk [vmem:[#allocation5] sm:$0xff] %vm3971, %v3876
    %3973 = vst.msk [vmem:[#allocation5 + $0x10] sm:$0xff] %vm3971, %v3878
    %3974 = vst.msk [vmem:[#allocation5 + $0x20] sm:$0xff] %vm3971, %v3880
    %3975 = vst.msk [vmem:[#allocation5 + $0x30] sm:$0xff] %vm3971, %v3882
    %3976 = vst.msk [vmem:[#allocation5 + $0x40] sm:$0xff] %vm3971, %v3884
    %3977 = vst.msk [vmem:[#allocation5 + $0x50] sm:$0xff] %vm3971, %v3886
    %3978 = vst.msk [vmem:[#allocation5 + $0x60] sm:$0xff] %vm3971, %v3888
    %3979 = vst.msk [vmem:[#allocation5 + $0x70] sm:$0xff] %vm3971, %v3890
    %3980 = vst.msk [vmem:[#allocation5 + $0x80] sm:$0xff] %vm3971, %v3892
    %3981 = vst.msk [vmem:[#allocation5 + $0x90] sm:$0xff] %vm3971, %v3894
    %3982 = vst.msk [vmem:[#allocation5 + $0xa0] sm:$0xff] %vm3971, %v3896
    %3983 = vst.msk [vmem:[#allocation5 + $0xb0] sm:$0xff] %vm3971, %v3898
    %3984 = vst.msk [vmem:[#allocation5 + $0xc0] sm:$0xff] %vm3971, %v3900
    %3985 = vst.msk [vmem:[#allocation5 + $0xd0] sm:$0xff] %vm3971, %v3902
    %3986 = vst.msk [vmem:[#allocation5 + $0xe0] sm:$0xff] %vm3971, %v3904
    %3987 = vst.msk [vmem:[#allocation5 + $0xf0] sm:$0xff] %vm3971, %v3906
    %3988 = vst.msk [vmem:[#allocation5 + $0x100] sm:$0xff] %vm3971, %v3908
    %3989 = vst.msk [vmem:[#allocation5 + $0x110] sm:$0xff] %vm3971, %v3910
    %3990 = vst.msk [vmem:[#allocation5 + $0x120] sm:$0xff] %vm3971, %v3912
    %3991 = vst.msk [vmem:[#allocation5 + $0x130] sm:$0xff] %vm3971, %v3914
    %3992 = vst.msk [vmem:[#allocation5 + $0x140] sm:$0xff] %vm3971, %v3916
    %3993 = vst.msk [vmem:[#allocation5 + $0x150] sm:$0xff] %vm3971, %v3918
    %3994 = vst.msk [vmem:[#allocation5 + $0x160] sm:$0xff] %vm3971, %v3920
    %3995 = vst.msk [vmem:[#allocation5 + $0x170] sm:$0xff] %vm3971, %v3922
    %3996 = vst.msk [vmem:[#allocation5 + $0x180] sm:$0xff] %vm3971, %v3924
    %3997 = vst.msk [vmem:[#allocation5 + $0x190] sm:$0xff] %vm3971, %v3926
    %3998 = vst.msk [vmem:[#allocation5 + $0x1a0] sm:$0xff] %vm3971, %v3928
    %3999 = vst.msk [vmem:[#allocation5 + $0x1b0] sm:$0xff] %vm3971, %v3930
    %4000 = vst.msk [vmem:[#allocation5 + $0x1c0] sm:$0xff] %vm3971, %v3932
    %4001 = vst.msk [vmem:[#allocation5 + $0x1d0] sm:$0xff] %vm3971, %v3934
    %4002 = vst.msk [vmem:[#allocation5 + $0x1e0] sm:$0xff] %vm3971, %v3936
    %4003 = vst.msk [vmem:[#allocation5 + $0x1f0] sm:$0xff] %vm3971, %v3938
    %v4004 = vld [vmem:[%s3040 + $0x8] sm:$0xff]
    %v4005 = vld [vmem:[%s3040 + $0x10] sm:$0xff]
    %v4006 = vld [vmem:[%s3040 + $0x28] sm:$0xff]
    %v4007 = vld [vmem:[%s3040 + $0x30] sm:$0xff]
    %v4008 = vld [vmem:[%s3040 + $0x48] sm:$0xff]
    %v4009 = vld [vmem:[%s3040 + $0x50] sm:$0xff]
    %v4010 = vld [vmem:[%s3040 + $0x68] sm:$0xff]
    %v4011 = vld [vmem:[%s3040 + $0x70] sm:$0xff]
    %v4012 = vld [vmem:[%s3040 + $0x88] sm:$0xff]
    %v4013 = vld [vmem:[%s3040 + $0x90] sm:$0xff]
    %v4014 = vld [vmem:[%s3040 + $0xa8] sm:$0xff]
    %v4015 = vld [vmem:[%s3040 + $0xb0] sm:$0xff]
    %v4016 = vld [vmem:[%s3040 + $0xc8] sm:$0xff]
    %v4017 = vld [vmem:[%s3040 + $0xd0] sm:$0xff]
    %v4018 = vld [vmem:[%s3040 + $0xe8] sm:$0xff]
    %v4019 = vld [vmem:[%s3040 + $0xf0] sm:$0xff]
    %v4020 = vld [vmem:[%s3040 + $0x108] sm:$0xff]
    %v4021 = vld [vmem:[%s3040 + $0x110] sm:$0xff]
    %v4022 = vld [vmem:[%s3040 + $0x128] sm:$0xff]
    %v4023 = vld [vmem:[%s3040 + $0x130] sm:$0xff]
    %v4024 = vld [vmem:[%s3040 + $0x148] sm:$0xff]
    %v4025 = vld [vmem:[%s3040 + $0x150] sm:$0xff]
    %v4026 = vld [vmem:[%s3040 + $0x168] sm:$0xff]
    %v4027 = vld [vmem:[%s3040 + $0x170] sm:$0xff]
    %v4028 = vld [vmem:[%s3040 + $0x188] sm:$0xff]
    %v4029 = vld [vmem:[%s3040 + $0x190] sm:$0xff]
    %v4030 = vld [vmem:[%s3040 + $0x1a8] sm:$0xff]
    %v4031 = vld [vmem:[%s3040 + $0x1b0] sm:$0xff]
    %v4032 = vld [vmem:[%s3040 + $0x1c8] sm:$0xff]
    %v4033 = vld [vmem:[%s3040 + $0x1d0] sm:$0xff]
    %v4034 = vld [vmem:[%s3040 + $0x1e8] sm:$0xff]
    %v4035 = vld [vmem:[%s3040 + $0x1f0] sm:$0xff]
    %v4036 = vld [vmem:[%s3040 + $0x248] sm:$0xff]
    %v4037 = vld [vmem:[%s3040 + $0x250] sm:$0xff]
    %v4038 = vld [vmem:[%s3040 + $0x268] sm:$0xff]
    %v4039 = vld [vmem:[%s3040 + $0x270] sm:$0xff]
    %v4040 = vld [vmem:[%s3040 + $0x288] sm:$0xff]
    %v4041 = vld [vmem:[%s3040 + $0x290] sm:$0xff]
    %v4042 = vld [vmem:[%s3040 + $0x2a8] sm:$0xff]
    %v4043 = vld [vmem:[%s3040 + $0x2b0] sm:$0xff]
    %v4044 = vld [vmem:[%s3040 + $0x2c8] sm:$0xff]
    %v4045 = vld [vmem:[%s3040 + $0x2d0] sm:$0xff]
    %v4046 = vld [vmem:[%s3040 + $0x2e8] sm:$0xff]
    %v4047 = vld [vmem:[%s3040 + $0x2f0] sm:$0xff]
    %v4048 = vld [vmem:[%s3040 + $0x308] sm:$0xff]
    %v4049 = vld [vmem:[%s3040 + $0x310] sm:$0xff]
    %v4050 = vld [vmem:[%s3040 + $0x328] sm:$0xff]
    %v4051 = vld [vmem:[%s3040 + $0x330] sm:$0xff]
    %v4052 = vld [vmem:[%s3040 + $0x348] sm:$0xff]
    %v4053 = vld [vmem:[%s3040 + $0x350] sm:$0xff]
    %v4054 = vld [vmem:[%s3040 + $0x368] sm:$0xff]
    %v4055 = vld [vmem:[%s3040 + $0x370] sm:$0xff]
    %v4056 = vld [vmem:[%s3040 + $0x388] sm:$0xff]
    %v4057 = vld [vmem:[%s3040 + $0x390] sm:$0xff]
    %v4058 = vld [vmem:[%s3040 + $0x3a8] sm:$0xff]
    %v4059 = vld [vmem:[%s3040 + $0x3b0] sm:$0xff]
    %v4060 = vld [vmem:[%s3040 + $0x3c8] sm:$0xff]
    %v4061 = vld [vmem:[%s3040 + $0x3d0] sm:$0xff]
    %v4062 = vld [vmem:[%s3040 + $0x3e8] sm:$0xff]
    %v4063 = vld [vmem:[%s3040 + $0x3f0] sm:$0xff]
    %v4064 = vld [vmem:[%s3040 + $0x408] sm:$0xff]
    %v4065 = vld [vmem:[%s3040 + $0x410] sm:$0xff]
    %v4066 = vld [vmem:[%s3040 + $0x428] sm:$0xff]
    %v4067 = vld [vmem:[%s3040 + $0x430] sm:$0xff]
    %v4068 = vpack.c.bf16 %v4005, %v4004
    %v4069 = vpack.c.bf16 %v4007, %v4006
    %v4070 = vpack.c.bf16 %v4009, %v4008
    %v4071 = vpack.c.bf16 %v4011, %v4010
    %v4072 = vpack.c.bf16 %v4013, %v4012
    %v4073 = vpack.c.bf16 %v4015, %v4014
    %v4074 = vpack.c.bf16 %v4017, %v4016
    %v4075 = vpack.c.bf16 %v4019, %v4018
    %v4076 = vpack.c.bf16 %v4021, %v4020
    %v4077 = vpack.c.bf16 %v4023, %v4022
    %v4078 = vpack.c.bf16 %v4025, %v4024
    %v4079 = vpack.c.bf16 %v4027, %v4026
    %v4080 = vpack.c.bf16 %v4029, %v4028
    %v4081 = vpack.c.bf16 %v4031, %v4030
    %v4082 = vpack.c.bf16 %v4033, %v4032
    %v4083 = vpack.c.bf16 %v4035, %v4034
    %v4084 = vpack.c.bf16 %v4037, %v4036
    %v4085 = vpack.c.bf16 %v4039, %v4038
    %v4086 = vpack.c.bf16 %v4041, %v4040
    %v4087 = vpack.c.bf16 %v4043, %v4042
    %v4088 = vpack.c.bf16 %v4045, %v4044
    %v4089 = vpack.c.bf16 %v4047, %v4046
    %v4090 = vpack.c.bf16 %v4049, %v4048
    %v4091 = vpack.c.bf16 %v4051, %v4050
    %v4092 = vpack.c.bf16 %v4053, %v4052
    %v4093 = vpack.c.bf16 %v4055, %v4054
    %v4094 = vpack.c.bf16 %v4057, %v4056
    %v4095 = vpack.c.bf16 %v4059, %v4058
    %v4096 = vpack.c.bf16 %v4061, %v4060
    %v4097 = vpack.c.bf16 %v4063, %v4062
    %v4098 = vpack.c.bf16 %v4065, %v4064
    %v4099 = vpack.c.bf16 %v4067, %v4066
    %4132 = vrot.lane.b32.xlu0 %v4068, 32
    %v4133 = vpop.permute.xlu0 %4132
    %4134 = vrot.lane.b32.xlu0 %v4069, 32
    %v4135 = vpop.permute.xlu0 %4134
    %4136 = vrot.lane.b32.xlu0 %v4070, 32
    %v4137 = vpop.permute.xlu0 %4136
    %4138 = vrot.lane.b32.xlu0 %v4071, 32
    %v4139 = vpop.permute.xlu0 %4138
    %4140 = vrot.lane.b32.xlu0 %v4072, 32
    %v4141 = vpop.permute.xlu0 %4140
    %4142 = vrot.lane.b32.xlu0 %v4073, 32
    %v4143 = vpop.permute.xlu0 %4142
    %4144 = vrot.lane.b32.xlu0 %v4074, 32
    %v4145 = vpop.permute.xlu0 %4144
    %4146 = vrot.lane.b32.xlu0 %v4075, 32
    %v4147 = vpop.permute.xlu0 %4146
    %4148 = vrot.lane.b32.xlu0 %v4076, 32
    %v4149 = vpop.permute.xlu0 %4148
    %4150 = vrot.lane.b32.xlu0 %v4077, 32
    %v4151 = vpop.permute.xlu0 %4150
    %4152 = vrot.lane.b32.xlu0 %v4078, 32
    %v4153 = vpop.permute.xlu0 %4152
    %4154 = vrot.lane.b32.xlu0 %v4079, 32
    %v4155 = vpop.permute.xlu0 %4154
    %4156 = vrot.lane.b32.xlu0 %v4080, 32
    %v4157 = vpop.permute.xlu0 %4156
    %4158 = vrot.lane.b32.xlu0 %v4081, 32
    %v4159 = vpop.permute.xlu0 %4158
    %4160 = vrot.lane.b32.xlu0 %v4082, 32
    %v4161 = vpop.permute.xlu0 %4160
    %4162 = vrot.lane.b32.xlu0 %v4083, 32
    %v4163 = vpop.permute.xlu0 %4162
    %4164 = vrot.lane.b32.xlu0 %v4084, 32
    %v4165 = vpop.permute.xlu0 %4164
    %4166 = vrot.lane.b32.xlu0 %v4085, 32
    %v4167 = vpop.permute.xlu0 %4166
    %4168 = vrot.lane.b32.xlu0 %v4086, 32
    %v4169 = vpop.permute.xlu0 %4168
    %4170 = vrot.lane.b32.xlu0 %v4087, 32
    %v4171 = vpop.permute.xlu0 %4170
    %4172 = vrot.lane.b32.xlu0 %v4088, 32
    %v4173 = vpop.permute.xlu0 %4172
    %4174 = vrot.lane.b32.xlu0 %v4089, 32
    %v4175 = vpop.permute.xlu0 %4174
    %4176 = vrot.lane.b32.xlu0 %v4090, 32
    %v4177 = vpop.permute.xlu0 %4176
    %4178 = vrot.lane.b32.xlu0 %v4091, 32
    %v4179 = vpop.permute.xlu0 %4178
    %4180 = vrot.lane.b32.xlu0 %v4092, 32
    %v4181 = vpop.permute.xlu0 %4180
    %4182 = vrot.lane.b32.xlu0 %v4093, 32
    %v4183 = vpop.permute.xlu0 %4182
    %4184 = vrot.lane.b32.xlu0 %v4094, 32
    %v4185 = vpop.permute.xlu0 %4184
    %4186 = vrot.lane.b32.xlu0 %v4095, 32
    %v4187 = vpop.permute.xlu0 %4186
    %4188 = vrot.lane.b32.xlu0 %v4096, 32
    %v4189 = vpop.permute.xlu0 %4188
    %4190 = vrot.lane.b32.xlu0 %v4097, 32
    %v4191 = vpop.permute.xlu0 %4190
    %4192 = vrot.lane.b32.xlu0 %v4098, 32
    %v4193 = vpop.permute.xlu0 %4192
    %4194 = vrot.lane.b32.xlu0 %v4099, 32
    %v4195 = vpop.permute.xlu0 %4194
    %vm4228 = vcmask 326912
    %4229 = vst.msk [vmem:[#allocation5] sm:$0xff] %vm4228, %v4133
    %4230 = vst.msk [vmem:[#allocation5 + $0x10] sm:$0xff] %vm4228, %v4135
    %4231 = vst.msk [vmem:[#allocation5 + $0x20] sm:$0xff] %vm4228, %v4137
    %4232 = vst.msk [vmem:[#allocation5 + $0x30] sm:$0xff] %vm4228, %v4139
    %4233 = vst.msk [vmem:[#allocation5 + $0x40] sm:$0xff] %vm4228, %v4141
    %4234 = vst.msk [vmem:[#allocation5 + $0x50] sm:$0xff] %vm4228, %v4143
    %4235 = vst.msk [vmem:[#allocation5 + $0x60] sm:$0xff] %vm4228, %v4145
    %4236 = vst.msk [vmem:[#allocation5 + $0x70] sm:$0xff] %vm4228, %v4147
    %4237 = vst.msk [vmem:[#allocation5 + $0x80] sm:$0xff] %vm4228, %v4149
    %4238 = vst.msk [vmem:[#allocation5 + $0x90] sm:$0xff] %vm4228, %v4151
    %4239 = vst.msk [vmem:[#allocation5 + $0xa0] sm:$0xff] %vm4228, %v4153
    %4240 = vst.msk [vmem:[#allocation5 + $0xb0] sm:$0xff] %vm4228, %v4155
    %4241 = vst.msk [vmem:[#allocation5 + $0xc0] sm:$0xff] %vm4228, %v4157
    %4242 = vst.msk [vmem:[#allocation5 + $0xd0] sm:$0xff] %vm4228, %v4159
    %4243 = vst.msk [vmem:[#allocation5 + $0xe0] sm:$0xff] %vm4228, %v4161
    %4244 = vst.msk [vmem:[#allocation5 + $0xf0] sm:$0xff] %vm4228, %v4163
    %4245 = vst.msk [vmem:[#allocation5 + $0x100] sm:$0xff] %vm4228, %v4165
    %4246 = vst.msk [vmem:[#allocation5 + $0x110] sm:$0xff] %vm4228, %v4167
    %4247 = vst.msk [vmem:[#allocation5 + $0x120] sm:$0xff] %vm4228, %v4169
    %4248 = vst.msk [vmem:[#allocation5 + $0x130] sm:$0xff] %vm4228, %v4171
    %4249 = vst.msk [vmem:[#allocation5 + $0x140] sm:$0xff] %vm4228, %v4173
    %4250 = vst.msk [vmem:[#allocation5 + $0x150] sm:$0xff] %vm4228, %v4175
    %4251 = vst.msk [vmem:[#allocation5 + $0x160] sm:$0xff] %vm4228, %v4177
    %4252 = vst.msk [vmem:[#allocation5 + $0x170] sm:$0xff] %vm4228, %v4179
    %4253 = vst.msk [vmem:[#allocation5 + $0x180] sm:$0xff] %vm4228, %v4181
    %4254 = vst.msk [vmem:[#allocation5 + $0x190] sm:$0xff] %vm4228, %v4183
    %4255 = vst.msk [vmem:[#allocation5 + $0x1a0] sm:$0xff] %vm4228, %v4185
    %4256 = vst.msk [vmem:[#allocation5 + $0x1b0] sm:$0xff] %vm4228, %v4187
    %4257 = vst.msk [vmem:[#allocation5 + $0x1c0] sm:$0xff] %vm4228, %v4189
    %4258 = vst.msk [vmem:[#allocation5 + $0x1d0] sm:$0xff] %vm4228, %v4191
    %4259 = vst.msk [vmem:[#allocation5 + $0x1e0] sm:$0xff] %vm4228, %v4193
    %4260 = vst.msk [vmem:[#allocation5 + $0x1f0] sm:$0xff] %vm4228, %v4195
    %v4261 = vld [vmem:[%s3040 + $0x9] sm:$0xff]
    %v4262 = vld [vmem:[%s3040 + $0x11] sm:$0xff]
    %v4263 = vld [vmem:[%s3040 + $0x29] sm:$0xff]
    %v4264 = vld [vmem:[%s3040 + $0x31] sm:$0xff]
    %v4265 = vld [vmem:[%s3040 + $0x49] sm:$0xff]
    %v4266 = vld [vmem:[%s3040 + $0x51] sm:$0xff]
    %v4267 = vld [vmem:[%s3040 + $0x69] sm:$0xff]
    %v4268 = vld [vmem:[%s3040 + $0x71] sm:$0xff]
    %v4269 = vld [vmem:[%s3040 + $0x89] sm:$0xff]
    %v4270 = vld [vmem:[%s3040 + $0x91] sm:$0xff]
    %v4271 = vld [vmem:[%s3040 + $0xa9] sm:$0xff]
    %v4272 = vld [vmem:[%s3040 + $0xb1] sm:$0xff]
    %v4273 = vld [vmem:[%s3040 + $0xc9] sm:$0xff]
    %v4274 = vld [vmem:[%s3040 + $0xd1] sm:$0xff]
    %v4275 = vld [vmem:[%s3040 + $0xe9] sm:$0xff]
    %v4276 = vld [vmem:[%s3040 + $0xf1] sm:$0xff]
    %v4277 = vld [vmem:[%s3040 + $0x109] sm:$0xff]
    %v4278 = vld [vmem:[%s3040 + $0x111] sm:$0xff]
    %v4279 = vld [vmem:[%s3040 + $0x129] sm:$0xff]
    %v4280 = vld [vmem:[%s3040 + $0x131] sm:$0xff]
    %v4281 = vld [vmem:[%s3040 + $0x149] sm:$0xff]
    %v4282 = vld [vmem:[%s3040 + $0x151] sm:$0xff]
    %v4283 = vld [vmem:[%s3040 + $0x169] sm:$0xff]
    %v4284 = vld [vmem:[%s3040 + $0x171] sm:$0xff]
    %v4285 = vld [vmem:[%s3040 + $0x189] sm:$0xff]
    %v4286 = vld [vmem:[%s3040 + $0x191] sm:$0xff]
    %v4287 = vld [vmem:[%s3040 + $0x1a9] sm:$0xff]
    %v4288 = vld [vmem:[%s3040 + $0x1b1] sm:$0xff]
    %v4289 = vld [vmem:[%s3040 + $0x1c9] sm:$0xff]
    %v4290 = vld [vmem:[%s3040 + $0x1d1] sm:$0xff]
    %v4291 = vld [vmem:[%s3040 + $0x1e9] sm:$0xff]
    %v4292 = vld [vmem:[%s3040 + $0x1f1] sm:$0xff]
    %v4293 = vld [vmem:[%s3040 + $0x249] sm:$0xff]
    %v4294 = vld [vmem:[%s3040 + $0x251] sm:$0xff]
    %v4295 = vld [vmem:[%s3040 + $0x269] sm:$0xff]
    %v4296 = vld [vmem:[%s3040 + $0x271] sm:$0xff]
    %v4297 = vld [vmem:[%s3040 + $0x289] sm:$0xff]
    %v4298 = vld [vmem:[%s3040 + $0x291] sm:$0xff]
    %v4299 = vld [vmem:[%s3040 + $0x2a9] sm:$0xff]
    %v4300 = vld [vmem:[%s3040 + $0x2b1] sm:$0xff]
    %v4301 = vld [vmem:[%s3040 + $0x2c9] sm:$0xff]
    %v4302 = vld [vmem:[%s3040 + $0x2d1] sm:$0xff]
    %v4303 = vld [vmem:[%s3040 + $0x2e9] sm:$0xff]
    %v4304 = vld [vmem:[%s3040 + $0x2f1] sm:$0xff]
    %v4305 = vld [vmem:[%s3040 + $0x309] sm:$0xff]
    %v4306 = vld [vmem:[%s3040 + $0x311] sm:$0xff]
    %v4307 = vld [vmem:[%s3040 + $0x329] sm:$0xff]
    %v4308 = vld [vmem:[%s3040 + $0x331] sm:$0xff]
    %v4309 = vld [vmem:[%s3040 + $0x349] sm:$0xff]
    %v4310 = vld [vmem:[%s3040 + $0x351] sm:$0xff]
    %v4311 = vld [vmem:[%s3040 + $0x369] sm:$0xff]
    %v4312 = vld [vmem:[%s3040 + $0x371] sm:$0xff]
    %v4313 = vld [vmem:[%s3040 + $0x389] sm:$0xff]
    %v4314 = vld [vmem:[%s3040 + $0x391] sm:$0xff]
    %v4315 = vld [vmem:[%s3040 + $0x3a9] sm:$0xff]
    %v4316 = vld [vmem:[%s3040 + $0x3b1] sm:$0xff]
    %v4317 = vld [vmem:[%s3040 + $0x3c9] sm:$0xff]
    %v4318 = vld [vmem:[%s3040 + $0x3d1] sm:$0xff]
    %v4319 = vld [vmem:[%s3040 + $0x3e9] sm:$0xff]
    %v4320 = vld [vmem:[%s3040 + $0x3f1] sm:$0xff]
    %v4321 = vld [vmem:[%s3040 + $0x409] sm:$0xff]
    %v4322 = vld [vmem:[%s3040 + $0x411] sm:$0xff]
    %v4323 = vld [vmem:[%s3040 + $0x429] sm:$0xff]
    %v4324 = vld [vmem:[%s3040 + $0x431] sm:$0xff]
    %v4325 = vpack.c.bf16 %v4262, %v4261
    %v4326 = vpack.c.bf16 %v4264, %v4263
    %v4327 = vpack.c.bf16 %v4266, %v4265
    %v4328 = vpack.c.bf16 %v4268, %v4267
    %v4329 = vpack.c.bf16 %v4270, %v4269
    %v4330 = vpack.c.bf16 %v4272, %v4271
    %v4331 = vpack.c.bf16 %v4274, %v4273
    %v4332 = vpack.c.bf16 %v4276, %v4275
    %v4333 = vpack.c.bf16 %v4278, %v4277
    %v4334 = vpack.c.bf16 %v4280, %v4279
    %v4335 = vpack.c.bf16 %v4282, %v4281
    %v4336 = vpack.c.bf16 %v4284, %v4283
    %v4337 = vpack.c.bf16 %v4286, %v4285
    %v4338 = vpack.c.bf16 %v4288, %v4287
    %v4339 = vpack.c.bf16 %v4290, %v4289
    %v4340 = vpack.c.bf16 %v4292, %v4291
    %v4341 = vpack.c.bf16 %v4294, %v4293
    %v4342 = vpack.c.bf16 %v4296, %v4295
    %v4343 = vpack.c.bf16 %v4298, %v4297
    %v4344 = vpack.c.bf16 %v4300, %v4299
    %v4345 = vpack.c.bf16 %v4302, %v4301
    %v4346 = vpack.c.bf16 %v4304, %v4303
    %v4347 = vpack.c.bf16 %v4306, %v4305
    %v4348 = vpack.c.bf16 %v4308, %v4307
    %v4349 = vpack.c.bf16 %v4310, %v4309
    %v4350 = vpack.c.bf16 %v4312, %v4311
    %v4351 = vpack.c.bf16 %v4314, %v4313
    %v4352 = vpack.c.bf16 %v4316, %v4315
    %v4353 = vpack.c.bf16 %v4318, %v4317
    %v4354 = vpack.c.bf16 %v4320, %v4319
    %v4355 = vpack.c.bf16 %v4322, %v4321
    %v4356 = vpack.c.bf16 %v4324, %v4323
    %4389 = vrot.lane.b32.xlu0 %v4325, 40
    %v4390 = vpop.permute.xlu0 %4389
    %4391 = vrot.lane.b32.xlu0 %v4326, 40
    %v4392 = vpop.permute.xlu0 %4391
    %4393 = vrot.lane.b32.xlu0 %v4327, 40
    %v4394 = vpop.permute.xlu0 %4393
    %4395 = vrot.lane.b32.xlu0 %v4328, 40
    %v4396 = vpop.permute.xlu0 %4395
    %4397 = vrot.lane.b32.xlu0 %v4329, 40
    %v4398 = vpop.permute.xlu0 %4397
    %4399 = vrot.lane.b32.xlu0 %v4330, 40
    %v4400 = vpop.permute.xlu0 %4399
    %4401 = vrot.lane.b32.xlu0 %v4331, 40
    %v4402 = vpop.permute.xlu0 %4401
    %4403 = vrot.lane.b32.xlu0 %v4332, 40
    %v4404 = vpop.permute.xlu0 %4403
    %4405 = vrot.lane.b32.xlu0 %v4333, 40
    %v4406 = vpop.permute.xlu0 %4405
    %4407 = vrot.lane.b32.xlu0 %v4334, 40
    %v4408 = vpop.permute.xlu0 %4407
    %4409 = vrot.lane.b32.xlu0 %v4335, 40
    %v4410 = vpop.permute.xlu0 %4409
    %4411 = vrot.lane.b32.xlu0 %v4336, 40
    %v4412 = vpop.permute.xlu0 %4411
    %4413 = vrot.lane.b32.xlu0 %v4337, 40
    %v4414 = vpop.permute.xlu0 %4413
    %4415 = vrot.lane.b32.xlu0 %v4338, 40
    %v4416 = vpop.permute.xlu0 %4415
    %4417 = vrot.lane.b32.xlu0 %v4339, 40
    %v4418 = vpop.permute.xlu0 %4417
    %4419 = vrot.lane.b32.xlu0 %v4340, 40
    %v4420 = vpop.permute.xlu0 %4419
    %4421 = vrot.lane.b32.xlu0 %v4341, 40
    %v4422 = vpop.permute.xlu0 %4421
    %4423 = vrot.lane.b32.xlu0 %v4342, 40
    %v4424 = vpop.permute.xlu0 %4423
    %4425 = vrot.lane.b32.xlu0 %v4343, 40
    %v4426 = vpop.permute.xlu0 %4425
    %4427 = vrot.lane.b32.xlu0 %v4344, 40
    %v4428 = vpop.permute.xlu0 %4427
    %4429 = vrot.lane.b32.xlu0 %v4345, 40
    %v4430 = vpop.permute.xlu0 %4429
    %4431 = vrot.lane.b32.xlu0 %v4346, 40
    %v4432 = vpop.permute.xlu0 %4431
    %4433 = vrot.lane.b32.xlu0 %v4347, 40
    %v4434 = vpop.permute.xlu0 %4433
    %4435 = vrot.lane.b32.xlu0 %v4348, 40
    %v4436 = vpop.permute.xlu0 %4435
    %4437 = vrot.lane.b32.xlu0 %v4349, 40
    %v4438 = vpop.permute.xlu0 %4437
    %4439 = vrot.lane.b32.xlu0 %v4350, 40
    %v4440 = vpop.permute.xlu0 %4439
    %4441 = vrot.lane.b32.xlu0 %v4351, 40
    %v4442 = vpop.permute.xlu0 %4441
    %4443 = vrot.lane.b32.xlu0 %v4352, 40
    %v4444 = vpop.permute.xlu0 %4443
    %4445 = vrot.lane.b32.xlu0 %v4353, 40
    %v4446 = vpop.permute.xlu0 %4445
    %4447 = vrot.lane.b32.xlu0 %v4354, 40
    %v4448 = vpop.permute.xlu0 %4447
    %4449 = vrot.lane.b32.xlu0 %v4355, 40
    %v4450 = vpop.permute.xlu0 %4449
    %4451 = vrot.lane.b32.xlu0 %v4356, 40
    %v4452 = vpop.permute.xlu0 %4451
    %vm4485 = vcmask 392512
    %4486 = vst.msk [vmem:[#allocation5] sm:$0xff] %vm4485, %v4390
    %4487 = vst.msk [vmem:[#allocation5 + $0x10] sm:$0xff] %vm4485, %v4392
    %4488 = vst.msk [vmem:[#allocation5 + $0x20] sm:$0xff] %vm4485, %v4394
    %4489 = vst.msk [vmem:[#allocation5 + $0x30] sm:$0xff] %vm4485, %v4396
    %4490 = vst.msk [vmem:[#allocation5 + $0x40] sm:$0xff] %vm4485, %v4398
    %4491 = vst.msk [vmem:[#allocation5 + $0x50] sm:$0xff] %vm4485, %v4400
    %4492 = vst.msk [vmem:[#allocation5 + $0x60] sm:$0xff] %vm4485, %v4402
    %4493 = vst.msk [vmem:[#allocation5 + $0x70] sm:$0xff] %vm4485, %v4404
    %4494 = vst.msk [vmem:[#allocation5 + $0x80] sm:$0xff] %vm4485, %v4406
    %4495 = vst.msk [vmem:[#allocation5 + $0x90] sm:$0xff] %vm4485, %v4408
    %4496 = vst.msk [vmem:[#allocation5 + $0xa0] sm:$0xff] %vm4485, %v4410
    %4497 = vst.msk [vmem:[#allocation5 + $0xb0] sm:$0xff] %vm4485, %v4412
    %4498 = vst.msk [vmem:[#allocation5 + $0xc0] sm:$0xff] %vm4485, %v4414
    %4499 = vst.msk [vmem:[#allocation5 + $0xd0] sm:$0xff] %vm4485, %v4416
    %4500 = vst.msk [vmem:[#allocation5 + $0xe0] sm:$0xff] %vm4485, %v4418
    %4501 = vst.msk [vmem:[#allocation5 + $0xf0] sm:$0xff] %vm4485, %v4420
    %4502 = vst.msk [vmem:[#allocation5 + $0x100] sm:$0xff] %vm4485, %v4422
    %4503 = vst.msk [vmem:[#allocation5 + $0x110] sm:$0xff] %vm4485, %v4424
    %4504 = vst.msk [vmem:[#allocation5 + $0x120] sm:$0xff] %vm4485, %v4426
    %4505 = vst.msk [vmem:[#allocation5 + $0x130] sm:$0xff] %vm4485, %v4428
    %4506 = vst.msk [vmem:[#allocation5 + $0x140] sm:$0xff] %vm4485, %v4430
    %4507 = vst.msk [vmem:[#allocation5 + $0x150] sm:$0xff] %vm4485, %v4432
    %4508 = vst.msk [vmem:[#allocation5 + $0x160] sm:$0xff] %vm4485, %v4434
    %4509 = vst.msk [vmem:[#allocation5 + $0x170] sm:$0xff] %vm4485, %v4436
    %4510 = vst.msk [vmem:[#allocation5 + $0x180] sm:$0xff] %vm4485, %v4438
    %4511 = vst.msk [vmem:[#allocation5 + $0x190] sm:$0xff] %vm4485, %v4440
    %4512 = vst.msk [vmem:[#allocation5 + $0x1a0] sm:$0xff] %vm4485, %v4442
    %4513 = vst.msk [vmem:[#allocation5 + $0x1b0] sm:$0xff] %vm4485, %v4444
    %4514 = vst.msk [vmem:[#allocation5 + $0x1c0] sm:$0xff] %vm4485, %v4446
    %4515 = vst.msk [vmem:[#allocation5 + $0x1d0] sm:$0xff] %vm4485, %v4448
    %4516 = vst.msk [vmem:[#allocation5 + $0x1e0] sm:$0xff] %vm4485, %v4450
    %4517 = vst.msk [vmem:[#allocation5 + $0x1f0] sm:$0xff] %vm4485, %v4452
    %s4518 = scalar_lea.vmem [#allocation3], 64
    %v4519 = vld [vmem:[%s4518 + $0x7] sm:$0xff]
    %v4520 = vld [vmem:[%s4518 + $0xf] sm:$0xff]
    %v4521 = vld [vmem:[%s4518 + $0x27] sm:$0xff]
    %v4522 = vld [vmem:[%s4518 + $0x2f] sm:$0xff]
    %v4523 = vld [vmem:[%s4518 + $0x47] sm:$0xff]
    %v4524 = vld [vmem:[%s4518 + $0x4f] sm:$0xff]
    %v4525 = vld [vmem:[%s4518 + $0x67] sm:$0xff]
    %v4526 = vld [vmem:[%s4518 + $0x6f] sm:$0xff]
    %v4527 = vld [vmem:[%s4518 + $0x87] sm:$0xff]
    %v4528 = vld [vmem:[%s4518 + $0x8f] sm:$0xff]
    %v4529 = vld [vmem:[%s4518 + $0xa7] sm:$0xff]
    %v4530 = vld [vmem:[%s4518 + $0xaf] sm:$0xff]
    %v4531 = vld [vmem:[%s4518 + $0xc7] sm:$0xff]
    %v4532 = vld [vmem:[%s4518 + $0xcf] sm:$0xff]
    %v4533 = vld [vmem:[%s4518 + $0xe7] sm:$0xff]
    %v4534 = vld [vmem:[%s4518 + $0xef] sm:$0xff]
    %v4535 = vld [vmem:[%s4518 + $0x107] sm:$0xff]
    %v4536 = vld [vmem:[%s4518 + $0x10f] sm:$0xff]
    %v4537 = vld [vmem:[%s4518 + $0x127] sm:$0xff]
    %v4538 = vld [vmem:[%s4518 + $0x12f] sm:$0xff]
    %v4539 = vld [vmem:[%s4518 + $0x147] sm:$0xff]
    %v4540 = vld [vmem:[%s4518 + $0x14f] sm:$0xff]
    %v4541 = vld [vmem:[%s4518 + $0x167] sm:$0xff]
    %v4542 = vld [vmem:[%s4518 + $0x16f] sm:$0xff]
    %v4543 = vld [vmem:[%s4518 + $0x187] sm:$0xff]
    %v4544 = vld [vmem:[%s4518 + $0x18f] sm:$0xff]
    %v4545 = vld [vmem:[%s4518 + $0x1a7] sm:$0xff]
    %v4546 = vld [vmem:[%s4518 + $0x1af] sm:$0xff]
    %v4547 = vld [vmem:[%s4518 + $0x1c7] sm:$0xff]
    %v4548 = vld [vmem:[%s4518 + $0x1cf] sm:$0xff]
    %v4549 = vld [vmem:[%s4518 + $0x1e7] sm:$0xff]
    %v4550 = vld [vmem:[%s4518 + $0x1ef] sm:$0xff]
    %v4551 = vld [vmem:[%s4518 + $0x247] sm:$0xff]
    %v4552 = vld [vmem:[%s4518 + $0x24f] sm:$0xff]
    %v4553 = vld [vmem:[%s4518 + $0x267] sm:$0xff]
    %v4554 = vld [vmem:[%s4518 + $0x26f] sm:$0xff]
    %v4555 = vld [vmem:[%s4518 + $0x287] sm:$0xff]
    %v4556 = vld [vmem:[%s4518 + $0x28f] sm:$0xff]
    %v4557 = vld [vmem:[%s4518 + $0x2a7] sm:$0xff]
    %v4558 = vld [vmem:[%s4518 + $0x2af] sm:$0xff]
    %v4559 = vld [vmem:[%s4518 + $0x2c7] sm:$0xff]
    %v4560 = vld [vmem:[%s4518 + $0x2cf] sm:$0xff]
    %v4561 = vld [vmem:[%s4518 + $0x2e7] sm:$0xff]
    %v4562 = vld [vmem:[%s4518 + $0x2ef] sm:$0xff]
    %v4563 = vld [vmem:[%s4518 + $0x307] sm:$0xff]
    %v4564 = vld [vmem:[%s4518 + $0x30f] sm:$0xff]
    %v4565 = vld [vmem:[%s4518 + $0x327] sm:$0xff]
    %v4566 = vld [vmem:[%s4518 + $0x32f] sm:$0xff]
    %v4567 = vld [vmem:[%s4518 + $0x347] sm:$0xff]
    %v4568 = vld [vmem:[%s4518 + $0x34f] sm:$0xff]
    %v4569 = vld [vmem:[%s4518 + $0x367] sm:$0xff]
    %v4570 = vld [vmem:[%s4518 + $0x36f] sm:$0xff]
    %v4571 = vld [vmem:[%s4518 + $0x387] sm:$0xff]
    %v4572 = vld [vmem:[%s4518 + $0x38f] sm:$0xff]
    %v4573 = vld [vmem:[%s4518 + $0x3a7] sm:$0xff]
    %v4574 = vld [vmem:[%s4518 + $0x3af] sm:$0xff]
    %v4575 = vld [vmem:[%s4518 + $0x3c7] sm:$0xff]
    %v4576 = vld [vmem:[%s4518 + $0x3cf] sm:$0xff]
    %v4577 = vld [vmem:[%s4518 + $0x3e7] sm:$0xff]
    %v4578 = vld [vmem:[%s4518 + $0x3ef] sm:$0xff]
    %v4579 = vld [vmem:[%s4518 + $0x407] sm:$0xff]
    %v4580 = vld [vmem:[%s4518 + $0x40f] sm:$0xff]
    %v4581 = vld [vmem:[%s4518 + $0x427] sm:$0xff]
    %v4582 = vld [vmem:[%s4518 + $0x42f] sm:$0xff]
    %v4583 = vpack.c.bf16 %v4520, %v4519
    %v4584 = vpack.c.bf16 %v4522, %v4521
    %v4585 = vpack.c.bf16 %v4524, %v4523
    %v4586 = vpack.c.bf16 %v4526, %v4525
    %v4587 = vpack.c.bf16 %v4528, %v4527
    %v4588 = vpack.c.bf16 %v4530, %v4529
    %v4589 = vpack.c.bf16 %v4532, %v4531
    %v4590 = vpack.c.bf16 %v4534, %v4533
    %v4591 = vpack.c.bf16 %v4536, %v4535
    %v4592 = vpack.c.bf16 %v4538, %v4537
    %v4593 = vpack.c.bf16 %v4540, %v4539
    %v4594 = vpack.c.bf16 %v4542, %v4541
    %v4595 = vpack.c.bf16 %v4544, %v4543
    %v4596 = vpack.c.bf16 %v4546, %v4545
    %v4597 = vpack.c.bf16 %v4548, %v4547
    %v4598 = vpack.c.bf16 %v4550, %v4549
    %v4599 = vpack.c.bf16 %v4552, %v4551
    %v4600 = vpack.c.bf16 %v4554, %v4553
    %v4601 = vpack.c.bf16 %v4556, %v4555
    %v4602 = vpack.c.bf16 %v4558, %v4557
    %v4603 = vpack.c.bf16 %v4560, %v4559
    %v4604 = vpack.c.bf16 %v4562, %v4561
    %v4605 = vpack.c.bf16 %v4564, %v4563
    %v4606 = vpack.c.bf16 %v4566, %v4565
    %v4607 = vpack.c.bf16 %v4568, %v4567
    %v4608 = vpack.c.bf16 %v4570, %v4569
    %v4609 = vpack.c.bf16 %v4572, %v4571
    %v4610 = vpack.c.bf16 %v4574, %v4573
    %v4611 = vpack.c.bf16 %v4576, %v4575
    %v4612 = vpack.c.bf16 %v4578, %v4577
    %v4613 = vpack.c.bf16 %v4580, %v4579
    %v4614 = vpack.c.bf16 %v4582, %v4581
    %4647 = vrot.lane.b32.xlu0 %v4583, 48
    %v4648 = vpop.permute.xlu0 %4647
    %4649 = vrot.lane.b32.xlu0 %v4584, 48
    %v4650 = vpop.permute.xlu0 %4649
    %4651 = vrot.lane.b32.xlu0 %v4585, 48
    %v4652 = vpop.permute.xlu0 %4651
    %4653 = vrot.lane.b32.xlu0 %v4586, 48
    %v4654 = vpop.permute.xlu0 %4653
    %4655 = vrot.lane.b32.xlu0 %v4587, 48
    %v4656 = vpop.permute.xlu0 %4655
    %4657 = vrot.lane.b32.xlu0 %v4588, 48
    %v4658 = vpop.permute.xlu0 %4657
    %4659 = vrot.lane.b32.xlu0 %v4589, 48
    %v4660 = vpop.permute.xlu0 %4659
    %4661 = vrot.lane.b32.xlu0 %v4590, 48
    %v4662 = vpop.permute.xlu0 %4661
    %4663 = vrot.lane.b32.xlu0 %v4591, 48
    %v4664 = vpop.permute.xlu0 %4663
    %4665 = vrot.lane.b32.xlu0 %v4592, 48
    %v4666 = vpop.permute.xlu0 %4665
    %4667 = vrot.lane.b32.xlu0 %v4593, 48
    %v4668 = vpop.permute.xlu0 %4667
    %4669 = vrot.lane.b32.xlu0 %v4594, 48
    %v4670 = vpop.permute.xlu0 %4669
    %4671 = vrot.lane.b32.xlu0 %v4595, 48
    %v4672 = vpop.permute.xlu0 %4671
    %4673 = vrot.lane.b32.xlu0 %v4596, 48
    %v4674 = vpop.permute.xlu0 %4673
    %4675 = vrot.lane.b32.xlu0 %v4597, 48
    %v4676 = vpop.permute.xlu0 %4675
    %4677 = vrot.lane.b32.xlu0 %v4598, 48
    %v4678 = vpop.permute.xlu0 %4677
    %4679 = vrot.lane.b32.xlu0 %v4599, 48
    %v4680 = vpop.permute.xlu0 %4679
    %4681 = vrot.lane.b32.xlu0 %v4600, 48
    %v4682 = vpop.permute.xlu0 %4681
    %4683 = vrot.lane.b32.xlu0 %v4601, 48
    %v4684 = vpop.permute.xlu0 %4683
    %4685 = vrot.lane.b32.xlu0 %v4602, 48
    %v4686 = vpop.permute.xlu0 %4685
    %4687 = vrot.lane.b32.xlu0 %v4603, 48
    %v4688 = vpop.permute.xlu0 %4687
    %4689 = vrot.lane.b32.xlu0 %v4604, 48
    %v4690 = vpop.permute.xlu0 %4689
    %4691 = vrot.lane.b32.xlu0 %v4605, 48
    %v4692 = vpop.permute.xlu0 %4691
    %4693 = vrot.lane.b32.xlu0 %v4606, 48
    %v4694 = vpop.permute.xlu0 %4693
    %4695 = vrot.lane.b32.xlu0 %v4607, 48
    %v4696 = vpop.permute.xlu0 %4695
    %4697 = vrot.lane.b32.xlu0 %v4608, 48
    %v4698 = vpop.permute.xlu0 %4697
    %4699 = vrot.lane.b32.xlu0 %v4609, 48
    %v4700 = vpop.permute.xlu0 %4699
    %4701 = vrot.lane.b32.xlu0 %v4610, 48
    %v4702 = vpop.permute.xlu0 %4701
    %4703 = vrot.lane.b32.xlu0 %v4611, 48
    %v4704 = vpop.permute.xlu0 %4703
    %4705 = vrot.lane.b32.xlu0 %v4612, 48
    %v4706 = vpop.permute.xlu0 %4705
    %4707 = vrot.lane.b32.xlu0 %v4613, 48
    %v4708 = vpop.permute.xlu0 %4707
    %4709 = vrot.lane.b32.xlu0 %v4614, 48
    %v4710 = vpop.permute.xlu0 %4709
    %vm4743 = vcmask 458112
    %4744 = vst.msk [vmem:[#allocation5] sm:$0xff] %vm4743, %v4648
    %4745 = vst.msk [vmem:[#allocation5 + $0x10] sm:$0xff] %vm4743, %v4650
    %4746 = vst.msk [vmem:[#allocation5 + $0x20] sm:$0xff] %vm4743, %v4652
    %4747 = vst.msk [vmem:[#allocation5 + $0x30] sm:$0xff] %vm4743, %v4654
    %4748 = vst.msk [vmem:[#allocation5 + $0x40] sm:$0xff] %vm4743, %v4656
    %4749 = vst.msk [vmem:[#allocation5 + $0x50] sm:$0xff] %vm4743, %v4658
    %4750 = vst.msk [vmem:[#allocation5 + $0x60] sm:$0xff] %vm4743, %v4660
    %4751 = vst.msk [vmem:[#allocation5 + $0x70] sm:$0xff] %vm4743, %v4662
    %4752 = vst.msk [vmem:[#allocation5 + $0x80] sm:$0xff] %vm4743, %v4664
    %4753 = vst.msk [vmem:[#allocation5 + $0x90] sm:$0xff] %vm4743, %v4666
    %4754 = vst.msk [vmem:[#allocation5 + $0xa0] sm:$0xff] %vm4743, %v4668
    %4755 = vst.msk [vmem:[#allocation5 + $0xb0] sm:$0xff] %vm4743, %v4670
    %4756 = vst.msk [vmem:[#allocation5 + $0xc0] sm:$0xff] %vm4743, %v4672
    %4757 = vst.msk [vmem:[#allocation5 + $0xd0] sm:$0xff] %vm4743, %v4674
    %4758 = vst.msk [vmem:[#allocation5 + $0xe0] sm:$0xff] %vm4743, %v4676
    %4759 = vst.msk [vmem:[#allocation5 + $0xf0] sm:$0xff] %vm4743, %v4678
    %4760 = vst.msk [vmem:[#allocation5 + $0x100] sm:$0xff] %vm4743, %v4680
    %4761 = vst.msk [vmem:[#allocation5 + $0x110] sm:$0xff] %vm4743, %v4682
    %4762 = vst.msk [vmem:[#allocation5 + $0x120] sm:$0xff] %vm4743, %v4684
    %4763 = vst.msk [vmem:[#allocation5 + $0x130] sm:$0xff] %vm4743, %v4686
    %4764 = vst.msk [vmem:[#allocation5 + $0x140] sm:$0xff] %vm4743, %v4688
    %4765 = vst.msk [vmem:[#allocation5 + $0x150] sm:$0xff] %vm4743, %v4690
    %4766 = vst.msk [vmem:[#allocation5 + $0x160] sm:$0xff] %vm4743, %v4692
    %4767 = vst.msk [vmem:[#allocation5 + $0x170] sm:$0xff] %vm4743, %v4694
    %4768 = vst.msk [vmem:[#allocation5 + $0x180] sm:$0xff] %vm4743, %v4696
    %4769 = vst.msk [vmem:[#allocation5 + $0x190] sm:$0xff] %vm4743, %v4698
    %4770 = vst.msk [vmem:[#allocation5 + $0x1a0] sm:$0xff] %vm4743, %v4700
    %4771 = vst.msk [vmem:[#allocation5 + $0x1b0] sm:$0xff] %vm4743, %v4702
    %4772 = vst.msk [vmem:[#allocation5 + $0x1c0] sm:$0xff] %vm4743, %v4704
    %4773 = vst.msk [vmem:[#allocation5 + $0x1d0] sm:$0xff] %vm4743, %v4706
    %4774 = vst.msk [vmem:[#allocation5 + $0x1e0] sm:$0xff] %vm4743, %v4708
    %4775 = vst.msk [vmem:[#allocation5 + $0x1f0] sm:$0xff] %vm4743, %v4710
    %v4776 = vld [vmem:[%s4518 + $0x8] sm:$0xff]
    %v4777 = vld [vmem:[%s4518 + $0x10] sm:$0xff]
    %v4778 = vld [vmem:[%s4518 + $0x28] sm:$0xff]
    %v4779 = vld [vmem:[%s4518 + $0x30] sm:$0xff]
    %v4780 = vld [vmem:[%s4518 + $0x48] sm:$0xff]
    %v4781 = vld [vmem:[%s4518 + $0x50] sm:$0xff]
    %v4782 = vld [vmem:[%s4518 + $0x68] sm:$0xff]
    %v4783 = vld [vmem:[%s4518 + $0x70] sm:$0xff]
    %v4784 = vld [vmem:[%s4518 + $0x88] sm:$0xff]
    %v4785 = vld [vmem:[%s4518 + $0x90] sm:$0xff]
    %v4786 = vld [vmem:[%s4518 + $0xa8] sm:$0xff]
    %v4787 = vld [vmem:[%s4518 + $0xb0] sm:$0xff]
    %v4788 = vld [vmem:[%s4518 + $0xc8] sm:$0xff]
    %v4789 = vld [vmem:[%s4518 + $0xd0] sm:$0xff]
    %v4790 = vld [vmem:[%s4518 + $0xe8] sm:$0xff]
    %v4791 = vld [vmem:[%s4518 + $0xf0] sm:$0xff]
    %v4792 = vld [vmem:[%s4518 + $0x108] sm:$0xff]
    %v4793 = vld [vmem:[%s4518 + $0x110] sm:$0xff]
    %v4794 = vld [vmem:[%s4518 + $0x128] sm:$0xff]
    %v4795 = vld [vmem:[%s4518 + $0x130] sm:$0xff]
    %v4796 = vld [vmem:[%s4518 + $0x148] sm:$0xff]
    %v4797 = vld [vmem:[%s4518 + $0x150] sm:$0xff]
    %v4798 = vld [vmem:[%s4518 + $0x168] sm:$0xff]
    %v4799 = vld [vmem:[%s4518 + $0x170] sm:$0xff]
    %v4800 = vld [vmem:[%s4518 + $0x188] sm:$0xff]
    %v4801 = vld [vmem:[%s4518 + $0x190] sm:$0xff]
    %v4802 = vld [vmem:[%s4518 + $0x1a8] sm:$0xff]
    %v4803 = vld [vmem:[%s4518 + $0x1b0] sm:$0xff]
    %v4804 = vld [vmem:[%s4518 + $0x1c8] sm:$0xff]
    %v4805 = vld [vmem:[%s4518 + $0x1d0] sm:$0xff]
    %v4806 = vld [vmem:[%s4518 + $0x1e8] sm:$0xff]
    %v4807 = vld [vmem:[%s4518 + $0x1f0] sm:$0xff]
    %v4808 = vld [vmem:[%s4518 + $0x248] sm:$0xff]
    %v4809 = vld [vmem:[%s4518 + $0x250] sm:$0xff]
    %v4810 = vld [vmem:[%s4518 + $0x268] sm:$0xff]
    %v4811 = vld [vmem:[%s4518 + $0x270] sm:$0xff]
    %v4812 = vld [vmem:[%s4518 + $0x288] sm:$0xff]
    %v4813 = vld [vmem:[%s4518 + $0x290] sm:$0xff]
    %v4814 = vld [vmem:[%s4518 + $0x2a8] sm:$0xff]
    %v4815 = vld [vmem:[%s4518 + $0x2b0] sm:$0xff]
    %v4816 = vld [vmem:[%s4518 + $0x2c8] sm:$0xff]
    %v4817 = vld [vmem:[%s4518 + $0x2d0] sm:$0xff]
    %v4818 = vld [vmem:[%s4518 + $0x2e8] sm:$0xff]
    %v4819 = vld [vmem:[%s4518 + $0x2f0] sm:$0xff]
    %v4820 = vld [vmem:[%s4518 + $0x308] sm:$0xff]
    %v4821 = vld [vmem:[%s4518 + $0x310] sm:$0xff]
    %v4822 = vld [vmem:[%s4518 + $0x328] sm:$0xff]
    %v4823 = vld [vmem:[%s4518 + $0x330] sm:$0xff]
    %v4824 = vld [vmem:[%s4518 + $0x348] sm:$0xff]
    %v4825 = vld [vmem:[%s4518 + $0x350] sm:$0xff]
    %v4826 = vld [vmem:[%s4518 + $0x368] sm:$0xff]
    %v4827 = vld [vmem:[%s4518 + $0x370] sm:$0xff]
    %v4828 = vld [vmem:[%s4518 + $0x388] sm:$0xff]
    %v4829 = vld [vmem:[%s4518 + $0x390] sm:$0xff]
    %v4830 = vld [vmem:[%s4518 + $0x3a8] sm:$0xff]
    %v4831 = vld [vmem:[%s4518 + $0x3b0] sm:$0xff]
    %v4832 = vld [vmem:[%s4518 + $0x3c8] sm:$0xff]
    %v4833 = vld [vmem:[%s4518 + $0x3d0] sm:$0xff]
    %v4834 = vld [vmem:[%s4518 + $0x3e8] sm:$0xff]
    %v4835 = vld [vmem:[%s4518 + $0x3f0] sm:$0xff]
    %v4836 = vld [vmem:[%s4518 + $0x408] sm:$0xff]
    %v4837 = vld [vmem:[%s4518 + $0x410] sm:$0xff]
    %v4838 = vld [vmem:[%s4518 + $0x428] sm:$0xff]
    %v4839 = vld [vmem:[%s4518 + $0x430] sm:$0xff]
    %v4840 = vpack.c.bf16 %v4777, %v4776
    %v4841 = vpack.c.bf16 %v4779, %v4778
    %v4842 = vpack.c.bf16 %v4781, %v4780
    %v4843 = vpack.c.bf16 %v4783, %v4782
    %v4844 = vpack.c.bf16 %v4785, %v4784
    %v4845 = vpack.c.bf16 %v4787, %v4786
    %v4846 = vpack.c.bf16 %v4789, %v4788
    %v4847 = vpack.c.bf16 %v4791, %v4790
    %v4848 = vpack.c.bf16 %v4793, %v4792
    %v4849 = vpack.c.bf16 %v4795, %v4794
    %v4850 = vpack.c.bf16 %v4797, %v4796
    %v4851 = vpack.c.bf16 %v4799, %v4798
    %v4852 = vpack.c.bf16 %v4801, %v4800
    %v4853 = vpack.c.bf16 %v4803, %v4802
    %v4854 = vpack.c.bf16 %v4805, %v4804
    %v4855 = vpack.c.bf16 %v4807, %v4806
    %v4856 = vpack.c.bf16 %v4809, %v4808
    %v4857 = vpack.c.bf16 %v4811, %v4810
    %v4858 = vpack.c.bf16 %v4813, %v4812
    %v4859 = vpack.c.bf16 %v4815, %v4814
    %v4860 = vpack.c.bf16 %v4817, %v4816
    %v4861 = vpack.c.bf16 %v4819, %v4818
    %v4862 = vpack.c.bf16 %v4821, %v4820
    %v4863 = vpack.c.bf16 %v4823, %v4822
    %v4864 = vpack.c.bf16 %v4825, %v4824
    %v4865 = vpack.c.bf16 %v4827, %v4826
    %v4866 = vpack.c.bf16 %v4829, %v4828
    %v4867 = vpack.c.bf16 %v4831, %v4830
    %v4868 = vpack.c.bf16 %v4833, %v4832
    %v4869 = vpack.c.bf16 %v4835, %v4834
    %v4870 = vpack.c.bf16 %v4837, %v4836
    %v4871 = vpack.c.bf16 %v4839, %v4838
    %4904 = vrot.lane.b32.xlu0 %v4840, 56
    %v4905 = vpop.permute.xlu0 %4904
    %4906 = vrot.lane.b32.xlu0 %v4841, 56
    %v4907 = vpop.permute.xlu0 %4906
    %4908 = vrot.lane.b32.xlu0 %v4842, 56
    %v4909 = vpop.permute.xlu0 %4908
    %4910 = vrot.lane.b32.xlu0 %v4843, 56
    %v4911 = vpop.permute.xlu0 %4910
    %4912 = vrot.lane.b32.xlu0 %v4844, 56
    %v4913 = vpop.permute.xlu0 %4912
    %4914 = vrot.lane.b32.xlu0 %v4845, 56
    %v4915 = vpop.permute.xlu0 %4914
    %4916 = vrot.lane.b32.xlu0 %v4846, 56
    %v4917 = vpop.permute.xlu0 %4916
    %4918 = vrot.lane.b32.xlu0 %v4847, 56
    %v4919 = vpop.permute.xlu0 %4918
    %4920 = vrot.lane.b32.xlu0 %v4848, 56
    %v4921 = vpop.permute.xlu0 %4920
    %4922 = vrot.lane.b32.xlu0 %v4849, 56
    %v4923 = vpop.permute.xlu0 %4922
    %4924 = vrot.lane.b32.xlu0 %v4850, 56
    %v4925 = vpop.permute.xlu0 %4924
    %4926 = vrot.lane.b32.xlu0 %v4851, 56
    %v4927 = vpop.permute.xlu0 %4926
    %4928 = vrot.lane.b32.xlu0 %v4852, 56
    %v4929 = vpop.permute.xlu0 %4928
    %4930 = vrot.lane.b32.xlu0 %v4853, 56
    %v4931 = vpop.permute.xlu0 %4930
    %4932 = vrot.lane.b32.xlu0 %v4854, 56
    %v4933 = vpop.permute.xlu0 %4932
    %4934 = vrot.lane.b32.xlu0 %v4855, 56
    %v4935 = vpop.permute.xlu0 %4934
    %4936 = vrot.lane.b32.xlu0 %v4856, 56
    %v4937 = vpop.permute.xlu0 %4936
    %4938 = vrot.lane.b32.xlu0 %v4857, 56
    %v4939 = vpop.permute.xlu0 %4938
    %4940 = vrot.lane.b32.xlu0 %v4858, 56
    %v4941 = vpop.permute.xlu0 %4940
    %4942 = vrot.lane.b32.xlu0 %v4859, 56
    %v4943 = vpop.permute.xlu0 %4942
    %4944 = vrot.lane.b32.xlu0 %v4860, 56
    %v4945 = vpop.permute.xlu0 %4944
    %4946 = vrot.lane.b32.xlu0 %v4861, 56
    %v4947 = vpop.permute.xlu0 %4946
    %4948 = vrot.lane.b32.xlu0 %v4862, 56
    %v4949 = vpop.permute.xlu0 %4948
    %4950 = vrot.lane.b32.xlu0 %v4863, 56
    %v4951 = vpop.permute.xlu0 %4950
    %4952 = vrot.lane.b32.xlu0 %v4864, 56
    %v4953 = vpop.permute.xlu0 %4952
    %4954 = vrot.lane.b32.xlu0 %v4865, 56
    %v4955 = vpop.permute.xlu0 %4954
    %4956 = vrot.lane.b32.xlu0 %v4866, 56
    %v4957 = vpop.permute.xlu0 %4956
    %4958 = vrot.lane.b32.xlu0 %v4867, 56
    %v4959 = vpop.permute.xlu0 %4958
    %4960 = vrot.lane.b32.xlu0 %v4868, 56
    %v4961 = vpop.permute.xlu0 %4960
    %4962 = vrot.lane.b32.xlu0 %v4869, 56
    %v4963 = vpop.permute.xlu0 %4962
    %4964 = vrot.lane.b32.xlu0 %v4870, 56
    %v4965 = vpop.permute.xlu0 %4964
    %4966 = vrot.lane.b32.xlu0 %v4871, 56
    %v4967 = vpop.permute.xlu0 %4966
    %vm5000 = vcmask 523712
    %5001 = vst.msk [vmem:[#allocation5] sm:$0xff] %vm5000, %v4905
    %5002 = vst.msk [vmem:[#allocation5 + $0x10] sm:$0xff] %vm5000, %v4907
    %5003 = vst.msk [vmem:[#allocation5 + $0x20] sm:$0xff] %vm5000, %v4909
    %5004 = vst.msk [vmem:[#allocation5 + $0x30] sm:$0xff] %vm5000, %v4911
    %5005 = vst.msk [vmem:[#allocation5 + $0x40] sm:$0xff] %vm5000, %v4913
    %5006 = vst.msk [vmem:[#allocation5 + $0x50] sm:$0xff] %vm5000, %v4915
    %5007 = vst.msk [vmem:[#allocation5 + $0x60] sm:$0xff] %vm5000, %v4917
    %5008 = vst.msk [vmem:[#allocation5 + $0x70] sm:$0xff] %vm5000, %v4919
    %5009 = vst.msk [vmem:[#allocation5 + $0x80] sm:$0xff] %vm5000, %v4921
    %5010 = vst.msk [vmem:[#allocation5 + $0x90] sm:$0xff] %vm5000, %v4923
    %5011 = vst.msk [vmem:[#allocation5 + $0xa0] sm:$0xff] %vm5000, %v4925
    %5012 = vst.msk [vmem:[#allocation5 + $0xb0] sm:$0xff] %vm5000, %v4927
    %5013 = vst.msk [vmem:[#allocation5 + $0xc0] sm:$0xff] %vm5000, %v4929
    %5014 = vst.msk [vmem:[#allocation5 + $0xd0] sm:$0xff] %vm5000, %v4931
    %5015 = vst.msk [vmem:[#allocation5 + $0xe0] sm:$0xff] %vm5000, %v4933
    %5016 = vst.msk [vmem:[#allocation5 + $0xf0] sm:$0xff] %vm5000, %v4935
    %5017 = vst.msk [vmem:[#allocation5 + $0x100] sm:$0xff] %vm5000, %v4937
    %5018 = vst.msk [vmem:[#allocation5 + $0x110] sm:$0xff] %vm5000, %v4939
    %5019 = vst.msk [vmem:[#allocation5 + $0x120] sm:$0xff] %vm5000, %v4941
    %5020 = vst.msk [vmem:[#allocation5 + $0x130] sm:$0xff] %vm5000, %v4943
    %5021 = vst.msk [vmem:[#allocation5 + $0x140] sm:$0xff] %vm5000, %v4945
    %5022 = vst.msk [vmem:[#allocation5 + $0x150] sm:$0xff] %vm5000, %v4947
    %5023 = vst.msk [vmem:[#allocation5 + $0x160] sm:$0xff] %vm5000, %v4949
    %5024 = vst.msk [vmem:[#allocation5 + $0x170] sm:$0xff] %vm5000, %v4951
    %5025 = vst.msk [vmem:[#allocation5 + $0x180] sm:$0xff] %vm5000, %v4953
    %5026 = vst.msk [vmem:[#allocation5 + $0x190] sm:$0xff] %vm5000, %v4955
    %5027 = vst.msk [vmem:[#allocation5 + $0x1a0] sm:$0xff] %vm5000, %v4957
    %5028 = vst.msk [vmem:[#allocation5 + $0x1b0] sm:$0xff] %vm5000, %v4959
    %5029 = vst.msk [vmem:[#allocation5 + $0x1c0] sm:$0xff] %vm5000, %v4961
    %5030 = vst.msk [vmem:[#allocation5 + $0x1d0] sm:$0xff] %vm5000, %v4963
    %5031 = vst.msk [vmem:[#allocation5 + $0x1e0] sm:$0xff] %vm5000, %v4965
    %5032 = vst.msk [vmem:[#allocation5 + $0x1f0] sm:$0xff] %vm5000, %v4967
    %v5033 = vld [vmem:[%s4518 + $0x9] sm:$0xff]
    %v5034 = vld [vmem:[%s4518 + $0x11] sm:$0xff]
    %v5035 = vld [vmem:[%s4518 + $0x29] sm:$0xff]
    %v5036 = vld [vmem:[%s4518 + $0x31] sm:$0xff]
    %v5037 = vld [vmem:[%s4518 + $0x49] sm:$0xff]
    %v5038 = vld [vmem:[%s4518 + $0x51] sm:$0xff]
    %v5039 = vld [vmem:[%s4518 + $0x69] sm:$0xff]
    %v5040 = vld [vmem:[%s4518 + $0x71] sm:$0xff]
    %v5041 = vld [vmem:[%s4518 + $0x89] sm:$0xff]
    %v5042 = vld [vmem:[%s4518 + $0x91] sm:$0xff]
    %v5043 = vld [vmem:[%s4518 + $0xa9] sm:$0xff]
    %v5044 = vld [vmem:[%s4518 + $0xb1] sm:$0xff]
    %v5045 = vld [vmem:[%s4518 + $0xc9] sm:$0xff]
    %v5046 = vld [vmem:[%s4518 + $0xd1] sm:$0xff]
    %v5047 = vld [vmem:[%s4518 + $0xe9] sm:$0xff]
    %v5048 = vld [vmem:[%s4518 + $0xf1] sm:$0xff]
    %v5049 = vld [vmem:[%s4518 + $0x109] sm:$0xff]
    %v5050 = vld [vmem:[%s4518 + $0x111] sm:$0xff]
    %v5051 = vld [vmem:[%s4518 + $0x129] sm:$0xff]
    %v5052 = vld [vmem:[%s4518 + $0x131] sm:$0xff]
    %v5053 = vld [vmem:[%s4518 + $0x149] sm:$0xff]
    %v5054 = vld [vmem:[%s4518 + $0x151] sm:$0xff]
    %v5055 = vld [vmem:[%s4518 + $0x169] sm:$0xff]
    %v5056 = vld [vmem:[%s4518 + $0x171] sm:$0xff]
    %v5057 = vld [vmem:[%s4518 + $0x189] sm:$0xff]
    %v5058 = vld [vmem:[%s4518 + $0x191] sm:$0xff]
    %v5059 = vld [vmem:[%s4518 + $0x1a9] sm:$0xff]
    %v5060 = vld [vmem:[%s4518 + $0x1b1] sm:$0xff]
    %v5061 = vld [vmem:[%s4518 + $0x1c9] sm:$0xff]
    %v5062 = vld [vmem:[%s4518 + $0x1d1] sm:$0xff]
    %v5063 = vld [vmem:[%s4518 + $0x1e9] sm:$0xff]
    %v5064 = vld [vmem:[%s4518 + $0x1f1] sm:$0xff]
    %v5065 = vld [vmem:[%s4518 + $0x249] sm:$0xff]
    %v5066 = vld [vmem:[%s4518 + $0x251] sm:$0xff]
    %v5067 = vld [vmem:[%s4518 + $0x269] sm:$0xff]
    %v5068 = vld [vmem:[%s4518 + $0x271] sm:$0xff]
    %v5069 = vld [vmem:[%s4518 + $0x289] sm:$0xff]
    %v5070 = vld [vmem:[%s4518 + $0x291] sm:$0xff]
    %v5071 = vld [vmem:[%s4518 + $0x2a9] sm:$0xff]
    %v5072 = vld [vmem:[%s4518 + $0x2b1] sm:$0xff]
    %v5073 = vld [vmem:[%s4518 + $0x2c9] sm:$0xff]
    %v5074 = vld [vmem:[%s4518 + $0x2d1] sm:$0xff]
    %v5075 = vld [vmem:[%s4518 + $0x2e9] sm:$0xff]
    %v5076 = vld [vmem:[%s4518 + $0x2f1] sm:$0xff]
    %v5077 = vld [vmem:[%s4518 + $0x309] sm:$0xff]
    %v5078 = vld [vmem:[%s4518 + $0x311] sm:$0xff]
    %v5079 = vld [vmem:[%s4518 + $0x329] sm:$0xff]
    %v5080 = vld [vmem:[%s4518 + $0x331] sm:$0xff]
    %v5081 = vld [vmem:[%s4518 + $0x349] sm:$0xff]
    %v5082 = vld [vmem:[%s4518 + $0x351] sm:$0xff]
    %v5083 = vld [vmem:[%s4518 + $0x369] sm:$0xff]
    %v5084 = vld [vmem:[%s4518 + $0x371] sm:$0xff]
    %v5085 = vld [vmem:[%s4518 + $0x389] sm:$0xff]
    %v5086 = vld [vmem:[%s4518 + $0x391] sm:$0xff]
    %v5087 = vld [vmem:[%s4518 + $0x3a9] sm:$0xff]
    %v5088 = vld [vmem:[%s4518 + $0x3b1] sm:$0xff]
    %v5089 = vld [vmem:[%s4518 + $0x3c9] sm:$0xff]
    %v5090 = vld [vmem:[%s4518 + $0x3d1] sm:$0xff]
    %v5091 = vld [vmem:[%s4518 + $0x3e9] sm:$0xff]
    %v5092 = vld [vmem:[%s4518 + $0x3f1] sm:$0xff]
    %v5093 = vld [vmem:[%s4518 + $0x409] sm:$0xff]
    %v5094 = vld [vmem:[%s4518 + $0x411] sm:$0xff]
    %v5095 = vld [vmem:[%s4518 + $0x429] sm:$0xff]
    %v5096 = vld [vmem:[%s4518 + $0x431] sm:$0xff]
    %v5097 = vpack.c.bf16 %v5034, %v5033
    %v5098 = vpack.c.bf16 %v5036, %v5035
    %v5099 = vpack.c.bf16 %v5038, %v5037
    %v5100 = vpack.c.bf16 %v5040, %v5039
    %v5101 = vpack.c.bf16 %v5042, %v5041
    %v5102 = vpack.c.bf16 %v5044, %v5043
    %v5103 = vpack.c.bf16 %v5046, %v5045
    %v5104 = vpack.c.bf16 %v5048, %v5047
    %v5105 = vpack.c.bf16 %v5050, %v5049
    %v5106 = vpack.c.bf16 %v5052, %v5051
    %v5107 = vpack.c.bf16 %v5054, %v5053
    %v5108 = vpack.c.bf16 %v5056, %v5055
    %v5109 = vpack.c.bf16 %v5058, %v5057
    %v5110 = vpack.c.bf16 %v5060, %v5059
    %v5111 = vpack.c.bf16 %v5062, %v5061
    %v5112 = vpack.c.bf16 %v5064, %v5063
    %v5113 = vpack.c.bf16 %v5066, %v5065
    %v5114 = vpack.c.bf16 %v5068, %v5067
    %v5115 = vpack.c.bf16 %v5070, %v5069
    %v5116 = vpack.c.bf16 %v5072, %v5071
    %v5117 = vpack.c.bf16 %v5074, %v5073
    %v5118 = vpack.c.bf16 %v5076, %v5075
    %v5119 = vpack.c.bf16 %v5078, %v5077
    %v5120 = vpack.c.bf16 %v5080, %v5079
    %v5121 = vpack.c.bf16 %v5082, %v5081
    %v5122 = vpack.c.bf16 %v5084, %v5083
    %v5123 = vpack.c.bf16 %v5086, %v5085
    %v5124 = vpack.c.bf16 %v5088, %v5087
    %v5125 = vpack.c.bf16 %v5090, %v5089
    %v5126 = vpack.c.bf16 %v5092, %v5091
    %v5127 = vpack.c.bf16 %v5094, %v5093
    %v5128 = vpack.c.bf16 %v5096, %v5095
    %5161 = vrot.lane.b32.xlu0 %v5097, 64
    %v5162 = vpop.permute.xlu0 %5161
    %5163 = vrot.lane.b32.xlu0 %v5098, 64
    %v5164 = vpop.permute.xlu0 %5163
    %5165 = vrot.lane.b32.xlu0 %v5099, 64
    %v5166 = vpop.permute.xlu0 %5165
    %5167 = vrot.lane.b32.xlu0 %v5100, 64
    %v5168 = vpop.permute.xlu0 %5167
    %5169 = vrot.lane.b32.xlu0 %v5101, 64
    %v5170 = vpop.permute.xlu0 %5169
    %5171 = vrot.lane.b32.xlu0 %v5102, 64
    %v5172 = vpop.permute.xlu0 %5171
    %5173 = vrot.lane.b32.xlu0 %v5103, 64
    %v5174 = vpop.permute.xlu0 %5173
    %5175 = vrot.lane.b32.xlu0 %v5104, 64
    %v5176 = vpop.permute.xlu0 %5175
    %5177 = vrot.lane.b32.xlu0 %v5105, 64
    %v5178 = vpop.permute.xlu0 %5177
    %5179 = vrot.lane.b32.xlu0 %v5106, 64
    %v5180 = vpop.permute.xlu0 %5179
    %5181 = vrot.lane.b32.xlu0 %v5107, 64
    %v5182 = vpop.permute.xlu0 %5181
    %5183 = vrot.lane.b32.xlu0 %v5108, 64
    %v5184 = vpop.permute.xlu0 %5183
    %5185 = vrot.lane.b32.xlu0 %v5109, 64
    %v5186 = vpop.permute.xlu0 %5185
    %5187 = vrot.lane.b32.xlu0 %v5110, 64
    %v5188 = vpop.permute.xlu0 %5187
    %5189 = vrot.lane.b32.xlu0 %v5111, 64
    %v5190 = vpop.permute.xlu0 %5189
    %5191 = vrot.lane.b32.xlu0 %v5112, 64
    %v5192 = vpop.permute.xlu0 %5191
    %5193 = vrot.lane.b32.xlu0 %v5113, 64
    %v5194 = vpop.permute.xlu0 %5193
    %5195 = vrot.lane.b32.xlu0 %v5114, 64
    %v5196 = vpop.permute.xlu0 %5195
    %5197 = vrot.lane.b32.xlu0 %v5115, 64
    %v5198 = vpop.permute.xlu0 %5197
    %5199 = vrot.lane.b32.xlu0 %v5116, 64
    %v5200 = vpop.permute.xlu0 %5199
    %5201 = vrot.lane.b32.xlu0 %v5117, 64
    %v5202 = vpop.permute.xlu0 %5201
    %5203 = vrot.lane.b32.xlu0 %v5118, 64
    %v5204 = vpop.permute.xlu0 %5203
    %5205 = vrot.lane.b32.xlu0 %v5119, 64
    %v5206 = vpop.permute.xlu0 %5205
    %5207 = vrot.lane.b32.xlu0 %v5120, 64
    %v5208 = vpop.permute.xlu0 %5207
    %5209 = vrot.lane.b32.xlu0 %v5121, 64
    %v5210 = vpop.permute.xlu0 %5209
    %5211 = vrot.lane.b32.xlu0 %v5122, 64
    %v5212 = vpop.permute.xlu0 %5211
    %5213 = vrot.lane.b32.xlu0 %v5123, 64
    %v5214 = vpop.permute.xlu0 %5213
    %5215 = vrot.lane.b32.xlu0 %v5124, 64
    %v5216 = vpop.permute.xlu0 %5215
    %5217 = vrot.lane.b32.xlu0 %v5125, 64
    %v5218 = vpop.permute.xlu0 %5217
    %5219 = vrot.lane.b32.xlu0 %v5126, 64
    %v5220 = vpop.permute.xlu0 %5219
    %5221 = vrot.lane.b32.xlu0 %v5127, 64
    %v5222 = vpop.permute.xlu0 %5221
    %5223 = vrot.lane.b32.xlu0 %v5128, 64
    %v5224 = vpop.permute.xlu0 %5223
    %vm5257 = vcmask 589312
    %5258 = vst.msk [vmem:[#allocation5] sm:$0xff] %vm5257, %v5162
    %5259 = vst.msk [vmem:[#allocation5 + $0x10] sm:$0xff] %vm5257, %v5164
    %5260 = vst.msk [vmem:[#allocation5 + $0x20] sm:$0xff] %vm5257, %v5166
    %5261 = vst.msk [vmem:[#allocation5 + $0x30] sm:$0xff] %vm5257, %v5168
    %5262 = vst.msk [vmem:[#allocation5 + $0x40] sm:$0xff] %vm5257, %v5170
    %5263 = vst.msk [vmem:[#allocation5 + $0x50] sm:$0xff] %vm5257, %v5172
    %5264 = vst.msk [vmem:[#allocation5 + $0x60] sm:$0xff] %vm5257, %v5174
    %5265 = vst.msk [vmem:[#allocation5 + $0x70] sm:$0xff] %vm5257, %v5176
    %5266 = vst.msk [vmem:[#allocation5 + $0x80] sm:$0xff] %vm5257, %v5178
    %5267 = vst.msk [vmem:[#allocation5 + $0x90] sm:$0xff] %vm5257, %v5180
    %5268 = vst.msk [vmem:[#allocation5 + $0xa0] sm:$0xff] %vm5257, %v5182
    %5269 = vst.msk [vmem:[#allocation5 + $0xb0] sm:$0xff] %vm5257, %v5184
    %5270 = vst.msk [vmem:[#allocation5 + $0xc0] sm:$0xff] %vm5257, %v5186
    %5271 = vst.msk [vmem:[#allocation5 + $0xd0] sm:$0xff] %vm5257, %v5188
    %5272 = vst.msk [vmem:[#allocation5 + $0xe0] sm:$0xff] %vm5257, %v5190
    %5273 = vst.msk [vmem:[#allocation5 + $0xf0] sm:$0xff] %vm5257, %v5192
    %5274 = vst.msk [vmem:[#allocation5 + $0x100] sm:$0xff] %vm5257, %v5194
    %5275 = vst.msk [vmem:[#allocation5 + $0x110] sm:$0xff] %vm5257, %v5196
    %5276 = vst.msk [vmem:[#allocation5 + $0x120] sm:$0xff] %vm5257, %v5198
    %5277 = vst.msk [vmem:[#allocation5 + $0x130] sm:$0xff] %vm5257, %v5200
    %5278 = vst.msk [vmem:[#allocation5 + $0x140] sm:$0xff] %vm5257, %v5202
    %5279 = vst.msk [vmem:[#allocation5 + $0x150] sm:$0xff] %vm5257, %v5204
    %5280 = vst.msk [vmem:[#allocation5 + $0x160] sm:$0xff] %vm5257, %v5206
    %5281 = vst.msk [vmem:[#allocation5 + $0x170] sm:$0xff] %vm5257, %v5208
    %5282 = vst.msk [vmem:[#allocation5 + $0x180] sm:$0xff] %vm5257, %v5210
    %5283 = vst.msk [vmem:[#allocation5 + $0x190] sm:$0xff] %vm5257, %v5212
    %5284 = vst.msk [vmem:[#allocation5 + $0x1a0] sm:$0xff] %vm5257, %v5214
    %5285 = vst.msk [vmem:[#allocation5 + $0x1b0] sm:$0xff] %vm5257, %v5216
    %5286 = vst.msk [vmem:[#allocation5 + $0x1c0] sm:$0xff] %vm5257, %v5218
    %5287 = vst.msk [vmem:[#allocation5 + $0x1d0] sm:$0xff] %vm5257, %v5220
    %5288 = vst.msk [vmem:[#allocation5 + $0x1e0] sm:$0xff] %vm5257, %v5222
    %5289 = vst.msk [vmem:[#allocation5 + $0x1f0] sm:$0xff] %vm5257, %v5224
    %v5290 = vld [vmem:[#allocation5] sm:$0xff]
    %v5291 = vld [vmem:[#allocation5 + $0x10] sm:$0xff]
    %v5292 = vld [vmem:[#allocation5 + $0x20] sm:$0xff]
    %v5293 = vld [vmem:[#allocation5 + $0x30] sm:$0xff]
    %v5294 = vld [vmem:[#allocation5 + $0x40] sm:$0xff]
    %v5295 = vld [vmem:[#allocation5 + $0x50] sm:$0xff]
    %v5296 = vld [vmem:[#allocation5 + $0x60] sm:$0xff]
    %v5297 = vld [vmem:[#allocation5 + $0x70] sm:$0xff]
    %v5298 = vld [vmem:[#allocation5 + $0x80] sm:$0xff]
    %v5299 = vld [vmem:[#allocation5 + $0x90] sm:$0xff]
    %v5300 = vld [vmem:[#allocation5 + $0xa0] sm:$0xff]
    %v5301 = vld [vmem:[#allocation5 + $0xb0] sm:$0xff]
    %v5302 = vld [vmem:[#allocation5 + $0xc0] sm:$0xff]
    %v5303 = vld [vmem:[#allocation5 + $0xd0] sm:$0xff]
    %v5304 = vld [vmem:[#allocation5 + $0xe0] sm:$0xff]
    %v5305 = vld [vmem:[#allocation5 + $0xf0] sm:$0xff]
    %v5306 = vld [vmem:[#allocation5 + $0x100] sm:$0xff]
    %v5307 = vld [vmem:[#allocation5 + $0x110] sm:$0xff]
    %v5308 = vld [vmem:[#allocation5 + $0x120] sm:$0xff]
    %v5309 = vld [vmem:[#allocation5 + $0x130] sm:$0xff]
    %v5310 = vld [vmem:[#allocation5 + $0x140] sm:$0xff]
    %v5311 = vld [vmem:[#allocation5 + $0x150] sm:$0xff]
    %v5312 = vld [vmem:[#allocation5 + $0x160] sm:$0xff]
    %v5313 = vld [vmem:[#allocation5 + $0x170] sm:$0xff]
    %v5314 = vld [vmem:[#allocation5 + $0x180] sm:$0xff]
    %v5315 = vld [vmem:[#allocation5 + $0x190] sm:$0xff]
    %v5316 = vld [vmem:[#allocation5 + $0x1a0] sm:$0xff]
    %v5317 = vld [vmem:[#allocation5 + $0x1b0] sm:$0xff]
    %v5318 = vld [vmem:[#allocation5 + $0x1c0] sm:$0xff]
    %v5319 = vld [vmem:[#allocation5 + $0x1d0] sm:$0xff]
    %v5320 = vld [vmem:[#allocation5 + $0x1e0] sm:$0xff]
    %v5321 = vld [vmem:[#allocation5 + $0x1f0] sm:$0xff]
    %v5322 = vld [vmem:[%s3] sm:$0xf]
    %v5323 = vld [vmem:[%s3 + $0x4] sm:$0xf]
    %v5324 = vld [vmem:[%s3 + $0x8] sm:$0xf]
    %v5325 = vld [vmem:[%s3 + $0xc] sm:$0xf]
    %v5326 = vld [vmem:[%s3 + $0x10] sm:$0xf]
    %v5327 = vld [vmem:[%s3 + $0x14] sm:$0xf]
    %v5328 = vld [vmem:[%s3 + $0x18] sm:$0xf]
    %v5329 = vld [vmem:[%s3 + $0x1c] sm:$0xf]
    %v5330 = vld [vmem:[%s3 + $0x20] sm:$0xf]
    %v5331 = vld [vmem:[%s4] sm:$0x1]
    %v5333 = vlaneseq
    %v5334 = vshrl.u32 %v5333, 7
    %v5335 = vsub.s32 0, %v5334
    %v5336 = vrot.slane %v5331, %v5335
    %v5347 = vunpack.c.l.b16 %v5322
    %v5348 = vunpack.c.l.b16 %v5323
    %v5349 = vunpack.c.l.b16 %v5324
    %v5350 = vunpack.c.l.b16 %v5325
    %v5351 = vunpack.c.l.b16 %v5326
    %v5352 = vunpack.c.l.b16 %v5327
    %v5353 = vunpack.c.l.b16 %v5328
    %v5354 = vunpack.c.l.b16 %v5329
    %v5355 = vunpack.c.l.b16 %v5330
    %v5356 = vpack.c.b16 %v5348, %v5347
    %v5357 = vpack.c.b16 %v5350, %v5349
    %v5358 = vpack.c.b16 %v5352, %v5351
    %v5359 = vpack.c.b16 %v5354, %v5353
    %v5360 = vpack.c.b16 %v5355, %v5355
    %vm5365 = vcmask 588800
    %v5367 = vsel %vm5365, %v5290, 0
    %v5370 = vsel %vm5365, %v5291, 0
    %v5373 = vsel %vm5365, %v5292, 0
    %v5376 = vsel %vm5365, %v5293, 0
    %v5379 = vsel %vm5365, %v5294, 0
    %v5382 = vsel %vm5365, %v5295, 0
    %v5385 = vsel %vm5365, %v5296, 0
    %v5388 = vsel %vm5365, %v5297, 0
    %v5391 = vsel %vm5365, %v5298, 0
    %v5394 = vsel %vm5365, %v5299, 0
    %v5397 = vsel %vm5365, %v5300, 0
    %v5400 = vsel %vm5365, %v5301, 0
    %v5403 = vsel %vm5365, %v5302, 0
    %v5406 = vsel %vm5365, %v5303, 0
    %v5409 = vsel %vm5365, %v5304, 0
    %v5412 = vsel %vm5365, %v5305, 0
    %v5415 = vsel %vm5365, %v5306, 0
    %v5418 = vsel %vm5365, %v5307, 0
    %v5421 = vsel %vm5365, %v5308, 0
    %v5424 = vsel %vm5365, %v5309, 0
    %v5427 = vsel %vm5365, %v5310, 0
    %v5430 = vsel %vm5365, %v5311, 0
    %v5433 = vsel %vm5365, %v5312, 0
    %v5436 = vsel %vm5365, %v5313, 0
    %v5439 = vsel %vm5365, %v5314, 0
    %v5442 = vsel %vm5365, %v5315, 0
    %v5445 = vsel %vm5365, %v5316, 0
    %v5448 = vsel %vm5365, %v5317, 0
    %v5451 = vsel %vm5365, %v5318, 0
    %v5454 = vsel %vm5365, %v5319, 0
    %v5457 = vsel %vm5365, %v5320, 0
    %v5460 = vsel %vm5365, %v5321, 0
    %vm5462 = vcmask 1043456
    %v5464 = vsel %vm5462, %v5360, 0
    %5466 = vmatprep.subr.bf16.mxu0 0
    %5467 = vmatpush1.bf16.msra.mxu0 %v5356
    %5468 = vmatprep.subr.bf16.mxu0 0
    %5469 = vmatpush1.bf16.msra.mxu0 %v5357
    %5470 = vmatprep.subr.bf16.mxu0 0
    %5471 = vmatpush1.bf16.msra.mxu0 %v5358
    %5472 = vmatprep.subr.bf16.mxu0 0
    %5473 = vmatpush1.bf16.msra.mxu0 %v5359
    %5474 = vmatprep.subr.bf16.mxu0 0
    %5475 = vmatpush1.bf16.msra.mxu0 %v5464
    %5476 = vmatprep.subr.bf16.mxu0 0
    %5477 = vmatpush1.bf16.msra.mxu0 0
    %5478 = vmatprep.subr.bf16.mxu0 0
    %5479 = vmatpush1.bf16.msra.mxu0 0
    %5480 = vmatprep.subr.bf16.mxu0 0
    %5481 = vmatpush1.bf16.msra.mxu0 0
    %5482 = vmatprep.subr.bf16.mxu0 0
    %5483 = vmatpush1.bf16.msra.mxu0 0
    %5484 = vmatprep.subr.bf16.mxu0 0
    %5485 = vmatpush1.bf16.msra.mxu0 0
    %5486 = vmatprep.subr.bf16.mxu0 0
    %5487 = vmatpush1.bf16.msra.mxu0 0
    %5488 = vmatprep.subr.bf16.mxu0 0
    %5489 = vmatpush1.bf16.msra.mxu0 0
    %5490 = vmatprep.subr.bf16.mxu0 0
    %5491 = vmatpush1.bf16.msra.mxu0 0
    %5492 = vmatprep.subr.bf16.mxu0 0
    %5493 = vmatpush1.bf16.msra.mxu0 0
    %5494 = vmatprep.subr.bf16.mxu0 0
    %5495 = vmatpush1.bf16.msra.mxu0 0
    %5496 = vmatprep.subr.bf16.mxu0 0
    %5497 = vmatpush1.bf16.msra.mxu0 0
    %5498 = vmatprep.mubr.bf16.mxu0 0
    %5499 = vmatmul.mubr.bf16.gmra.mrb[0].mxu0 %v5367
    %v5500 = vpop.f32.mrb[0].mxu0
    %v5501 = vadd.f32 %v5336, %v5500
    %v5502 = vpop.f32.mrb[0].mxu0
    %v5503 = vpop.f32.mrb[0].mxu0
    %v5504 = vadd.f32 %v5336, %v5503
    %v5505 = vpop.f32.mrb[0].mxu0
    %5506 = vmatprep.mubr.bf16.mxu0 0
    %5507 = vmatmul.mubr.bf16.gmra.mrb[0].mxu0 %v5370
    %v5508 = vpop.f32.mrb[0].mxu0
    %v5509 = vadd.f32 %v5336, %v5508
    %v5510 = vpop.f32.mrb[0].mxu0
    %v5511 = vpop.f32.mrb[0].mxu0
    %v5512 = vadd.f32 %v5336, %v5511
    %v5513 = vpop.f32.mrb[0].mxu0
    %5514 = vmatprep.mubr.bf16.mxu0 0
    %5515 = vmatmul.mubr.bf16.gmra.mrb[0].mxu0 %v5373
    %v5516 = vpop.f32.mrb[0].mxu0
    %v5517 = vadd.f32 %v5336, %v5516
    %v5518 = vpop.f32.mrb[0].mxu0
    %v5519 = vpop.f32.mrb[0].mxu0
    %v5520 = vadd.f32 %v5336, %v5519
    %v5521 = vpop.f32.mrb[0].mxu0
    %5522 = vmatprep.mubr.bf16.mxu0 0
    %5523 = vmatmul.mubr.bf16.gmra.mrb[0].mxu0 %v5376
    %v5524 = vpop.f32.mrb[0].mxu0
    %v5525 = vadd.f32 %v5336, %v5524
    %v5526 = vpop.f32.mrb[0].mxu0
    %v5527 = vpop.f32.mrb[0].mxu0
    %v5528 = vadd.f32 %v5336, %v5527
    %v5529 = vpop.f32.mrb[0].mxu0
    %5530 = vmatprep.mubr.bf16.mxu0 0
    %5531 = vmatmul.mubr.bf16.gmra.mrb[0].mxu0 %v5379
    %v5532 = vpop.f32.mrb[0].mxu0
    %v5533 = vadd.f32 %v5336, %v5532
    %v5534 = vpop.f32.mrb[0].mxu0
    %v5535 = vpop.f32.mrb[0].mxu0
    %v5536 = vadd.f32 %v5336, %v5535
    %v5537 = vpop.f32.mrb[0].mxu0
    %5538 = vmatprep.mubr.bf16.mxu0 0
    %5539 = vmatmul.mubr.bf16.gmra.mrb[0].mxu0 %v5382
    %v5540 = vpop.f32.mrb[0].mxu0
    %v5541 = vadd.f32 %v5336, %v5540
    %v5542 = vpop.f32.mrb[0].mxu0
    %v5543 = vpop.f32.mrb[0].mxu0
    %v5544 = vadd.f32 %v5336, %v5543
    %v5545 = vpop.f32.mrb[0].mxu0
    %5546 = vmatprep.mubr.bf16.mxu0 0
    %5547 = vmatmul.mubr.bf16.gmra.mrb[0].mxu0 %v5385
    %v5548 = vpop.f32.mrb[0].mxu0
    %v5549 = vadd.f32 %v5336, %v5548
    %v5550 = vpop.f32.mrb[0].mxu0
    %v5551 = vpop.f32.mrb[0].mxu0
    %v5552 = vadd.f32 %v5336, %v5551
    %v5553 = vpop.f32.mrb[0].mxu0
    %5554 = vmatprep.mubr.bf16.mxu0 0
    %5555 = vmatmul.mubr.bf16.gmra.mrb[0].mxu0 %v5388
    %v5556 = vpop.f32.mrb[0].mxu0
    %v5557 = vadd.f32 %v5336, %v5556
    %v5558 = vpop.f32.mrb[0].mxu0
    %v5559 = vpop.f32.mrb[0].mxu0
    %v5560 = vadd.f32 %v5336, %v5559
    %v5561 = vpop.f32.mrb[0].mxu0
    %5562 = vmatprep.mubr.bf16.mxu0 0
    %5563 = vmatmul.mubr.bf16.gmra.mrb[0].mxu0 %v5391
    %v5564 = vpop.f32.mrb[0].mxu0
    %v5565 = vadd.f32 %v5336, %v5564
    %v5566 = vpop.f32.mrb[0].mxu0
    %v5567 = vpop.f32.mrb[0].mxu0
    %v5568 = vadd.f32 %v5336, %v5567
    %v5569 = vpop.f32.mrb[0].mxu0
    %5570 = vmatprep.mubr.bf16.mxu0 0
    %5571 = vmatmul.mubr.bf16.gmra.mrb[0].mxu0 %v5394
    %v5572 = vpop.f32.mrb[0].mxu0
    %v5573 = vadd.f32 %v5336, %v5572
    %v5574 = vpop.f32.mrb[0].mxu0
    %v5575 = vpop.f32.mrb[0].mxu0
    %v5576 = vadd.f32 %v5336, %v5575
    %v5577 = vpop.f32.mrb[0].mxu0
    %5578 = vmatprep.mubr.bf16.mxu0 0
    %5579 = vmatmul.mubr.bf16.gmra.mrb[0].mxu0 %v5397
    %v5580 = vpop.f32.mrb[0].mxu0
    %v5581 = vadd.f32 %v5336, %v5580
    %v5582 = vpop.f32.mrb[0].mxu0
    %v5583 = vpop.f32.mrb[0].mxu0
    %v5584 = vadd.f32 %v5336, %v5583
    %v5585 = vpop.f32.mrb[0].mxu0
    %5586 = vmatprep.mubr.bf16.mxu0 0
    %5587 = vmatmul.mubr.bf16.gmra.mrb[0].mxu0 %v5400
    %v5588 = vpop.f32.mrb[0].mxu0
    %v5589 = vadd.f32 %v5336, %v5588
    %v5590 = vpop.f32.mrb[0].mxu0
    %v5591 = vpop.f32.mrb[0].mxu0
    %v5592 = vadd.f32 %v5336, %v5591
    %v5593 = vpop.f32.mrb[0].mxu0
    %5594 = vmatprep.mubr.bf16.mxu0 0
    %5595 = vmatmul.mubr.bf16.gmra.mrb[0].mxu0 %v5403
    %v5596 = vpop.f32.mrb[0].mxu0
    %v5597 = vadd.f32 %v5336, %v5596
    %v5598 = vpop.f32.mrb[0].mxu0
    %v5599 = vpop.f32.mrb[0].mxu0
    %v5600 = vadd.f32 %v5336, %v5599
    %v5601 = vpop.f32.mrb[0].mxu0
    %5602 = vmatprep.mubr.bf16.mxu0 0
    %5603 = vmatmul.mubr.bf16.gmra.mrb[0].mxu0 %v5406
    %v5604 = vpop.f32.mrb[0].mxu0
    %v5605 = vadd.f32 %v5336, %v5604
    %v5606 = vpop.f32.mrb[0].mxu0
    %v5607 = vpop.f32.mrb[0].mxu0
    %v5608 = vadd.f32 %v5336, %v5607
    %v5609 = vpop.f32.mrb[0].mxu0
    %5610 = vmatprep.mubr.bf16.mxu0 0
    %5611 = vmatmul.mubr.bf16.gmra.mrb[0].mxu0 %v5409
    %v5612 = vpop.f32.mrb[0].mxu0
    %v5613 = vadd.f32 %v5336, %v5612
    %v5614 = vpop.f32.mrb[0].mxu0
    %v5615 = vpop.f32.mrb[0].mxu0
    %v5616 = vadd.f32 %v5336, %v5615
    %v5617 = vpop.f32.mrb[0].mxu0
    %5618 = vmatprep.mubr.bf16.mxu0 0
    %5619 = vmatmul.mubr.bf16.gmra.mrb[0].mxu0 %v5412
    %v5620 = vpop.f32.mrb[0].mxu0
    %v5621 = vadd.f32 %v5336, %v5620
    %v5622 = vpop.f32.mrb[0].mxu0
    %v5623 = vpop.f32.mrb[0].mxu0
    %v5624 = vadd.f32 %v5336, %v5623
    %v5625 = vpop.f32.mrb[0].mxu0
    %5626 = vmatprep.mubr.bf16.mxu0 0
    %5627 = vmatmul.mubr.bf16.gmra.mrb[0].mxu0 %v5415
    %v5628 = vpop.f32.mrb[0].mxu0
    %v5629 = vadd.f32 %v5336, %v5628
    %v5630 = vpop.f32.mrb[0].mxu0
    %v5631 = vpop.f32.mrb[0].mxu0
    %v5632 = vadd.f32 %v5336, %v5631
    %v5633 = vpop.f32.mrb[0].mxu0
    %5634 = vmatprep.mubr.bf16.mxu0 0
    %5635 = vmatmul.mubr.bf16.gmra.mrb[0].mxu0 %v5418
    %v5636 = vpop.f32.mrb[0].mxu0
    %v5637 = vadd.f32 %v5336, %v5636
    %v5638 = vpop.f32.mrb[0].mxu0
    %v5639 = vpop.f32.mrb[0].mxu0
    %v5640 = vadd.f32 %v5336, %v5639
    %v5641 = vpop.f32.mrb[0].mxu0
    %5642 = vmatprep.mubr.bf16.mxu0 0
    %5643 = vmatmul.mubr.bf16.gmra.mrb[0].mxu0 %v5421
    %v5644 = vpop.f32.mrb[0].mxu0
    %v5645 = vadd.f32 %v5336, %v5644
    %v5646 = vpop.f32.mrb[0].mxu0
    %v5647 = vpop.f32.mrb[0].mxu0
    %v5648 = vadd.f32 %v5336, %v5647
    %v5649 = vpop.f32.mrb[0].mxu0
    %5650 = vmatprep.mubr.bf16.mxu0 0
    %5651 = vmatmul.mubr.bf16.gmra.mrb[0].mxu0 %v5424
    %v5652 = vpop.f32.mrb[0].mxu0
    %v5653 = vadd.f32 %v5336, %v5652
    %v5654 = vpop.f32.mrb[0].mxu0
    %v5655 = vpop.f32.mrb[0].mxu0
    %v5656 = vadd.f32 %v5336, %v5655
    %v5657 = vpop.f32.mrb[0].mxu0
    %5658 = vmatprep.mubr.bf16.mxu0 0
    %5659 = vmatmul.mubr.bf16.gmra.mrb[0].mxu0 %v5427
    %v5660 = vpop.f32.mrb[0].mxu0
    %v5661 = vadd.f32 %v5336, %v5660
    %v5662 = vpop.f32.mrb[0].mxu0
    %v5663 = vpop.f32.mrb[0].mxu0
    %v5664 = vadd.f32 %v5336, %v5663
    %v5665 = vpop.f32.mrb[0].mxu0
    %5666 = vmatprep.mubr.bf16.mxu0 0
    %5667 = vmatmul.mubr.bf16.gmra.mrb[0].mxu0 %v5430
    %v5668 = vpop.f32.mrb[0].mxu0
    %v5669 = vadd.f32 %v5336, %v5668
    %v5670 = vpop.f32.mrb[0].mxu0
    %v5671 = vpop.f32.mrb[0].mxu0
    %v5672 = vadd.f32 %v5336, %v5671
    %v5673 = vpop.f32.mrb[0].mxu0
    %5674 = vmatprep.mubr.bf16.mxu0 0
    %5675 = vmatmul.mubr.bf16.gmra.mrb[0].mxu0 %v5433
    %v5676 = vpop.f32.mrb[0].mxu0
    %v5677 = vadd.f32 %v5336, %v5676
    %v5678 = vpop.f32.mrb[0].mxu0
    %v5679 = vpop.f32.mrb[0].mxu0
    %v5680 = vadd.f32 %v5336, %v5679
    %v5681 = vpop.f32.mrb[0].mxu0
    %5682 = vmatprep.mubr.bf16.mxu0 0
    %5683 = vmatmul.mubr.bf16.gmra.mrb[0].mxu0 %v5436
    %v5684 = vpop.f32.mrb[0].mxu0
    %v5685 = vadd.f32 %v5336, %v5684
    %v5686 = vpop.f32.mrb[0].mxu0
    %v5687 = vpop.f32.mrb[0].mxu0
    %v5688 = vadd.f32 %v5336, %v5687
    %v5689 = vpop.f32.mrb[0].mxu0
    %5690 = vmatprep.mubr.bf16.mxu0 0
    %5691 = vmatmul.mubr.bf16.gmra.mrb[0].mxu0 %v5439
    %v5692 = vpop.f32.mrb[0].mxu0
    %v5693 = vadd.f32 %v5336, %v5692
    %v5694 = vpop.f32.mrb[0].mxu0
    %v5695 = vpop.f32.mrb[0].mxu0
    %v5696 = vadd.f32 %v5336, %v5695
    %v5697 = vpop.f32.mrb[0].mxu0
    %5698 = vmatprep.mubr.bf16.mxu0 0
    %5699 = vmatmul.mubr.bf16.gmra.mrb[0].mxu0 %v5442
    %v5700 = vpop.f32.mrb[0].mxu0
    %v5701 = vadd.f32 %v5336, %v5700
    %v5702 = vpop.f32.mrb[0].mxu0
    %v5703 = vpop.f32.mrb[0].mxu0
    %v5704 = vadd.f32 %v5336, %v5703
    %v5705 = vpop.f32.mrb[0].mxu0
    %5706 = vmatprep.mubr.bf16.mxu0 0
    %5707 = vmatmul.mubr.bf16.gmra.mrb[0].mxu0 %v5445
    %v5708 = vpop.f32.mrb[0].mxu0
    %v5709 = vadd.f32 %v5336, %v5708
    %v5710 = vpop.f32.mrb[0].mxu0
    %v5711 = vpop.f32.mrb[0].mxu0
    %v5712 = vadd.f32 %v5336, %v5711
    %v5713 = vpop.f32.mrb[0].mxu0
    %5714 = vmatprep.mubr.bf16.mxu0 0
    %5715 = vmatmul.mubr.bf16.gmra.mrb[0].mxu0 %v5448
    %v5716 = vpop.f32.mrb[0].mxu0
    %v5717 = vadd.f32 %v5336, %v5716
    %v5718 = vpop.f32.mrb[0].mxu0
    %v5719 = vpop.f32.mrb[0].mxu0
    %v5720 = vadd.f32 %v5336, %v5719
    %v5721 = vpop.f32.mrb[0].mxu0
    %5722 = vmatprep.mubr.bf16.mxu0 0
    %5723 = vmatmul.mubr.bf16.gmra.mrb[0].mxu0 %v5451
    %v5724 = vpop.f32.mrb[0].mxu0
    %v5725 = vadd.f32 %v5336, %v5724
    %v5726 = vpop.f32.mrb[0].mxu0
    %v5727 = vpop.f32.mrb[0].mxu0
    %v5728 = vadd.f32 %v5336, %v5727
    %v5729 = vpop.f32.mrb[0].mxu0
    %5730 = vmatprep.mubr.bf16.mxu0 0
    %5731 = vmatmul.mubr.bf16.gmra.mrb[0].mxu0 %v5454
    %v5732 = vpop.f32.mrb[0].mxu0
    %v5733 = vadd.f32 %v5336, %v5732
    %v5734 = vpop.f32.mrb[0].mxu0
    %v5735 = vpop.f32.mrb[0].mxu0
    %v5736 = vadd.f32 %v5336, %v5735
    %v5737 = vpop.f32.mrb[0].mxu0
    %5738 = vmatprep.mubr.bf16.mxu0 0
    %5739 = vmatmul.mubr.bf16.gmra.mrb[0].mxu0 %v5457
    %v5740 = vpop.f32.mrb[0].mxu0
    %v5741 = vadd.f32 %v5336, %v5740
    %v5742 = vpop.f32.mrb[0].mxu0
    %v5743 = vpop.f32.mrb[0].mxu0
    %v5744 = vadd.f32 %v5336, %v5743
    %v5745 = vpop.f32.mrb[0].mxu0
    %5746 = vmatprep.mubr.bf16.mxu0 0
    %5747 = vmatmul.mubr.bf16.gmra.mrb[0].mxu0 %v5460
    %v5748 = vpop.f32.mrb[0].mxu0
    %v5749 = vadd.f32 %v5336, %v5748
    %v5750 = vpop.f32.mrb[0].mxu0
    %v5751 = vpop.f32.mrb[0].mxu0
    %v5752 = vadd.f32 %v5336, %v5751
    %v5753 = vpop.f32.mrb[0].mxu0
    %5754 = vdwg.mxu0
    %v5755 = vmax.f32 %v5501, 0.0
    %v5756 = vmax.f32 %v5504, 0.0
    %v5757 = vmax.f32 %v5509, 0.0
    %v5758 = vmax.f32 %v5512, 0.0
    %v5759 = vmax.f32 %v5517, 0.0
    %v5760 = vmax.f32 %v5520, 0.0
    %v5761 = vmax.f32 %v5525, 0.0
    %v5762 = vmax.f32 %v5528, 0.0
    %v5763 = vmax.f32 %v5533, 0.0
    %v5764 = vmax.f32 %v5536, 0.0
    %v5765 = vmax.f32 %v5541, 0.0
    %v5766 = vmax.f32 %v5544, 0.0
    %v5767 = vmax.f32 %v5549, 0.0
    %v5768 = vmax.f32 %v5552, 0.0
    %v5769 = vmax.f32 %v5557, 0.0
    %v5770 = vmax.f32 %v5560, 0.0
    %v5771 = vmax.f32 %v5565, 0.0
    %v5772 = vmax.f32 %v5568, 0.0
    %v5773 = vmax.f32 %v5573, 0.0
    %v5774 = vmax.f32 %v5576, 0.0
    %v5775 = vmax.f32 %v5581, 0.0
    %v5776 = vmax.f32 %v5584, 0.0
    %v5777 = vmax.f32 %v5589, 0.0
    %v5778 = vmax.f32 %v5592, 0.0
    %v5779 = vmax.f32 %v5597, 0.0
    %v5780 = vmax.f32 %v5600, 0.0
    %v5781 = vmax.f32 %v5605, 0.0
    %v5782 = vmax.f32 %v5608, 0.0
    %v5783 = vmax.f32 %v5613, 0.0
    %v5784 = vmax.f32 %v5616, 0.0
    %v5785 = vmax.f32 %v5621, 0.0
    %v5786 = vmax.f32 %v5624, 0.0
    %v5787 = vmax.f32 %v5629, 0.0
    %v5788 = vmax.f32 %v5632, 0.0
    %v5789 = vmax.f32 %v5637, 0.0
    %v5790 = vmax.f32 %v5640, 0.0
    %v5791 = vmax.f32 %v5645, 0.0
    %v5792 = vmax.f32 %v5648, 0.0
    %v5793 = vmax.f32 %v5653, 0.0
    %v5794 = vmax.f32 %v5656, 0.0
    %v5795 = vmax.f32 %v5661, 0.0
    %v5796 = vmax.f32 %v5664, 0.0
    %v5797 = vmax.f32 %v5669, 0.0
    %v5798 = vmax.f32 %v5672, 0.0
    %v5799 = vmax.f32 %v5677, 0.0
    %v5800 = vmax.f32 %v5680, 0.0
    %v5801 = vmax.f32 %v5685, 0.0
    %v5802 = vmax.f32 %v5688, 0.0
    %v5803 = vmax.f32 %v5693, 0.0
    %v5804 = vmax.f32 %v5696, 0.0
    %v5805 = vmax.f32 %v5701, 0.0
    %v5806 = vmax.f32 %v5704, 0.0
    %v5807 = vmax.f32 %v5709, 0.0
    %v5808 = vmax.f32 %v5712, 0.0
    %v5809 = vmax.f32 %v5717, 0.0
    %v5810 = vmax.f32 %v5720, 0.0
    %v5811 = vmax.f32 %v5725, 0.0
    %v5812 = vmax.f32 %v5728, 0.0
    %v5813 = vmax.f32 %v5733, 0.0
    %v5814 = vmax.f32 %v5736, 0.0
    %v5815 = vmax.f32 %v5741, 0.0
    %v5816 = vmax.f32 %v5744, 0.0
    %v5817 = vmax.f32 %v5749, 0.0
    %v5818 = vmax.f32 %v5752, 0.0
    %5819 = vst.msk [vmem:[%s3040 + $0x8] sm:$0xff] %vm2958, %v5755
    %5820 = vst.msk [vmem:[%s3040 + $0x10] sm:$0xff] %vm2958, %v5756
    %5821 = vst.msk [vmem:[%s3040 + $0x28] sm:$0xff] %vm2958, %v5757
    %5822 = vst.msk [vmem:[%s3040 + $0x30] sm:$0xff] %vm2958, %v5758
    %5823 = vst.msk [vmem:[%s3040 + $0x48] sm:$0xff] %vm2958, %v5759
    %5824 = vst.msk [vmem:[%s3040 + $0x50] sm:$0xff] %vm2958, %v5760
    %5825 = vst.msk [vmem:[%s3040 + $0x68] sm:$0xff] %vm2958, %v5761
    %5826 = vst.msk [vmem:[%s3040 + $0x70] sm:$0xff] %vm2958, %v5762
    %5827 = vst.msk [vmem:[%s3040 + $0x88] sm:$0xff] %vm2958, %v5763
    %5828 = vst.msk [vmem:[%s3040 + $0x90] sm:$0xff] %vm2958, %v5764
    %5829 = vst.msk [vmem:[%s3040 + $0xa8] sm:$0xff] %vm2958, %v5765
    %5830 = vst.msk [vmem:[%s3040 + $0xb0] sm:$0xff] %vm2958, %v5766
    %5831 = vst.msk [vmem:[%s3040 + $0xc8] sm:$0xff] %vm2958, %v5767
    %5832 = vst.msk [vmem:[%s3040 + $0xd0] sm:$0xff] %vm2958, %v5768
    %5833 = vst.msk [vmem:[%s3040 + $0xe8] sm:$0xff] %vm2958, %v5769
    %5834 = vst.msk [vmem:[%s3040 + $0xf0] sm:$0xff] %vm2958, %v5770
    %5835 = vst.msk [vmem:[%s3040 + $0x108] sm:$0xff] %vm2958, %v5771
    %5836 = vst.msk [vmem:[%s3040 + $0x110] sm:$0xff] %vm2958, %v5772
    %5837 = vst.msk [vmem:[%s3040 + $0x128] sm:$0xff] %vm2958, %v5773
    %5838 = vst.msk [vmem:[%s3040 + $0x130] sm:$0xff] %vm2958, %v5774
    %5839 = vst.msk [vmem:[%s3040 + $0x148] sm:$0xff] %vm2958, %v5775
    %5840 = vst.msk [vmem:[%s3040 + $0x150] sm:$0xff] %vm2958, %v5776
    %5841 = vst.msk [vmem:[%s3040 + $0x168] sm:$0xff] %vm2958, %v5777
    %5842 = vst.msk [vmem:[%s3040 + $0x170] sm:$0xff] %vm2958, %v5778
    %5843 = vst.msk [vmem:[%s3040 + $0x188] sm:$0xff] %vm2958, %v5779
    %5844 = vst.msk [vmem:[%s3040 + $0x190] sm:$0xff] %vm2958, %v5780
    %5845 = vst.msk [vmem:[%s3040 + $0x1a8] sm:$0xff] %vm2958, %v5781
    %5846 = vst.msk [vmem:[%s3040 + $0x1b0] sm:$0xff] %vm2958, %v5782
    %5847 = vst.msk [vmem:[%s3040 + $0x1c8] sm:$0xff] %vm2958, %v5783
    %5848 = vst.msk [vmem:[%s3040 + $0x1d0] sm:$0xff] %vm2958, %v5784
    %5849 = vst.msk [vmem:[%s3040 + $0x1e8] sm:$0xff] %vm2958, %v5785
    %5850 = vst.msk [vmem:[%s3040 + $0x1f0] sm:$0xff] %vm2958, %v5786
    %5851 = vst.msk [vmem:[%s3040 + $0x248] sm:$0xff] %vm2958, %v5787
    %5852 = vst.msk [vmem:[%s3040 + $0x250] sm:$0xff] %vm2958, %v5788
    %5853 = vst.msk [vmem:[%s3040 + $0x268] sm:$0xff] %vm2958, %v5789
    %5854 = vst.msk [vmem:[%s3040 + $0x270] sm:$0xff] %vm2958, %v5790
    %5855 = vst.msk [vmem:[%s3040 + $0x288] sm:$0xff] %vm2958, %v5791
    %5856 = vst.msk [vmem:[%s3040 + $0x290] sm:$0xff] %vm2958, %v5792
    %5857 = vst.msk [vmem:[%s3040 + $0x2a8] sm:$0xff] %vm2958, %v5793
    %5858 = vst.msk [vmem:[%s3040 + $0x2b0] sm:$0xff] %vm2958, %v5794
    %5859 = vst.msk [vmem:[%s3040 + $0x2c8] sm:$0xff] %vm2958, %v5795
    %5860 = vst.msk [vmem:[%s3040 + $0x2d0] sm:$0xff] %vm2958, %v5796
    %5861 = vst.msk [vmem:[%s3040 + $0x2e8] sm:$0xff] %vm2958, %v5797
    %5862 = vst.msk [vmem:[%s3040 + $0x2f0] sm:$0xff] %vm2958, %v5798
    %5863 = vst.msk [vmem:[%s3040 + $0x308] sm:$0xff] %vm2958, %v5799
    %5864 = vst.msk [vmem:[%s3040 + $0x310] sm:$0xff] %vm2958, %v5800
    %5865 = vst.msk [vmem:[%s3040 + $0x328] sm:$0xff] %vm2958, %v5801
    %5866 = vst.msk [vmem:[%s3040 + $0x330] sm:$0xff] %vm2958, %v5802
    %5867 = vst.msk [vmem:[%s3040 + $0x348] sm:$0xff] %vm2958, %v5803
    %5868 = vst.msk [vmem:[%s3040 + $0x350] sm:$0xff] %vm2958, %v5804
    %5869 = vst.msk [vmem:[%s3040 + $0x368] sm:$0xff] %vm2958, %v5805
    %5870 = vst.msk [vmem:[%s3040 + $0x370] sm:$0xff] %vm2958, %v5806
    %5871 = vst.msk [vmem:[%s3040 + $0x388] sm:$0xff] %vm2958, %v5807
    %5872 = vst.msk [vmem:[%s3040 + $0x390] sm:$0xff] %vm2958, %v5808
    %5873 = vst.msk [vmem:[%s3040 + $0x3a8] sm:$0xff] %vm2958, %v5809
    %5874 = vst.msk [vmem:[%s3040 + $0x3b0] sm:$0xff] %vm2958, %v5810
    %5875 = vst.msk [vmem:[%s3040 + $0x3c8] sm:$0xff] %vm2958, %v5811
    %5876 = vst.msk [vmem:[%s3040 + $0x3d0] sm:$0xff] %vm2958, %v5812
    %5877 = vst.msk [vmem:[%s3040 + $0x3e8] sm:$0xff] %vm2958, %v5813
    %5878 = vst.msk [vmem:[%s3040 + $0x3f0] sm:$0xff] %vm2958, %v5814
    %5879 = vst.msk [vmem:[%s3040 + $0x408] sm:$0xff] %vm2958, %v5815
    %5880 = vst.msk [vmem:[%s3040 + $0x410] sm:$0xff] %vm2958, %v5816
    %5881 = vst.msk [vmem:[%s3040 + $0x428] sm:$0xff] %vm2958, %v5817
    %5882 = vst.msk [vmem:[%s3040 + $0x430] sm:$0xff] %vm2958, %v5818
    %v5883 = vld [vmem:[#allocation3 + $0x7] sm:$0xff]
    %v5884 = vld [vmem:[#allocation3 + $0xf] sm:$0xff]
    %v5885 = vld [vmem:[#allocation3 + $0x27] sm:$0xff]
    %v5886 = vld [vmem:[#allocation3 + $0x2f] sm:$0xff]
    %v5887 = vld [vmem:[#allocation3 + $0x47] sm:$0xff]
    %v5888 = vld [vmem:[#allocation3 + $0x4f] sm:$0xff]
    %v5889 = vld [vmem:[#allocation3 + $0x67] sm:$0xff]
    %v5890 = vld [vmem:[#allocation3 + $0x6f] sm:$0xff]
    %v5891 = vld [vmem:[#allocation3 + $0x87] sm:$0xff]
    %v5892 = vld [vmem:[#allocation3 + $0x8f] sm:$0xff]
    %v5893 = vld [vmem:[#allocation3 + $0xa7] sm:$0xff]
    %v5894 = vld [vmem:[#allocation3 + $0xaf] sm:$0xff]
    %v5895 = vld [vmem:[#allocation3 + $0xc7] sm:$0xff]
    %v5896 = vld [vmem:[#allocation3 + $0xcf] sm:$0xff]
    %v5897 = vld [vmem:[#allocation3 + $0xe7] sm:$0xff]
    %v5898 = vld [vmem:[#allocation3 + $0xef] sm:$0xff]
    %v5899 = vld [vmem:[#allocation3 + $0x107] sm:$0xff]
    %v5900 = vld [vmem:[#allocation3 + $0x10f] sm:$0xff]
    %v5901 = vld [vmem:[#allocation3 + $0x127] sm:$0xff]
    %v5902 = vld [vmem:[#allocation3 + $0x12f] sm:$0xff]
    %v5903 = vld [vmem:[#allocation3 + $0x147] sm:$0xff]
    %v5904 = vld [vmem:[#allocation3 + $0x14f] sm:$0xff]
    %v5905 = vld [vmem:[#allocation3 + $0x167] sm:$0xff]
    %v5906 = vld [vmem:[#allocation3 + $0x16f] sm:$0xff]
    %v5907 = vld [vmem:[#allocation3 + $0x187] sm:$0xff]
    %v5908 = vld [vmem:[#allocation3 + $0x18f] sm:$0xff]
    %v5909 = vld [vmem:[#allocation3 + $0x1a7] sm:$0xff]
    %v5910 = vld [vmem:[#allocation3 + $0x1af] sm:$0xff]
    %v5911 = vld [vmem:[#allocation3 + $0x1c7] sm:$0xff]
    %v5912 = vld [vmem:[#allocation3 + $0x1cf] sm:$0xff]
    %v5913 = vld [vmem:[#allocation3 + $0x1e7] sm:$0xff]
    %v5914 = vld [vmem:[#allocation3 + $0x1ef] sm:$0xff]
    %v5915 = vld [vmem:[#allocation3 + $0x247] sm:$0xff]
    %v5916 = vld [vmem:[#allocation3 + $0x24f] sm:$0xff]
    %v5917 = vld [vmem:[#allocation3 + $0x267] sm:$0xff]
    %v5918 = vld [vmem:[#allocation3 + $0x26f] sm:$0xff]
    %v5919 = vld [vmem:[#allocation3 + $0x287] sm:$0xff]
    %v5920 = vld [vmem:[#allocation3 + $0x28f] sm:$0xff]
    %v5921 = vld [vmem:[#allocation3 + $0x2a7] sm:$0xff]
    %v5922 = vld [vmem:[#allocation3 + $0x2af] sm:$0xff]
    %v5923 = vld [vmem:[#allocation3 + $0x2c7] sm:$0xff]
    %v5924 = vld [vmem:[#allocation3 + $0x2cf] sm:$0xff]
    %v5925 = vld [vmem:[#allocation3 + $0x2e7] sm:$0xff]
    %v5926 = vld [vmem:[#allocation3 + $0x2ef] sm:$0xff]
    %v5927 = vld [vmem:[#allocation3 + $0x307] sm:$0xff]
    %v5928 = vld [vmem:[#allocation3 + $0x30f] sm:$0xff]
    %v5929 = vld [vmem:[#allocation3 + $0x327] sm:$0xff]
    %v5930 = vld [vmem:[#allocation3 + $0x32f] sm:$0xff]
    %v5931 = vld [vmem:[#allocation3 + $0x347] sm:$0xff]
    %v5932 = vld [vmem:[#allocation3 + $0x34f] sm:$0xff]
    %v5933 = vld [vmem:[#allocation3 + $0x367] sm:$0xff]
    %v5934 = vld [vmem:[#allocation3 + $0x36f] sm:$0xff]
    %v5935 = vld [vmem:[#allocation3 + $0x387] sm:$0xff]
    %v5936 = vld [vmem:[#allocation3 + $0x38f] sm:$0xff]
    %v5937 = vld [vmem:[#allocation3 + $0x3a7] sm:$0xff]
    %v5938 = vld [vmem:[#allocation3 + $0x3af] sm:$0xff]
    %v5939 = vld [vmem:[#allocation3 + $0x3c7] sm:$0xff]
    %v5940 = vld [vmem:[#allocation3 + $0x3cf] sm:$0xff]
    %v5941 = vld [vmem:[#allocation3 + $0x3e7] sm:$0xff]
    %v5942 = vld [vmem:[#allocation3 + $0x3ef] sm:$0xff]
    %v5943 = vld [vmem:[#allocation3 + $0x407] sm:$0xff]
    %v5944 = vld [vmem:[#allocation3 + $0x40f] sm:$0xff]
    %v5945 = vld [vmem:[#allocation3 + $0x427] sm:$0xff]
    %v5946 = vld [vmem:[#allocation3 + $0x42f] sm:$0xff]
    %v5947 = vpack.c.bf16 %v5884, %v5883
    %v5948 = vpack.c.bf16 %v5886, %v5885
    %v5949 = vpack.c.bf16 %v5888, %v5887
    %v5950 = vpack.c.bf16 %v5890, %v5889
    %v5951 = vpack.c.bf16 %v5892, %v5891
    %v5952 = vpack.c.bf16 %v5894, %v5893
    %v5953 = vpack.c.bf16 %v5896, %v5895
    %v5954 = vpack.c.bf16 %v5898, %v5897
    %v5955 = vpack.c.bf16 %v5900, %v5899
    %v5956 = vpack.c.bf16 %v5902, %v5901
    %v5957 = vpack.c.bf16 %v5904, %v5903
    %v5958 = vpack.c.bf16 %v5906, %v5905
    %v5959 = vpack.c.bf16 %v5908, %v5907
    %v5960 = vpack.c.bf16 %v5910, %v5909
    %v5961 = vpack.c.bf16 %v5912, %v5911
    %v5962 = vpack.c.bf16 %v5914, %v5913
    %v5963 = vpack.c.bf16 %v5916, %v5915
    %v5964 = vpack.c.bf16 %v5918, %v5917
    %v5965 = vpack.c.bf16 %v5920, %v5919
    %v5966 = vpack.c.bf16 %v5922, %v5921
    %v5967 = vpack.c.bf16 %v5924, %v5923
    %v5968 = vpack.c.bf16 %v5926, %v5925
    %v5969 = vpack.c.bf16 %v5928, %v5927
    %v5970 = vpack.c.bf16 %v5930, %v5929
    %v5971 = vpack.c.bf16 %v5932, %v5931
    %v5972 = vpack.c.bf16 %v5934, %v5933
    %v5973 = vpack.c.bf16 %v5936, %v5935
    %v5974 = vpack.c.bf16 %v5938, %v5937
    %v5975 = vpack.c.bf16 %v5940, %v5939
    %v5976 = vpack.c.bf16 %v5942, %v5941
    %v5977 = vpack.c.bf16 %v5944, %v5943
    %v5978 = vpack.c.bf16 %v5946, %v5945
    %5979 = vst.msk [vmem:[#allocation5] sm:$0xff] %vm2958, %v5947
    %5980 = vst.msk [vmem:[#allocation5 + $0x10] sm:$0xff] %vm2958, %v5948
    %5981 = vst.msk [vmem:[#allocation5 + $0x20] sm:$0xff] %vm2958, %v5949
    %5982 = vst.msk [vmem:[#allocation5 + $0x30] sm:$0xff] %vm2958, %v5950
    %5983 = vst.msk [vmem:[#allocation5 + $0x40] sm:$0xff] %vm2958, %v5951
    %5984 = vst.msk [vmem:[#allocation5 + $0x50] sm:$0xff] %vm2958, %v5952
    %5985 = vst.msk [vmem:[#allocation5 + $0x60] sm:$0xff] %vm2958, %v5953
    %5986 = vst.msk [vmem:[#allocation5 + $0x70] sm:$0xff] %vm2958, %v5954
    %5987 = vst.msk [vmem:[#allocation5 + $0x80] sm:$0xff] %vm2958, %v5955
    %5988 = vst.msk [vmem:[#allocation5 + $0x90] sm:$0xff] %vm2958, %v5956
    %5989 = vst.msk [vmem:[#allocation5 + $0xa0] sm:$0xff] %vm2958, %v5957
    %5990 = vst.msk [vmem:[#allocation5 + $0xb0] sm:$0xff] %vm2958, %v5958
    %5991 = vst.msk [vmem:[#allocation5 + $0xc0] sm:$0xff] %vm2958, %v5959
    %5992 = vst.msk [vmem:[#allocation5 + $0xd0] sm:$0xff] %vm2958, %v5960
    %5993 = vst.msk [vmem:[#allocation5 + $0xe0] sm:$0xff] %vm2958, %v5961
    %5994 = vst.msk [vmem:[#allocation5 + $0xf0] sm:$0xff] %vm2958, %v5962
    %5995 = vst.msk [vmem:[#allocation5 + $0x100] sm:$0xff] %vm2958, %v5963
    %5996 = vst.msk [vmem:[#allocation5 + $0x110] sm:$0xff] %vm2958, %v5964
    %5997 = vst.msk [vmem:[#allocation5 + $0x120] sm:$0xff] %vm2958, %v5965
    %5998 = vst.msk [vmem:[#allocation5 + $0x130] sm:$0xff] %vm2958, %v5966
    %5999 = vst.msk [vmem:[#allocation5 + $0x140] sm:$0xff] %vm2958, %v5967
    %6000 = vst.msk [vmem:[#allocation5 + $0x150] sm:$0xff] %vm2958, %v5968
    %6001 = vst.msk [vmem:[#allocation5 + $0x160] sm:$0xff] %vm2958, %v5969
    %6002 = vst.msk [vmem:[#allocation5 + $0x170] sm:$0xff] %vm2958, %v5970
    %6003 = vst.msk [vmem:[#allocation5 + $0x180] sm:$0xff] %vm2958, %v5971
    %6004 = vst.msk [vmem:[#allocation5 + $0x190] sm:$0xff] %vm2958, %v5972
    %6005 = vst.msk [vmem:[#allocation5 + $0x1a0] sm:$0xff] %vm2958, %v5973
    %6006 = vst.msk [vmem:[#allocation5 + $0x1b0] sm:$0xff] %vm2958, %v5974
    %6007 = vst.msk [vmem:[#allocation5 + $0x1c0] sm:$0xff] %vm2958, %v5975
    %6008 = vst.msk [vmem:[#allocation5 + $0x1d0] sm:$0xff] %vm2958, %v5976
    %6009 = vst.msk [vmem:[#allocation5 + $0x1e0] sm:$0xff] %vm2958, %v5977
    %6010 = vst.msk [vmem:[#allocation5 + $0x1f0] sm:$0xff] %vm2958, %v5978
    %v6011 = vld [vmem:[#allocation3 + $0x8] sm:$0xff]
    %v6012 = vld [vmem:[#allocation3 + $0x10] sm:$0xff]
    %v6013 = vld [vmem:[#allocation3 + $0x28] sm:$0xff]
    %v6014 = vld [vmem:[#allocation3 + $0x30] sm:$0xff]
    %v6015 = vld [vmem:[#allocation3 + $0x48] sm:$0xff]
    %v6016 = vld [vmem:[#allocation3 + $0x50] sm:$0xff]
    %v6017 = vld [vmem:[#allocation3 + $0x68] sm:$0xff]
    %v6018 = vld [vmem:[#allocation3 + $0x70] sm:$0xff]
    %v6019 = vld [vmem:[#allocation3 + $0x88] sm:$0xff]
    %v6020 = vld [vmem:[#allocation3 + $0x90] sm:$0xff]
    %v6021 = vld [vmem:[#allocation3 + $0xa8] sm:$0xff]
    %v6022 = vld [vmem:[#allocation3 + $0xb0] sm:$0xff]
    %v6023 = vld [vmem:[#allocation3 + $0xc8] sm:$0xff]
    %v6024 = vld [vmem:[#allocation3 + $0xd0] sm:$0xff]
    %v6025 = vld [vmem:[#allocation3 + $0xe8] sm:$0xff]
    %v6026 = vld [vmem:[#allocation3 + $0xf0] sm:$0xff]
    %v6027 = vld [vmem:[#allocation3 + $0x108] sm:$0xff]
    %v6028 = vld [vmem:[#allocation3 + $0x110] sm:$0xff]
    %v6029 = vld [vmem:[#allocation3 + $0x128] sm:$0xff]
    %v6030 = vld [vmem:[#allocation3 + $0x130] sm:$0xff]
    %v6031 = vld [vmem:[#allocation3 + $0x148] sm:$0xff]
    %v6032 = vld [vmem:[#allocation3 + $0x150] sm:$0xff]
    %v6033 = vld [vmem:[#allocation3 + $0x168] sm:$0xff]
    %v6034 = vld [vmem:[#allocation3 + $0x170] sm:$0xff]
    %v6035 = vld [vmem:[#allocation3 + $0x188] sm:$0xff]
    %v6036 = vld [vmem:[#allocation3 + $0x190] sm:$0xff]
    %v6037 = vld [vmem:[#allocation3 + $0x1a8] sm:$0xff]
    %v6038 = vld [vmem:[#allocation3 + $0x1b0] sm:$0xff]
    %v6039 = vld [vmem:[#allocation3 + $0x1c8] sm:$0xff]
    %v6040 = vld [vmem:[#allocation3 + $0x1d0] sm:$0xff]
    %v6041 = vld [vmem:[#allocation3 + $0x1e8] sm:$0xff]
    %v6042 = vld [vmem:[#allocation3 + $0x1f0] sm:$0xff]
    %v6043 = vld [vmem:[#allocation3 + $0x248] sm:$0xff]
    %v6044 = vld [vmem:[#allocation3 + $0x250] sm:$0xff]
    %v6045 = vld [vmem:[#allocation3 + $0x268] sm:$0xff]
    %v6046 = vld [vmem:[#allocation3 + $0x270] sm:$0xff]
    %v6047 = vld [vmem:[#allocation3 + $0x288] sm:$0xff]
    %v6048 = vld [vmem:[#allocation3 + $0x290] sm:$0xff]
    %v6049 = vld [vmem:[#allocation3 + $0x2a8] sm:$0xff]
    %v6050 = vld [vmem:[#allocation3 + $0x2b0] sm:$0xff]
    %v6051 = vld [vmem:[#allocation3 + $0x2c8] sm:$0xff]
    %v6052 = vld [vmem:[#allocation3 + $0x2d0] sm:$0xff]
    %v6053 = vld [vmem:[#allocation3 + $0x2e8] sm:$0xff]
    %v6054 = vld [vmem:[#allocation3 + $0x2f0] sm:$0xff]
    %v6055 = vld [vmem:[#allocation3 + $0x308] sm:$0xff]
    %v6056 = vld [vmem:[#allocation3 + $0x310] sm:$0xff]
    %v6057 = vld [vmem:[#allocation3 + $0x328] sm:$0xff]
    %v6058 = vld [vmem:[#allocation3 + $0x330] sm:$0xff]
    %v6059 = vld [vmem:[#allocation3 + $0x348] sm:$0xff]
    %v6060 = vld [vmem:[#allocation3 + $0x350] sm:$0xff]
    %v6061 = vld [vmem:[#allocation3 + $0x368] sm:$0xff]
    %v6062 = vld [vmem:[#allocation3 + $0x370] sm:$0xff]
    %v6063 = vld [vmem:[#allocation3 + $0x388] sm:$0xff]
    %v6064 = vld [vmem:[#allocation3 + $0x390] sm:$0xff]
    %v6065 = vld [vmem:[#allocation3 + $0x3a8] sm:$0xff]
    %v6066 = vld [vmem:[#allocation3 + $0x3b0] sm:$0xff]
    %v6067 = vld [vmem:[#allocation3 + $0x3c8] sm:$0xff]
    %v6068 = vld [vmem:[#allocation3 + $0x3d0] sm:$0xff]
    %v6069 = vld [vmem:[#allocation3 + $0x3e8] sm:$0xff]
    %v6070 = vld [vmem:[#allocation3 + $0x3f0] sm:$0xff]
    %v6071 = vld [vmem:[#allocation3 + $0x408] sm:$0xff]
    %v6072 = vld [vmem:[#allocation3 + $0x410] sm:$0xff]
    %v6073 = vld [vmem:[#allocation3 + $0x428] sm:$0xff]
    %v6074 = vld [vmem:[#allocation3 + $0x430] sm:$0xff]
    %v6075 = vpack.c.bf16 %v6012, %v6011
    %v6076 = vpack.c.bf16 %v6014, %v6013
    %v6077 = vpack.c.bf16 %v6016, %v6015
    %v6078 = vpack.c.bf16 %v6018, %v6017
    %v6079 = vpack.c.bf16 %v6020, %v6019
    %v6080 = vpack.c.bf16 %v6022, %v6021
    %v6081 = vpack.c.bf16 %v6024, %v6023
    %v6082 = vpack.c.bf16 %v6026, %v6025
    %v6083 = vpack.c.bf16 %v6028, %v6027
    %v6084 = vpack.c.bf16 %v6030, %v6029
    %v6085 = vpack.c.bf16 %v6032, %v6031
    %v6086 = vpack.c.bf16 %v6034, %v6033
    %v6087 = vpack.c.bf16 %v6036, %v6035
    %v6088 = vpack.c.bf16 %v6038, %v6037
    %v6089 = vpack.c.bf16 %v6040, %v6039
    %v6090 = vpack.c.bf16 %v6042, %v6041
    %v6091 = vpack.c.bf16 %v6044, %v6043
    %v6092 = vpack.c.bf16 %v6046, %v6045
    %v6093 = vpack.c.bf16 %v6048, %v6047
    %v6094 = vpack.c.bf16 %v6050, %v6049
    %v6095 = vpack.c.bf16 %v6052, %v6051
    %v6096 = vpack.c.bf16 %v6054, %v6053
    %v6097 = vpack.c.bf16 %v6056, %v6055
    %v6098 = vpack.c.bf16 %v6058, %v6057
    %v6099 = vpack.c.bf16 %v6060, %v6059
    %v6100 = vpack.c.bf16 %v6062, %v6061
    %v6101 = vpack.c.bf16 %v6064, %v6063
    %v6102 = vpack.c.bf16 %v6066, %v6065
    %v6103 = vpack.c.bf16 %v6068, %v6067
    %v6104 = vpack.c.bf16 %v6070, %v6069
    %v6105 = vpack.c.bf16 %v6072, %v6071
    %v6106 = vpack.c.bf16 %v6074, %v6073
    %6139 = vrot.lane.b32.xlu0 %v6075, 8
    %v6140 = vpop.permute.xlu0 %6139
    %6141 = vrot.lane.b32.xlu0 %v6076, 8
    %v6142 = vpop.permute.xlu0 %6141
    %6143 = vrot.lane.b32.xlu0 %v6077, 8
    %v6144 = vpop.permute.xlu0 %6143
    %6145 = vrot.lane.b32.xlu0 %v6078, 8
    %v6146 = vpop.permute.xlu0 %6145
    %6147 = vrot.lane.b32.xlu0 %v6079, 8
    %v6148 = vpop.permute.xlu0 %6147
    %6149 = vrot.lane.b32.xlu0 %v6080, 8
    %v6150 = vpop.permute.xlu0 %6149
    %6151 = vrot.lane.b32.xlu0 %v6081, 8
    %v6152 = vpop.permute.xlu0 %6151
    %6153 = vrot.lane.b32.xlu0 %v6082, 8
    %v6154 = vpop.permute.xlu0 %6153
    %6155 = vrot.lane.b32.xlu0 %v6083, 8
    %v6156 = vpop.permute.xlu0 %6155
    %6157 = vrot.lane.b32.xlu0 %v6084, 8
    %v6158 = vpop.permute.xlu0 %6157
    %6159 = vrot.lane.b32.xlu0 %v6085, 8
    %v6160 = vpop.permute.xlu0 %6159
    %6161 = vrot.lane.b32.xlu0 %v6086, 8
    %v6162 = vpop.permute.xlu0 %6161
    %6163 = vrot.lane.b32.xlu0 %v6087, 8
    %v6164 = vpop.permute.xlu0 %6163
    %6165 = vrot.lane.b32.xlu0 %v6088, 8
    %v6166 = vpop.permute.xlu0 %6165
    %6167 = vrot.lane.b32.xlu0 %v6089, 8
    %v6168 = vpop.permute.xlu0 %6167
    %6169 = vrot.lane.b32.xlu0 %v6090, 8
    %v6170 = vpop.permute.xlu0 %6169
    %6171 = vrot.lane.b32.xlu0 %v6091, 8
    %v6172 = vpop.permute.xlu0 %6171
    %6173 = vrot.lane.b32.xlu0 %v6092, 8
    %v6174 = vpop.permute.xlu0 %6173
    %6175 = vrot.lane.b32.xlu0 %v6093, 8
    %v6176 = vpop.permute.xlu0 %6175
    %6177 = vrot.lane.b32.xlu0 %v6094, 8
    %v6178 = vpop.permute.xlu0 %6177
    %6179 = vrot.lane.b32.xlu0 %v6095, 8
    %v6180 = vpop.permute.xlu0 %6179
    %6181 = vrot.lane.b32.xlu0 %v6096, 8
    %v6182 = vpop.permute.xlu0 %6181
    %6183 = vrot.lane.b32.xlu0 %v6097, 8
    %v6184 = vpop.permute.xlu0 %6183
    %6185 = vrot.lane.b32.xlu0 %v6098, 8
    %v6186 = vpop.permute.xlu0 %6185
    %6187 = vrot.lane.b32.xlu0 %v6099, 8
    %v6188 = vpop.permute.xlu0 %6187
    %6189 = vrot.lane.b32.xlu0 %v6100, 8
    %v6190 = vpop.permute.xlu0 %6189
    %6191 = vrot.lane.b32.xlu0 %v6101, 8
    %v6192 = vpop.permute.xlu0 %6191
    %6193 = vrot.lane.b32.xlu0 %v6102, 8
    %v6194 = vpop.permute.xlu0 %6193
    %6195 = vrot.lane.b32.xlu0 %v6103, 8
    %v6196 = vpop.permute.xlu0 %6195
    %6197 = vrot.lane.b32.xlu0 %v6104, 8
    %v6198 = vpop.permute.xlu0 %6197
    %6199 = vrot.lane.b32.xlu0 %v6105, 8
    %v6200 = vpop.permute.xlu0 %6199
    %6201 = vrot.lane.b32.xlu0 %v6106, 8
    %v6202 = vpop.permute.xlu0 %6201
    %6235 = vst.msk [vmem:[#allocation5] sm:$0xff] %vm3457, %v6140
    %6236 = vst.msk [vmem:[#allocation5 + $0x10] sm:$0xff] %vm3457, %v6142
    %6237 = vst.msk [vmem:[#allocation5 + $0x20] sm:$0xff] %vm3457, %v6144
    %6238 = vst.msk [vmem:[#allocation5 + $0x30] sm:$0xff] %vm3457, %v6146
    %6239 = vst.msk [vmem:[#allocation5 + $0x40] sm:$0xff] %vm3457, %v6148
    %6240 = vst.msk [vmem:[#allocation5 + $0x50] sm:$0xff] %vm3457, %v6150
    %6241 = vst.msk [vmem:[#allocation5 + $0x60] sm:$0xff] %vm3457, %v6152
    %6242 = vst.msk [vmem:[#allocation5 + $0x70] sm:$0xff] %vm3457, %v6154
    %6243 = vst.msk [vmem:[#allocation5 + $0x80] sm:$0xff] %vm3457, %v6156
    %6244 = vst.msk [vmem:[#allocation5 + $0x90] sm:$0xff] %vm3457, %v6158
    %6245 = vst.msk [vmem:[#allocation5 + $0xa0] sm:$0xff] %vm3457, %v6160
    %6246 = vst.msk [vmem:[#allocation5 + $0xb0] sm:$0xff] %vm3457, %v6162
    %6247 = vst.msk [vmem:[#allocation5 + $0xc0] sm:$0xff] %vm3457, %v6164
    %6248 = vst.msk [vmem:[#allocation5 + $0xd0] sm:$0xff] %vm3457, %v6166
    %6249 = vst.msk [vmem:[#allocation5 + $0xe0] sm:$0xff] %vm3457, %v6168
    %6250 = vst.msk [vmem:[#allocation5 + $0xf0] sm:$0xff] %vm3457, %v6170
    %6251 = vst.msk [vmem:[#allocation5 + $0x100] sm:$0xff] %vm3457, %v6172
    %6252 = vst.msk [vmem:[#allocation5 + $0x110] sm:$0xff] %vm3457, %v6174
    %6253 = vst.msk [vmem:[#allocation5 + $0x120] sm:$0xff] %vm3457, %v6176
    %6254 = vst.msk [vmem:[#allocation5 + $0x130] sm:$0xff] %vm3457, %v6178
    %6255 = vst.msk [vmem:[#allocation5 + $0x140] sm:$0xff] %vm3457, %v6180
    %6256 = vst.msk [vmem:[#allocation5 + $0x150] sm:$0xff] %vm3457, %v6182
    %6257 = vst.msk [vmem:[#allocation5 + $0x160] sm:$0xff] %vm3457, %v6184
    %6258 = vst.msk [vmem:[#allocation5 + $0x170] sm:$0xff] %vm3457, %v6186
    %6259 = vst.msk [vmem:[#allocation5 + $0x180] sm:$0xff] %vm3457, %v6188
    %6260 = vst.msk [vmem:[#allocation5 + $0x190] sm:$0xff] %vm3457, %v6190
    %6261 = vst.msk [vmem:[#allocation5 + $0x1a0] sm:$0xff] %vm3457, %v6192
    %6262 = vst.msk [vmem:[#allocation5 + $0x1b0] sm:$0xff] %vm3457, %v6194
    %6263 = vst.msk [vmem:[#allocation5 + $0x1c0] sm:$0xff] %vm3457, %v6196
    %6264 = vst.msk [vmem:[#allocation5 + $0x1d0] sm:$0xff] %vm3457, %v6198
    %6265 = vst.msk [vmem:[#allocation5 + $0x1e0] sm:$0xff] %vm3457, %v6200
    %6266 = vst.msk [vmem:[#allocation5 + $0x1f0] sm:$0xff] %vm3457, %v6202
    %v6267 = vld [vmem:[#allocation3 + $0x9] sm:$0xff]
    %v6268 = vld [vmem:[#allocation3 + $0x11] sm:$0xff]
    %v6269 = vld [vmem:[#allocation3 + $0x29] sm:$0xff]
    %v6270 = vld [vmem:[#allocation3 + $0x31] sm:$0xff]
    %v6271 = vld [vmem:[#allocation3 + $0x49] sm:$0xff]
    %v6272 = vld [vmem:[#allocation3 + $0x51] sm:$0xff]
    %v6273 = vld [vmem:[#allocation3 + $0x69] sm:$0xff]
    %v6274 = vld [vmem:[#allocation3 + $0x71] sm:$0xff]
    %v6275 = vld [vmem:[#allocation3 + $0x89] sm:$0xff]
    %v6276 = vld [vmem:[#allocation3 + $0x91] sm:$0xff]
    %v6277 = vld [vmem:[#allocation3 + $0xa9] sm:$0xff]
    %v6278 = vld [vmem:[#allocation3 + $0xb1] sm:$0xff]
    %v6279 = vld [vmem:[#allocation3 + $0xc9] sm:$0xff]
    %v6280 = vld [vmem:[#allocation3 + $0xd1] sm:$0xff]
    %v6281 = vld [vmem:[#allocation3 + $0xe9] sm:$0xff]
    %v6282 = vld [vmem:[#allocation3 + $0xf1] sm:$0xff]
    %v6283 = vld [vmem:[#allocation3 + $0x109] sm:$0xff]
    %v6284 = vld [vmem:[#allocation3 + $0x111] sm:$0xff]
    %v6285 = vld [vmem:[#allocation3 + $0x129] sm:$0xff]
    %v6286 = vld [vmem:[#allocation3 + $0x131] sm:$0xff]
    %v6287 = vld [vmem:[#allocation3 + $0x149] sm:$0xff]
    %v6288 = vld [vmem:[#allocation3 + $0x151] sm:$0xff]
    %v6289 = vld [vmem:[#allocation3 + $0x169] sm:$0xff]
    %v6290 = vld [vmem:[#allocation3 + $0x171] sm:$0xff]
    %v6291 = vld [vmem:[#allocation3 + $0x189] sm:$0xff]
    %v6292 = vld [vmem:[#allocation3 + $0x191] sm:$0xff]
    %v6293 = vld [vmem:[#allocation3 + $0x1a9] sm:$0xff]
    %v6294 = vld [vmem:[#allocation3 + $0x1b1] sm:$0xff]
    %v6295 = vld [vmem:[#allocation3 + $0x1c9] sm:$0xff]
    %v6296 = vld [vmem:[#allocation3 + $0x1d1] sm:$0xff]
    %v6297 = vld [vmem:[#allocation3 + $0x1e9] sm:$0xff]
    %v6298 = vld [vmem:[#allocation3 + $0x1f1] sm:$0xff]
    %v6299 = vld [vmem:[#allocation3 + $0x249] sm:$0xff]
    %v6300 = vld [vmem:[#allocation3 + $0x251] sm:$0xff]
    %v6301 = vld [vmem:[#allocation3 + $0x269] sm:$0xff]
    %v6302 = vld [vmem:[#allocation3 + $0x271] sm:$0xff]
    %v6303 = vld [vmem:[#allocation3 + $0x289] sm:$0xff]
    %v6304 = vld [vmem:[#allocation3 + $0x291] sm:$0xff]
    %v6305 = vld [vmem:[#allocation3 + $0x2a9] sm:$0xff]
    %v6306 = vld [vmem:[#allocation3 + $0x2b1] sm:$0xff]
    %v6307 = vld [vmem:[#allocation3 + $0x2c9] sm:$0xff]
    %v6308 = vld [vmem:[#allocation3 + $0x2d1] sm:$0xff]
    %v6309 = vld [vmem:[#allocation3 + $0x2e9] sm:$0xff]
    %v6310 = vld [vmem:[#allocation3 + $0x2f1] sm:$0xff]
    %v6311 = vld [vmem:[#allocation3 + $0x309] sm:$0xff]
    %v6312 = vld [vmem:[#allocation3 + $0x311] sm:$0xff]
    %v6313 = vld [vmem:[#allocation3 + $0x329] sm:$0xff]
    %v6314 = vld [vmem:[#allocation3 + $0x331] sm:$0xff]
    %v6315 = vld [vmem:[#allocation3 + $0x349] sm:$0xff]
    %v6316 = vld [vmem:[#allocation3 + $0x351] sm:$0xff]
    %v6317 = vld [vmem:[#allocation3 + $0x369] sm:$0xff]
    %v6318 = vld [vmem:[#allocation3 + $0x371] sm:$0xff]
    %v6319 = vld [vmem:[#allocation3 + $0x389] sm:$0xff]
    %v6320 = vld [vmem:[#allocation3 + $0x391] sm:$0xff]
    %v6321 = vld [vmem:[#allocation3 + $0x3a9] sm:$0xff]
    %v6322 = vld [vmem:[#allocation3 + $0x3b1] sm:$0xff]
    %v6323 = vld [vmem:[#allocation3 + $0x3c9] sm:$0xff]
    %v6324 = vld [vmem:[#allocation3 + $0x3d1] sm:$0xff]
    %v6325 = vld [vmem:[#allocation3 + $0x3e9] sm:$0xff]
    %v6326 = vld [vmem:[#allocation3 + $0x3f1] sm:$0xff]
    %v6327 = vld [vmem:[#allocation3 + $0x409] sm:$0xff]
    %v6328 = vld [vmem:[#allocation3 + $0x411] sm:$0xff]
    %v6329 = vld [vmem:[#allocation3 + $0x429] sm:$0xff]
    %v6330 = vld [vmem:[#allocation3 + $0x431] sm:$0xff]
    %v6331 = vpack.c.bf16 %v6268, %v6267
    %v6332 = vpack.c.bf16 %v6270, %v6269
    %v6333 = vpack.c.bf16 %v6272, %v6271
    %v6334 = vpack.c.bf16 %v6274, %v6273
    %v6335 = vpack.c.bf16 %v6276, %v6275
    %v6336 = vpack.c.bf16 %v6278, %v6277
    %v6337 = vpack.c.bf16 %v6280, %v6279
    %v6338 = vpack.c.bf16 %v6282, %v6281
    %v6339 = vpack.c.bf16 %v6284, %v6283
    %v6340 = vpack.c.bf16 %v6286, %v6285
    %v6341 = vpack.c.bf16 %v6288, %v6287
    %v6342 = vpack.c.bf16 %v6290, %v6289
    %v6343 = vpack.c.bf16 %v6292, %v6291
    %v6344 = vpack.c.bf16 %v6294, %v6293
    %v6345 = vpack.c.bf16 %v6296, %v6295
    %v6346 = vpack.c.bf16 %v6298, %v6297
    %v6347 = vpack.c.bf16 %v6300, %v6299
    %v6348 = vpack.c.bf16 %v6302, %v6301
    %v6349 = vpack.c.bf16 %v6304, %v6303
    %v6350 = vpack.c.bf16 %v6306, %v6305
    %v6351 = vpack.c.bf16 %v6308, %v6307
    %v6352 = vpack.c.bf16 %v6310, %v6309
    %v6353 = vpack.c.bf16 %v6312, %v6311
    %v6354 = vpack.c.bf16 %v6314, %v6313
    %v6355 = vpack.c.bf16 %v6316, %v6315
    %v6356 = vpack.c.bf16 %v6318, %v6317
    %v6357 = vpack.c.bf16 %v6320, %v6319
    %v6358 = vpack.c.bf16 %v6322, %v6321
    %v6359 = vpack.c.bf16 %v6324, %v6323
    %v6360 = vpack.c.bf16 %v6326, %v6325
    %v6361 = vpack.c.bf16 %v6328, %v6327
    %v6362 = vpack.c.bf16 %v6330, %v6329
    %6395 = vrot.lane.b32.xlu0 %v6331, 16
    %v6396 = vpop.permute.xlu0 %6395
    %6397 = vrot.lane.b32.xlu0 %v6332, 16
    %v6398 = vpop.permute.xlu0 %6397
    %6399 = vrot.lane.b32.xlu0 %v6333, 16
    %v6400 = vpop.permute.xlu0 %6399
    %6401 = vrot.lane.b32.xlu0 %v6334, 16
    %v6402 = vpop.permute.xlu0 %6401
    %6403 = vrot.lane.b32.xlu0 %v6335, 16
    %v6404 = vpop.permute.xlu0 %6403
    %6405 = vrot.lane.b32.xlu0 %v6336, 16
    %v6406 = vpop.permute.xlu0 %6405
    %6407 = vrot.lane.b32.xlu0 %v6337, 16
    %v6408 = vpop.permute.xlu0 %6407
    %6409 = vrot.lane.b32.xlu0 %v6338, 16
    %v6410 = vpop.permute.xlu0 %6409
    %6411 = vrot.lane.b32.xlu0 %v6339, 16
    %v6412 = vpop.permute.xlu0 %6411
    %6413 = vrot.lane.b32.xlu0 %v6340, 16
    %v6414 = vpop.permute.xlu0 %6413
    %6415 = vrot.lane.b32.xlu0 %v6341, 16
    %v6416 = vpop.permute.xlu0 %6415
    %6417 = vrot.lane.b32.xlu0 %v6342, 16
    %v6418 = vpop.permute.xlu0 %6417
    %6419 = vrot.lane.b32.xlu0 %v6343, 16
    %v6420 = vpop.permute.xlu0 %6419
    %6421 = vrot.lane.b32.xlu0 %v6344, 16
    %v6422 = vpop.permute.xlu0 %6421
    %6423 = vrot.lane.b32.xlu0 %v6345, 16
    %v6424 = vpop.permute.xlu0 %6423
    %6425 = vrot.lane.b32.xlu0 %v6346, 16
    %v6426 = vpop.permute.xlu0 %6425
    %6427 = vrot.lane.b32.xlu0 %v6347, 16
    %v6428 = vpop.permute.xlu0 %6427
    %6429 = vrot.lane.b32.xlu0 %v6348, 16
    %v6430 = vpop.permute.xlu0 %6429
    %6431 = vrot.lane.b32.xlu0 %v6349, 16
    %v6432 = vpop.permute.xlu0 %6431
    %6433 = vrot.lane.b32.xlu0 %v6350, 16
    %v6434 = vpop.permute.xlu0 %6433
    %6435 = vrot.lane.b32.xlu0 %v6351, 16
    %v6436 = vpop.permute.xlu0 %6435
    %6437 = vrot.lane.b32.xlu0 %v6352, 16
    %v6438 = vpop.permute.xlu0 %6437
    %6439 = vrot.lane.b32.xlu0 %v6353, 16
    %v6440 = vpop.permute.xlu0 %6439
    %6441 = vrot.lane.b32.xlu0 %v6354, 16
    %v6442 = vpop.permute.xlu0 %6441
    %6443 = vrot.lane.b32.xlu0 %v6355, 16
    %v6444 = vpop.permute.xlu0 %6443
    %6445 = vrot.lane.b32.xlu0 %v6356, 16
    %v6446 = vpop.permute.xlu0 %6445
    %6447 = vrot.lane.b32.xlu0 %v6357, 16
    %v6448 = vpop.permute.xlu0 %6447
    %6449 = vrot.lane.b32.xlu0 %v6358, 16
    %v6450 = vpop.permute.xlu0 %6449
    %6451 = vrot.lane.b32.xlu0 %v6359, 16
    %v6452 = vpop.permute.xlu0 %6451
    %6453 = vrot.lane.b32.xlu0 %v6360, 16
    %v6454 = vpop.permute.xlu0 %6453
    %6455 = vrot.lane.b32.xlu0 %v6361, 16
    %v6456 = vpop.permute.xlu0 %6455
    %6457 = vrot.lane.b32.xlu0 %v6362, 16
    %v6458 = vpop.permute.xlu0 %6457
    %6491 = vst.msk [vmem:[#allocation5] sm:$0xff] %vm3714, %v6396
    %6492 = vst.msk [vmem:[#allocation5 + $0x10] sm:$0xff] %vm3714, %v6398
    %6493 = vst.msk [vmem:[#allocation5 + $0x20] sm:$0xff] %vm3714, %v6400
    %6494 = vst.msk [vmem:[#allocation5 + $0x30] sm:$0xff] %vm3714, %v6402
    %6495 = vst.msk [vmem:[#allocation5 + $0x40] sm:$0xff] %vm3714, %v6404
    %6496 = vst.msk [vmem:[#allocation5 + $0x50] sm:$0xff] %vm3714, %v6406
    %6497 = vst.msk [vmem:[#allocation5 + $0x60] sm:$0xff] %vm3714, %v6408
    %6498 = vst.msk [vmem:[#allocation5 + $0x70] sm:$0xff] %vm3714, %v6410
    %6499 = vst.msk [vmem:[#allocation5 + $0x80] sm:$0xff] %vm3714, %v6412
    %6500 = vst.msk [vmem:[#allocation5 + $0x90] sm:$0xff] %vm3714, %v6414
    %6501 = vst.msk [vmem:[#allocation5 + $0xa0] sm:$0xff] %vm3714, %v6416
    %6502 = vst.msk [vmem:[#allocation5 + $0xb0] sm:$0xff] %vm3714, %v6418
    %6503 = vst.msk [vmem:[#allocation5 + $0xc0] sm:$0xff] %vm3714, %v6420
    %6504 = vst.msk [vmem:[#allocation5 + $0xd0] sm:$0xff] %vm3714, %v6422
    %6505 = vst.msk [vmem:[#allocation5 + $0xe0] sm:$0xff] %vm3714, %v6424
    %6506 = vst.msk [vmem:[#allocation5 + $0xf0] sm:$0xff] %vm3714, %v6426
    %6507 = vst.msk [vmem:[#allocation5 + $0x100] sm:$0xff] %vm3714, %v6428
    %6508 = vst.msk [vmem:[#allocation5 + $0x110] sm:$0xff] %vm3714, %v6430
    %6509 = vst.msk [vmem:[#allocation5 + $0x120] sm:$0xff] %vm3714, %v6432
    %6510 = vst.msk [vmem:[#allocation5 + $0x130] sm:$0xff] %vm3714, %v6434
    %6511 = vst.msk [vmem:[#allocation5 + $0x140] sm:$0xff] %vm3714, %v6436
    %6512 = vst.msk [vmem:[#allocation5 + $0x150] sm:$0xff] %vm3714, %v6438
    %6513 = vst.msk [vmem:[#allocation5 + $0x160] sm:$0xff] %vm3714, %v6440
    %6514 = vst.msk [vmem:[#allocation5 + $0x170] sm:$0xff] %vm3714, %v6442
    %6515 = vst.msk [vmem:[#allocation5 + $0x180] sm:$0xff] %vm3714, %v6444
    %6516 = vst.msk [vmem:[#allocation5 + $0x190] sm:$0xff] %vm3714, %v6446
    %6517 = vst.msk [vmem:[#allocation5 + $0x1a0] sm:$0xff] %vm3714, %v6448
    %6518 = vst.msk [vmem:[#allocation5 + $0x1b0] sm:$0xff] %vm3714, %v6450
    %6519 = vst.msk [vmem:[#allocation5 + $0x1c0] sm:$0xff] %vm3714, %v6452
    %6520 = vst.msk [vmem:[#allocation5 + $0x1d0] sm:$0xff] %vm3714, %v6454
    %6521 = vst.msk [vmem:[#allocation5 + $0x1e0] sm:$0xff] %vm3714, %v6456
    %6522 = vst.msk [vmem:[#allocation5 + $0x1f0] sm:$0xff] %vm3714, %v6458
    %v6523 = vld [vmem:[%s3040 + $0x7] sm:$0xff]
    %v6524 = vld [vmem:[%s3040 + $0xf] sm:$0xff]
    %v6525 = vld [vmem:[%s3040 + $0x27] sm:$0xff]
    %v6526 = vld [vmem:[%s3040 + $0x2f] sm:$0xff]
    %v6527 = vld [vmem:[%s3040 + $0x47] sm:$0xff]
    %v6528 = vld [vmem:[%s3040 + $0x4f] sm:$0xff]
    %v6529 = vld [vmem:[%s3040 + $0x67] sm:$0xff]
    %v6530 = vld [vmem:[%s3040 + $0x6f] sm:$0xff]
    %v6531 = vld [vmem:[%s3040 + $0x87] sm:$0xff]
    %v6532 = vld [vmem:[%s3040 + $0x8f] sm:$0xff]
    %v6533 = vld [vmem:[%s3040 + $0xa7] sm:$0xff]
    %v6534 = vld [vmem:[%s3040 + $0xaf] sm:$0xff]
    %v6535 = vld [vmem:[%s3040 + $0xc7] sm:$0xff]
    %v6536 = vld [vmem:[%s3040 + $0xcf] sm:$0xff]
    %v6537 = vld [vmem:[%s3040 + $0xe7] sm:$0xff]
    %v6538 = vld [vmem:[%s3040 + $0xef] sm:$0xff]
    %v6539 = vld [vmem:[%s3040 + $0x107] sm:$0xff]
    %v6540 = vld [vmem:[%s3040 + $0x10f] sm:$0xff]
    %v6541 = vld [vmem:[%s3040 + $0x127] sm:$0xff]
    %v6542 = vld [vmem:[%s3040 + $0x12f] sm:$0xff]
    %v6543 = vld [vmem:[%s3040 + $0x147] sm:$0xff]
    %v6544 = vld [vmem:[%s3040 + $0x14f] sm:$0xff]
    %v6545 = vld [vmem:[%s3040 + $0x167] sm:$0xff]
    %v6546 = vld [vmem:[%s3040 + $0x16f] sm:$0xff]
    %v6547 = vld [vmem:[%s3040 + $0x187] sm:$0xff]
    %v6548 = vld [vmem:[%s3040 + $0x18f] sm:$0xff]
    %v6549 = vld [vmem:[%s3040 + $0x1a7] sm:$0xff]
    %v6550 = vld [vmem:[%s3040 + $0x1af] sm:$0xff]
    %v6551 = vld [vmem:[%s3040 + $0x1c7] sm:$0xff]
    %v6552 = vld [vmem:[%s3040 + $0x1cf] sm:$0xff]
    %v6553 = vld [vmem:[%s3040 + $0x1e7] sm:$0xff]
    %v6554 = vld [vmem:[%s3040 + $0x1ef] sm:$0xff]
    %v6555 = vld [vmem:[%s3040 + $0x247] sm:$0xff]
    %v6556 = vld [vmem:[%s3040 + $0x24f] sm:$0xff]
    %v6557 = vld [vmem:[%s3040 + $0x267] sm:$0xff]
    %v6558 = vld [vmem:[%s3040 + $0x26f] sm:$0xff]
    %v6559 = vld [vmem:[%s3040 + $0x287] sm:$0xff]
    %v6560 = vld [vmem:[%s3040 + $0x28f] sm:$0xff]
    %v6561 = vld [vmem:[%s3040 + $0x2a7] sm:$0xff]
    %v6562 = vld [vmem:[%s3040 + $0x2af] sm:$0xff]
    %v6563 = vld [vmem:[%s3040 + $0x2c7] sm:$0xff]
    %v6564 = vld [vmem:[%s3040 + $0x2cf] sm:$0xff]
    %v6565 = vld [vmem:[%s3040 + $0x2e7] sm:$0xff]
    %v6566 = vld [vmem:[%s3040 + $0x2ef] sm:$0xff]
    %v6567 = vld [vmem:[%s3040 + $0x307] sm:$0xff]
    %v6568 = vld [vmem:[%s3040 + $0x30f] sm:$0xff]
    %v6569 = vld [vmem:[%s3040 + $0x327] sm:$0xff]
    %v6570 = vld [vmem:[%s3040 + $0x32f] sm:$0xff]
    %v6571 = vld [vmem:[%s3040 + $0x347] sm:$0xff]
    %v6572 = vld [vmem:[%s3040 + $0x34f] sm:$0xff]
    %v6573 = vld [vmem:[%s3040 + $0x367] sm:$0xff]
    %v6574 = vld [vmem:[%s3040 + $0x36f] sm:$0xff]
    %v6575 = vld [vmem:[%s3040 + $0x387] sm:$0xff]
    %v6576 = vld [vmem:[%s3040 + $0x38f] sm:$0xff]
    %v6577 = vld [vmem:[%s3040 + $0x3a7] sm:$0xff]
    %v6578 = vld [vmem:[%s3040 + $0x3af] sm:$0xff]
    %v6579 = vld [vmem:[%s3040 + $0x3c7] sm:$0xff]
    %v6580 = vld [vmem:[%s3040 + $0x3cf] sm:$0xff]
    %v6581 = vld [vmem:[%s3040 + $0x3e7] sm:$0xff]
    %v6582 = vld [vmem:[%s3040 + $0x3ef] sm:$0xff]
    %v6583 = vld [vmem:[%s3040 + $0x407] sm:$0xff]
    %v6584 = vld [vmem:[%s3040 + $0x40f] sm:$0xff]
    %v6585 = vld [vmem:[%s3040 + $0x427] sm:$0xff]
    %v6586 = vld [vmem:[%s3040 + $0x42f] sm:$0xff]
    %v6587 = vpack.c.bf16 %v6524, %v6523
    %v6588 = vpack.c.bf16 %v6526, %v6525
    %v6589 = vpack.c.bf16 %v6528, %v6527
    %v6590 = vpack.c.bf16 %v6530, %v6529
    %v6591 = vpack.c.bf16 %v6532, %v6531
    %v6592 = vpack.c.bf16 %v6534, %v6533
    %v6593 = vpack.c.bf16 %v6536, %v6535
    %v6594 = vpack.c.bf16 %v6538, %v6537
    %v6595 = vpack.c.bf16 %v6540, %v6539
    %v6596 = vpack.c.bf16 %v6542, %v6541
    %v6597 = vpack.c.bf16 %v6544, %v6543
    %v6598 = vpack.c.bf16 %v6546, %v6545
    %v6599 = vpack.c.bf16 %v6548, %v6547
    %v6600 = vpack.c.bf16 %v6550, %v6549
    %v6601 = vpack.c.bf16 %v6552, %v6551
    %v6602 = vpack.c.bf16 %v6554, %v6553
    %v6603 = vpack.c.bf16 %v6556, %v6555
    %v6604 = vpack.c.bf16 %v6558, %v6557
    %v6605 = vpack.c.bf16 %v6560, %v6559
    %v6606 = vpack.c.bf16 %v6562, %v6561
    %v6607 = vpack.c.bf16 %v6564, %v6563
    %v6608 = vpack.c.bf16 %v6566, %v6565
    %v6609 = vpack.c.bf16 %v6568, %v6567
    %v6610 = vpack.c.bf16 %v6570, %v6569
    %v6611 = vpack.c.bf16 %v6572, %v6571
    %v6612 = vpack.c.bf16 %v6574, %v6573
    %v6613 = vpack.c.bf16 %v6576, %v6575
    %v6614 = vpack.c.bf16 %v6578, %v6577
    %v6615 = vpack.c.bf16 %v6580, %v6579
    %v6616 = vpack.c.bf16 %v6582, %v6581
    %v6617 = vpack.c.bf16 %v6584, %v6583
    %v6618 = vpack.c.bf16 %v6586, %v6585
    %6651 = vrot.lane.b32.xlu0 %v6587, 24
    %v6652 = vpop.permute.xlu0 %6651
    %6653 = vrot.lane.b32.xlu0 %v6588, 24
    %v6654 = vpop.permute.xlu0 %6653
    %6655 = vrot.lane.b32.xlu0 %v6589, 24
    %v6656 = vpop.permute.xlu0 %6655
    %6657 = vrot.lane.b32.xlu0 %v6590, 24
    %v6658 = vpop.permute.xlu0 %6657
    %6659 = vrot.lane.b32.xlu0 %v6591, 24
    %v6660 = vpop.permute.xlu0 %6659
    %6661 = vrot.lane.b32.xlu0 %v6592, 24
    %v6662 = vpop.permute.xlu0 %6661
    %6663 = vrot.lane.b32.xlu0 %v6593, 24
    %v6664 = vpop.permute.xlu0 %6663
    %6665 = vrot.lane.b32.xlu0 %v6594, 24
    %v6666 = vpop.permute.xlu0 %6665
    %6667 = vrot.lane.b32.xlu0 %v6595, 24
    %v6668 = vpop.permute.xlu0 %6667
    %6669 = vrot.lane.b32.xlu0 %v6596, 24
    %v6670 = vpop.permute.xlu0 %6669
    %6671 = vrot.lane.b32.xlu0 %v6597, 24
    %v6672 = vpop.permute.xlu0 %6671
    %6673 = vrot.lane.b32.xlu0 %v6598, 24
    %v6674 = vpop.permute.xlu0 %6673
    %6675 = vrot.lane.b32.xlu0 %v6599, 24
    %v6676 = vpop.permute.xlu0 %6675
    %6677 = vrot.lane.b32.xlu0 %v6600, 24
    %v6678 = vpop.permute.xlu0 %6677
    %6679 = vrot.lane.b32.xlu0 %v6601, 24
    %v6680 = vpop.permute.xlu0 %6679
    %6681 = vrot.lane.b32.xlu0 %v6602, 24
    %v6682 = vpop.permute.xlu0 %6681
    %6683 = vrot.lane.b32.xlu0 %v6603, 24
    %v6684 = vpop.permute.xlu0 %6683
    %6685 = vrot.lane.b32.xlu0 %v6604, 24
    %v6686 = vpop.permute.xlu0 %6685
    %6687 = vrot.lane.b32.xlu0 %v6605, 24
    %v6688 = vpop.permute.xlu0 %6687
    %6689 = vrot.lane.b32.xlu0 %v6606, 24
    %v6690 = vpop.permute.xlu0 %6689
    %6691 = vrot.lane.b32.xlu0 %v6607, 24
    %v6692 = vpop.permute.xlu0 %6691
    %6693 = vrot.lane.b32.xlu0 %v6608, 24
    %v6694 = vpop.permute.xlu0 %6693
    %6695 = vrot.lane.b32.xlu0 %v6609, 24
    %v6696 = vpop.permute.xlu0 %6695
    %6697 = vrot.lane.b32.xlu0 %v6610, 24
    %v6698 = vpop.permute.xlu0 %6697
    %6699 = vrot.lane.b32.xlu0 %v6611, 24
    %v6700 = vpop.permute.xlu0 %6699
    %6701 = vrot.lane.b32.xlu0 %v6612, 24
    %v6702 = vpop.permute.xlu0 %6701
    %6703 = vrot.lane.b32.xlu0 %v6613, 24
    %v6704 = vpop.permute.xlu0 %6703
    %6705 = vrot.lane.b32.xlu0 %v6614, 24
    %v6706 = vpop.permute.xlu0 %6705
    %6707 = vrot.lane.b32.xlu0 %v6615, 24
    %v6708 = vpop.permute.xlu0 %6707
    %6709 = vrot.lane.b32.xlu0 %v6616, 24
    %v6710 = vpop.permute.xlu0 %6709
    %6711 = vrot.lane.b32.xlu0 %v6617, 24
    %v6712 = vpop.permute.xlu0 %6711
    %6713 = vrot.lane.b32.xlu0 %v6618, 24
    %v6714 = vpop.permute.xlu0 %6713
    %6747 = vst.msk [vmem:[#allocation5] sm:$0xff] %vm3971, %v6652
    %6748 = vst.msk [vmem:[#allocation5 + $0x10] sm:$0xff] %vm3971, %v6654
    %6749 = vst.msk [vmem:[#allocation5 + $0x20] sm:$0xff] %vm3971, %v6656
    %6750 = vst.msk [vmem:[#allocation5 + $0x30] sm:$0xff] %vm3971, %v6658
    %6751 = vst.msk [vmem:[#allocation5 + $0x40] sm:$0xff] %vm3971, %v6660
    %6752 = vst.msk [vmem:[#allocation5 + $0x50] sm:$0xff] %vm3971, %v6662
    %6753 = vst.msk [vmem:[#allocation5 + $0x60] sm:$0xff] %vm3971, %v6664
    %6754 = vst.msk [vmem:[#allocation5 + $0x70] sm:$0xff] %vm3971, %v6666
    %6755 = vst.msk [vmem:[#allocation5 + $0x80] sm:$0xff] %vm3971, %v6668
    %6756 = vst.msk [vmem:[#allocation5 + $0x90] sm:$0xff] %vm3971, %v6670
    %6757 = vst.msk [vmem:[#allocation5 + $0xa0] sm:$0xff] %vm3971, %v6672
    %6758 = vst.msk [vmem:[#allocation5 + $0xb0] sm:$0xff] %vm3971, %v6674
    %6759 = vst.msk [vmem:[#allocation5 + $0xc0] sm:$0xff] %vm3971, %v6676
    %6760 = vst.msk [vmem:[#allocation5 + $0xd0] sm:$0xff] %vm3971, %v6678
    %6761 = vst.msk [vmem:[#allocation5 + $0xe0] sm:$0xff] %vm3971, %v6680
    %6762 = vst.msk [vmem:[#allocation5 + $0xf0] sm:$0xff] %vm3971, %v6682
    %6763 = vst.msk [vmem:[#allocation5 + $0x100] sm:$0xff] %vm3971, %v6684
    %6764 = vst.msk [vmem:[#allocation5 + $0x110] sm:$0xff] %vm3971, %v6686
    %6765 = vst.msk [vmem:[#allocation5 + $0x120] sm:$0xff] %vm3971, %v6688
    %6766 = vst.msk [vmem:[#allocation5 + $0x130] sm:$0xff] %vm3971, %v6690
    %6767 = vst.msk [vmem:[#allocation5 + $0x140] sm:$0xff] %vm3971, %v6692
    %6768 = vst.msk [vmem:[#allocation5 + $0x150] sm:$0xff] %vm3971, %v6694
    %6769 = vst.msk [vmem:[#allocation5 + $0x160] sm:$0xff] %vm3971, %v6696
    %6770 = vst.msk [vmem:[#allocation5 + $0x170] sm:$0xff] %vm3971, %v6698
    %6771 = vst.msk [vmem:[#allocation5 + $0x180] sm:$0xff] %vm3971, %v6700
    %6772 = vst.msk [vmem:[#allocation5 + $0x190] sm:$0xff] %vm3971, %v6702
    %6773 = vst.msk [vmem:[#allocation5 + $0x1a0] sm:$0xff] %vm3971, %v6704
    %6774 = vst.msk [vmem:[#allocation5 + $0x1b0] sm:$0xff] %vm3971, %v6706
    %6775 = vst.msk [vmem:[#allocation5 + $0x1c0] sm:$0xff] %vm3971, %v6708
    %6776 = vst.msk [vmem:[#allocation5 + $0x1d0] sm:$0xff] %vm3971, %v6710
    %6777 = vst.msk [vmem:[#allocation5 + $0x1e0] sm:$0xff] %vm3971, %v6712
    %6778 = vst.msk [vmem:[#allocation5 + $0x1f0] sm:$0xff] %vm3971, %v6714
    %v6779 = vld [vmem:[%s3040 + $0x8] sm:$0xff]
    %v6780 = vld [vmem:[%s3040 + $0x10] sm:$0xff]
    %v6781 = vld [vmem:[%s3040 + $0x28] sm:$0xff]
    %v6782 = vld [vmem:[%s3040 + $0x30] sm:$0xff]
    %v6783 = vld [vmem:[%s3040 + $0x48] sm:$0xff]
    %v6784 = vld [vmem:[%s3040 + $0x50] sm:$0xff]
    %v6785 = vld [vmem:[%s3040 + $0x68] sm:$0xff]
    %v6786 = vld [vmem:[%s3040 + $0x70] sm:$0xff]
    %v6787 = vld [vmem:[%s3040 + $0x88] sm:$0xff]
    %v6788 = vld [vmem:[%s3040 + $0x90] sm:$0xff]
    %v6789 = vld [vmem:[%s3040 + $0xa8] sm:$0xff]
    %v6790 = vld [vmem:[%s3040 + $0xb0] sm:$0xff]
    %v6791 = vld [vmem:[%s3040 + $0xc8] sm:$0xff]
    %v6792 = vld [vmem:[%s3040 + $0xd0] sm:$0xff]
    %v6793 = vld [vmem:[%s3040 + $0xe8] sm:$0xff]
    %v6794 = vld [vmem:[%s3040 + $0xf0] sm:$0xff]
    %v6795 = vld [vmem:[%s3040 + $0x108] sm:$0xff]
    %v6796 = vld [vmem:[%s3040 + $0x110] sm:$0xff]
    %v6797 = vld [vmem:[%s3040 + $0x128] sm:$0xff]
    %v6798 = vld [vmem:[%s3040 + $0x130] sm:$0xff]
    %v6799 = vld [vmem:[%s3040 + $0x148] sm:$0xff]
    %v6800 = vld [vmem:[%s3040 + $0x150] sm:$0xff]
    %v6801 = vld [vmem:[%s3040 + $0x168] sm:$0xff]
    %v6802 = vld [vmem:[%s3040 + $0x170] sm:$0xff]
    %v6803 = vld [vmem:[%s3040 + $0x188] sm:$0xff]
    %v6804 = vld [vmem:[%s3040 + $0x190] sm:$0xff]
    %v6805 = vld [vmem:[%s3040 + $0x1a8] sm:$0xff]
    %v6806 = vld [vmem:[%s3040 + $0x1b0] sm:$0xff]
    %v6807 = vld [vmem:[%s3040 + $0x1c8] sm:$0xff]
    %v6808 = vld [vmem:[%s3040 + $0x1d0] sm:$0xff]
    %v6809 = vld [vmem:[%s3040 + $0x1e8] sm:$0xff]
    %v6810 = vld [vmem:[%s3040 + $0x1f0] sm:$0xff]
    %v6811 = vld [vmem:[%s3040 + $0x248] sm:$0xff]
    %v6812 = vld [vmem:[%s3040 + $0x250] sm:$0xff]
    %v6813 = vld [vmem:[%s3040 + $0x268] sm:$0xff]
    %v6814 = vld [vmem:[%s3040 + $0x270] sm:$0xff]
    %v6815 = vld [vmem:[%s3040 + $0x288] sm:$0xff]
    %v6816 = vld [vmem:[%s3040 + $0x290] sm:$0xff]
    %v6817 = vld [vmem:[%s3040 + $0x2a8] sm:$0xff]
    %v6818 = vld [vmem:[%s3040 + $0x2b0] sm:$0xff]
    %v6819 = vld [vmem:[%s3040 + $0x2c8] sm:$0xff]
    %v6820 = vld [vmem:[%s3040 + $0x2d0] sm:$0xff]
    %v6821 = vld [vmem:[%s3040 + $0x2e8] sm:$0xff]
    %v6822 = vld [vmem:[%s3040 + $0x2f0] sm:$0xff]
    %v6823 = vld [vmem:[%s3040 + $0x308] sm:$0xff]
    %v6824 = vld [vmem:[%s3040 + $0x310] sm:$0xff]
    %v6825 = vld [vmem:[%s3040 + $0x328] sm:$0xff]
    %v6826 = vld [vmem:[%s3040 + $0x330] sm:$0xff]
    %v6827 = vld [vmem:[%s3040 + $0x348] sm:$0xff]
    %v6828 = vld [vmem:[%s3040 + $0x350] sm:$0xff]
    %v6829 = vld [vmem:[%s3040 + $0x368] sm:$0xff]
    %v6830 = vld [vmem:[%s3040 + $0x370] sm:$0xff]
    %v6831 = vld [vmem:[%s3040 + $0x388] sm:$0xff]
    %v6832 = vld [vmem:[%s3040 + $0x390] sm:$0xff]
    %v6833 = vld [vmem:[%s3040 + $0x3a8] sm:$0xff]
    %v6834 = vld [vmem:[%s3040 + $0x3b0] sm:$0xff]
    %v6835 = vld [vmem:[%s3040 + $0x3c8] sm:$0xff]
    %v6836 = vld [vmem:[%s3040 + $0x3d0] sm:$0xff]
    %v6837 = vld [vmem:[%s3040 + $0x3e8] sm:$0xff]
    %v6838 = vld [vmem:[%s3040 + $0x3f0] sm:$0xff]
    %v6839 = vld [vmem:[%s3040 + $0x408] sm:$0xff]
    %v6840 = vld [vmem:[%s3040 + $0x410] sm:$0xff]
    %v6841 = vld [vmem:[%s3040 + $0x428] sm:$0xff]
    %v6842 = vld [vmem:[%s3040 + $0x430] sm:$0xff]
    %v6843 = vpack.c.bf16 %v6780, %v6779
    %v6844 = vpack.c.bf16 %v6782, %v6781
    %v6845 = vpack.c.bf16 %v6784, %v6783
    %v6846 = vpack.c.bf16 %v6786, %v6785
    %v6847 = vpack.c.bf16 %v6788, %v6787
    %v6848 = vpack.c.bf16 %v6790, %v6789
    %v6849 = vpack.c.bf16 %v6792, %v6791
    %v6850 = vpack.c.bf16 %v6794, %v6793
    %v6851 = vpack.c.bf16 %v6796, %v6795
    %v6852 = vpack.c.bf16 %v6798, %v6797
    %v6853 = vpack.c.bf16 %v6800, %v6799
    %v6854 = vpack.c.bf16 %v6802, %v6801
    %v6855 = vpack.c.bf16 %v6804, %v6803
    %v6856 = vpack.c.bf16 %v6806, %v6805
    %v6857 = vpack.c.bf16 %v6808, %v6807
    %v6858 = vpack.c.bf16 %v6810, %v6809
    %v6859 = vpack.c.bf16 %v6812, %v6811
    %v6860 = vpack.c.bf16 %v6814, %v6813
    %v6861 = vpack.c.bf16 %v6816, %v6815
    %v6862 = vpack.c.bf16 %v6818, %v6817
    %v6863 = vpack.c.bf16 %v6820, %v6819
    %v6864 = vpack.c.bf16 %v6822, %v6821
    %v6865 = vpack.c.bf16 %v6824, %v6823
    %v6866 = vpack.c.bf16 %v6826, %v6825
    %v6867 = vpack.c.bf16 %v6828, %v6827
    %v6868 = vpack.c.bf16 %v6830, %v6829
    %v6869 = vpack.c.bf16 %v6832, %v6831
    %v6870 = vpack.c.bf16 %v6834, %v6833
    %v6871 = vpack.c.bf16 %v6836, %v6835
    %v6872 = vpack.c.bf16 %v6838, %v6837
    %v6873 = vpack.c.bf16 %v6840, %v6839
    %v6874 = vpack.c.bf16 %v6842, %v6841
    %6907 = vrot.lane.b32.xlu0 %v6843, 32
    %v6908 = vpop.permute.xlu0 %6907
    %6909 = vrot.lane.b32.xlu0 %v6844, 32
    %v6910 = vpop.permute.xlu0 %6909
    %6911 = vrot.lane.b32.xlu0 %v6845, 32
    %v6912 = vpop.permute.xlu0 %6911
    %6913 = vrot.lane.b32.xlu0 %v6846, 32
    %v6914 = vpop.permute.xlu0 %6913
    %6915 = vrot.lane.b32.xlu0 %v6847, 32
    %v6916 = vpop.permute.xlu0 %6915
    %6917 = vrot.lane.b32.xlu0 %v6848, 32
    %v6918 = vpop.permute.xlu0 %6917
    %6919 = vrot.lane.b32.xlu0 %v6849, 32
    %v6920 = vpop.permute.xlu0 %6919
    %6921 = vrot.lane.b32.xlu0 %v6850, 32
    %v6922 = vpop.permute.xlu0 %6921
    %6923 = vrot.lane.b32.xlu0 %v6851, 32
    %v6924 = vpop.permute.xlu0 %6923
    %6925 = vrot.lane.b32.xlu0 %v6852, 32
    %v6926 = vpop.permute.xlu0 %6925
    %6927 = vrot.lane.b32.xlu0 %v6853, 32
    %v6928 = vpop.permute.xlu0 %6927
    %6929 = vrot.lane.b32.xlu0 %v6854, 32
    %v6930 = vpop.permute.xlu0 %6929
    %6931 = vrot.lane.b32.xlu0 %v6855, 32
    %v6932 = vpop.permute.xlu0 %6931
    %6933 = vrot.lane.b32.xlu0 %v6856, 32
    %v6934 = vpop.permute.xlu0 %6933
    %6935 = vrot.lane.b32.xlu0 %v6857, 32
    %v6936 = vpop.permute.xlu0 %6935
    %6937 = vrot.lane.b32.xlu0 %v6858, 32
    %v6938 = vpop.permute.xlu0 %6937
    %6939 = vrot.lane.b32.xlu0 %v6859, 32
    %v6940 = vpop.permute.xlu0 %6939
    %6941 = vrot.lane.b32.xlu0 %v6860, 32
    %v6942 = vpop.permute.xlu0 %6941
    %6943 = vrot.lane.b32.xlu0 %v6861, 32
    %v6944 = vpop.permute.xlu0 %6943
    %6945 = vrot.lane.b32.xlu0 %v6862, 32
    %v6946 = vpop.permute.xlu0 %6945
    %6947 = vrot.lane.b32.xlu0 %v6863, 32
    %v6948 = vpop.permute.xlu0 %6947
    %6949 = vrot.lane.b32.xlu0 %v6864, 32
    %v6950 = vpop.permute.xlu0 %6949
    %6951 = vrot.lane.b32.xlu0 %v6865, 32
    %v6952 = vpop.permute.xlu0 %6951
    %6953 = vrot.lane.b32.xlu0 %v6866, 32
    %v6954 = vpop.permute.xlu0 %6953
    %6955 = vrot.lane.b32.xlu0 %v6867, 32
    %v6956 = vpop.permute.xlu0 %6955
    %6957 = vrot.lane.b32.xlu0 %v6868, 32
    %v6958 = vpop.permute.xlu0 %6957
    %6959 = vrot.lane.b32.xlu0 %v6869, 32
    %v6960 = vpop.permute.xlu0 %6959
    %6961 = vrot.lane.b32.xlu0 %v6870, 32
    %v6962 = vpop.permute.xlu0 %6961
    %6963 = vrot.lane.b32.xlu0 %v6871, 32
    %v6964 = vpop.permute.xlu0 %6963
    %6965 = vrot.lane.b32.xlu0 %v6872, 32
    %v6966 = vpop.permute.xlu0 %6965
    %6967 = vrot.lane.b32.xlu0 %v6873, 32
    %v6968 = vpop.permute.xlu0 %6967
    %6969 = vrot.lane.b32.xlu0 %v6874, 32
    %v6970 = vpop.permute.xlu0 %6969
    %7003 = vst.msk [vmem:[#allocation5] sm:$0xff] %vm4228, %v6908
    %7004 = vst.msk [vmem:[#allocation5 + $0x10] sm:$0xff] %vm4228, %v6910
    %7005 = vst.msk [vmem:[#allocation5 + $0x20] sm:$0xff] %vm4228, %v6912
    %7006 = vst.msk [vmem:[#allocation5 + $0x30] sm:$0xff] %vm4228, %v6914
    %7007 = vst.msk [vmem:[#allocation5 + $0x40] sm:$0xff] %vm4228, %v6916
    %7008 = vst.msk [vmem:[#allocation5 + $0x50] sm:$0xff] %vm4228, %v6918
    %7009 = vst.msk [vmem:[#allocation5 + $0x60] sm:$0xff] %vm4228, %v6920
    %7010 = vst.msk [vmem:[#allocation5 + $0x70] sm:$0xff] %vm4228, %v6922
    %7011 = vst.msk [vmem:[#allocation5 + $0x80] sm:$0xff] %vm4228, %v6924
    %7012 = vst.msk [vmem:[#allocation5 + $0x90] sm:$0xff] %vm4228, %v6926
    %7013 = vst.msk [vmem:[#allocation5 + $0xa0] sm:$0xff] %vm4228, %v6928
    %7014 = vst.msk [vmem:[#allocation5 + $0xb0] sm:$0xff] %vm4228, %v6930
    %7015 = vst.msk [vmem:[#allocation5 + $0xc0] sm:$0xff] %vm4228, %v6932
    %7016 = vst.msk [vmem:[#allocation5 + $0xd0] sm:$0xff] %vm4228, %v6934
    %7017 = vst.msk [vmem:[#allocation5 + $0xe0] sm:$0xff] %vm4228, %v6936
    %7018 = vst.msk [vmem:[#allocation5 + $0xf0] sm:$0xff] %vm4228, %v6938
    %7019 = vst.msk [vmem:[#allocation5 + $0x100] sm:$0xff] %vm4228, %v6940
    %7020 = vst.msk [vmem:[#allocation5 + $0x110] sm:$0xff] %vm4228, %v6942
    %7021 = vst.msk [vmem:[#allocation5 + $0x120] sm:$0xff] %vm4228, %v6944
    %7022 = vst.msk [vmem:[#allocation5 + $0x130] sm:$0xff] %vm4228, %v6946
    %7023 = vst.msk [vmem:[#allocation5 + $0x140] sm:$0xff] %vm4228, %v6948
    %7024 = vst.msk [vmem:[#allocation5 + $0x150] sm:$0xff] %vm4228, %v6950
    %7025 = vst.msk [vmem:[#allocation5 + $0x160] sm:$0xff] %vm4228, %v6952
    %7026 = vst.msk [vmem:[#allocation5 + $0x170] sm:$0xff] %vm4228, %v6954
    %7027 = vst.msk [vmem:[#allocation5 + $0x180] sm:$0xff] %vm4228, %v6956
    %7028 = vst.msk [vmem:[#allocation5 + $0x190] sm:$0xff] %vm4228, %v6958
    %7029 = vst.msk [vmem:[#allocation5 + $0x1a0] sm:$0xff] %vm4228, %v6960
    %7030 = vst.msk [vmem:[#allocation5 + $0x1b0] sm:$0xff] %vm4228, %v6962
    %7031 = vst.msk [vmem:[#allocation5 + $0x1c0] sm:$0xff] %vm4228, %v6964
    %7032 = vst.msk [vmem:[#allocation5 + $0x1d0] sm:$0xff] %vm4228, %v6966
    %7033 = vst.msk [vmem:[#allocation5 + $0x1e0] sm:$0xff] %vm4228, %v6968
    %7034 = vst.msk [vmem:[#allocation5 + $0x1f0] sm:$0xff] %vm4228, %v6970
    %v7035 = vld [vmem:[%s3040 + $0x9] sm:$0xff]
    %v7036 = vld [vmem:[%s3040 + $0x11] sm:$0xff]
    %v7037 = vld [vmem:[%s3040 + $0x29] sm:$0xff]
    %v7038 = vld [vmem:[%s3040 + $0x31] sm:$0xff]
    %v7039 = vld [vmem:[%s3040 + $0x49] sm:$0xff]
    %v7040 = vld [vmem:[%s3040 + $0x51] sm:$0xff]
    %v7041 = vld [vmem:[%s3040 + $0x69] sm:$0xff]
    %v7042 = vld [vmem:[%s3040 + $0x71] sm:$0xff]
    %v7043 = vld [vmem:[%s3040 + $0x89] sm:$0xff]
    %v7044 = vld [vmem:[%s3040 + $0x91] sm:$0xff]
    %v7045 = vld [vmem:[%s3040 + $0xa9] sm:$0xff]
    %v7046 = vld [vmem:[%s3040 + $0xb1] sm:$0xff]
    %v7047 = vld [vmem:[%s3040 + $0xc9] sm:$0xff]
    %v7048 = vld [vmem:[%s3040 + $0xd1] sm:$0xff]
    %v7049 = vld [vmem:[%s3040 + $0xe9] sm:$0xff]
    %v7050 = vld [vmem:[%s3040 + $0xf1] sm:$0xff]
    %v7051 = vld [vmem:[%s3040 + $0x109] sm:$0xff]
    %v7052 = vld [vmem:[%s3040 + $0x111] sm:$0xff]
    %v7053 = vld [vmem:[%s3040 + $0x129] sm:$0xff]
    %v7054 = vld [vmem:[%s3040 + $0x131] sm:$0xff]
    %v7055 = vld [vmem:[%s3040 + $0x149] sm:$0xff]
    %v7056 = vld [vmem:[%s3040 + $0x151] sm:$0xff]
    %v7057 = vld [vmem:[%s3040 + $0x169] sm:$0xff]
    %v7058 = vld [vmem:[%s3040 + $0x171] sm:$0xff]
    %v7059 = vld [vmem:[%s3040 + $0x189] sm:$0xff]
    %v7060 = vld [vmem:[%s3040 + $0x191] sm:$0xff]
    %v7061 = vld [vmem:[%s3040 + $0x1a9] sm:$0xff]
    %v7062 = vld [vmem:[%s3040 + $0x1b1] sm:$0xff]
    %v7063 = vld [vmem:[%s3040 + $0x1c9] sm:$0xff]
    %v7064 = vld [vmem:[%s3040 + $0x1d1] sm:$0xff]
    %v7065 = vld [vmem:[%s3040 + $0x1e9] sm:$0xff]
    %v7066 = vld [vmem:[%s3040 + $0x1f1] sm:$0xff]
    %v7067 = vld [vmem:[%s3040 + $0x249] sm:$0xff]
    %v7068 = vld [vmem:[%s3040 + $0x251] sm:$0xff]
    %v7069 = vld [vmem:[%s3040 + $0x269] sm:$0xff]
    %v7070 = vld [vmem:[%s3040 + $0x271] sm:$0xff]
    %v7071 = vld [vmem:[%s3040 + $0x289] sm:$0xff]
    %v7072 = vld [vmem:[%s3040 + $0x291] sm:$0xff]
    %v7073 = vld [vmem:[%s3040 + $0x2a9] sm:$0xff]
    %v7074 = vld [vmem:[%s3040 + $0x2b1] sm:$0xff]
    %v7075 = vld [vmem:[%s3040 + $0x2c9] sm:$0xff]
    %v7076 = vld [vmem:[%s3040 + $0x2d1] sm:$0xff]
    %v7077 = vld [vmem:[%s3040 + $0x2e9] sm:$0xff]
    %v7078 = vld [vmem:[%s3040 + $0x2f1] sm:$0xff]
    %v7079 = vld [vmem:[%s3040 + $0x309] sm:$0xff]
    %v7080 = vld [vmem:[%s3040 + $0x311] sm:$0xff]
    %v7081 = vld [vmem:[%s3040 + $0x329] sm:$0xff]
    %v7082 = vld [vmem:[%s3040 + $0x331] sm:$0xff]
    %v7083 = vld [vmem:[%s3040 + $0x349] sm:$0xff]
    %v7084 = vld [vmem:[%s3040 + $0x351] sm:$0xff]
    %v7085 = vld [vmem:[%s3040 + $0x369] sm:$0xff]
    %v7086 = vld [vmem:[%s3040 + $0x371] sm:$0xff]
    %v7087 = vld [vmem:[%s3040 + $0x389] sm:$0xff]
    %v7088 = vld [vmem:[%s3040 + $0x391] sm:$0xff]
    %v7089 = vld [vmem:[%s3040 + $0x3a9] sm:$0xff]
    %v7090 = vld [vmem:[%s3040 + $0x3b1] sm:$0xff]
    %v7091 = vld [vmem:[%s3040 + $0x3c9] sm:$0xff]
    %v7092 = vld [vmem:[%s3040 + $0x3d1] sm:$0xff]
    %v7093 = vld [vmem:[%s3040 + $0x3e9] sm:$0xff]
    %v7094 = vld [vmem:[%s3040 + $0x3f1] sm:$0xff]
    %v7095 = vld [vmem:[%s3040 + $0x409] sm:$0xff]
    %v7096 = vld [vmem:[%s3040 + $0x411] sm:$0xff]
    %v7097 = vld [vmem:[%s3040 + $0x429] sm:$0xff]
    %v7098 = vld [vmem:[%s3040 + $0x431] sm:$0xff]
    %v7099 = vpack.c.bf16 %v7036, %v7035
    %v7100 = vpack.c.bf16 %v7038, %v7037
    %v7101 = vpack.c.bf16 %v7040, %v7039
    %v7102 = vpack.c.bf16 %v7042, %v7041
    %v7103 = vpack.c.bf16 %v7044, %v7043
    %v7104 = vpack.c.bf16 %v7046, %v7045
    %v7105 = vpack.c.bf16 %v7048, %v7047
    %v7106 = vpack.c.bf16 %v7050, %v7049
    %v7107 = vpack.c.bf16 %v7052, %v7051
    %v7108 = vpack.c.bf16 %v7054, %v7053
    %v7109 = vpack.c.bf16 %v7056, %v7055
    %v7110 = vpack.c.bf16 %v7058, %v7057
    %v7111 = vpack.c.bf16 %v7060, %v7059
    %v7112 = vpack.c.bf16 %v7062, %v7061
    %v7113 = vpack.c.bf16 %v7064, %v7063
    %v7114 = vpack.c.bf16 %v7066, %v7065
    %v7115 = vpack.c.bf16 %v7068, %v7067
    %v7116 = vpack.c.bf16 %v7070, %v7069
    %v7117 = vpack.c.bf16 %v7072, %v7071
    %v7118 = vpack.c.bf16 %v7074, %v7073
    %v7119 = vpack.c.bf16 %v7076, %v7075
    %v7120 = vpack.c.bf16 %v7078, %v7077
    %v7121 = vpack.c.bf16 %v7080, %v7079
    %v7122 = vpack.c.bf16 %v7082, %v7081
    %v7123 = vpack.c.bf16 %v7084, %v7083
    %v7124 = vpack.c.bf16 %v7086, %v7085
    %v7125 = vpack.c.bf16 %v7088, %v7087
    %v7126 = vpack.c.bf16 %v7090, %v7089
    %v7127 = vpack.c.bf16 %v7092, %v7091
    %v7128 = vpack.c.bf16 %v7094, %v7093
    %v7129 = vpack.c.bf16 %v7096, %v7095
    %v7130 = vpack.c.bf16 %v7098, %v7097
    %7163 = vrot.lane.b32.xlu0 %v7099, 40
    %v7164 = vpop.permute.xlu0 %7163
    %7165 = vrot.lane.b32.xlu0 %v7100, 40
    %v7166 = vpop.permute.xlu0 %7165
    %7167 = vrot.lane.b32.xlu0 %v7101, 40
    %v7168 = vpop.permute.xlu0 %7167
    %7169 = vrot.lane.b32.xlu0 %v7102, 40
    %v7170 = vpop.permute.xlu0 %7169
    %7171 = vrot.lane.b32.xlu0 %v7103, 40
    %v7172 = vpop.permute.xlu0 %7171
    %7173 = vrot.lane.b32.xlu0 %v7104, 40
    %v7174 = vpop.permute.xlu0 %7173
    %7175 = vrot.lane.b32.xlu0 %v7105, 40
    %v7176 = vpop.permute.xlu0 %7175
    %7177 = vrot.lane.b32.xlu0 %v7106, 40
    %v7178 = vpop.permute.xlu0 %7177
    %7179 = vrot.lane.b32.xlu0 %v7107, 40
    %v7180 = vpop.permute.xlu0 %7179
    %7181 = vrot.lane.b32.xlu0 %v7108, 40
    %v7182 = vpop.permute.xlu0 %7181
    %7183 = vrot.lane.b32.xlu0 %v7109, 40
    %v7184 = vpop.permute.xlu0 %7183
    %7185 = vrot.lane.b32.xlu0 %v7110, 40
    %v7186 = vpop.permute.xlu0 %7185
    %7187 = vrot.lane.b32.xlu0 %v7111, 40
    %v7188 = vpop.permute.xlu0 %7187
    %7189 = vrot.lane.b32.xlu0 %v7112, 40
    %v7190 = vpop.permute.xlu0 %7189
    %7191 = vrot.lane.b32.xlu0 %v7113, 40
    %v7192 = vpop.permute.xlu0 %7191
    %7193 = vrot.lane.b32.xlu0 %v7114, 40
    %v7194 = vpop.permute.xlu0 %7193
    %7195 = vrot.lane.b32.xlu0 %v7115, 40
    %v7196 = vpop.permute.xlu0 %7195
    %7197 = vrot.lane.b32.xlu0 %v7116, 40
    %v7198 = vpop.permute.xlu0 %7197
    %7199 = vrot.lane.b32.xlu0 %v7117, 40
    %v7200 = vpop.permute.xlu0 %7199
    %7201 = vrot.lane.b32.xlu0 %v7118, 40
    %v7202 = vpop.permute.xlu0 %7201
    %7203 = vrot.lane.b32.xlu0 %v7119, 40
    %v7204 = vpop.permute.xlu0 %7203
    %7205 = vrot.lane.b32.xlu0 %v7120, 40
    %v7206 = vpop.permute.xlu0 %7205
    %7207 = vrot.lane.b32.xlu0 %v7121, 40
    %v7208 = vpop.permute.xlu0 %7207
    %7209 = vrot.lane.b32.xlu0 %v7122, 40
    %v7210 = vpop.permute.xlu0 %7209
    %7211 = vrot.lane.b32.xlu0 %v7123, 40
    %v7212 = vpop.permute.xlu0 %7211
    %7213 = vrot.lane.b32.xlu0 %v7124, 40
    %v7214 = vpop.permute.xlu0 %7213
    %7215 = vrot.lane.b32.xlu0 %v7125, 40
    %v7216 = vpop.permute.xlu0 %7215
    %7217 = vrot.lane.b32.xlu0 %v7126, 40
    %v7218 = vpop.permute.xlu0 %7217
    %7219 = vrot.lane.b32.xlu0 %v7127, 40
    %v7220 = vpop.permute.xlu0 %7219
    %7221 = vrot.lane.b32.xlu0 %v7128, 40
    %v7222 = vpop.permute.xlu0 %7221
    %7223 = vrot.lane.b32.xlu0 %v7129, 40
    %v7224 = vpop.permute.xlu0 %7223
    %7225 = vrot.lane.b32.xlu0 %v7130, 40
    %v7226 = vpop.permute.xlu0 %7225
    %7259 = vst.msk [vmem:[#allocation5] sm:$0xff] %vm4485, %v7164
    %7260 = vst.msk [vmem:[#allocation5 + $0x10] sm:$0xff] %vm4485, %v7166
    %7261 = vst.msk [vmem:[#allocation5 + $0x20] sm:$0xff] %vm4485, %v7168
    %7262 = vst.msk [vmem:[#allocation5 + $0x30] sm:$0xff] %vm4485, %v7170
    %7263 = vst.msk [vmem:[#allocation5 + $0x40] sm:$0xff] %vm4485, %v7172
    %7264 = vst.msk [vmem:[#allocation5 + $0x50] sm:$0xff] %vm4485, %v7174
    %7265 = vst.msk [vmem:[#allocation5 + $0x60] sm:$0xff] %vm4485, %v7176
    %7266 = vst.msk [vmem:[#allocation5 + $0x70] sm:$0xff] %vm4485, %v7178
    %7267 = vst.msk [vmem:[#allocation5 + $0x80] sm:$0xff] %vm4485, %v7180
    %7268 = vst.msk [vmem:[#allocation5 + $0x90] sm:$0xff] %vm4485, %v7182
    %7269 = vst.msk [vmem:[#allocation5 + $0xa0] sm:$0xff] %vm4485, %v7184
    %7270 = vst.msk [vmem:[#allocation5 + $0xb0] sm:$0xff] %vm4485, %v7186
    %7271 = vst.msk [vmem:[#allocation5 + $0xc0] sm:$0xff] %vm4485, %v7188
    %7272 = vst.msk [vmem:[#allocation5 + $0xd0] sm:$0xff] %vm4485, %v7190
    %7273 = vst.msk [vmem:[#allocation5 + $0xe0] sm:$0xff] %vm4485, %v7192
    %7274 = vst.msk [vmem:[#allocation5 + $0xf0] sm:$0xff] %vm4485, %v7194
    %7275 = vst.msk [vmem:[#allocation5 + $0x100] sm:$0xff] %vm4485, %v7196
    %7276 = vst.msk [vmem:[#allocation5 + $0x110] sm:$0xff] %vm4485, %v7198
    %7277 = vst.msk [vmem:[#allocation5 + $0x120] sm:$0xff] %vm4485, %v7200
    %7278 = vst.msk [vmem:[#allocation5 + $0x130] sm:$0xff] %vm4485, %v7202
    %7279 = vst.msk [vmem:[#allocation5 + $0x140] sm:$0xff] %vm4485, %v7204
    %7280 = vst.msk [vmem:[#allocation5 + $0x150] sm:$0xff] %vm4485, %v7206
    %7281 = vst.msk [vmem:[#allocation5 + $0x160] sm:$0xff] %vm4485, %v7208
    %7282 = vst.msk [vmem:[#allocation5 + $0x170] sm:$0xff] %vm4485, %v7210
    %7283 = vst.msk [vmem:[#allocation5 + $0x180] sm:$0xff] %vm4485, %v7212
    %7284 = vst.msk [vmem:[#allocation5 + $0x190] sm:$0xff] %vm4485, %v7214
    %7285 = vst.msk [vmem:[#allocation5 + $0x1a0] sm:$0xff] %vm4485, %v7216
    %7286 = vst.msk [vmem:[#allocation5 + $0x1b0] sm:$0xff] %vm4485, %v7218
    %7287 = vst.msk [vmem:[#allocation5 + $0x1c0] sm:$0xff] %vm4485, %v7220
    %7288 = vst.msk [vmem:[#allocation5 + $0x1d0] sm:$0xff] %vm4485, %v7222
    %7289 = vst.msk [vmem:[#allocation5 + $0x1e0] sm:$0xff] %vm4485, %v7224
    %7290 = vst.msk [vmem:[#allocation5 + $0x1f0] sm:$0xff] %vm4485, %v7226
    %v7291 = vld [vmem:[%s4518 + $0x7] sm:$0xff]
    %v7292 = vld [vmem:[%s4518 + $0xf] sm:$0xff]
    %v7293 = vld [vmem:[%s4518 + $0x27] sm:$0xff]
    %v7294 = vld [vmem:[%s4518 + $0x2f] sm:$0xff]
    %v7295 = vld [vmem:[%s4518 + $0x47] sm:$0xff]
    %v7296 = vld [vmem:[%s4518 + $0x4f] sm:$0xff]
    %v7297 = vld [vmem:[%s4518 + $0x67] sm:$0xff]
    %v7298 = vld [vmem:[%s4518 + $0x6f] sm:$0xff]
    %v7299 = vld [vmem:[%s4518 + $0x87] sm:$0xff]
    %v7300 = vld [vmem:[%s4518 + $0x8f] sm:$0xff]
    %v7301 = vld [vmem:[%s4518 + $0xa7] sm:$0xff]
    %v7302 = vld [vmem:[%s4518 + $0xaf] sm:$0xff]
    %v7303 = vld [vmem:[%s4518 + $0xc7] sm:$0xff]
    %v7304 = vld [vmem:[%s4518 + $0xcf] sm:$0xff]
    %v7305 = vld [vmem:[%s4518 + $0xe7] sm:$0xff]
    %v7306 = vld [vmem:[%s4518 + $0xef] sm:$0xff]
    %v7307 = vld [vmem:[%s4518 + $0x107] sm:$0xff]
    %v7308 = vld [vmem:[%s4518 + $0x10f] sm:$0xff]
    %v7309 = vld [vmem:[%s4518 + $0x127] sm:$0xff]
    %v7310 = vld [vmem:[%s4518 + $0x12f] sm:$0xff]
    %v7311 = vld [vmem:[%s4518 + $0x147] sm:$0xff]
    %v7312 = vld [vmem:[%s4518 + $0x14f] sm:$0xff]
    %v7313 = vld [vmem:[%s4518 + $0x167] sm:$0xff]
    %v7314 = vld [vmem:[%s4518 + $0x16f] sm:$0xff]
    %v7315 = vld [vmem:[%s4518 + $0x187] sm:$0xff]
    %v7316 = vld [vmem:[%s4518 + $0x18f] sm:$0xff]
    %v7317 = vld [vmem:[%s4518 + $0x1a7] sm:$0xff]
    %v7318 = vld [vmem:[%s4518 + $0x1af] sm:$0xff]
    %v7319 = vld [vmem:[%s4518 + $0x1c7] sm:$0xff]
    %v7320 = vld [vmem:[%s4518 + $0x1cf] sm:$0xff]
    %v7321 = vld [vmem:[%s4518 + $0x1e7] sm:$0xff]
    %v7322 = vld [vmem:[%s4518 + $0x1ef] sm:$0xff]
    %v7323 = vld [vmem:[%s4518 + $0x247] sm:$0xff]
    %v7324 = vld [vmem:[%s4518 + $0x24f] sm:$0xff]
    %v7325 = vld [vmem:[%s4518 + $0x267] sm:$0xff]
    %v7326 = vld [vmem:[%s4518 + $0x26f] sm:$0xff]
    %v7327 = vld [vmem:[%s4518 + $0x287] sm:$0xff]
    %v7328 = vld [vmem:[%s4518 + $0x28f] sm:$0xff]
    %v7329 = vld [vmem:[%s4518 + $0x2a7] sm:$0xff]
    %v7330 = vld [vmem:[%s4518 + $0x2af] sm:$0xff]
    %v7331 = vld [vmem:[%s4518 + $0x2c7] sm:$0xff]
    %v7332 = vld [vmem:[%s4518 + $0x2cf] sm:$0xff]
    %v7333 = vld [vmem:[%s4518 + $0x2e7] sm:$0xff]
    %v7334 = vld [vmem:[%s4518 + $0x2ef] sm:$0xff]
    %v7335 = vld [vmem:[%s4518 + $0x307] sm:$0xff]
    %v7336 = vld [vmem:[%s4518 + $0x30f] sm:$0xff]
    %v7337 = vld [vmem:[%s4518 + $0x327] sm:$0xff]
    %v7338 = vld [vmem:[%s4518 + $0x32f] sm:$0xff]
    %v7339 = vld [vmem:[%s4518 + $0x347] sm:$0xff]
    %v7340 = vld [vmem:[%s4518 + $0x34f] sm:$0xff]
    %v7341 = vld [vmem:[%s4518 + $0x367] sm:$0xff]
    %v7342 = vld [vmem:[%s4518 + $0x36f] sm:$0xff]
    %v7343 = vld [vmem:[%s4518 + $0x387] sm:$0xff]
    %v7344 = vld [vmem:[%s4518 + $0x38f] sm:$0xff]
    %v7345 = vld [vmem:[%s4518 + $0x3a7] sm:$0xff]
    %v7346 = vld [vmem:[%s4518 + $0x3af] sm:$0xff]
    %v7347 = vld [vmem:[%s4518 + $0x3c7] sm:$0xff]
    %v7348 = vld [vmem:[%s4518 + $0x3cf] sm:$0xff]
    %v7349 = vld [vmem:[%s4518 + $0x3e7] sm:$0xff]
    %v7350 = vld [vmem:[%s4518 + $0x3ef] sm:$0xff]
    %v7351 = vld [vmem:[%s4518 + $0x407] sm:$0xff]
    %v7352 = vld [vmem:[%s4518 + $0x40f] sm:$0xff]
    %v7353 = vld [vmem:[%s4518 + $0x427] sm:$0xff]
    %v7354 = vld [vmem:[%s4518 + $0x42f] sm:$0xff]
    %v7355 = vpack.c.bf16 %v7292, %v7291
    %v7356 = vpack.c.bf16 %v7294, %v7293
    %v7357 = vpack.c.bf16 %v7296, %v7295
    %v7358 = vpack.c.bf16 %v7298, %v7297
    %v7359 = vpack.c.bf16 %v7300, %v7299
    %v7360 = vpack.c.bf16 %v7302, %v7301
    %v7361 = vpack.c.bf16 %v7304, %v7303
    %v7362 = vpack.c.bf16 %v7306, %v7305
    %v7363 = vpack.c.bf16 %v7308, %v7307
    %v7364 = vpack.c.bf16 %v7310, %v7309
    %v7365 = vpack.c.bf16 %v7312, %v7311
    %v7366 = vpack.c.bf16 %v7314, %v7313
    %v7367 = vpack.c.bf16 %v7316, %v7315
    %v7368 = vpack.c.bf16 %v7318, %v7317
    %v7369 = vpack.c.bf16 %v7320, %v7319
    %v7370 = vpack.c.bf16 %v7322, %v7321
    %v7371 = vpack.c.bf16 %v7324, %v7323
    %v7372 = vpack.c.bf16 %v7326, %v7325
    %v7373 = vpack.c.bf16 %v7328, %v7327
    %v7374 = vpack.c.bf16 %v7330, %v7329
    %v7375 = vpack.c.bf16 %v7332, %v7331
    %v7376 = vpack.c.bf16 %v7334, %v7333
    %v7377 = vpack.c.bf16 %v7336, %v7335
    %v7378 = vpack.c.bf16 %v7338, %v7337
    %v7379 = vpack.c.bf16 %v7340, %v7339
    %v7380 = vpack.c.bf16 %v7342, %v7341
    %v7381 = vpack.c.bf16 %v7344, %v7343
    %v7382 = vpack.c.bf16 %v7346, %v7345
    %v7383 = vpack.c.bf16 %v7348, %v7347
    %v7384 = vpack.c.bf16 %v7350, %v7349
    %v7385 = vpack.c.bf16 %v7352, %v7351
    %v7386 = vpack.c.bf16 %v7354, %v7353
    %7419 = vrot.lane.b32.xlu0 %v7355, 48
    %v7420 = vpop.permute.xlu0 %7419
    %7421 = vrot.lane.b32.xlu0 %v7356, 48
    %v7422 = vpop.permute.xlu0 %7421
    %7423 = vrot.lane.b32.xlu0 %v7357, 48
    %v7424 = vpop.permute.xlu0 %7423
    %7425 = vrot.lane.b32.xlu0 %v7358, 48
    %v7426 = vpop.permute.xlu0 %7425
    %7427 = vrot.lane.b32.xlu0 %v7359, 48
    %v7428 = vpop.permute.xlu0 %7427
    %7429 = vrot.lane.b32.xlu0 %v7360, 48
    %v7430 = vpop.permute.xlu0 %7429
    %7431 = vrot.lane.b32.xlu0 %v7361, 48
    %v7432 = vpop.permute.xlu0 %7431
    %7433 = vrot.lane.b32.xlu0 %v7362, 48
    %v7434 = vpop.permute.xlu0 %7433
    %7435 = vrot.lane.b32.xlu0 %v7363, 48
    %v7436 = vpop.permute.xlu0 %7435
    %7437 = vrot.lane.b32.xlu0 %v7364, 48
    %v7438 = vpop.permute.xlu0 %7437
    %7439 = vrot.lane.b32.xlu0 %v7365, 48
    %v7440 = vpop.permute.xlu0 %7439
    %7441 = vrot.lane.b32.xlu0 %v7366, 48
    %v7442 = vpop.permute.xlu0 %7441
    %7443 = vrot.lane.b32.xlu0 %v7367, 48
    %v7444 = vpop.permute.xlu0 %7443
    %7445 = vrot.lane.b32.xlu0 %v7368, 48
    %v7446 = vpop.permute.xlu0 %7445
    %7447 = vrot.lane.b32.xlu0 %v7369, 48
    %v7448 = vpop.permute.xlu0 %7447
    %7449 = vrot.lane.b32.xlu0 %v7370, 48
    %v7450 = vpop.permute.xlu0 %7449
    %7451 = vrot.lane.b32.xlu0 %v7371, 48
    %v7452 = vpop.permute.xlu0 %7451
    %7453 = vrot.lane.b32.xlu0 %v7372, 48
    %v7454 = vpop.permute.xlu0 %7453
    %7455 = vrot.lane.b32.xlu0 %v7373, 48
    %v7456 = vpop.permute.xlu0 %7455
    %7457 = vrot.lane.b32.xlu0 %v7374, 48
    %v7458 = vpop.permute.xlu0 %7457
    %7459 = vrot.lane.b32.xlu0 %v7375, 48
    %v7460 = vpop.permute.xlu0 %7459
    %7461 = vrot.lane.b32.xlu0 %v7376, 48
    %v7462 = vpop.permute.xlu0 %7461
    %7463 = vrot.lane.b32.xlu0 %v7377, 48
    %v7464 = vpop.permute.xlu0 %7463
    %7465 = vrot.lane.b32.xlu0 %v7378, 48
    %v7466 = vpop.permute.xlu0 %7465
    %7467 = vrot.lane.b32.xlu0 %v7379, 48
    %v7468 = vpop.permute.xlu0 %7467
    %7469 = vrot.lane.b32.xlu0 %v7380, 48
    %v7470 = vpop.permute.xlu0 %7469
    %7471 = vrot.lane.b32.xlu0 %v7381, 48
    %v7472 = vpop.permute.xlu0 %7471
    %7473 = vrot.lane.b32.xlu0 %v7382, 48
    %v7474 = vpop.permute.xlu0 %7473
    %7475 = vrot.lane.b32.xlu0 %v7383, 48
    %v7476 = vpop.permute.xlu0 %7475
    %7477 = vrot.lane.b32.xlu0 %v7384, 48
    %v7478 = vpop.permute.xlu0 %7477
    %7479 = vrot.lane.b32.xlu0 %v7385, 48
    %v7480 = vpop.permute.xlu0 %7479
    %7481 = vrot.lane.b32.xlu0 %v7386, 48
    %v7482 = vpop.permute.xlu0 %7481
    %7515 = vst.msk [vmem:[#allocation5] sm:$0xff] %vm4743, %v7420
    %7516 = vst.msk [vmem:[#allocation5 + $0x10] sm:$0xff] %vm4743, %v7422
    %7517 = vst.msk [vmem:[#allocation5 + $0x20] sm:$0xff] %vm4743, %v7424
    %7518 = vst.msk [vmem:[#allocation5 + $0x30] sm:$0xff] %vm4743, %v7426
    %7519 = vst.msk [vmem:[#allocation5 + $0x40] sm:$0xff] %vm4743, %v7428
    %7520 = vst.msk [vmem:[#allocation5 + $0x50] sm:$0xff] %vm4743, %v7430
    %7521 = vst.msk [vmem:[#allocation5 + $0x60] sm:$0xff] %vm4743, %v7432
    %7522 = vst.msk [vmem:[#allocation5 + $0x70] sm:$0xff] %vm4743, %v7434
    %7523 = vst.msk [vmem:[#allocation5 + $0x80] sm:$0xff] %vm4743, %v7436
    %7524 = vst.msk [vmem:[#allocation5 + $0x90] sm:$0xff] %vm4743, %v7438
    %7525 = vst.msk [vmem:[#allocation5 + $0xa0] sm:$0xff] %vm4743, %v7440
    %7526 = vst.msk [vmem:[#allocation5 + $0xb0] sm:$0xff] %vm4743, %v7442
    %7527 = vst.msk [vmem:[#allocation5 + $0xc0] sm:$0xff] %vm4743, %v7444
    %7528 = vst.msk [vmem:[#allocation5 + $0xd0] sm:$0xff] %vm4743, %v7446
    %7529 = vst.msk [vmem:[#allocation5 + $0xe0] sm:$0xff] %vm4743, %v7448
    %7530 = vst.msk [vmem:[#allocation5 + $0xf0] sm:$0xff] %vm4743, %v7450
    %7531 = vst.msk [vmem:[#allocation5 + $0x100] sm:$0xff] %vm4743, %v7452
    %7532 = vst.msk [vmem:[#allocation5 + $0x110] sm:$0xff] %vm4743, %v7454
    %7533 = vst.msk [vmem:[#allocation5 + $0x120] sm:$0xff] %vm4743, %v7456
    %7534 = vst.msk [vmem:[#allocation5 + $0x130] sm:$0xff] %vm4743, %v7458
    %7535 = vst.msk [vmem:[#allocation5 + $0x140] sm:$0xff] %vm4743, %v7460
    %7536 = vst.msk [vmem:[#allocation5 + $0x150] sm:$0xff] %vm4743, %v7462
    %7537 = vst.msk [vmem:[#allocation5 + $0x160] sm:$0xff] %vm4743, %v7464
    %7538 = vst.msk [vmem:[#allocation5 + $0x170] sm:$0xff] %vm4743, %v7466
    %7539 = vst.msk [vmem:[#allocation5 + $0x180] sm:$0xff] %vm4743, %v7468
    %7540 = vst.msk [vmem:[#allocation5 + $0x190] sm:$0xff] %vm4743, %v7470
    %7541 = vst.msk [vmem:[#allocation5 + $0x1a0] sm:$0xff] %vm4743, %v7472
    %7542 = vst.msk [vmem:[#allocation5 + $0x1b0] sm:$0xff] %vm4743, %v7474
    %7543 = vst.msk [vmem:[#allocation5 + $0x1c0] sm:$0xff] %vm4743, %v7476
    %7544 = vst.msk [vmem:[#allocation5 + $0x1d0] sm:$0xff] %vm4743, %v7478
    %7545 = vst.msk [vmem:[#allocation5 + $0x1e0] sm:$0xff] %vm4743, %v7480
    %7546 = vst.msk [vmem:[#allocation5 + $0x1f0] sm:$0xff] %vm4743, %v7482
    %v7547 = vld [vmem:[%s4518 + $0x8] sm:$0xff]
    %v7548 = vld [vmem:[%s4518 + $0x10] sm:$0xff]
    %v7549 = vld [vmem:[%s4518 + $0x28] sm:$0xff]
    %v7550 = vld [vmem:[%s4518 + $0x30] sm:$0xff]
    %v7551 = vld [vmem:[%s4518 + $0x48] sm:$0xff]
    %v7552 = vld [vmem:[%s4518 + $0x50] sm:$0xff]
    %v7553 = vld [vmem:[%s4518 + $0x68] sm:$0xff]
    %v7554 = vld [vmem:[%s4518 + $0x70] sm:$0xff]
    %v7555 = vld [vmem:[%s4518 + $0x88] sm:$0xff]
    %v7556 = vld [vmem:[%s4518 + $0x90] sm:$0xff]
    %v7557 = vld [vmem:[%s4518 + $0xa8] sm:$0xff]
    %v7558 = vld [vmem:[%s4518 + $0xb0] sm:$0xff]
    %v7559 = vld [vmem:[%s4518 + $0xc8] sm:$0xff]
    %v7560 = vld [vmem:[%s4518 + $0xd0] sm:$0xff]
    %v7561 = vld [vmem:[%s4518 + $0xe8] sm:$0xff]
    %v7562 = vld [vmem:[%s4518 + $0xf0] sm:$0xff]
    %v7563 = vld [vmem:[%s4518 + $0x108] sm:$0xff]
    %v7564 = vld [vmem:[%s4518 + $0x110] sm:$0xff]
    %v7565 = vld [vmem:[%s4518 + $0x128] sm:$0xff]
    %v7566 = vld [vmem:[%s4518 + $0x130] sm:$0xff]
    %v7567 = vld [vmem:[%s4518 + $0x148] sm:$0xff]
    %v7568 = vld [vmem:[%s4518 + $0x150] sm:$0xff]
    %v7569 = vld [vmem:[%s4518 + $0x168] sm:$0xff]
    %v7570 = vld [vmem:[%s4518 + $0x170] sm:$0xff]
    %v7571 = vld [vmem:[%s4518 + $0x188] sm:$0xff]
    %v7572 = vld [vmem:[%s4518 + $0x190] sm:$0xff]
    %v7573 = vld [vmem:[%s4518 + $0x1a8] sm:$0xff]
    %v7574 = vld [vmem:[%s4518 + $0x1b0] sm:$0xff]
    %v7575 = vld [vmem:[%s4518 + $0x1c8] sm:$0xff]
    %v7576 = vld [vmem:[%s4518 + $0x1d0] sm:$0xff]
    %v7577 = vld [vmem:[%s4518 + $0x1e8] sm:$0xff]
    %v7578 = vld [vmem:[%s4518 + $0x1f0] sm:$0xff]
    %v7579 = vld [vmem:[%s4518 + $0x248] sm:$0xff]
    %v7580 = vld [vmem:[%s4518 + $0x250] sm:$0xff]
    %v7581 = vld [vmem:[%s4518 + $0x268] sm:$0xff]
    %v7582 = vld [vmem:[%s4518 + $0x270] sm:$0xff]
    %v7583 = vld [vmem:[%s4518 + $0x288] sm:$0xff]
    %v7584 = vld [vmem:[%s4518 + $0x290] sm:$0xff]
    %v7585 = vld [vmem:[%s4518 + $0x2a8] sm:$0xff]
    %v7586 = vld [vmem:[%s4518 + $0x2b0] sm:$0xff]
    %v7587 = vld [vmem:[%s4518 + $0x2c8] sm:$0xff]
    %v7588 = vld [vmem:[%s4518 + $0x2d0] sm:$0xff]
    %v7589 = vld [vmem:[%s4518 + $0x2e8] sm:$0xff]
    %v7590 = vld [vmem:[%s4518 + $0x2f0] sm:$0xff]
    %v7591 = vld [vmem:[%s4518 + $0x308] sm:$0xff]
    %v7592 = vld [vmem:[%s4518 + $0x310] sm:$0xff]
    %v7593 = vld [vmem:[%s4518 + $0x328] sm:$0xff]
    %v7594 = vld [vmem:[%s4518 + $0x330] sm:$0xff]
    %v7595 = vld [vmem:[%s4518 + $0x348] sm:$0xff]
    %v7596 = vld [vmem:[%s4518 + $0x350] sm:$0xff]
    %v7597 = vld [vmem:[%s4518 + $0x368] sm:$0xff]
    %v7598 = vld [vmem:[%s4518 + $0x370] sm:$0xff]
    %v7599 = vld [vmem:[%s4518 + $0x388] sm:$0xff]
    %v7600 = vld [vmem:[%s4518 + $0x390] sm:$0xff]
    %v7601 = vld [vmem:[%s4518 + $0x3a8] sm:$0xff]
    %v7602 = vld [vmem:[%s4518 + $0x3b0] sm:$0xff]
    %v7603 = vld [vmem:[%s4518 + $0x3c8] sm:$0xff]
    %v7604 = vld [vmem:[%s4518 + $0x3d0] sm:$0xff]
    %v7605 = vld [vmem:[%s4518 + $0x3e8] sm:$0xff]
    %v7606 = vld [vmem:[%s4518 + $0x3f0] sm:$0xff]
    %v7607 = vld [vmem:[%s4518 + $0x408] sm:$0xff]
    %v7608 = vld [vmem:[%s4518 + $0x410] sm:$0xff]
    %v7609 = vld [vmem:[%s4518 + $0x428] sm:$0xff]
    %v7610 = vld [vmem:[%s4518 + $0x430] sm:$0xff]
    %v7611 = vpack.c.bf16 %v7548, %v7547
    %v7612 = vpack.c.bf16 %v7550, %v7549
    %v7613 = vpack.c.bf16 %v7552, %v7551
    %v7614 = vpack.c.bf16 %v7554, %v7553
    %v7615 = vpack.c.bf16 %v7556, %v7555
    %v7616 = vpack.c.bf16 %v7558, %v7557
    %v7617 = vpack.c.bf16 %v7560, %v7559
    %v7618 = vpack.c.bf16 %v7562, %v7561
    %v7619 = vpack.c.bf16 %v7564, %v7563
    %v7620 = vpack.c.bf16 %v7566, %v7565
    %v7621 = vpack.c.bf16 %v7568, %v7567
    %v7622 = vpack.c.bf16 %v7570, %v7569
    %v7623 = vpack.c.bf16 %v7572, %v7571
    %v7624 = vpack.c.bf16 %v7574, %v7573
    %v7625 = vpack.c.bf16 %v7576, %v7575
    %v7626 = vpack.c.bf16 %v7578, %v7577
    %v7627 = vpack.c.bf16 %v7580, %v7579
    %v7628 = vpack.c.bf16 %v7582, %v7581
    %v7629 = vpack.c.bf16 %v7584, %v7583
    %v7630 = vpack.c.bf16 %v7586, %v7585
    %v7631 = vpack.c.bf16 %v7588, %v7587
    %v7632 = vpack.c.bf16 %v7590, %v7589
    %v7633 = vpack.c.bf16 %v7592, %v7591
    %v7634 = vpack.c.bf16 %v7594, %v7593
    %v7635 = vpack.c.bf16 %v7596, %v7595
    %v7636 = vpack.c.bf16 %v7598, %v7597
    %v7637 = vpack.c.bf16 %v7600, %v7599
    %v7638 = vpack.c.bf16 %v7602, %v7601
    %v7639 = vpack.c.bf16 %v7604, %v7603
    %v7640 = vpack.c.bf16 %v7606, %v7605
    %v7641 = vpack.c.bf16 %v7608, %v7607
    %v7642 = vpack.c.bf16 %v7610, %v7609
    %7675 = vrot.lane.b32.xlu0 %v7611, 56
    %v7676 = vpop.permute.xlu0 %7675
    %7677 = vrot.lane.b32.xlu0 %v7612, 56
    %v7678 = vpop.permute.xlu0 %7677
    %7679 = vrot.lane.b32.xlu0 %v7613, 56
    %v7680 = vpop.permute.xlu0 %7679
    %7681 = vrot.lane.b32.xlu0 %v7614, 56
    %v7682 = vpop.permute.xlu0 %7681
    %7683 = vrot.lane.b32.xlu0 %v7615, 56
    %v7684 = vpop.permute.xlu0 %7683
    %7685 = vrot.lane.b32.xlu0 %v7616, 56
    %v7686 = vpop.permute.xlu0 %7685
    %7687 = vrot.lane.b32.xlu0 %v7617, 56
    %v7688 = vpop.permute.xlu0 %7687
    %7689 = vrot.lane.b32.xlu0 %v7618, 56
    %v7690 = vpop.permute.xlu0 %7689
    %7691 = vrot.lane.b32.xlu0 %v7619, 56
    %v7692 = vpop.permute.xlu0 %7691
    %7693 = vrot.lane.b32.xlu0 %v7620, 56
    %v7694 = vpop.permute.xlu0 %7693
    %7695 = vrot.lane.b32.xlu0 %v7621, 56
    %v7696 = vpop.permute.xlu0 %7695
    %7697 = vrot.lane.b32.xlu0 %v7622, 56
    %v7698 = vpop.permute.xlu0 %7697
    %7699 = vrot.lane.b32.xlu0 %v7623, 56
    %v7700 = vpop.permute.xlu0 %7699
    %7701 = vrot.lane.b32.xlu0 %v7624, 56
    %v7702 = vpop.permute.xlu0 %7701
    %7703 = vrot.lane.b32.xlu0 %v7625, 56
    %v7704 = vpop.permute.xlu0 %7703
    %7705 = vrot.lane.b32.xlu0 %v7626, 56
    %v7706 = vpop.permute.xlu0 %7705
    %7707 = vrot.lane.b32.xlu0 %v7627, 56
    %v7708 = vpop.permute.xlu0 %7707
    %7709 = vrot.lane.b32.xlu0 %v7628, 56
    %v7710 = vpop.permute.xlu0 %7709
    %7711 = vrot.lane.b32.xlu0 %v7629, 56
    %v7712 = vpop.permute.xlu0 %7711
    %7713 = vrot.lane.b32.xlu0 %v7630, 56
    %v7714 = vpop.permute.xlu0 %7713
    %7715 = vrot.lane.b32.xlu0 %v7631, 56
    %v7716 = vpop.permute.xlu0 %7715
    %7717 = vrot.lane.b32.xlu0 %v7632, 56
    %v7718 = vpop.permute.xlu0 %7717
    %7719 = vrot.lane.b32.xlu0 %v7633, 56
    %v7720 = vpop.permute.xlu0 %7719
    %7721 = vrot.lane.b32.xlu0 %v7634, 56
    %v7722 = vpop.permute.xlu0 %7721
    %7723 = vrot.lane.b32.xlu0 %v7635, 56
    %v7724 = vpop.permute.xlu0 %7723
    %7725 = vrot.lane.b32.xlu0 %v7636, 56
    %v7726 = vpop.permute.xlu0 %7725
    %7727 = vrot.lane.b32.xlu0 %v7637, 56
    %v7728 = vpop.permute.xlu0 %7727
    %7729 = vrot.lane.b32.xlu0 %v7638, 56
    %v7730 = vpop.permute.xlu0 %7729
    %7731 = vrot.lane.b32.xlu0 %v7639, 56
    %v7732 = vpop.permute.xlu0 %7731
    %7733 = vrot.lane.b32.xlu0 %v7640, 56
    %v7734 = vpop.permute.xlu0 %7733
    %7735 = vrot.lane.b32.xlu0 %v7641, 56
    %v7736 = vpop.permute.xlu0 %7735
    %7737 = vrot.lane.b32.xlu0 %v7642, 56
    %v7738 = vpop.permute.xlu0 %7737
    %7771 = vst.msk [vmem:[#allocation5] sm:$0xff] %vm5000, %v7676
    %7772 = vst.msk [vmem:[#allocation5 + $0x10] sm:$0xff] %vm5000, %v7678
    %7773 = vst.msk [vmem:[#allocation5 + $0x20] sm:$0xff] %vm5000, %v7680
    %7774 = vst.msk [vmem:[#allocation5 + $0x30] sm:$0xff] %vm5000, %v7682
    %7775 = vst.msk [vmem:[#allocation5 + $0x40] sm:$0xff] %vm5000, %v7684
    %7776 = vst.msk [vmem:[#allocation5 + $0x50] sm:$0xff] %vm5000, %v7686
    %7777 = vst.msk [vmem:[#allocation5 + $0x60] sm:$0xff] %vm5000, %v7688
    %7778 = vst.msk [vmem:[#allocation5 + $0x70] sm:$0xff] %vm5000, %v7690
    %7779 = vst.msk [vmem:[#allocation5 + $0x80] sm:$0xff] %vm5000, %v7692
    %7780 = vst.msk [vmem:[#allocation5 + $0x90] sm:$0xff] %vm5000, %v7694
    %7781 = vst.msk [vmem:[#allocation5 + $0xa0] sm:$0xff] %vm5000, %v7696
    %7782 = vst.msk [vmem:[#allocation5 + $0xb0] sm:$0xff] %vm5000, %v7698
    %7783 = vst.msk [vmem:[#allocation5 + $0xc0] sm:$0xff] %vm5000, %v7700
    %7784 = vst.msk [vmem:[#allocation5 + $0xd0] sm:$0xff] %vm5000, %v7702
    %7785 = vst.msk [vmem:[#allocation5 + $0xe0] sm:$0xff] %vm5000, %v7704
    %7786 = vst.msk [vmem:[#allocation5 + $0xf0] sm:$0xff] %vm5000, %v7706
    %7787 = vst.msk [vmem:[#allocation5 + $0x100] sm:$0xff] %vm5000, %v7708
    %7788 = vst.msk [vmem:[#allocation5 + $0x110] sm:$0xff] %vm5000, %v7710
    %7789 = vst.msk [vmem:[#allocation5 + $0x120] sm:$0xff] %vm5000, %v7712
    %7790 = vst.msk [vmem:[#allocation5 + $0x130] sm:$0xff] %vm5000, %v7714
    %7791 = vst.msk [vmem:[#allocation5 + $0x140] sm:$0xff] %vm5000, %v7716
    %7792 = vst.msk [vmem:[#allocation5 + $0x150] sm:$0xff] %vm5000, %v7718
    %7793 = vst.msk [vmem:[#allocation5 + $0x160] sm:$0xff] %vm5000, %v7720
    %7794 = vst.msk [vmem:[#allocation5 + $0x170] sm:$0xff] %vm5000, %v7722
    %7795 = vst.msk [vmem:[#allocation5 + $0x180] sm:$0xff] %vm5000, %v7724
    %7796 = vst.msk [vmem:[#allocation5 + $0x190] sm:$0xff] %vm5000, %v7726
    %7797 = vst.msk [vmem:[#allocation5 + $0x1a0] sm:$0xff] %vm5000, %v7728
    %7798 = vst.msk [vmem:[#allocation5 + $0x1b0] sm:$0xff] %vm5000, %v7730
    %7799 = vst.msk [vmem:[#allocation5 + $0x1c0] sm:$0xff] %vm5000, %v7732
    %7800 = vst.msk [vmem:[#allocation5 + $0x1d0] sm:$0xff] %vm5000, %v7734
    %7801 = vst.msk [vmem:[#allocation5 + $0x1e0] sm:$0xff] %vm5000, %v7736
    %7802 = vst.msk [vmem:[#allocation5 + $0x1f0] sm:$0xff] %vm5000, %v7738
    %v7803 = vld [vmem:[%s4518 + $0x9] sm:$0xff]
    %v7804 = vld [vmem:[%s4518 + $0x11] sm:$0xff]
    %v7805 = vld [vmem:[%s4518 + $0x29] sm:$0xff]
    %v7806 = vld [vmem:[%s4518 + $0x31] sm:$0xff]
    %v7807 = vld [vmem:[%s4518 + $0x49] sm:$0xff]
    %v7808 = vld [vmem:[%s4518 + $0x51] sm:$0xff]
    %v7809 = vld [vmem:[%s4518 + $0x69] sm:$0xff]
    %v7810 = vld [vmem:[%s4518 + $0x71] sm:$0xff]
    %v7811 = vld [vmem:[%s4518 + $0x89] sm:$0xff]
    %v7812 = vld [vmem:[%s4518 + $0x91] sm:$0xff]
    %v7813 = vld [vmem:[%s4518 + $0xa9] sm:$0xff]
    %v7814 = vld [vmem:[%s4518 + $0xb1] sm:$0xff]
    %v7815 = vld [vmem:[%s4518 + $0xc9] sm:$0xff]
    %v7816 = vld [vmem:[%s4518 + $0xd1] sm:$0xff]
    %v7817 = vld [vmem:[%s4518 + $0xe9] sm:$0xff]
    %v7818 = vld [vmem:[%s4518 + $0xf1] sm:$0xff]
    %v7819 = vld [vmem:[%s4518 + $0x109] sm:$0xff]
    %v7820 = vld [vmem:[%s4518 + $0x111] sm:$0xff]
    %v7821 = vld [vmem:[%s4518 + $0x129] sm:$0xff]
    %v7822 = vld [vmem:[%s4518 + $0x131] sm:$0xff]
    %v7823 = vld [vmem:[%s4518 + $0x149] sm:$0xff]
    %v7824 = vld [vmem:[%s4518 + $0x151] sm:$0xff]
    %v7825 = vld [vmem:[%s4518 + $0x169] sm:$0xff]
    %v7826 = vld [vmem:[%s4518 + $0x171] sm:$0xff]
    %v7827 = vld [vmem:[%s4518 + $0x189] sm:$0xff]
    %v7828 = vld [vmem:[%s4518 + $0x191] sm:$0xff]
    %v7829 = vld [vmem:[%s4518 + $0x1a9] sm:$0xff]
    %v7830 = vld [vmem:[%s4518 + $0x1b1] sm:$0xff]
    %v7831 = vld [vmem:[%s4518 + $0x1c9] sm:$0xff]
    %v7832 = vld [vmem:[%s4518 + $0x1d1] sm:$0xff]
    %v7833 = vld [vmem:[%s4518 + $0x1e9] sm:$0xff]
    %v7834 = vld [vmem:[%s4518 + $0x1f1] sm:$0xff]
    %v7835 = vld [vmem:[%s4518 + $0x249] sm:$0xff]
    %v7836 = vld [vmem:[%s4518 + $0x251] sm:$0xff]
    %v7837 = vld [vmem:[%s4518 + $0x269] sm:$0xff]
    %v7838 = vld [vmem:[%s4518 + $0x271] sm:$0xff]
    %v7839 = vld [vmem:[%s4518 + $0x289] sm:$0xff]
    %v7840 = vld [vmem:[%s4518 + $0x291] sm:$0xff]
    %v7841 = vld [vmem:[%s4518 + $0x2a9] sm:$0xff]
    %v7842 = vld [vmem:[%s4518 + $0x2b1] sm:$0xff]
    %v7843 = vld [vmem:[%s4518 + $0x2c9] sm:$0xff]
    %v7844 = vld [vmem:[%s4518 + $0x2d1] sm:$0xff]
    %v7845 = vld [vmem:[%s4518 + $0x2e9] sm:$0xff]
    %v7846 = vld [vmem:[%s4518 + $0x2f1] sm:$0xff]
    %v7847 = vld [vmem:[%s4518 + $0x309] sm:$0xff]
    %v7848 = vld [vmem:[%s4518 + $0x311] sm:$0xff]
    %v7849 = vld [vmem:[%s4518 + $0x329] sm:$0xff]
    %v7850 = vld [vmem:[%s4518 + $0x331] sm:$0xff]
    %v7851 = vld [vmem:[%s4518 + $0x349] sm:$0xff]
    %v7852 = vld [vmem:[%s4518 + $0x351] sm:$0xff]
    %v7853 = vld [vmem:[%s4518 + $0x369] sm:$0xff]
    %v7854 = vld [vmem:[%s4518 + $0x371] sm:$0xff]
    %v7855 = vld [vmem:[%s4518 + $0x389] sm:$0xff]
    %v7856 = vld [vmem:[%s4518 + $0x391] sm:$0xff]
    %v7857 = vld [vmem:[%s4518 + $0x3a9] sm:$0xff]
    %v7858 = vld [vmem:[%s4518 + $0x3b1] sm:$0xff]
    %v7859 = vld [vmem:[%s4518 + $0x3c9] sm:$0xff]
    %v7860 = vld [vmem:[%s4518 + $0x3d1] sm:$0xff]
    %v7861 = vld [vmem:[%s4518 + $0x3e9] sm:$0xff]
    %v7862 = vld [vmem:[%s4518 + $0x3f1] sm:$0xff]
    %v7863 = vld [vmem:[%s4518 + $0x409] sm:$0xff]
    %v7864 = vld [vmem:[%s4518 + $0x411] sm:$0xff]
    %v7865 = vld [vmem:[%s4518 + $0x429] sm:$0xff]
    %v7866 = vld [vmem:[%s4518 + $0x431] sm:$0xff]
    %v7867 = vpack.c.bf16 %v7804, %v7803
    %v7868 = vpack.c.bf16 %v7806, %v7805
    %v7869 = vpack.c.bf16 %v7808, %v7807
    %v7870 = vpack.c.bf16 %v7810, %v7809
    %v7871 = vpack.c.bf16 %v7812, %v7811
    %v7872 = vpack.c.bf16 %v7814, %v7813
    %v7873 = vpack.c.bf16 %v7816, %v7815
    %v7874 = vpack.c.bf16 %v7818, %v7817
    %v7875 = vpack.c.bf16 %v7820, %v7819
    %v7876 = vpack.c.bf16 %v7822, %v7821
    %v7877 = vpack.c.bf16 %v7824, %v7823
    %v7878 = vpack.c.bf16 %v7826, %v7825
    %v7879 = vpack.c.bf16 %v7828, %v7827
    %v7880 = vpack.c.bf16 %v7830, %v7829
    %v7881 = vpack.c.bf16 %v7832, %v7831
    %v7882 = vpack.c.bf16 %v7834, %v7833
    %v7883 = vpack.c.bf16 %v7836, %v7835
    %v7884 = vpack.c.bf16 %v7838, %v7837
    %v7885 = vpack.c.bf16 %v7840, %v7839
    %v7886 = vpack.c.bf16 %v7842, %v7841
    %v7887 = vpack.c.bf16 %v7844, %v7843
    %v7888 = vpack.c.bf16 %v7846, %v7845
    %v7889 = vpack.c.bf16 %v7848, %v7847
    %v7890 = vpack.c.bf16 %v7850, %v7849
    %v7891 = vpack.c.bf16 %v7852, %v7851
    %v7892 = vpack.c.bf16 %v7854, %v7853
    %v7893 = vpack.c.bf16 %v7856, %v7855
    %v7894 = vpack.c.bf16 %v7858, %v7857
    %v7895 = vpack.c.bf16 %v7860, %v7859
    %v7896 = vpack.c.bf16 %v7862, %v7861
    %v7897 = vpack.c.bf16 %v7864, %v7863
    %v7898 = vpack.c.bf16 %v7866, %v7865
    %7931 = vrot.lane.b32.xlu0 %v7867, 64
    %v7932 = vpop.permute.xlu0 %7931
    %7933 = vrot.lane.b32.xlu0 %v7868, 64
    %v7934 = vpop.permute.xlu0 %7933
    %7935 = vrot.lane.b32.xlu0 %v7869, 64
    %v7936 = vpop.permute.xlu0 %7935
    %7937 = vrot.lane.b32.xlu0 %v7870, 64
    %v7938 = vpop.permute.xlu0 %7937
    %7939 = vrot.lane.b32.xlu0 %v7871, 64
    %v7940 = vpop.permute.xlu0 %7939
    %7941 = vrot.lane.b32.xlu0 %v7872, 64
    %v7942 = vpop.permute.xlu0 %7941
    %7943 = vrot.lane.b32.xlu0 %v7873, 64
    %v7944 = vpop.permute.xlu0 %7943
    %7945 = vrot.lane.b32.xlu0 %v7874, 64
    %v7946 = vpop.permute.xlu0 %7945
    %7947 = vrot.lane.b32.xlu0 %v7875, 64
    %v7948 = vpop.permute.xlu0 %7947
    %7949 = vrot.lane.b32.xlu0 %v7876, 64
    %v7950 = vpop.permute.xlu0 %7949
    %7951 = vrot.lane.b32.xlu0 %v7877, 64
    %v7952 = vpop.permute.xlu0 %7951
    %7953 = vrot.lane.b32.xlu0 %v7878, 64
    %v7954 = vpop.permute.xlu0 %7953
    %7955 = vrot.lane.b32.xlu0 %v7879, 64
    %v7956 = vpop.permute.xlu0 %7955
    %7957 = vrot.lane.b32.xlu0 %v7880, 64
    %v7958 = vpop.permute.xlu0 %7957
    %7959 = vrot.lane.b32.xlu0 %v7881, 64
    %v7960 = vpop.permute.xlu0 %7959
    %7961 = vrot.lane.b32.xlu0 %v7882, 64
    %v7962 = vpop.permute.xlu0 %7961
    %7963 = vrot.lane.b32.xlu0 %v7883, 64
    %v7964 = vpop.permute.xlu0 %7963
    %7965 = vrot.lane.b32.xlu0 %v7884, 64
    %v7966 = vpop.permute.xlu0 %7965
    %7967 = vrot.lane.b32.xlu0 %v7885, 64
    %v7968 = vpop.permute.xlu0 %7967
    %7969 = vrot.lane.b32.xlu0 %v7886, 64
    %v7970 = vpop.permute.xlu0 %7969
    %7971 = vrot.lane.b32.xlu0 %v7887, 64
    %v7972 = vpop.permute.xlu0 %7971
    %7973 = vrot.lane.b32.xlu0 %v7888, 64
    %v7974 = vpop.permute.xlu0 %7973
    %7975 = vrot.lane.b32.xlu0 %v7889, 64
    %v7976 = vpop.permute.xlu0 %7975
    %7977 = vrot.lane.b32.xlu0 %v7890, 64
    %v7978 = vpop.permute.xlu0 %7977
    %7979 = vrot.lane.b32.xlu0 %v7891, 64
    %v7980 = vpop.permute.xlu0 %7979
    %7981 = vrot.lane.b32.xlu0 %v7892, 64
    %v7982 = vpop.permute.xlu0 %7981
    %7983 = vrot.lane.b32.xlu0 %v7893, 64
    %v7984 = vpop.permute.xlu0 %7983
    %7985 = vrot.lane.b32.xlu0 %v7894, 64
    %v7986 = vpop.permute.xlu0 %7985
    %7987 = vrot.lane.b32.xlu0 %v7895, 64
    %v7988 = vpop.permute.xlu0 %7987
    %7989 = vrot.lane.b32.xlu0 %v7896, 64
    %v7990 = vpop.permute.xlu0 %7989
    %7991 = vrot.lane.b32.xlu0 %v7897, 64
    %v7992 = vpop.permute.xlu0 %7991
    %7993 = vrot.lane.b32.xlu0 %v7898, 64
    %v7994 = vpop.permute.xlu0 %7993
    %8027 = vst.msk [vmem:[#allocation5] sm:$0xff] %vm5257, %v7932
    %8028 = vst.msk [vmem:[#allocation5 + $0x10] sm:$0xff] %vm5257, %v7934
    %8029 = vst.msk [vmem:[#allocation5 + $0x20] sm:$0xff] %vm5257, %v7936
    %8030 = vst.msk [vmem:[#allocation5 + $0x30] sm:$0xff] %vm5257, %v7938
    %8031 = vst.msk [vmem:[#allocation5 + $0x40] sm:$0xff] %vm5257, %v7940
    %8032 = vst.msk [vmem:[#allocation5 + $0x50] sm:$0xff] %vm5257, %v7942
    %8033 = vst.msk [vmem:[#allocation5 + $0x60] sm:$0xff] %vm5257, %v7944
    %8034 = vst.msk [vmem:[#allocation5 + $0x70] sm:$0xff] %vm5257, %v7946
    %8035 = vst.msk [vmem:[#allocation5 + $0x80] sm:$0xff] %vm5257, %v7948
    %8036 = vst.msk [vmem:[#allocation5 + $0x90] sm:$0xff] %vm5257, %v7950
    %8037 = vst.msk [vmem:[#allocation5 + $0xa0] sm:$0xff] %vm5257, %v7952
    %8038 = vst.msk [vmem:[#allocation5 + $0xb0] sm:$0xff] %vm5257, %v7954
    %8039 = vst.msk [vmem:[#allocation5 + $0xc0] sm:$0xff] %vm5257, %v7956
    %8040 = vst.msk [vmem:[#allocation5 + $0xd0] sm:$0xff] %vm5257, %v7958
    %8041 = vst.msk [vmem:[#allocation5 + $0xe0] sm:$0xff] %vm5257, %v7960
    %8042 = vst.msk [vmem:[#allocation5 + $0xf0] sm:$0xff] %vm5257, %v7962
    %8043 = vst.msk [vmem:[#allocation5 + $0x100] sm:$0xff] %vm5257, %v7964
    %8044 = vst.msk [vmem:[#allocation5 + $0x110] sm:$0xff] %vm5257, %v7966
    %8045 = vst.msk [vmem:[#allocation5 + $0x120] sm:$0xff] %vm5257, %v7968
    %8046 = vst.msk [vmem:[#allocation5 + $0x130] sm:$0xff] %vm5257, %v7970
    %8047 = vst.msk [vmem:[#allocation5 + $0x140] sm:$0xff] %vm5257, %v7972
    %8048 = vst.msk [vmem:[#allocation5 + $0x150] sm:$0xff] %vm5257, %v7974
    %8049 = vst.msk [vmem:[#allocation5 + $0x160] sm:$0xff] %vm5257, %v7976
    %8050 = vst.msk [vmem:[#allocation5 + $0x170] sm:$0xff] %vm5257, %v7978
    %8051 = vst.msk [vmem:[#allocation5 + $0x180] sm:$0xff] %vm5257, %v7980
    %8052 = vst.msk [vmem:[#allocation5 + $0x190] sm:$0xff] %vm5257, %v7982
    %8053 = vst.msk [vmem:[#allocation5 + $0x1a0] sm:$0xff] %vm5257, %v7984
    %8054 = vst.msk [vmem:[#allocation5 + $0x1b0] sm:$0xff] %vm5257, %v7986
    %8055 = vst.msk [vmem:[#allocation5 + $0x1c0] sm:$0xff] %vm5257, %v7988
    %8056 = vst.msk [vmem:[#allocation5 + $0x1d0] sm:$0xff] %vm5257, %v7990
    %8057 = vst.msk [vmem:[#allocation5 + $0x1e0] sm:$0xff] %vm5257, %v7992
    %8058 = vst.msk [vmem:[#allocation5 + $0x1f0] sm:$0xff] %vm5257, %v7994
    %v8059 = vld [vmem:[#allocation5] sm:$0xff]
    %v8060 = vld [vmem:[#allocation5 + $0x10] sm:$0xff]
    %v8061 = vld [vmem:[#allocation5 + $0x20] sm:$0xff]
    %v8062 = vld [vmem:[#allocation5 + $0x30] sm:$0xff]
    %v8063 = vld [vmem:[#allocation5 + $0x40] sm:$0xff]
    %v8064 = vld [vmem:[#allocation5 + $0x50] sm:$0xff]
    %v8065 = vld [vmem:[#allocation5 + $0x60] sm:$0xff]
    %v8066 = vld [vmem:[#allocation5 + $0x70] sm:$0xff]
    %v8067 = vld [vmem:[#allocation5 + $0x80] sm:$0xff]
    %v8068 = vld [vmem:[#allocation5 + $0x90] sm:$0xff]
    %v8069 = vld [vmem:[#allocation5 + $0xa0] sm:$0xff]
    %v8070 = vld [vmem:[#allocation5 + $0xb0] sm:$0xff]
    %v8071 = vld [vmem:[#allocation5 + $0xc0] sm:$0xff]
    %v8072 = vld [vmem:[#allocation5 + $0xd0] sm:$0xff]
    %v8073 = vld [vmem:[#allocation5 + $0xe0] sm:$0xff]
    %v8074 = vld [vmem:[#allocation5 + $0xf0] sm:$0xff]
    %v8075 = vld [vmem:[#allocation5 + $0x100] sm:$0xff]
    %v8076 = vld [vmem:[#allocation5 + $0x110] sm:$0xff]
    %v8077 = vld [vmem:[#allocation5 + $0x120] sm:$0xff]
    %v8078 = vld [vmem:[#allocation5 + $0x130] sm:$0xff]
    %v8079 = vld [vmem:[#allocation5 + $0x140] sm:$0xff]
    %v8080 = vld [vmem:[#allocation5 + $0x150] sm:$0xff]
    %v8081 = vld [vmem:[#allocation5 + $0x160] sm:$0xff]
    %v8082 = vld [vmem:[#allocation5 + $0x170] sm:$0xff]
    %v8083 = vld [vmem:[#allocation5 + $0x180] sm:$0xff]
    %v8084 = vld [vmem:[#allocation5 + $0x190] sm:$0xff]
    %v8085 = vld [vmem:[#allocation5 + $0x1a0] sm:$0xff]
    %v8086 = vld [vmem:[#allocation5 + $0x1b0] sm:$0xff]
    %v8087 = vld [vmem:[#allocation5 + $0x1c0] sm:$0xff]
    %v8088 = vld [vmem:[#allocation5 + $0x1d0] sm:$0xff]
    %v8089 = vld [vmem:[#allocation5 + $0x1e0] sm:$0xff]
    %v8090 = vld [vmem:[#allocation5 + $0x1f0] sm:$0xff]
    %v8091 = vld [vmem:[%s5] sm:$0xf]
    %v8092 = vld [vmem:[%s5 + $0x4] sm:$0xf]
    %v8093 = vld [vmem:[%s5 + $0x8] sm:$0xf]
    %v8094 = vld [vmem:[%s5 + $0xc] sm:$0xf]
    %v8095 = vld [vmem:[%s5 + $0x10] sm:$0xf]
    %v8096 = vld [vmem:[%s5 + $0x14] sm:$0xf]
    %v8097 = vld [vmem:[%s5 + $0x18] sm:$0xf]
    %v8098 = vld [vmem:[%s5 + $0x1c] sm:$0xf]
    %v8099 = vld [vmem:[%s5 + $0x20] sm:$0xf]
    %v8100 = vld [vmem:[%s6] sm:$0x1]
    %v8102 = vlaneseq
    %v8103 = vshrl.u32 %v8102, 7
    %v8104 = vsub.s32 0, %v8103
    %v8105 = vrot.slane %v8100, %v8104
    %v8116 = vunpack.c.l.b16 %v8091
    %v8117 = vunpack.c.l.b16 %v8092
    %v8118 = vunpack.c.l.b16 %v8093
    %v8119 = vunpack.c.l.b16 %v8094
    %v8120 = vunpack.c.l.b16 %v8095
    %v8121 = vunpack.c.l.b16 %v8096
    %v8122 = vunpack.c.l.b16 %v8097
    %v8123 = vunpack.c.l.b16 %v8098
    %v8124 = vunpack.c.l.b16 %v8099
    %v8125 = vpack.c.b16 %v8117, %v8116
    %v8126 = vpack.c.b16 %v8119, %v8118
    %v8127 = vpack.c.b16 %v8121, %v8120
    %v8128 = vpack.c.b16 %v8123, %v8122
    %v8129 = vpack.c.b16 %v8124, %v8124
    %v8135 = vsel %vm5365, %v8059, 0
    %v8138 = vsel %vm5365, %v8060, 0
    %v8141 = vsel %vm5365, %v8061, 0
    %v8144 = vsel %vm5365, %v8062, 0
    %v8147 = vsel %vm5365, %v8063, 0
    %v8150 = vsel %vm5365, %v8064, 0
    %v8153 = vsel %vm5365, %v8065, 0
    %v8156 = vsel %vm5365, %v8066, 0
    %v8159 = vsel %vm5365, %v8067, 0
    %v8162 = vsel %vm5365, %v8068, 0
    %v8165 = vsel %vm5365, %v8069, 0
    %v8168 = vsel %vm5365, %v8070, 0
    %v8171 = vsel %vm5365, %v8071, 0
    %v8174 = vsel %vm5365, %v8072, 0
    %v8177 = vsel %vm5365, %v8073, 0
    %v8180 = vsel %vm5365, %v8074, 0
    %v8183 = vsel %vm5365, %v8075, 0
    %v8186 = vsel %vm5365, %v8076, 0
    %v8189 = vsel %vm5365, %v8077, 0
    %v8192 = vsel %vm5365, %v8078, 0
    %v8195 = vsel %vm5365, %v8079, 0
    %v8198 = vsel %vm5365, %v8080, 0
    %v8201 = vsel %vm5365, %v8081, 0
    %v8204 = vsel %vm5365, %v8082, 0
    %v8207 = vsel %vm5365, %v8083, 0
    %v8210 = vsel %vm5365, %v8084, 0
    %v8213 = vsel %vm5365, %v8085, 0
    %v8216 = vsel %vm5365, %v8086, 0
    %v8219 = vsel %vm5365, %v8087, 0
    %v8222 = vsel %vm5365, %v8088, 0
    %v8225 = vsel %vm5365, %v8089, 0
    %v8228 = vsel %vm5365, %v8090, 0
    %v8231 = vsel %vm5462, %v8129, 0
    %8233 = vmatprep.subr.bf16.mxu0 0
    %8234 = vmatpush1.bf16.msra.mxu0 %v8125
    %8235 = vmatprep.subr.bf16.mxu0 0
    %8236 = vmatpush1.bf16.msra.mxu0 %v8126
    %8237 = vmatprep.subr.bf16.mxu0 0
    %8238 = vmatpush1.bf16.msra.mxu0 %v8127
    %8239 = vmatprep.subr.bf16.mxu0 0
    %8240 = vmatpush1.bf16.msra.mxu0 %v8128
    %8241 = vmatprep.subr.bf16.mxu0 0
    %8242 = vmatpush1.bf16.msra.mxu0 %v8231
    %8243 = vmatprep.subr.bf16.mxu0 0
    %8244 = vmatpush1.bf16.msra.mxu0 0
    %8245 = vmatprep.subr.bf16.mxu0 0
    %8246 = vmatpush1.bf16.msra.mxu0 0
    %8247 = vmatprep.subr.bf16.mxu0 0
    %8248 = vmatpush1.bf16.msra.mxu0 0
    %8249 = vmatprep.subr.bf16.mxu0 0
    %8250 = vmatpush1.bf16.msra.mxu0 0
    %8251 = vmatprep.subr.bf16.mxu0 0
    %8252 = vmatpush1.bf16.msra.mxu0 0
    %8253 = vmatprep.subr.bf16.mxu0 0
    %8254 = vmatpush1.bf16.msra.mxu0 0
    %8255 = vmatprep.subr.bf16.mxu0 0
    %8256 = vmatpush1.bf16.msra.mxu0 0
    %8257 = vmatprep.subr.bf16.mxu0 0
    %8258 = vmatpush1.bf16.msra.mxu0 0
    %8259 = vmatprep.subr.bf16.mxu0 0
    %8260 = vmatpush1.bf16.msra.mxu0 0
    %8261 = vmatprep.subr.bf16.mxu0 0
    %8262 = vmatpush1.bf16.msra.mxu0 0
    %8263 = vmatprep.subr.bf16.mxu0 0
    %8264 = vmatpush1.bf16.msra.mxu0 0
    %8265 = vmatprep.mubr.bf16.mxu0 0
    %8266 = vmatmul.mubr.bf16.gmra.mrb[0].mxu0 %v8135
    %v8267 = vpop.f32.mrb[0].mxu0
    %v8268 = vadd.f32 %v8105, %v8267
    %v8269 = vpop.f32.mrb[0].mxu0
    %v8270 = vpop.f32.mrb[0].mxu0
    %v8271 = vadd.f32 %v8105, %v8270
    %v8272 = vpop.f32.mrb[0].mxu0
    %8273 = vmatprep.mubr.bf16.mxu0 0
    %8274 = vmatmul.mubr.bf16.gmra.mrb[0].mxu0 %v8138
    %v8275 = vpop.f32.mrb[0].mxu0
    %v8276 = vadd.f32 %v8105, %v8275
    %v8277 = vpop.f32.mrb[0].mxu0
    %v8278 = vpop.f32.mrb[0].mxu0
    %v8279 = vadd.f32 %v8105, %v8278
    %v8280 = vpop.f32.mrb[0].mxu0
    %8281 = vmatprep.mubr.bf16.mxu0 0
    %8282 = vmatmul.mubr.bf16.gmra.mrb[0].mxu0 %v8141
    %v8283 = vpop.f32.mrb[0].mxu0
    %v8284 = vadd.f32 %v8105, %v8283
    %v8285 = vpop.f32.mrb[0].mxu0
    %v8286 = vpop.f32.mrb[0].mxu0
    %v8287 = vadd.f32 %v8105, %v8286
    %v8288 = vpop.f32.mrb[0].mxu0
    %8289 = vmatprep.mubr.bf16.mxu0 0
    %8290 = vmatmul.mubr.bf16.gmra.mrb[0].mxu0 %v8144
    %v8291 = vpop.f32.mrb[0].mxu0
    %v8292 = vadd.f32 %v8105, %v8291
    %v8293 = vpop.f32.mrb[0].mxu0
    %v8294 = vpop.f32.mrb[0].mxu0
    %v8295 = vadd.f32 %v8105, %v8294
    %v8296 = vpop.f32.mrb[0].mxu0
    %8297 = vmatprep.mubr.bf16.mxu0 0
    %8298 = vmatmul.mubr.bf16.gmra.mrb[0].mxu0 %v8147
    %v8299 = vpop.f32.mrb[0].mxu0
    %v8300 = vadd.f32 %v8105, %v8299
    %v8301 = vpop.f32.mrb[0].mxu0
    %v8302 = vpop.f32.mrb[0].mxu0
    %v8303 = vadd.f32 %v8105, %v8302
    %v8304 = vpop.f32.mrb[0].mxu0
    %8305 = vmatprep.mubr.bf16.mxu0 0
    %8306 = vmatmul.mubr.bf16.gmra.mrb[0].mxu0 %v8150
    %v8307 = vpop.f32.mrb[0].mxu0
    %v8308 = vadd.f32 %v8105, %v8307
    %v8309 = vpop.f32.mrb[0].mxu0
    %v8310 = vpop.f32.mrb[0].mxu0
    %v8311 = vadd.f32 %v8105, %v8310
    %v8312 = vpop.f32.mrb[0].mxu0
    %8313 = vmatprep.mubr.bf16.mxu0 0
    %8314 = vmatmul.mubr.bf16.gmra.mrb[0].mxu0 %v8153
    %v8315 = vpop.f32.mrb[0].mxu0
    %v8316 = vadd.f32 %v8105, %v8315
    %v8317 = vpop.f32.mrb[0].mxu0
    %v8318 = vpop.f32.mrb[0].mxu0
    %v8319 = vadd.f32 %v8105, %v8318
    %v8320 = vpop.f32.mrb[0].mxu0
    %8321 = vmatprep.mubr.bf16.mxu0 0
    %8322 = vmatmul.mubr.bf16.gmra.mrb[0].mxu0 %v8156
    %v8323 = vpop.f32.mrb[0].mxu0
    %v8324 = vadd.f32 %v8105, %v8323
    %v8325 = vpop.f32.mrb[0].mxu0
    %v8326 = vpop.f32.mrb[0].mxu0
    %v8327 = vadd.f32 %v8105, %v8326
    %v8328 = vpop.f32.mrb[0].mxu0
    %8329 = vmatprep.mubr.bf16.mxu0 0
    %8330 = vmatmul.mubr.bf16.gmra.mrb[0].mxu0 %v8159
    %v8331 = vpop.f32.mrb[0].mxu0
    %v8332 = vadd.f32 %v8105, %v8331
    %v8333 = vpop.f32.mrb[0].mxu0
    %v8334 = vpop.f32.mrb[0].mxu0
    %v8335 = vadd.f32 %v8105, %v8334
    %v8336 = vpop.f32.mrb[0].mxu0
    %8337 = vmatprep.mubr.bf16.mxu0 0
    %8338 = vmatmul.mubr.bf16.gmra.mrb[0].mxu0 %v8162
    %v8339 = vpop.f32.mrb[0].mxu0
    %v8340 = vadd.f32 %v8105, %v8339
    %v8341 = vpop.f32.mrb[0].mxu0
    %v8342 = vpop.f32.mrb[0].mxu0
    %v8343 = vadd.f32 %v8105, %v8342
    %v8344 = vpop.f32.mrb[0].mxu0
    %8345 = vmatprep.mubr.bf16.mxu0 0
    %8346 = vmatmul.mubr.bf16.gmra.mrb[0].mxu0 %v8165
    %v8347 = vpop.f32.mrb[0].mxu0
    %v8348 = vadd.f32 %v8105, %v8347
    %v8349 = vpop.f32.mrb[0].mxu0
    %v8350 = vpop.f32.mrb[0].mxu0
    %v8351 = vadd.f32 %v8105, %v8350
    %v8352 = vpop.f32.mrb[0].mxu0
    %8353 = vmatprep.mubr.bf16.mxu0 0
    %8354 = vmatmul.mubr.bf16.gmra.mrb[0].mxu0 %v8168
    %v8355 = vpop.f32.mrb[0].mxu0
    %v8356 = vadd.f32 %v8105, %v8355
    %v8357 = vpop.f32.mrb[0].mxu0
    %v8358 = vpop.f32.mrb[0].mxu0
    %v8359 = vadd.f32 %v8105, %v8358
    %v8360 = vpop.f32.mrb[0].mxu0
    %8361 = vmatprep.mubr.bf16.mxu0 0
    %8362 = vmatmul.mubr.bf16.gmra.mrb[0].mxu0 %v8171
    %v8363 = vpop.f32.mrb[0].mxu0
    %v8364 = vadd.f32 %v8105, %v8363
    %v8365 = vpop.f32.mrb[0].mxu0
    %v8366 = vpop.f32.mrb[0].mxu0
    %v8367 = vadd.f32 %v8105, %v8366
    %v8368 = vpop.f32.mrb[0].mxu0
    %8369 = vmatprep.mubr.bf16.mxu0 0
    %8370 = vmatmul.mubr.bf16.gmra.mrb[0].mxu0 %v8174
    %v8371 = vpop.f32.mrb[0].mxu0
    %v8372 = vadd.f32 %v8105, %v8371
    %v8373 = vpop.f32.mrb[0].mxu0
    %v8374 = vpop.f32.mrb[0].mxu0
    %v8375 = vadd.f32 %v8105, %v8374
    %v8376 = vpop.f32.mrb[0].mxu0
    %8377 = vmatprep.mubr.bf16.mxu0 0
    %8378 = vmatmul.mubr.bf16.gmra.mrb[0].mxu0 %v8177
    %v8379 = vpop.f32.mrb[0].mxu0
    %v8380 = vadd.f32 %v8105, %v8379
    %v8381 = vpop.f32.mrb[0].mxu0
    %v8382 = vpop.f32.mrb[0].mxu0
    %v8383 = vadd.f32 %v8105, %v8382
    %v8384 = vpop.f32.mrb[0].mxu0
    %8385 = vmatprep.mubr.bf16.mxu0 0
    %8386 = vmatmul.mubr.bf16.gmra.mrb[0].mxu0 %v8180
    %v8387 = vpop.f32.mrb[0].mxu0
    %v8388 = vadd.f32 %v8105, %v8387
    %v8389 = vpop.f32.mrb[0].mxu0
    %v8390 = vpop.f32.mrb[0].mxu0
    %v8391 = vadd.f32 %v8105, %v8390
    %v8392 = vpop.f32.mrb[0].mxu0
    %8393 = vmatprep.mubr.bf16.mxu0 0
    %8394 = vmatmul.mubr.bf16.gmra.mrb[0].mxu0 %v8183
    %v8395 = vpop.f32.mrb[0].mxu0
    %v8396 = vadd.f32 %v8105, %v8395
    %v8397 = vpop.f32.mrb[0].mxu0
    %v8398 = vpop.f32.mrb[0].mxu0
    %v8399 = vadd.f32 %v8105, %v8398
    %v8400 = vpop.f32.mrb[0].mxu0
    %8401 = vmatprep.mubr.bf16.mxu0 0
    %8402 = vmatmul.mubr.bf16.gmra.mrb[0].mxu0 %v8186
    %v8403 = vpop.f32.mrb[0].mxu0
    %v8404 = vadd.f32 %v8105, %v8403
    %v8405 = vpop.f32.mrb[0].mxu0
    %v8406 = vpop.f32.mrb[0].mxu0
    %v8407 = vadd.f32 %v8105, %v8406
    %v8408 = vpop.f32.mrb[0].mxu0
    %8409 = vmatprep.mubr.bf16.mxu0 0
    %8410 = vmatmul.mubr.bf16.gmra.mrb[0].mxu0 %v8189
    %v8411 = vpop.f32.mrb[0].mxu0
    %v8412 = vadd.f32 %v8105, %v8411
    %v8413 = vpop.f32.mrb[0].mxu0
    %v8414 = vpop.f32.mrb[0].mxu0
    %v8415 = vadd.f32 %v8105, %v8414
    %v8416 = vpop.f32.mrb[0].mxu0
    %8417 = vmatprep.mubr.bf16.mxu0 0
    %8418 = vmatmul.mubr.bf16.gmra.mrb[0].mxu0 %v8192
    %v8419 = vpop.f32.mrb[0].mxu0
    %v8420 = vadd.f32 %v8105, %v8419
    %v8421 = vpop.f32.mrb[0].mxu0
    %v8422 = vpop.f32.mrb[0].mxu0
    %v8423 = vadd.f32 %v8105, %v8422
    %v8424 = vpop.f32.mrb[0].mxu0
    %8425 = vmatprep.mubr.bf16.mxu0 0
    %8426 = vmatmul.mubr.bf16.gmra.mrb[0].mxu0 %v8195
    %v8427 = vpop.f32.mrb[0].mxu0
    %v8428 = vadd.f32 %v8105, %v8427
    %v8429 = vpop.f32.mrb[0].mxu0
    %v8430 = vpop.f32.mrb[0].mxu0
    %v8431 = vadd.f32 %v8105, %v8430
    %v8432 = vpop.f32.mrb[0].mxu0
    %8433 = vmatprep.mubr.bf16.mxu0 0
    %8434 = vmatmul.mubr.bf16.gmra.mrb[0].mxu0 %v8198
    %v8435 = vpop.f32.mrb[0].mxu0
    %v8436 = vadd.f32 %v8105, %v8435
    %v8437 = vpop.f32.mrb[0].mxu0
    %v8438 = vpop.f32.mrb[0].mxu0
    %v8439 = vadd.f32 %v8105, %v8438
    %v8440 = vpop.f32.mrb[0].mxu0
    %8441 = vmatprep.mubr.bf16.mxu0 0
    %8442 = vmatmul.mubr.bf16.gmra.mrb[0].mxu0 %v8201
    %v8443 = vpop.f32.mrb[0].mxu0
    %v8444 = vadd.f32 %v8105, %v8443
    %v8445 = vpop.f32.mrb[0].mxu0
    %v8446 = vpop.f32.mrb[0].mxu0
    %v8447 = vadd.f32 %v8105, %v8446
    %v8448 = vpop.f32.mrb[0].mxu0
    %8449 = vmatprep.mubr.bf16.mxu0 0
    %8450 = vmatmul.mubr.bf16.gmra.mrb[0].mxu0 %v8204
    %v8451 = vpop.f32.mrb[0].mxu0
    %v8452 = vadd.f32 %v8105, %v8451
    %v8453 = vpop.f32.mrb[0].mxu0
    %v8454 = vpop.f32.mrb[0].mxu0
    %v8455 = vadd.f32 %v8105, %v8454
    %v8456 = vpop.f32.mrb[0].mxu0
    %8457 = vmatprep.mubr.bf16.mxu0 0
    %8458 = vmatmul.mubr.bf16.gmra.mrb[0].mxu0 %v8207
    %v8459 = vpop.f32.mrb[0].mxu0
    %v8460 = vadd.f32 %v8105, %v8459
    %v8461 = vpop.f32.mrb[0].mxu0
    %v8462 = vpop.f32.mrb[0].mxu0
    %v8463 = vadd.f32 %v8105, %v8462
    %v8464 = vpop.f32.mrb[0].mxu0
    %8465 = vmatprep.mubr.bf16.mxu0 0
    %8466 = vmatmul.mubr.bf16.gmra.mrb[0].mxu0 %v8210
    %v8467 = vpop.f32.mrb[0].mxu0
    %v8468 = vadd.f32 %v8105, %v8467
    %v8469 = vpop.f32.mrb[0].mxu0
    %v8470 = vpop.f32.mrb[0].mxu0
    %v8471 = vadd.f32 %v8105, %v8470
    %v8472 = vpop.f32.mrb[0].mxu0
    %8473 = vmatprep.mubr.bf16.mxu0 0
    %8474 = vmatmul.mubr.bf16.gmra.mrb[0].mxu0 %v8213
    %v8475 = vpop.f32.mrb[0].mxu0
    %v8476 = vadd.f32 %v8105, %v8475
    %v8477 = vpop.f32.mrb[0].mxu0
    %v8478 = vpop.f32.mrb[0].mxu0
    %v8479 = vadd.f32 %v8105, %v8478
    %v8480 = vpop.f32.mrb[0].mxu0
    %8481 = vmatprep.mubr.bf16.mxu0 0
    %8482 = vmatmul.mubr.bf16.gmra.mrb[0].mxu0 %v8216
    %v8483 = vpop.f32.mrb[0].mxu0
    %v8484 = vadd.f32 %v8105, %v8483
    %v8485 = vpop.f32.mrb[0].mxu0
    %v8486 = vpop.f32.mrb[0].mxu0
    %v8487 = vadd.f32 %v8105, %v8486
    %v8488 = vpop.f32.mrb[0].mxu0
    %8489 = vmatprep.mubr.bf16.mxu0 0
    %8490 = vmatmul.mubr.bf16.gmra.mrb[0].mxu0 %v8219
    %v8491 = vpop.f32.mrb[0].mxu0
    %v8492 = vadd.f32 %v8105, %v8491
    %v8493 = vpop.f32.mrb[0].mxu0
    %v8494 = vpop.f32.mrb[0].mxu0
    %v8495 = vadd.f32 %v8105, %v8494
    %v8496 = vpop.f32.mrb[0].mxu0
    %8497 = vmatprep.mubr.bf16.mxu0 0
    %8498 = vmatmul.mubr.bf16.gmra.mrb[0].mxu0 %v8222
    %v8499 = vpop.f32.mrb[0].mxu0
    %v8500 = vadd.f32 %v8105, %v8499
    %v8501 = vpop.f32.mrb[0].mxu0
    %v8502 = vpop.f32.mrb[0].mxu0
    %v8503 = vadd.f32 %v8105, %v8502
    %v8504 = vpop.f32.mrb[0].mxu0
    %8505 = vmatprep.mubr.bf16.mxu0 0
    %8506 = vmatmul.mubr.bf16.gmra.mrb[0].mxu0 %v8225
    %v8507 = vpop.f32.mrb[0].mxu0
    %v8508 = vadd.f32 %v8105, %v8507
    %v8509 = vpop.f32.mrb[0].mxu0
    %v8510 = vpop.f32.mrb[0].mxu0
    %v8511 = vadd.f32 %v8105, %v8510
    %v8512 = vpop.f32.mrb[0].mxu0
    %8513 = vmatprep.mubr.bf16.mxu0 0
    %8514 = vmatmul.mubr.bf16.gmra.mrb[0].mxu0 %v8228
    %v8515 = vpop.f32.mrb[0].mxu0
    %v8516 = vadd.f32 %v8105, %v8515
    %v8517 = vpop.f32.mrb[0].mxu0
    %v8518 = vpop.f32.mrb[0].mxu0
    %v8519 = vadd.f32 %v8105, %v8518
    %v8520 = vpop.f32.mrb[0].mxu0
    %8521 = vdwg.mxu0
    %v8522 = vadd.f32 %v8268, %v2894
    %v8523 = vadd.f32 %v8271, %v2895
    %v8524 = vadd.f32 %v8276, %v2896
    %v8525 = vadd.f32 %v8279, %v2897
    %v8526 = vadd.f32 %v8284, %v2898
    %v8527 = vadd.f32 %v8287, %v2899
    %v8528 = vadd.f32 %v8292, %v2900
    %v8529 = vadd.f32 %v8295, %v2901
    %v8530 = vadd.f32 %v8300, %v2902
    %v8531 = vadd.f32 %v8303, %v2903
    %v8532 = vadd.f32 %v8308, %v2904
    %v8533 = vadd.f32 %v8311, %v2905
    %v8534 = vadd.f32 %v8316, %v2906
    %v8535 = vadd.f32 %v8319, %v2907
    %v8536 = vadd.f32 %v8324, %v2908
    %v8537 = vadd.f32 %v8327, %v2909
    %v8538 = vadd.f32 %v8332, %v2910
    %v8539 = vadd.f32 %v8335, %v2911
    %v8540 = vadd.f32 %v8340, %v2912
    %v8541 = vadd.f32 %v8343, %v2913
    %v8542 = vadd.f32 %v8348, %v2914
    %v8543 = vadd.f32 %v8351, %v2915
    %v8544 = vadd.f32 %v8356, %v2916
    %v8545 = vadd.f32 %v8359, %v2917
    %v8546 = vadd.f32 %v8364, %v2918
    %v8547 = vadd.f32 %v8367, %v2919
    %v8548 = vadd.f32 %v8372, %v2920
    %v8549 = vadd.f32 %v8375, %v2921
    %v8550 = vadd.f32 %v8380, %v2922
    %v8551 = vadd.f32 %v8383, %v2923
    %v8552 = vadd.f32 %v8388, %v2924
    %v8553 = vadd.f32 %v8391, %v2925
    %v8554 = vadd.f32 %v8396, %v2926
    %v8555 = vadd.f32 %v8399, %v2927
    %v8556 = vadd.f32 %v8404, %v2928
    %v8557 = vadd.f32 %v8407, %v2929
    %v8558 = vadd.f32 %v8412, %v2930
    %v8559 = vadd.f32 %v8415, %v2931
    %v8560 = vadd.f32 %v8420, %v2932
    %v8561 = vadd.f32 %v8423, %v2933
    %v8562 = vadd.f32 %v8428, %v2934
    %v8563 = vadd.f32 %v8431, %v2935
    %v8564 = vadd.f32 %v8436, %v2936
    %v8565 = vadd.f32 %v8439, %v2937
    %v8566 = vadd.f32 %v8444, %v2938
    %v8567 = vadd.f32 %v8447, %v2939
    %v8568 = vadd.f32 %v8452, %v2940
    %v8569 = vadd.f32 %v8455, %v2941
    %v8570 = vadd.f32 %v8460, %v2942
    %v8571 = vadd.f32 %v8463, %v2943
    %v8572 = vadd.f32 %v8468, %v2944
    %v8573 = vadd.f32 %v8471, %v2945
    %v8574 = vadd.f32 %v8476, %v2946
    %v8575 = vadd.f32 %v8479, %v2947
    %v8576 = vadd.f32 %v8484, %v2948
    %v8577 = vadd.f32 %v8487, %v2949
    %v8578 = vadd.f32 %v8492, %v2950
    %v8579 = vadd.f32 %v8495, %v2951
    %v8580 = vadd.f32 %v8500, %v2952
    %v8581 = vadd.f32 %v8503, %v2953
    %v8582 = vadd.f32 %v8508, %v2954
    %v8583 = vadd.f32 %v8511, %v2955
    %v8584 = vadd.f32 %v8516, %v2956
    %v8585 = vadd.f32 %v8519, %v2957
    %v8586 = vmax.f32 %v8522, 0.0
    %v8587 = vmax.f32 %v8523, 0.0
    %v8588 = vmax.f32 %v8524, 0.0
    %v8589 = vmax.f32 %v8525, 0.0
    %v8590 = vmax.f32 %v8526, 0.0
    %v8591 = vmax.f32 %v8527, 0.0
    %v8592 = vmax.f32 %v8528, 0.0
    %v8593 = vmax.f32 %v8529, 0.0
    %v8594 = vmax.f32 %v8530, 0.0
    %v8595 = vmax.f32 %v8531, 0.0
    %v8596 = vmax.f32 %v8532, 0.0
    %v8597 = vmax.f32 %v8533, 0.0
    %v8598 = vmax.f32 %v8534, 0.0
    %v8599 = vmax.f32 %v8535, 0.0
    %v8600 = vmax.f32 %v8536, 0.0
    %v8601 = vmax.f32 %v8537, 0.0
    %v8602 = vmax.f32 %v8538, 0.0
    %v8603 = vmax.f32 %v8539, 0.0
    %v8604 = vmax.f32 %v8540, 0.0
    %v8605 = vmax.f32 %v8541, 0.0
    %v8606 = vmax.f32 %v8542, 0.0
    %v8607 = vmax.f32 %v8543, 0.0
    %v8608 = vmax.f32 %v8544, 0.0
    %v8609 = vmax.f32 %v8545, 0.0
    %v8610 = vmax.f32 %v8546, 0.0
    %v8611 = vmax.f32 %v8547, 0.0
    %v8612 = vmax.f32 %v8548, 0.0
    %v8613 = vmax.f32 %v8549, 0.0
    %v8614 = vmax.f32 %v8550, 0.0
    %v8615 = vmax.f32 %v8551, 0.0
    %v8616 = vmax.f32 %v8552, 0.0
    %v8617 = vmax.f32 %v8553, 0.0
    %v8618 = vmax.f32 %v8554, 0.0
    %v8619 = vmax.f32 %v8555, 0.0
    %v8620 = vmax.f32 %v8556, 0.0
    %v8621 = vmax.f32 %v8557, 0.0
    %v8622 = vmax.f32 %v8558, 0.0
    %v8623 = vmax.f32 %v8559, 0.0
    %v8624 = vmax.f32 %v8560, 0.0
    %v8625 = vmax.f32 %v8561, 0.0
    %v8626 = vmax.f32 %v8562, 0.0
    %v8627 = vmax.f32 %v8563, 0.0
    %v8628 = vmax.f32 %v8564, 0.0
    %v8629 = vmax.f32 %v8565, 0.0
    %v8630 = vmax.f32 %v8566, 0.0
    %v8631 = vmax.f32 %v8567, 0.0
    %v8632 = vmax.f32 %v8568, 0.0
    %v8633 = vmax.f32 %v8569, 0.0
    %v8634 = vmax.f32 %v8570, 0.0
    %v8635 = vmax.f32 %v8571, 0.0
    %v8636 = vmax.f32 %v8572, 0.0
    %v8637 = vmax.f32 %v8573, 0.0
    %v8638 = vmax.f32 %v8574, 0.0
    %v8639 = vmax.f32 %v8575, 0.0
    %v8640 = vmax.f32 %v8576, 0.0
    %v8641 = vmax.f32 %v8577, 0.0
    %v8642 = vmax.f32 %v8578, 0.0
    %v8643 = vmax.f32 %v8579, 0.0
    %v8644 = vmax.f32 %v8580, 0.0
    %v8645 = vmax.f32 %v8581, 0.0
    %v8646 = vmax.f32 %v8582, 0.0
    %v8647 = vmax.f32 %v8583, 0.0
    %v8648 = vmax.f32 %v8584, 0.0
    %v8649 = vmax.f32 %v8585, 0.0
    %8650 = vst.msk [vmem:[%s3040 + $0x8] sm:$0xff] %vm2958, %v8586
    %8651 = vst.msk [vmem:[%s3040 + $0x10] sm:$0xff] %vm2958, %v8587
    %8652 = vst.msk [vmem:[%s3040 + $0x28] sm:$0xff] %vm2958, %v8588
    %8653 = vst.msk [vmem:[%s3040 + $0x30] sm:$0xff] %vm2958, %v8589
    %8654 = vst.msk [vmem:[%s3040 + $0x48] sm:$0xff] %vm2958, %v8590
    %8655 = vst.msk [vmem:[%s3040 + $0x50] sm:$0xff] %vm2958, %v8591
    %8656 = vst.msk [vmem:[%s3040 + $0x68] sm:$0xff] %vm2958, %v8592
    %8657 = vst.msk [vmem:[%s3040 + $0x70] sm:$0xff] %vm2958, %v8593
    %8658 = vst.msk [vmem:[%s3040 + $0x88] sm:$0xff] %vm2958, %v8594
    %8659 = vst.msk [vmem:[%s3040 + $0x90] sm:$0xff] %vm2958, %v8595
    %8660 = vst.msk [vmem:[%s3040 + $0xa8] sm:$0xff] %vm2958, %v8596
    %8661 = vst.msk [vmem:[%s3040 + $0xb0] sm:$0xff] %vm2958, %v8597
    %8662 = vst.msk [vmem:[%s3040 + $0xc8] sm:$0xff] %vm2958, %v8598
    %8663 = vst.msk [vmem:[%s3040 + $0xd0] sm:$0xff] %vm2958, %v8599
    %8664 = vst.msk [vmem:[%s3040 + $0xe8] sm:$0xff] %vm2958, %v8600
    %8665 = vst.msk [vmem:[%s3040 + $0xf0] sm:$0xff] %vm2958, %v8601
    %8666 = vst.msk [vmem:[%s3040 + $0x108] sm:$0xff] %vm2958, %v8602
    %8667 = vst.msk [vmem:[%s3040 + $0x110] sm:$0xff] %vm2958, %v8603
    %8668 = vst.msk [vmem:[%s3040 + $0x128] sm:$0xff] %vm2958, %v8604
    %8669 = vst.msk [vmem:[%s3040 + $0x130] sm:$0xff] %vm2958, %v8605
    %8670 = vst.msk [vmem:[%s3040 + $0x148] sm:$0xff] %vm2958, %v8606
    %8671 = vst.msk [vmem:[%s3040 + $0x150] sm:$0xff] %vm2958, %v8607
    %8672 = vst.msk [vmem:[%s3040 + $0x168] sm:$0xff] %vm2958, %v8608
    %8673 = vst.msk [vmem:[%s3040 + $0x170] sm:$0xff] %vm2958, %v8609
    %8674 = vst.msk [vmem:[%s3040 + $0x188] sm:$0xff] %vm2958, %v8610
    %8675 = vst.msk [vmem:[%s3040 + $0x190] sm:$0xff] %vm2958, %v8611
    %8676 = vst.msk [vmem:[%s3040 + $0x1a8] sm:$0xff] %vm2958, %v8612
    %8677 = vst.msk [vmem:[%s3040 + $0x1b0] sm:$0xff] %vm2958, %v8613
    %8678 = vst.msk [vmem:[%s3040 + $0x1c8] sm:$0xff] %vm2958, %v8614
    %8679 = vst.msk [vmem:[%s3040 + $0x1d0] sm:$0xff] %vm2958, %v8615
    %8680 = vst.msk [vmem:[%s3040 + $0x1e8] sm:$0xff] %vm2958, %v8616
    %8681 = vst.msk [vmem:[%s3040 + $0x1f0] sm:$0xff] %vm2958, %v8617
    %8682 = vst.msk [vmem:[%s3040 + $0x248] sm:$0xff] %vm2958, %v8618
    %8683 = vst.msk [vmem:[%s3040 + $0x250] sm:$0xff] %vm2958, %v8619
    %8684 = vst.msk [vmem:[%s3040 + $0x268] sm:$0xff] %vm2958, %v8620
    %8685 = vst.msk [vmem:[%s3040 + $0x270] sm:$0xff] %vm2958, %v8621
    %8686 = vst.msk [vmem:[%s3040 + $0x288] sm:$0xff] %vm2958, %v8622
    %8687 = vst.msk [vmem:[%s3040 + $0x290] sm:$0xff] %vm2958, %v8623
    %8688 = vst.msk [vmem:[%s3040 + $0x2a8] sm:$0xff] %vm2958, %v8624
    %8689 = vst.msk [vmem:[%s3040 + $0x2b0] sm:$0xff] %vm2958, %v8625
    %8690 = vst.msk [vmem:[%s3040 + $0x2c8] sm:$0xff] %vm2958, %v8626
    %8691 = vst.msk [vmem:[%s3040 + $0x2d0] sm:$0xff] %vm2958, %v8627
    %8692 = vst.msk [vmem:[%s3040 + $0x2e8] sm:$0xff] %vm2958, %v8628
    %8693 = vst.msk [vmem:[%s3040 + $0x2f0] sm:$0xff] %vm2958, %v8629
    %8694 = vst.msk [vmem:[%s3040 + $0x308] sm:$0xff] %vm2958, %v8630
    %8695 = vst.msk [vmem:[%s3040 + $0x310] sm:$0xff] %vm2958, %v8631
    %8696 = vst.msk [vmem:[%s3040 + $0x328] sm:$0xff] %vm2958, %v8632
    %8697 = vst.msk [vmem:[%s3040 + $0x330] sm:$0xff] %vm2958, %v8633
    %8698 = vst.msk [vmem:[%s3040 + $0x348] sm:$0xff] %vm2958, %v8634
    %8699 = vst.msk [vmem:[%s3040 + $0x350] sm:$0xff] %vm2958, %v8635
    %8700 = vst.msk [vmem:[%s3040 + $0x368] sm:$0xff] %vm2958, %v8636
    %8701 = vst.msk [vmem:[%s3040 + $0x370] sm:$0xff] %vm2958, %v8637
    %8702 = vst.msk [vmem:[%s3040 + $0x388] sm:$0xff] %vm2958, %v8638
    %8703 = vst.msk [vmem:[%s3040 + $0x390] sm:$0xff] %vm2958, %v8639
    %8704 = vst.msk [vmem:[%s3040 + $0x3a8] sm:$0xff] %vm2958, %v8640
    %8705 = vst.msk [vmem:[%s3040 + $0x3b0] sm:$0xff] %vm2958, %v8641
    %8706 = vst.msk [vmem:[%s3040 + $0x3c8] sm:$0xff] %vm2958, %v8642
    %8707 = vst.msk [vmem:[%s3040 + $0x3d0] sm:$0xff] %vm2958, %v8643
    %8708 = vst.msk [vmem:[%s3040 + $0x3e8] sm:$0xff] %vm2958, %v8644
    %8709 = vst.msk [vmem:[%s3040 + $0x3f0] sm:$0xff] %vm2958, %v8645
    %8710 = vst.msk [vmem:[%s3040 + $0x408] sm:$0xff] %vm2958, %v8646
    %8711 = vst.msk [vmem:[%s3040 + $0x410] sm:$0xff] %vm2958, %v8647
    %8712 = vst.msk [vmem:[%s3040 + $0x428] sm:$0xff] %vm2958, %v8648
    %8713 = vst.msk [vmem:[%s3040 + $0x430] sm:$0xff] %vm2958, %v8649
    %s8714 = scalar_lea.vmem [#allocation3], 7
    %v8715 = vld [vmem:[%s8714] ss:$2 sm:$0xff]
    %s8716 = scalar_lea.vmem [#allocation3], 71
    %v8717 = vld [vmem:[%s8716] ss:$2 sm:$0xff]
    %s8718 = scalar_lea.vmem [#allocation3], 135
    %v8719 = vld [vmem:[%s8718] ss:$2 sm:$0xff]
    %s8720 = scalar_lea.vmem [#allocation3], 199
    %v8721 = vld [vmem:[%s8720] ss:$2 sm:$0xff]
    %s8722 = scalar_lea.vmem [#allocation3], 263
    %v8723 = vld [vmem:[%s8722] ss:$2 sm:$0xff]
    %s8724 = scalar_lea.vmem [#allocation3], 327
    %v8725 = vld [vmem:[%s8724] ss:$2 sm:$0xff]
    %s8726 = scalar_lea.vmem [#allocation3], 391
    %v8727 = vld [vmem:[%s8726] ss:$2 sm:$0xff]
    %s8728 = scalar_lea.vmem [#allocation3], 455
    %v8729 = vld [vmem:[%s8728] ss:$2 sm:$0xff]
    %s8730 = scalar_lea.vmem [#allocation3], 583
    %v8731 = vld [vmem:[%s8730] ss:$2 sm:$0xff]
    %s8732 = scalar_lea.vmem [#allocation3], 647
    %v8733 = vld [vmem:[%s8732] ss:$2 sm:$0xff]
    %s8734 = scalar_lea.vmem [#allocation3], 711
    %v8735 = vld [vmem:[%s8734] ss:$2 sm:$0xff]
    %s8736 = scalar_lea.vmem [#allocation3], 775
    %v8737 = vld [vmem:[%s8736] ss:$2 sm:$0xff]
    %s8738 = scalar_lea.vmem [#allocation3], 839
    %v8739 = vld [vmem:[%s8738] ss:$2 sm:$0xff]
    %s8740 = scalar_lea.vmem [#allocation3], 903
    %v8741 = vld [vmem:[%s8740] ss:$2 sm:$0xff]
    %s8742 = scalar_lea.vmem [#allocation3], 967
    %v8743 = vld [vmem:[%s8742] ss:$2 sm:$0xff]
    %s8744 = scalar_lea.vmem [#allocation3], 1031
    %v8745 = vld [vmem:[%s8744] ss:$2 sm:$0xff]
    %v8746 = vpack.c.bf16 %v8717, %v8715
    %v8747 = vpack.c.bf16 %v8721, %v8719
    %v8748 = vpack.c.bf16 %v8725, %v8723
    %v8749 = vpack.c.bf16 %v8729, %v8727
    %v8750 = vpack.c.bf16 %v8733, %v8731
    %v8751 = vpack.c.bf16 %v8737, %v8735
    %v8752 = vpack.c.bf16 %v8741, %v8739
    %v8753 = vpack.c.bf16 %v8745, %v8743
    %8754 = vst.msk [vmem:[#allocation5] sm:$0xff] %vm2958, %v8746
    %8755 = vst.msk [vmem:[#allocation5 + $0x10] sm:$0xff] %vm2958, %v8747
    %8756 = vst.msk [vmem:[#allocation5 + $0x20] sm:$0xff] %vm2958, %v8748
    %8757 = vst.msk [vmem:[#allocation5 + $0x30] sm:$0xff] %vm2958, %v8749
    %8758 = vst.msk [vmem:[#allocation5 + $0x40] sm:$0xff] %vm2958, %v8750
    %8759 = vst.msk [vmem:[#allocation5 + $0x50] sm:$0xff] %vm2958, %v8751
    %8760 = vst.msk [vmem:[#allocation5 + $0x60] sm:$0xff] %vm2958, %v8752
    %8761 = vst.msk [vmem:[#allocation5 + $0x70] sm:$0xff] %vm2958, %v8753
    %s8762 = scalar_lea.vmem [#allocation3], 8
    %v8763 = vld [vmem:[%s8762] ss:$2 sm:$0xff]
    %s8764 = scalar_lea.vmem [#allocation3], 72
    %v8765 = vld [vmem:[%s8764] ss:$2 sm:$0xff]
    %s8766 = scalar_lea.vmem [#allocation3], 136
    %v8767 = vld [vmem:[%s8766] ss:$2 sm:$0xff]
    %s8768 = scalar_lea.vmem [#allocation3], 200
    %v8769 = vld [vmem:[%s8768] ss:$2 sm:$0xff]
    %s8770 = scalar_lea.vmem [#allocation3], 264
    %v8771 = vld [vmem:[%s8770] ss:$2 sm:$0xff]
    %s8772 = scalar_lea.vmem [#allocation3], 328
    %v8773 = vld [vmem:[%s8772] ss:$2 sm:$0xff]
    %s8774 = scalar_lea.vmem [#allocation3], 392
    %v8775 = vld [vmem:[%s8774] ss:$2 sm:$0xff]
    %s8776 = scalar_lea.vmem [#allocation3], 456
    %v8777 = vld [vmem:[%s8776] ss:$2 sm:$0xff]
    %s8778 = scalar_lea.vmem [#allocation3], 584
    %v8779 = vld [vmem:[%s8778] ss:$2 sm:$0xff]
    %s8780 = scalar_lea.vmem [#allocation3], 648
    %v8781 = vld [vmem:[%s8780] ss:$2 sm:$0xff]
    %s8782 = scalar_lea.vmem [#allocation3], 712
    %v8783 = vld [vmem:[%s8782] ss:$2 sm:$0xff]
    %s8784 = scalar_lea.vmem [#allocation3], 776
    %v8785 = vld [vmem:[%s8784] ss:$2 sm:$0xff]
    %s8786 = scalar_lea.vmem [#allocation3], 840
    %v8787 = vld [vmem:[%s8786] ss:$2 sm:$0xff]
    %s8788 = scalar_lea.vmem [#allocation3], 904
    %v8789 = vld [vmem:[%s8788] ss:$2 sm:$0xff]
    %s8790 = scalar_lea.vmem [#allocation3], 968
    %v8791 = vld [vmem:[%s8790] ss:$2 sm:$0xff]
    %s8792 = scalar_lea.vmem [#allocation3], 1032
    %v8793 = vld [vmem:[%s8792] ss:$2 sm:$0xff]
    %v8794 = vpack.c.bf16 %v8765, %v8763
    %v8795 = vpack.c.bf16 %v8769, %v8767
    %v8796 = vpack.c.bf16 %v8773, %v8771
    %v8797 = vpack.c.bf16 %v8777, %v8775
    %v8798 = vpack.c.bf16 %v8781, %v8779
    %v8799 = vpack.c.bf16 %v8785, %v8783
    %v8800 = vpack.c.bf16 %v8789, %v8787
    %v8801 = vpack.c.bf16 %v8793, %v8791
    %8810 = vrot.lane.b32.xlu0 %v8794, 8
    %v8811 = vpop.permute.xlu0 %8810
    %8812 = vrot.lane.b32.xlu0 %v8795, 8
    %v8813 = vpop.permute.xlu0 %8812
    %8814 = vrot.lane.b32.xlu0 %v8796, 8
    %v8815 = vpop.permute.xlu0 %8814
    %8816 = vrot.lane.b32.xlu0 %v8797, 8
    %v8817 = vpop.permute.xlu0 %8816
    %8818 = vrot.lane.b32.xlu0 %v8798, 8
    %v8819 = vpop.permute.xlu0 %8818
    %8820 = vrot.lane.b32.xlu0 %v8799, 8
    %v8821 = vpop.permute.xlu0 %8820
    %8822 = vrot.lane.b32.xlu0 %v8800, 8
    %v8823 = vpop.permute.xlu0 %8822
    %8824 = vrot.lane.b32.xlu0 %v8801, 8
    %v8825 = vpop.permute.xlu0 %8824
    %8834 = vst.msk [vmem:[#allocation5] sm:$0xff] %vm3457, %v8811
    %8835 = vst.msk [vmem:[#allocation5 + $0x10] sm:$0xff] %vm3457, %v8813
    %8836 = vst.msk [vmem:[#allocation5 + $0x20] sm:$0xff] %vm3457, %v8815
    %8837 = vst.msk [vmem:[#allocation5 + $0x30] sm:$0xff] %vm3457, %v8817
    %8838 = vst.msk [vmem:[#allocation5 + $0x40] sm:$0xff] %vm3457, %v8819
    %8839 = vst.msk [vmem:[#allocation5 + $0x50] sm:$0xff] %vm3457, %v8821
    %8840 = vst.msk [vmem:[#allocation5 + $0x60] sm:$0xff] %vm3457, %v8823
    %8841 = vst.msk [vmem:[#allocation5 + $0x70] sm:$0xff] %vm3457, %v8825
    %s8842 = scalar_lea.vmem [#allocation3], 9
    %v8843 = vld [vmem:[%s8842] ss:$2 sm:$0xff]
    %s8844 = scalar_lea.vmem [#allocation3], 73
    %v8845 = vld [vmem:[%s8844] ss:$2 sm:$0xff]
    %s8846 = scalar_lea.vmem [#allocation3], 137
    %v8847 = vld [vmem:[%s8846] ss:$2 sm:$0xff]
    %s8848 = scalar_lea.vmem [#allocation3], 201
    %v8849 = vld [vmem:[%s8848] ss:$2 sm:$0xff]
    %s8850 = scalar_lea.vmem [#allocation3], 265
    %v8851 = vld [vmem:[%s8850] ss:$2 sm:$0xff]
    %s8852 = scalar_lea.vmem [#allocation3], 329
    %v8853 = vld [vmem:[%s8852] ss:$2 sm:$0xff]
    %s8854 = scalar_lea.vmem [#allocation3], 393
    %v8855 = vld [vmem:[%s8854] ss:$2 sm:$0xff]
    %s8856 = scalar_lea.vmem [#allocation3], 457
    %v8857 = vld [vmem:[%s8856] ss:$2 sm:$0xff]
    %s8858 = scalar_lea.vmem [#allocation3], 585
    %v8859 = vld [vmem:[%s8858] ss:$2 sm:$0xff]
    %s8860 = scalar_lea.vmem [#allocation3], 649
    %v8861 = vld [vmem:[%s8860] ss:$2 sm:$0xff]
    %s8862 = scalar_lea.vmem [#allocation3], 713
    %v8863 = vld [vmem:[%s8862] ss:$2 sm:$0xff]
    %s8864 = scalar_lea.vmem [#allocation3], 777
    %v8865 = vld [vmem:[%s8864] ss:$2 sm:$0xff]
    %s8866 = scalar_lea.vmem [#allocation3], 841
    %v8867 = vld [vmem:[%s8866] ss:$2 sm:$0xff]
    %s8868 = scalar_lea.vmem [#allocation3], 905
    %v8869 = vld [vmem:[%s8868] ss:$2 sm:$0xff]
    %s8870 = scalar_lea.vmem [#allocation3], 969
    %v8871 = vld [vmem:[%s8870] ss:$2 sm:$0xff]
    %s8872 = scalar_lea.vmem [#allocation3], 1033
    %v8873 = vld [vmem:[%s8872] ss:$2 sm:$0xff]
    %v8874 = vpack.c.bf16 %v8845, %v8843
    %v8875 = vpack.c.bf16 %v8849, %v8847
    %v8876 = vpack.c.bf16 %v8853, %v8851
    %v8877 = vpack.c.bf16 %v8857, %v8855
    %v8878 = vpack.c.bf16 %v8861, %v8859
    %v8879 = vpack.c.bf16 %v8865, %v8863
    %v8880 = vpack.c.bf16 %v8869, %v8867
    %v8881 = vpack.c.bf16 %v8873, %v8871
    %8890 = vrot.lane.b32.xlu0 %v8874, 16
    %v8891 = vpop.permute.xlu0 %8890
    %8892 = vrot.lane.b32.xlu0 %v8875, 16
    %v8893 = vpop.permute.xlu0 %8892
    %8894 = vrot.lane.b32.xlu0 %v8876, 16
    %v8895 = vpop.permute.xlu0 %8894
    %8896 = vrot.lane.b32.xlu0 %v8877, 16
    %v8897 = vpop.permute.xlu0 %8896
    %8898 = vrot.lane.b32.xlu0 %v8878, 16
    %v8899 = vpop.permute.xlu0 %8898
    %8900 = vrot.lane.b32.xlu0 %v8879, 16
    %v8901 = vpop.permute.xlu0 %8900
    %8902 = vrot.lane.b32.xlu0 %v8880, 16
    %v8903 = vpop.permute.xlu0 %8902
    %8904 = vrot.lane.b32.xlu0 %v8881, 16
    %v8905 = vpop.permute.xlu0 %8904
    %8914 = vst.msk [vmem:[#allocation5] sm:$0xff] %vm3714, %v8891
    %8915 = vst.msk [vmem:[#allocation5 + $0x10] sm:$0xff] %vm3714, %v8893
    %8916 = vst.msk [vmem:[#allocation5 + $0x20] sm:$0xff] %vm3714, %v8895
    %8917 = vst.msk [vmem:[#allocation5 + $0x30] sm:$0xff] %vm3714, %v8897
    %8918 = vst.msk [vmem:[#allocation5 + $0x40] sm:$0xff] %vm3714, %v8899
    %8919 = vst.msk [vmem:[#allocation5 + $0x50] sm:$0xff] %vm3714, %v8901
    %8920 = vst.msk [vmem:[#allocation5 + $0x60] sm:$0xff] %vm3714, %v8903
    %8921 = vst.msk [vmem:[#allocation5 + $0x70] sm:$0xff] %vm3714, %v8905
    %s8922 = scalar_lea.vmem %s3040, 7 [#allocation3]
    %v8923 = vld [vmem:[%s8922] ss:$2 sm:$0xff]
    %s8924 = scalar_lea.vmem %s3040, 71 [#allocation3]
    %v8925 = vld [vmem:[%s8924] ss:$2 sm:$0xff]
    %s8926 = scalar_lea.vmem %s3040, 135 [#allocation3]
    %v8927 = vld [vmem:[%s8926] ss:$2 sm:$0xff]
    %s8928 = scalar_lea.vmem %s3040, 199 [#allocation3]
    %v8929 = vld [vmem:[%s8928] ss:$2 sm:$0xff]
    %s8930 = scalar_lea.vmem %s3040, 263 [#allocation3]
    %v8931 = vld [vmem:[%s8930] ss:$2 sm:$0xff]
    %s8932 = scalar_lea.vmem %s3040, 327 [#allocation3]
    %v8933 = vld [vmem:[%s8932] ss:$2 sm:$0xff]
    %s8934 = scalar_lea.vmem %s3040, 391 [#allocation3]
    %v8935 = vld [vmem:[%s8934] ss:$2 sm:$0xff]
    %s8936 = scalar_lea.vmem %s3040, 455 [#allocation3]
    %v8937 = vld [vmem:[%s8936] ss:$2 sm:$0xff]
    %s8938 = scalar_lea.vmem %s3040, 583 [#allocation3]
    %v8939 = vld [vmem:[%s8938] ss:$2 sm:$0xff]
    %s8940 = scalar_lea.vmem %s3040, 647 [#allocation3]
    %v8941 = vld [vmem:[%s8940] ss:$2 sm:$0xff]
    %s8942 = scalar_lea.vmem %s3040, 711 [#allocation3]
    %v8943 = vld [vmem:[%s8942] ss:$2 sm:$0xff]
    %s8944 = scalar_lea.vmem %s3040, 775 [#allocation3]
    %v8945 = vld [vmem:[%s8944] ss:$2 sm:$0xff]
    %s8946 = scalar_lea.vmem %s3040, 839 [#allocation3]
    %v8947 = vld [vmem:[%s8946] ss:$2 sm:$0xff]
    %s8948 = scalar_lea.vmem %s3040, 903 [#allocation3]
    %v8949 = vld [vmem:[%s8948] ss:$2 sm:$0xff]
    %s8950 = scalar_lea.vmem %s3040, 967 [#allocation3]
    %v8951 = vld [vmem:[%s8950] ss:$2 sm:$0xff]
    %s8952 = scalar_lea.vmem %s3040, 1031 [#allocation3]
    %v8953 = vld [vmem:[%s8952] ss:$2 sm:$0xff]
    %v8954 = vpack.c.bf16 %v8925, %v8923
    %v8955 = vpack.c.bf16 %v8929, %v8927
    %v8956 = vpack.c.bf16 %v8933, %v8931
    %v8957 = vpack.c.bf16 %v8937, %v8935
    %v8958 = vpack.c.bf16 %v8941, %v8939
    %v8959 = vpack.c.bf16 %v8945, %v8943
    %v8960 = vpack.c.bf16 %v8949, %v8947
    %v8961 = vpack.c.bf16 %v8953, %v8951
    %8970 = vrot.lane.b32.xlu0 %v8954, 24
    %v8971 = vpop.permute.xlu0 %8970
    %8972 = vrot.lane.b32.xlu0 %v8955, 24
    %v8973 = vpop.permute.xlu0 %8972
    %8974 = vrot.lane.b32.xlu0 %v8956, 24
    %v8975 = vpop.permute.xlu0 %8974
    %8976 = vrot.lane.b32.xlu0 %v8957, 24
    %v8977 = vpop.permute.xlu0 %8976
    %8978 = vrot.lane.b32.xlu0 %v8958, 24
    %v8979 = vpop.permute.xlu0 %8978
    %8980 = vrot.lane.b32.xlu0 %v8959, 24
    %v8981 = vpop.permute.xlu0 %8980
    %8982 = vrot.lane.b32.xlu0 %v8960, 24
    %v8983 = vpop.permute.xlu0 %8982
    %8984 = vrot.lane.b32.xlu0 %v8961, 24
    %v8985 = vpop.permute.xlu0 %8984
    %8994 = vst.msk [vmem:[#allocation5] sm:$0xff] %vm3971, %v8971
    %8995 = vst.msk [vmem:[#allocation5 + $0x10] sm:$0xff] %vm3971, %v8973
    %8996 = vst.msk [vmem:[#allocation5 + $0x20] sm:$0xff] %vm3971, %v8975
    %8997 = vst.msk [vmem:[#allocation5 + $0x30] sm:$0xff] %vm3971, %v8977
    %8998 = vst.msk [vmem:[#allocation5 + $0x40] sm:$0xff] %vm3971, %v8979
    %8999 = vst.msk [vmem:[#allocation5 + $0x50] sm:$0xff] %vm3971, %v8981
    %9000 = vst.msk [vmem:[#allocation5 + $0x60] sm:$0xff] %vm3971, %v8983
    %9001 = vst.msk [vmem:[#allocation5 + $0x70] sm:$0xff] %vm3971, %v8985
    %s9002 = scalar_lea.vmem %s3040, 8 [#allocation3]
    %v9003 = vld [vmem:[%s9002] ss:$2 sm:$0xff]
    %s9004 = scalar_lea.vmem %s3040, 72 [#allocation3]
    %v9005 = vld [vmem:[%s9004] ss:$2 sm:$0xff]
    %s9006 = scalar_lea.vmem %s3040, 136 [#allocation3]
    %v9007 = vld [vmem:[%s9006] ss:$2 sm:$0xff]
    %s9008 = scalar_lea.vmem %s3040, 200 [#allocation3]
    %v9009 = vld [vmem:[%s9008] ss:$2 sm:$0xff]
    %s9010 = scalar_lea.vmem %s3040, 264 [#allocation3]
    %v9011 = vld [vmem:[%s9010] ss:$2 sm:$0xff]
    %s9012 = scalar_lea.vmem %s3040, 328 [#allocation3]
    %v9013 = vld [vmem:[%s9012] ss:$2 sm:$0xff]
    %s9014 = scalar_lea.vmem %s3040, 392 [#allocation3]
    %v9015 = vld [vmem:[%s9014] ss:$2 sm:$0xff]
    %s9016 = scalar_lea.vmem %s3040, 456 [#allocation3]
    %v9017 = vld [vmem:[%s9016] ss:$2 sm:$0xff]
    %s9018 = scalar_lea.vmem %s3040, 584 [#allocation3]
    %v9019 = vld [vmem:[%s9018] ss:$2 sm:$0xff]
    %s9020 = scalar_lea.vmem %s3040, 648 [#allocation3]
    %v9021 = vld [vmem:[%s9020] ss:$2 sm:$0xff]
    %s9022 = scalar_lea.vmem %s3040, 712 [#allocation3]
    %v9023 = vld [vmem:[%s9022] ss:$2 sm:$0xff]
    %s9024 = scalar_lea.vmem %s3040, 776 [#allocation3]
    %v9025 = vld [vmem:[%s9024] ss:$2 sm:$0xff]
    %s9026 = scalar_lea.vmem %s3040, 840 [#allocation3]
    %v9027 = vld [vmem:[%s9026] ss:$2 sm:$0xff]
    %s9028 = scalar_lea.vmem %s3040, 904 [#allocation3]
    %v9029 = vld [vmem:[%s9028] ss:$2 sm:$0xff]
    %s9030 = scalar_lea.vmem %s3040, 968 [#allocation3]
    %v9031 = vld [vmem:[%s9030] ss:$2 sm:$0xff]
    %s9032 = scalar_lea.vmem %s3040, 1032 [#allocation3]
    %v9033 = vld [vmem:[%s9032] ss:$2 sm:$0xff]
    %v9034 = vpack.c.bf16 %v9005, %v9003
    %v9035 = vpack.c.bf16 %v9009, %v9007
    %v9036 = vpack.c.bf16 %v9013, %v9011
    %v9037 = vpack.c.bf16 %v9017, %v9015
    %v9038 = vpack.c.bf16 %v9021, %v9019
    %v9039 = vpack.c.bf16 %v9025, %v9023
    %v9040 = vpack.c.bf16 %v9029, %v9027
    %v9041 = vpack.c.bf16 %v9033, %v9031
    %9050 = vrot.lane.b32.xlu0 %v9034, 32
    %v9051 = vpop.permute.xlu0 %9050
    %9052 = vrot.lane.b32.xlu0 %v9035, 32
    %v9053 = vpop.permute.xlu0 %9052
    %9054 = vrot.lane.b32.xlu0 %v9036, 32
    %v9055 = vpop.permute.xlu0 %9054
    %9056 = vrot.lane.b32.xlu0 %v9037, 32
    %v9057 = vpop.permute.xlu0 %9056
    %9058 = vrot.lane.b32.xlu0 %v9038, 32
    %v9059 = vpop.permute.xlu0 %9058
    %9060 = vrot.lane.b32.xlu0 %v9039, 32
    %v9061 = vpop.permute.xlu0 %9060
    %9062 = vrot.lane.b32.xlu0 %v9040, 32
    %v9063 = vpop.permute.xlu0 %9062
    %9064 = vrot.lane.b32.xlu0 %v9041, 32
    %v9065 = vpop.permute.xlu0 %9064
    %9074 = vst.msk [vmem:[#allocation5] sm:$0xff] %vm4228, %v9051
    %9075 = vst.msk [vmem:[#allocation5 + $0x10] sm:$0xff] %vm4228, %v9053
    %9076 = vst.msk [vmem:[#allocation5 + $0x20] sm:$0xff] %vm4228, %v9055
    %9077 = vst.msk [vmem:[#allocation5 + $0x30] sm:$0xff] %vm4228, %v9057
    %9078 = vst.msk [vmem:[#allocation5 + $0x40] sm:$0xff] %vm4228, %v9059
    %9079 = vst.msk [vmem:[#allocation5 + $0x50] sm:$0xff] %vm4228, %v9061
    %9080 = vst.msk [vmem:[#allocation5 + $0x60] sm:$0xff] %vm4228, %v9063
    %9081 = vst.msk [vmem:[#allocation5 + $0x70] sm:$0xff] %vm4228, %v9065
    %s9082 = scalar_lea.vmem %s3040, 9 [#allocation3]
    %v9083 = vld [vmem:[%s9082] ss:$2 sm:$0xff]
    %s9084 = scalar_lea.vmem %s3040, 73 [#allocation3]
    %v9085 = vld [vmem:[%s9084] ss:$2 sm:$0xff]
    %s9086 = scalar_lea.vmem %s3040, 137 [#allocation3]
    %v9087 = vld [vmem:[%s9086] ss:$2 sm:$0xff]
    %s9088 = scalar_lea.vmem %s3040, 201 [#allocation3]
    %v9089 = vld [vmem:[%s9088] ss:$2 sm:$0xff]
    %s9090 = scalar_lea.vmem %s3040, 265 [#allocation3]
    %v9091 = vld [vmem:[%s9090] ss:$2 sm:$0xff]
    %s9092 = scalar_lea.vmem %s3040, 329 [#allocation3]
    %v9093 = vld [vmem:[%s9092] ss:$2 sm:$0xff]
    %s9094 = scalar_lea.vmem %s3040, 393 [#allocation3]
    %v9095 = vld [vmem:[%s9094] ss:$2 sm:$0xff]
    %s9096 = scalar_lea.vmem %s3040, 457 [#allocation3]
    %v9097 = vld [vmem:[%s9096] ss:$2 sm:$0xff]
    %s9098 = scalar_lea.vmem %s3040, 585 [#allocation3]
    %v9099 = vld [vmem:[%s9098] ss:$2 sm:$0xff]
    %s9100 = scalar_lea.vmem %s3040, 649 [#allocation3]
    %v9101 = vld [vmem:[%s9100] ss:$2 sm:$0xff]
    %s9102 = scalar_lea.vmem %s3040, 713 [#allocation3]
    %v9103 = vld [vmem:[%s9102] ss:$2 sm:$0xff]
    %s9104 = scalar_lea.vmem %s3040, 777 [#allocation3]
    %v9105 = vld [vmem:[%s9104] ss:$2 sm:$0xff]
    %s9106 = scalar_lea.vmem %s3040, 841 [#allocation3]
    %v9107 = vld [vmem:[%s9106] ss:$2 sm:$0xff]
    %s9108 = scalar_lea.vmem %s3040, 905 [#allocation3]
    %v9109 = vld [vmem:[%s9108] ss:$2 sm:$0xff]
    %s9110 = scalar_lea.vmem %s3040, 969 [#allocation3]
    %v9111 = vld [vmem:[%s9110] ss:$2 sm:$0xff]
    %s9112 = scalar_lea.vmem %s3040, 1033 [#allocation3]
    %v9113 = vld [vmem:[%s9112] ss:$2 sm:$0xff]
    %v9114 = vpack.c.bf16 %v9085, %v9083
    %v9115 = vpack.c.bf16 %v9089, %v9087
    %v9116 = vpack.c.bf16 %v9093, %v9091
    %v9117 = vpack.c.bf16 %v9097, %v9095
    %v9118 = vpack.c.bf16 %v9101, %v9099
    %v9119 = vpack.c.bf16 %v9105, %v9103
    %v9120 = vpack.c.bf16 %v9109, %v9107
    %v9121 = vpack.c.bf16 %v9113, %v9111
    %9130 = vrot.lane.b32.xlu0 %v9114, 40
    %v9131 = vpop.permute.xlu0 %9130
    %9132 = vrot.lane.b32.xlu0 %v9115, 40
    %v9133 = vpop.permute.xlu0 %9132
    %9134 = vrot.lane.b32.xlu0 %v9116, 40
    %v9135 = vpop.permute.xlu0 %9134
    %9136 = vrot.lane.b32.xlu0 %v9117, 40
    %v9137 = vpop.permute.xlu0 %9136
    %9138 = vrot.lane.b32.xlu0 %v9118, 40
    %v9139 = vpop.permute.xlu0 %9138
    %9140 = vrot.lane.b32.xlu0 %v9119, 40
    %v9141 = vpop.permute.xlu0 %9140
    %9142 = vrot.lane.b32.xlu0 %v9120, 40
    %v9143 = vpop.permute.xlu0 %9142
    %9144 = vrot.lane.b32.xlu0 %v9121, 40
    %v9145 = vpop.permute.xlu0 %9144
    %9154 = vst.msk [vmem:[#allocation5] sm:$0xff] %vm4485, %v9131
    %9155 = vst.msk [vmem:[#allocation5 + $0x10] sm:$0xff] %vm4485, %v9133
    %9156 = vst.msk [vmem:[#allocation5 + $0x20] sm:$0xff] %vm4485, %v9135
    %9157 = vst.msk [vmem:[#allocation5 + $0x30] sm:$0xff] %vm4485, %v9137
    %9158 = vst.msk [vmem:[#allocation5 + $0x40] sm:$0xff] %vm4485, %v9139
    %9159 = vst.msk [vmem:[#allocation5 + $0x50] sm:$0xff] %vm4485, %v9141
    %9160 = vst.msk [vmem:[#allocation5 + $0x60] sm:$0xff] %vm4485, %v9143
    %9161 = vst.msk [vmem:[#allocation5 + $0x70] sm:$0xff] %vm4485, %v9145
    %s9162 = scalar_lea.vmem %s4518, 7 [#allocation3]
    %v9163 = vld [vmem:[%s9162] ss:$2 sm:$0xff]
    %s9164 = scalar_lea.vmem %s4518, 71 [#allocation3]
    %v9165 = vld [vmem:[%s9164] ss:$2 sm:$0xff]
    %s9166 = scalar_lea.vmem %s4518, 135 [#allocation3]
    %v9167 = vld [vmem:[%s9166] ss:$2 sm:$0xff]
    %s9168 = scalar_lea.vmem %s4518, 199 [#allocation3]
    %v9169 = vld [vmem:[%s9168] ss:$2 sm:$0xff]
    %s9170 = scalar_lea.vmem %s4518, 263 [#allocation3]
    %v9171 = vld [vmem:[%s9170] ss:$2 sm:$0xff]
    %s9172 = scalar_lea.vmem %s4518, 327 [#allocation3]
    %v9173 = vld [vmem:[%s9172] ss:$2 sm:$0xff]
    %s9174 = scalar_lea.vmem %s4518, 391 [#allocation3]
    %v9175 = vld [vmem:[%s9174] ss:$2 sm:$0xff]
    %s9176 = scalar_lea.vmem %s4518, 455 [#allocation3]
    %v9177 = vld [vmem:[%s9176] ss:$2 sm:$0xff]
    %s9178 = scalar_lea.vmem %s4518, 583 [#allocation3]
    %v9179 = vld [vmem:[%s9178] ss:$2 sm:$0xff]
    %s9180 = scalar_lea.vmem %s4518, 647 [#allocation3]
    %v9181 = vld [vmem:[%s9180] ss:$2 sm:$0xff]
    %s9182 = scalar_lea.vmem %s4518, 711 [#allocation3]
    %v9183 = vld [vmem:[%s9182] ss:$2 sm:$0xff]
    %s9184 = scalar_lea.vmem %s4518, 775 [#allocation3]
    %v9185 = vld [vmem:[%s9184] ss:$2 sm:$0xff]
    %s9186 = scalar_lea.vmem %s4518, 839 [#allocation3]
    %v9187 = vld [vmem:[%s9186] ss:$2 sm:$0xff]
    %s9188 = scalar_lea.vmem %s4518, 903 [#allocation3]
    %v9189 = vld [vmem:[%s9188] ss:$2 sm:$0xff]
    %s9190 = scalar_lea.vmem %s4518, 967 [#allocation3]
    %v9191 = vld [vmem:[%s9190] ss:$2 sm:$0xff]
    %s9192 = scalar_lea.vmem %s4518, 1031 [#allocation3]
    %v9193 = vld [vmem:[%s9192] ss:$2 sm:$0xff]
    %v9194 = vpack.c.bf16 %v9165, %v9163
    %v9195 = vpack.c.bf16 %v9169, %v9167
    %v9196 = vpack.c.bf16 %v9173, %v9171
    %v9197 = vpack.c.bf16 %v9177, %v9175
    %v9198 = vpack.c.bf16 %v9181, %v9179
    %v9199 = vpack.c.bf16 %v9185, %v9183
    %v9200 = vpack.c.bf16 %v9189, %v9187
    %v9201 = vpack.c.bf16 %v9193, %v9191
    %9210 = vrot.lane.b32.xlu0 %v9194, 48
    %v9211 = vpop.permute.xlu0 %9210
    %9212 = vrot.lane.b32.xlu0 %v9195, 48
    %v9213 = vpop.permute.xlu0 %9212
    %9214 = vrot.lane.b32.xlu0 %v9196, 48
    %v9215 = vpop.permute.xlu0 %9214
    %9216 = vrot.lane.b32.xlu0 %v9197, 48
    %v9217 = vpop.permute.xlu0 %9216
    %9218 = vrot.lane.b32.xlu0 %v9198, 48
    %v9219 = vpop.permute.xlu0 %9218
    %9220 = vrot.lane.b32.xlu0 %v9199, 48
    %v9221 = vpop.permute.xlu0 %9220
    %9222 = vrot.lane.b32.xlu0 %v9200, 48
    %v9223 = vpop.permute.xlu0 %9222
    %9224 = vrot.lane.b32.xlu0 %v9201, 48
    %v9225 = vpop.permute.xlu0 %9224
    %9234 = vst.msk [vmem:[#allocation5] sm:$0xff] %vm4743, %v9211
    %9235 = vst.msk [vmem:[#allocation5 + $0x10] sm:$0xff] %vm4743, %v9213
    %9236 = vst.msk [vmem:[#allocation5 + $0x20] sm:$0xff] %vm4743, %v9215
    %9237 = vst.msk [vmem:[#allocation5 + $0x30] sm:$0xff] %vm4743, %v9217
    %9238 = vst.msk [vmem:[#allocation5 + $0x40] sm:$0xff] %vm4743, %v9219
    %9239 = vst.msk [vmem:[#allocation5 + $0x50] sm:$0xff] %vm4743, %v9221
    %9240 = vst.msk [vmem:[#allocation5 + $0x60] sm:$0xff] %vm4743, %v9223
    %9241 = vst.msk [vmem:[#allocation5 + $0x70] sm:$0xff] %vm4743, %v9225
    %s9242 = scalar_lea.vmem %s4518, 8 [#allocation3]
    %v9243 = vld [vmem:[%s9242] ss:$2 sm:$0xff]
    %s9244 = scalar_lea.vmem %s4518, 72 [#allocation3]
    %v9245 = vld [vmem:[%s9244] ss:$2 sm:$0xff]
    %s9246 = scalar_lea.vmem %s4518, 136 [#allocation3]
    %v9247 = vld [vmem:[%s9246] ss:$2 sm:$0xff]
    %s9248 = scalar_lea.vmem %s4518, 200 [#allocation3]
    %v9249 = vld [vmem:[%s9248] ss:$2 sm:$0xff]
    %s9250 = scalar_lea.vmem %s4518, 264 [#allocation3]
    %v9251 = vld [vmem:[%s9250] ss:$2 sm:$0xff]
    %s9252 = scalar_lea.vmem %s4518, 328 [#allocation3]
    %v9253 = vld [vmem:[%s9252] ss:$2 sm:$0xff]
    %s9254 = scalar_lea.vmem %s4518, 392 [#allocation3]
    %v9255 = vld [vmem:[%s9254] ss:$2 sm:$0xff]
    %s9256 = scalar_lea.vmem %s4518, 456 [#allocation3]
    %v9257 = vld [vmem:[%s9256] ss:$2 sm:$0xff]
    %s9258 = scalar_lea.vmem %s4518, 584 [#allocation3]
    %v9259 = vld [vmem:[%s9258] ss:$2 sm:$0xff]
    %s9260 = scalar_lea.vmem %s4518, 648 [#allocation3]
    %v9261 = vld [vmem:[%s9260] ss:$2 sm:$0xff]
    %s9262 = scalar_lea.vmem %s4518, 712 [#allocation3]
    %v9263 = vld [vmem:[%s9262] ss:$2 sm:$0xff]
    %s9264 = scalar_lea.vmem %s4518, 776 [#allocation3]
    %v9265 = vld [vmem:[%s9264] ss:$2 sm:$0xff]
    %s9266 = scalar_lea.vmem %s4518, 840 [#allocation3]
    %v9267 = vld [vmem:[%s9266] ss:$2 sm:$0xff]
    %s9268 = scalar_lea.vmem %s4518, 904 [#allocation3]
    %v9269 = vld [vmem:[%s9268] ss:$2 sm:$0xff]
    %s9270 = scalar_lea.vmem %s4518, 968 [#allocation3]
    %v9271 = vld [vmem:[%s9270] ss:$2 sm:$0xff]
    %s9272 = scalar_lea.vmem %s4518, 1032 [#allocation3]
    %v9273 = vld [vmem:[%s9272] ss:$2 sm:$0xff]
    %v9274 = vpack.c.bf16 %v9245, %v9243
    %v9275 = vpack.c.bf16 %v9249, %v9247
    %v9276 = vpack.c.bf16 %v9253, %v9251
    %v9277 = vpack.c.bf16 %v9257, %v9255
    %v9278 = vpack.c.bf16 %v9261, %v9259
    %v9279 = vpack.c.bf16 %v9265, %v9263
    %v9280 = vpack.c.bf16 %v9269, %v9267
    %v9281 = vpack.c.bf16 %v9273, %v9271
    %9290 = vrot.lane.b32.xlu0 %v9274, 56
    %v9291 = vpop.permute.xlu0 %9290
    %9292 = vrot.lane.b32.xlu0 %v9275, 56
    %v9293 = vpop.permute.xlu0 %9292
    %9294 = vrot.lane.b32.xlu0 %v9276, 56
    %v9295 = vpop.permute.xlu0 %9294
    %9296 = vrot.lane.b32.xlu0 %v9277, 56
    %v9297 = vpop.permute.xlu0 %9296
    %9298 = vrot.lane.b32.xlu0 %v9278, 56
    %v9299 = vpop.permute.xlu0 %9298
    %9300 = vrot.lane.b32.xlu0 %v9279, 56
    %v9301 = vpop.permute.xlu0 %9300
    %9302 = vrot.lane.b32.xlu0 %v9280, 56
    %v9303 = vpop.permute.xlu0 %9302
    %9304 = vrot.lane.b32.xlu0 %v9281, 56
    %v9305 = vpop.permute.xlu0 %9304
    %9314 = vst.msk [vmem:[#allocation5] sm:$0xff] %vm5000, %v9291
    %9315 = vst.msk [vmem:[#allocation5 + $0x10] sm:$0xff] %vm5000, %v9293
    %9316 = vst.msk [vmem:[#allocation5 + $0x20] sm:$0xff] %vm5000, %v9295
    %9317 = vst.msk [vmem:[#allocation5 + $0x30] sm:$0xff] %vm5000, %v9297
    %9318 = vst.msk [vmem:[#allocation5 + $0x40] sm:$0xff] %vm5000, %v9299
    %9319 = vst.msk [vmem:[#allocation5 + $0x50] sm:$0xff] %vm5000, %v9301
    %9320 = vst.msk [vmem:[#allocation5 + $0x60] sm:$0xff] %vm5000, %v9303
    %9321 = vst.msk [vmem:[#allocation5 + $0x70] sm:$0xff] %vm5000, %v9305
    %s9322 = scalar_lea.vmem %s4518, 9 [#allocation3]
    %v9323 = vld [vmem:[%s9322] ss:$2 sm:$0xff]
    %s9324 = scalar_lea.vmem %s4518, 73 [#allocation3]
    %v9325 = vld [vmem:[%s9324] ss:$2 sm:$0xff]
    %s9326 = scalar_lea.vmem %s4518, 137 [#allocation3]
    %v9327 = vld [vmem:[%s9326] ss:$2 sm:$0xff]
    %s9328 = scalar_lea.vmem %s4518, 201 [#allocation3]
    %v9329 = vld [vmem:[%s9328] ss:$2 sm:$0xff]
    %s9330 = scalar_lea.vmem %s4518, 265 [#allocation3]
    %v9331 = vld [vmem:[%s9330] ss:$2 sm:$0xff]
    %s9332 = scalar_lea.vmem %s4518, 329 [#allocation3]
    %v9333 = vld [vmem:[%s9332] ss:$2 sm:$0xff]
    %s9334 = scalar_lea.vmem %s4518, 393 [#allocation3]
    %v9335 = vld [vmem:[%s9334] ss:$2 sm:$0xff]
    %s9336 = scalar_lea.vmem %s4518, 457 [#allocation3]
    %v9337 = vld [vmem:[%s9336] ss:$2 sm:$0xff]
    %s9338 = scalar_lea.vmem %s4518, 585 [#allocation3]
    %v9339 = vld [vmem:[%s9338] ss:$2 sm:$0xff]
    %s9340 = scalar_lea.vmem %s4518, 649 [#allocation3]
    %v9341 = vld [vmem:[%s9340] ss:$2 sm:$0xff]
    %s9342 = scalar_lea.vmem %s4518, 713 [#allocation3]
    %v9343 = vld [vmem:[%s9342] ss:$2 sm:$0xff]
    %s9344 = scalar_lea.vmem %s4518, 777 [#allocation3]
    %v9345 = vld [vmem:[%s9344] ss:$2 sm:$0xff]
    %s9346 = scalar_lea.vmem %s4518, 841 [#allocation3]
    %v9347 = vld [vmem:[%s9346] ss:$2 sm:$0xff]
    %s9348 = scalar_lea.vmem %s4518, 905 [#allocation3]
    %v9349 = vld [vmem:[%s9348] ss:$2 sm:$0xff]
    %s9350 = scalar_lea.vmem %s4518, 969 [#allocation3]
    %v9351 = vld [vmem:[%s9350] ss:$2 sm:$0xff]
    %s9352 = scalar_lea.vmem %s4518, 1033 [#allocation3]
    %v9353 = vld [vmem:[%s9352] ss:$2 sm:$0xff]
    %v9354 = vpack.c.bf16 %v9325, %v9323
    %v9355 = vpack.c.bf16 %v9329, %v9327
    %v9356 = vpack.c.bf16 %v9333, %v9331
    %v9357 = vpack.c.bf16 %v9337, %v9335
    %v9358 = vpack.c.bf16 %v9341, %v9339
    %v9359 = vpack.c.bf16 %v9345, %v9343
    %v9360 = vpack.c.bf16 %v9349, %v9347
    %v9361 = vpack.c.bf16 %v9353, %v9351
    %9370 = vrot.lane.b32.xlu0 %v9354, 64
    %v9371 = vpop.permute.xlu0 %9370
    %9372 = vrot.lane.b32.xlu0 %v9355, 64
    %v9373 = vpop.permute.xlu0 %9372
    %9374 = vrot.lane.b32.xlu0 %v9356, 64
    %v9375 = vpop.permute.xlu0 %9374
    %9376 = vrot.lane.b32.xlu0 %v9357, 64
    %v9377 = vpop.permute.xlu0 %9376
    %9378 = vrot.lane.b32.xlu0 %v9358, 64
    %v9379 = vpop.permute.xlu0 %9378
    %9380 = vrot.lane.b32.xlu0 %v9359, 64
    %v9381 = vpop.permute.xlu0 %9380
    %9382 = vrot.lane.b32.xlu0 %v9360, 64
    %v9383 = vpop.permute.xlu0 %9382
    %9384 = vrot.lane.b32.xlu0 %v9361, 64
    %v9385 = vpop.permute.xlu0 %9384
    %9394 = vst.msk [vmem:[#allocation5] sm:$0xff] %vm5257, %v9371
    %9395 = vst.msk [vmem:[#allocation5 + $0x10] sm:$0xff] %vm5257, %v9373
    %9396 = vst.msk [vmem:[#allocation5 + $0x20] sm:$0xff] %vm5257, %v9375
    %9397 = vst.msk [vmem:[#allocation5 + $0x30] sm:$0xff] %vm5257, %v9377
    %9398 = vst.msk [vmem:[#allocation5 + $0x40] sm:$0xff] %vm5257, %v9379
    %9399 = vst.msk [vmem:[#allocation5 + $0x50] sm:$0xff] %vm5257, %v9381
    %9400 = vst.msk [vmem:[#allocation5 + $0x60] sm:$0xff] %vm5257, %v9383
    %9401 = vst.msk [vmem:[#allocation5 + $0x70] sm:$0xff] %vm5257, %v9385
    %v9402 = vld [vmem:[#allocation5] sm:$0xff]
    %v9403 = vld [vmem:[#allocation5 + $0x10] sm:$0xff]
    %v9404 = vld [vmem:[#allocation5 + $0x20] sm:$0xff]
    %v9405 = vld [vmem:[#allocation5 + $0x30] sm:$0xff]
    %v9406 = vld [vmem:[#allocation5 + $0x40] sm:$0xff]
    %v9407 = vld [vmem:[#allocation5 + $0x50] sm:$0xff]
    %v9408 = vld [vmem:[#allocation5 + $0x60] sm:$0xff]
    %v9409 = vld [vmem:[#allocation5 + $0x70] sm:$0xff]
    %v9410 = vld [vmem:[%s7] sm:$0xf]
    %v9411 = vld [vmem:[%s7 + $0x4] sm:$0xf]
    %v9412 = vld [vmem:[%s7 + $0x8] sm:$0xf]
    %v9413 = vld [vmem:[%s7 + $0xc] sm:$0xf]
    %v9414 = vld [vmem:[%s7 + $0x10] sm:$0xf]
    %v9415 = vld [vmem:[%s7 + $0x14] sm:$0xf]
    %v9416 = vld [vmem:[%s7 + $0x18] sm:$0xf]
    %v9417 = vld [vmem:[%s7 + $0x1c] sm:$0xf]
    %v9418 = vld [vmem:[%s7 + $0x20] sm:$0xf]
    %v9428 = vunpack.c.l.b16 %v9410
    %v9429 = vunpack.c.l.b16 %v9411
    %v9430 = vunpack.c.l.b16 %v9412
    %v9431 = vunpack.c.l.b16 %v9413
    %v9432 = vunpack.c.l.b16 %v9414
    %v9433 = vunpack.c.l.b16 %v9415
    %v9434 = vunpack.c.l.b16 %v9416
    %v9435 = vunpack.c.l.b16 %v9417
    %v9436 = vunpack.c.l.b16 %v9418
    %v9437 = vpack.c.b16 %v9429, %v9428
    %v9438 = vpack.c.b16 %v9431, %v9430
    %v9439 = vpack.c.b16 %v9433, %v9432
    %v9440 = vpack.c.b16 %v9435, %v9434
    %v9441 = vpack.c.b16 %v9436, %v9436
    %v9447 = vsel %vm5365, %v9402, 0
    %v9450 = vsel %vm5365, %v9403, 0
    %v9453 = vsel %vm5365, %v9404, 0
    %v9456 = vsel %vm5365, %v9405, 0
    %v9459 = vsel %vm5365, %v9406, 0
    %v9462 = vsel %vm5365, %v9407, 0
    %v9465 = vsel %vm5365, %v9408, 0
    %v9468 = vsel %vm5365, %v9409, 0
    %v9471 = vsel %vm5462, %v9441, 0
    %9473 = vmatprep.subr.bf16.mxu0 0
    %9474 = vmatpush1.bf16.msra.mxu0 %v9437
    %9475 = vmatprep.subr.bf16.mxu0 0
    %9476 = vmatpush1.bf16.msra.mxu0 %v9438
    %9477 = vmatprep.subr.bf16.mxu0 0
    %9478 = vmatpush1.bf16.msra.mxu0 %v9439
    %9479 = vmatprep.subr.bf16.mxu0 0
    %9480 = vmatpush1.bf16.msra.mxu0 %v9440
    %9481 = vmatprep.subr.bf16.mxu0 0
    %9482 = vmatpush1.bf16.msra.mxu0 %v9471
    %9483 = vmatprep.subr.bf16.mxu0 0
    %9484 = vmatpush1.bf16.msra.mxu0 0
    %9485 = vmatprep.subr.bf16.mxu0 0
    %9486 = vmatpush1.bf16.msra.mxu0 0
    %9487 = vmatprep.subr.bf16.mxu0 0
    %9488 = vmatpush1.bf16.msra.mxu0 0
    %9489 = vmatprep.subr.bf16.mxu0 0
    %9490 = vmatpush1.bf16.msra.mxu0 0
    %9491 = vmatprep.subr.bf16.mxu0 0
    %9492 = vmatpush1.bf16.msra.mxu0 0
    %9493 = vmatprep.subr.bf16.mxu0 0
    %9494 = vmatpush1.bf16.msra.mxu0 0
    %9495 = vmatprep.subr.bf16.mxu0 0
    %9496 = vmatpush1.bf16.msra.mxu0 0
    %9497 = vmatprep.subr.bf16.mxu0 0
    %9498 = vmatpush1.bf16.msra.mxu0 0
    %9499 = vmatprep.subr.bf16.mxu0 0
    %9500 = vmatpush1.bf16.msra.mxu0 0
    %9501 = vmatprep.subr.bf16.mxu0 0
    %9502 = vmatpush1.bf16.msra.mxu0 0
    %9503 = vmatprep.subr.bf16.mxu0 0
    %9504 = vmatpush1.bf16.msra.mxu0 0
    %9505 = vmatprep.mubr.bf16.mxu0 0
    %9506 = vmatmul.mubr.bf16.gmra.mrb[0].mxu0 %v9447
    %v9507 = vpop.f32.mrb[0].mxu0
    %v9508 = vadd.f32 0.0, %v9507
    %v9509 = vpop.f32.mrb[0].mxu0
    %v9510 = vpop.f32.mrb[0].mxu0
    %v9511 = vadd.f32 0.0, %v9510
    %v9512 = vpop.f32.mrb[0].mxu0
    %9513 = vmatprep.mubr.bf16.mxu0 0
    %9514 = vmatmul.mubr.bf16.gmra.mrb[0].mxu0 %v9450
    %v9515 = vpop.f32.mrb[0].mxu0
    %v9516 = vadd.f32 0.0, %v9515
    %v9517 = vpop.f32.mrb[0].mxu0
    %v9518 = vpop.f32.mrb[0].mxu0
    %v9519 = vadd.f32 0.0, %v9518
    %v9520 = vpop.f32.mrb[0].mxu0
    %9521 = vmatprep.mubr.bf16.mxu0 0
    %9522 = vmatmul.mubr.bf16.gmra.mrb[0].mxu0 %v9453
    %v9523 = vpop.f32.mrb[0].mxu0
    %v9524 = vadd.f32 0.0, %v9523
    %v9525 = vpop.f32.mrb[0].mxu0
    %v9526 = vpop.f32.mrb[0].mxu0
    %v9527 = vadd.f32 0.0, %v9526
    %v9528 = vpop.f32.mrb[0].mxu0
    %9529 = vmatprep.mubr.bf16.mxu0 0
    %9530 = vmatmul.mubr.bf16.gmra.mrb[0].mxu0 %v9456
    %v9531 = vpop.f32.mrb[0].mxu0
    %v9532 = vadd.f32 0.0, %v9531
    %v9533 = vpop.f32.mrb[0].mxu0
    %v9534 = vpop.f32.mrb[0].mxu0
    %v9535 = vadd.f32 0.0, %v9534
    %v9536 = vpop.f32.mrb[0].mxu0
    %9537 = vmatprep.mubr.bf16.mxu0 0
    %9538 = vmatmul.mubr.bf16.gmra.mrb[0].mxu0 %v9459
    %v9539 = vpop.f32.mrb[0].mxu0
    %v9540 = vadd.f32 0.0, %v9539
    %v9541 = vpop.f32.mrb[0].mxu0
    %v9542 = vpop.f32.mrb[0].mxu0
    %v9543 = vadd.f32 0.0, %v9542
    %v9544 = vpop.f32.mrb[0].mxu0
    %9545 = vmatprep.mubr.bf16.mxu0 0
    %9546 = vmatmul.mubr.bf16.gmra.mrb[0].mxu0 %v9462
    %v9547 = vpop.f32.mrb[0].mxu0
    %v9548 = vadd.f32 0.0, %v9547
    %v9549 = vpop.f32.mrb[0].mxu0
    %v9550 = vpop.f32.mrb[0].mxu0
    %v9551 = vadd.f32 0.0, %v9550
    %v9552 = vpop.f32.mrb[0].mxu0
    %9553 = vmatprep.mubr.bf16.mxu0 0
    %9554 = vmatmul.mubr.bf16.gmra.mrb[0].mxu0 %v9465
    %v9555 = vpop.f32.mrb[0].mxu0
    %v9556 = vadd.f32 0.0, %v9555
    %v9557 = vpop.f32.mrb[0].mxu0
    %v9558 = vpop.f32.mrb[0].mxu0
    %v9559 = vadd.f32 0.0, %v9558
    %v9560 = vpop.f32.mrb[0].mxu0
    %9561 = vmatprep.mubr.bf16.mxu0 0
    %9562 = vmatmul.mubr.bf16.gmra.mrb[0].mxu0 %v9468
    %v9563 = vpop.f32.mrb[0].mxu0
    %v9564 = vadd.f32 0.0, %v9563
    %v9565 = vpop.f32.mrb[0].mxu0
    %v9566 = vpop.f32.mrb[0].mxu0
    %v9567 = vadd.f32 0.0, %v9566
    %v9568 = vpop.f32.mrb[0].mxu0
    %9569 = vdwg.mxu0
    %v9570 = vld [vmem:[%s8] sm:$0x1]
    %v9572 = vlaneseq
    %v9573 = vshrl.u32 %v9572, 7
    %v9574 = vsub.s32 0, %v9573
    %v9575 = vrot.slane %v9570, %v9574
    %v9577 = vadd.f32 %v9508, %v9575
    %v9578 = vadd.f32 %v9511, %v9575
    %v9579 = vadd.f32 %v9516, %v9575
    %v9580 = vadd.f32 %v9519, %v9575
    %v9581 = vadd.f32 %v9524, %v9575
    %v9582 = vadd.f32 %v9527, %v9575
    %v9583 = vadd.f32 %v9532, %v9575
    %v9584 = vadd.f32 %v9535, %v9575
    %v9585 = vadd.f32 %v9540, %v9575
    %v9586 = vadd.f32 %v9543, %v9575
    %v9587 = vadd.f32 %v9548, %v9575
    %v9588 = vadd.f32 %v9551, %v9575
    %v9589 = vadd.f32 %v9556, %v9575
    %v9590 = vadd.f32 %v9559, %v9575
    %v9591 = vadd.f32 %v9564, %v9575
    %v9592 = vadd.f32 %v9567, %v9575
    %v9593 = vmax.f32 %v9577, 0.0
    %v9594 = vmax.f32 %v9578, 0.0
    %v9595 = vmax.f32 %v9579, 0.0
    %v9596 = vmax.f32 %v9580, 0.0
    %v9597 = vmax.f32 %v9581, 0.0
    %v9598 = vmax.f32 %v9582, 0.0
    %v9599 = vmax.f32 %v9583, 0.0
    %v9600 = vmax.f32 %v9584, 0.0
    %v9601 = vmax.f32 %v9585, 0.0
    %v9602 = vmax.f32 %v9586, 0.0
    %v9603 = vmax.f32 %v9587, 0.0
    %v9604 = vmax.f32 %v9588, 0.0
    %v9605 = vmax.f32 %v9589, 0.0
    %v9606 = vmax.f32 %v9590, 0.0
    %v9607 = vmax.f32 %v9591, 0.0
    %v9608 = vmax.f32 %v9592, 0.0
    %v9609 = vld [vmem:[%s9] sm:$0x1]
    %v9611 = vlaneseq
    %v9612 = vshrl.u32 %v9611, 7
    %v9613 = vsub.s32 0, %v9612
    %v9614 = vrot.slane %v9609, %v9613
    %9615 = vrot.lane.b32.xlu0 %v9614, 16
    %v9616 = vpop.permute.xlu0 %9615
    %v9618 = vadd.f32 %v9508, %v9616
    %v9619 = vadd.f32 %v9511, %v9616
    %v9620 = vadd.f32 %v9516, %v9616
    %v9621 = vadd.f32 %v9519, %v9616
    %v9622 = vadd.f32 %v9524, %v9616
    %v9623 = vadd.f32 %v9527, %v9616
    %v9624 = vadd.f32 %v9532, %v9616
    %v9625 = vadd.f32 %v9535, %v9616
    %v9626 = vadd.f32 %v9540, %v9616
    %v9627 = vadd.f32 %v9543, %v9616
    %v9628 = vadd.f32 %v9548, %v9616
    %v9629 = vadd.f32 %v9551, %v9616
    %v9630 = vadd.f32 %v9556, %v9616
    %v9631 = vadd.f32 %v9559, %v9616
    %v9632 = vadd.f32 %v9564, %v9616
    %v9633 = vadd.f32 %v9567, %v9616
    %vm9634 = vcmask 130048
    %9635 = vst.msk [vmem:[#allocation4] sm:$0xff] %vm9634, 0.0
    %9636 = vst.msk [vmem:[#allocation4 + $0x18] sm:$0xff] %vm9634, 0.0
    %9637 = vst.msk [vmem:[#allocation4 + $0x30] sm:$0xff] %vm9634, 0.0
    %9638 = vst.msk [vmem:[#allocation4 + $0x48] sm:$0xff] %vm9634, 0.0
    %9639 = vst.msk [vmem:[#allocation4 + $0x60] sm:$0xff] %vm9634, 0.0
    %9640 = vst.msk [vmem:[#allocation4 + $0x78] sm:$0xff] %vm9634, 0.0
    %9641 = vst.msk [vmem:[#allocation4 + $0x90] sm:$0xff] %vm9634, 0.0
    %9642 = vst.msk [vmem:[#allocation4 + $0xa8] sm:$0xff] %vm9634, 0.0
    %9643 = vst.msk [vmem:[#allocation4 + $0xc0] sm:$0xff] %vm9634, 0.0
    %9644 = vst.msk [vmem:[#allocation4 + $0xd8] sm:$0xff] %vm9634, 0.0
    %9645 = vst.msk [vmem:[#allocation4 + $0xf0] sm:$0xff] %vm9634, 0.0
    %9646 = vst.msk [vmem:[#allocation4 + $0x108] sm:$0xff] %vm9634, 0.0
    %9647 = vst.msk [vmem:[#allocation4 + $0x120] sm:$0xff] %vm9634, 0.0
    %9648 = vst.msk [vmem:[#allocation4 + $0x138] sm:$0xff] %vm9634, 0.0
    %9649 = vst.msk [vmem:[#allocation4 + $0x150] sm:$0xff] %vm9634, 0.0
    %9650 = vst.msk [vmem:[#allocation4 + $0x168] sm:$0xff] %vm9634, 0.0
    %9651 = vst.msk [vmem:[#allocation4 + $0x180] sm:$0xff] %vm9634, 0.0
    %9652 = vst.msk [vmem:[#allocation4 + $0x198] sm:$0xff] %vm9634, 0.0
    %9653 = vst.msk [vmem:[#allocation4 + $0x1b0] sm:$0xff] %vm9634, 0.0
    %9654 = vst.msk [vmem:[#allocation4 + $0x1c8] sm:$0xff] %vm9634, 0.0
    %9655 = vst.msk [vmem:[#allocation4 + $0x10] sm:$0xff] %vm9634, 0.0
    %9656 = vst.msk [vmem:[#allocation4 + $0x28] sm:$0xff] %vm9634, 0.0
    %9657 = vst.msk [vmem:[#allocation4 + $0x40] sm:$0xff] %vm9634, 0.0
    %9658 = vst.msk [vmem:[#allocation4 + $0x58] sm:$0xff] %vm9634, 0.0
    %9659 = vst.msk [vmem:[#allocation4 + $0x70] sm:$0xff] %vm9634, 0.0
    %9660 = vst.msk [vmem:[#allocation4 + $0x88] sm:$0xff] %vm9634, 0.0
    %9661 = vst.msk [vmem:[#allocation4 + $0xa0] sm:$0xff] %vm9634, 0.0
    %9662 = vst.msk [vmem:[#allocation4 + $0xb8] sm:$0xff] %vm9634, 0.0
    %9663 = vst.msk [vmem:[#allocation4 + $0xd0] sm:$0xff] %vm9634, 0.0
    %9664 = vst.msk [vmem:[#allocation4 + $0xe8] sm:$0xff] %vm9634, 0.0
    %9665 = vst.msk [vmem:[#allocation4 + $0x100] sm:$0xff] %vm9634, 0.0
    %9666 = vst.msk [vmem:[#allocation4 + $0x118] sm:$0xff] %vm9634, 0.0
    %9667 = vst.msk [vmem:[#allocation4 + $0x130] sm:$0xff] %vm9634, 0.0
    %9668 = vst.msk [vmem:[#allocation4 + $0x148] sm:$0xff] %vm9634, 0.0
    %9669 = vst.msk [vmem:[#allocation4 + $0x160] sm:$0xff] %vm9634, 0.0
    %9670 = vst.msk [vmem:[#allocation4 + $0x178] sm:$0xff] %vm9634, 0.0
    %9671 = vst.msk [vmem:[#allocation4 + $0x190] sm:$0xff] %vm9634, 0.0
    %9672 = vst.msk [vmem:[#allocation4 + $0x1a8] sm:$0xff] %vm9634, 0.0
    %9673 = vst.msk [vmem:[#allocation4 + $0x1c0] sm:$0xff] %vm9634, 0.0
    %9674 = vst.msk [vmem:[#allocation4 + $0x1d8] sm:$0xff] %vm9634, 0.0
    %9675 = vst.msk [vmem:[#allocation4 + $0x8] sm:$0xff] %vm9634, 0.0
    %9676 = vst.msk [vmem:[#allocation4 + $0xf8] sm:$0xff] %vm9634, 0.0
    %s9677 = scalar_lea.vmem [#allocation4], 216
    %9678 = vst.msk [vmem:[%s9677 + $0x8] sm:$0xff] %vm9634, 0.0
    %9679 = vst.msk [vmem:[%s9677 + $0xf8] sm:$0xff] %vm9634, 0.0
    %s9680 = scalar_lea.vmem [#allocation4], 24
    %9681 = vst.msk [vmem:[%s9680 + $0x8] sm:$0xff] %vm9634, %v9593
    %9682 = vst.msk [vmem:[%s9680 + $0x20] sm:$0xff] %vm9634, %v9594
    %9683 = vst.msk [vmem:[%s9680 + $0x38] sm:$0xff] %vm9634, %v9595
    %9684 = vst.msk [vmem:[%s9680 + $0x50] sm:$0xff] %vm9634, %v9596
    %9685 = vst.msk [vmem:[%s9680 + $0x68] sm:$0xff] %vm9634, %v9597
    %9686 = vst.msk [vmem:[%s9680 + $0x80] sm:$0xff] %vm9634, %v9598
    %9687 = vst.msk [vmem:[%s9680 + $0x98] sm:$0xff] %vm9634, %v9599
    %9688 = vst.msk [vmem:[%s9680 + $0xb0] sm:$0xff] %vm9634, %v9600
    %9689 = vst.msk [vmem:[%s9680 + $0xf8] sm:$0xff] %vm9634, %v9601
    %9690 = vst.msk [vmem:[%s9680 + $0x110] sm:$0xff] %vm9634, %v9602
    %9691 = vst.msk [vmem:[%s9680 + $0x128] sm:$0xff] %vm9634, %v9603
    %9692 = vst.msk [vmem:[%s9680 + $0x140] sm:$0xff] %vm9634, %v9604
    %9693 = vst.msk [vmem:[%s9680 + $0x158] sm:$0xff] %vm9634, %v9605
    %9694 = vst.msk [vmem:[%s9680 + $0x170] sm:$0xff] %vm9634, %v9606
    %9695 = vst.msk [vmem:[%s9680 + $0x188] sm:$0xff] %vm9634, %v9607
    %9696 = vst.msk [vmem:[%s9680 + $0x1a0] sm:$0xff] %vm9634, %v9608
    %v9697 = vld [vmem:[#allocation4 + $0x7] sm:$0xff]
    %v9698 = vld [vmem:[#allocation4 + $0x1f] sm:$0xff]
    %v9699 = vld [vmem:[#allocation4 + $0x37] sm:$0xff]
    %v9700 = vld [vmem:[#allocation4 + $0x4f] sm:$0xff]
    %v9701 = vld [vmem:[#allocation4 + $0x67] sm:$0xff]
    %v9702 = vld [vmem:[#allocation4 + $0x7f] sm:$0xff]
    %v9703 = vld [vmem:[#allocation4 + $0x97] sm:$0xff]
    %v9704 = vld [vmem:[#allocation4 + $0xaf] sm:$0xff]
    %v9705 = vld [vmem:[#allocation4 + $0xf7] sm:$0xff]
    %v9706 = vld [vmem:[#allocation4 + $0x10f] sm:$0xff]
    %v9707 = vld [vmem:[#allocation4 + $0x127] sm:$0xff]
    %v9708 = vld [vmem:[#allocation4 + $0x13f] sm:$0xff]
    %v9709 = vld [vmem:[#allocation4 + $0x157] sm:$0xff]
    %v9710 = vld [vmem:[#allocation4 + $0x16f] sm:$0xff]
    %v9711 = vld [vmem:[#allocation4 + $0x187] sm:$0xff]
    %v9712 = vld [vmem:[#allocation4 + $0x19f] sm:$0xff]
    %v9713 = vpack.c.bf16 %v9698, %v9697
    %v9714 = vpack.c.bf16 %v9700, %v9699
    %v9715 = vpack.c.bf16 %v9702, %v9701
    %v9716 = vpack.c.bf16 %v9704, %v9703
    %v9717 = vpack.c.bf16 %v9706, %v9705
    %v9718 = vpack.c.bf16 %v9708, %v9707
    %v9719 = vpack.c.bf16 %v9710, %v9709
    %v9720 = vpack.c.bf16 %v9712, %v9711
    %9721 = vst.msk [vmem:[#allocation5] sm:$0xff] %vm9634, %v9713
    %9722 = vst.msk [vmem:[#allocation5 + $0x10] sm:$0xff] %vm9634, %v9714
    %9723 = vst.msk [vmem:[#allocation5 + $0x20] sm:$0xff] %vm9634, %v9715
    %9724 = vst.msk [vmem:[#allocation5 + $0x30] sm:$0xff] %vm9634, %v9716
    %9725 = vst.msk [vmem:[#allocation5 + $0x40] sm:$0xff] %vm9634, %v9717
    %9726 = vst.msk [vmem:[#allocation5 + $0x50] sm:$0xff] %vm9634, %v9718
    %9727 = vst.msk [vmem:[#allocation5 + $0x60] sm:$0xff] %vm9634, %v9719
    %9728 = vst.msk [vmem:[#allocation5 + $0x70] sm:$0xff] %vm9634, %v9720
    %v9729 = vld [vmem:[#allocation4 + $0x8] sm:$0xff]
    %v9730 = vld [vmem:[#allocation4 + $0x20] sm:$0xff]
    %v9731 = vld [vmem:[#allocation4 + $0x38] sm:$0xff]
    %v9732 = vld [vmem:[#allocation4 + $0x50] sm:$0xff]
    %v9733 = vld [vmem:[#allocation4 + $0x68] sm:$0xff]
    %v9734 = vld [vmem:[#allocation4 + $0x80] sm:$0xff]
    %v9735 = vld [vmem:[#allocation4 + $0x98] sm:$0xff]
    %v9736 = vld [vmem:[#allocation4 + $0xb0] sm:$0xff]
    %v9737 = vld [vmem:[#allocation4 + $0xf8] sm:$0xff]
    %v9738 = vld [vmem:[#allocation4 + $0x110] sm:$0xff]
    %v9739 = vld [vmem:[#allocation4 + $0x128] sm:$0xff]
    %v9740 = vld [vmem:[#allocation4 + $0x140] sm:$0xff]
    %v9741 = vld [vmem:[#allocation4 + $0x158] sm:$0xff]
    %v9742 = vld [vmem:[#allocation4 + $0x170] sm:$0xff]
    %v9743 = vld [vmem:[#allocation4 + $0x188] sm:$0xff]
    %v9744 = vld [vmem:[#allocation4 + $0x1a0] sm:$0xff]
    %v9745 = vpack.c.bf16 %v9730, %v9729
    %v9746 = vpack.c.bf16 %v9732, %v9731
    %v9747 = vpack.c.bf16 %v9734, %v9733
    %v9748 = vpack.c.bf16 %v9736, %v9735
    %v9749 = vpack.c.bf16 %v9738, %v9737
    %v9750 = vpack.c.bf16 %v9740, %v9739
    %v9751 = vpack.c.bf16 %v9742, %v9741
    %v9752 = vpack.c.bf16 %v9744, %v9743
    %9761 = vrot.lane.b32.xlu0 %v9745, 16
    %v9762 = vpop.permute.xlu0 %9761
    %9763 = vrot.lane.b32.xlu0 %v9746, 16
    %v9764 = vpop.permute.xlu0 %9763
    %9765 = vrot.lane.b32.xlu0 %v9747, 16
    %v9766 = vpop.permute.xlu0 %9765
    %9767 = vrot.lane.b32.xlu0 %v9748, 16
    %v9768 = vpop.permute.xlu0 %9767
    %9769 = vrot.lane.b32.xlu0 %v9749, 16
    %v9770 = vpop.permute.xlu0 %9769
    %9771 = vrot.lane.b32.xlu0 %v9750, 16
    %v9772 = vpop.permute.xlu0 %9771
    %9773 = vrot.lane.b32.xlu0 %v9751, 16
    %v9774 = vpop.permute.xlu0 %9773
    %9775 = vrot.lane.b32.xlu0 %v9752, 16
    %v9776 = vpop.permute.xlu0 %9775
    %vm9785 = vcmask 261248
    %9786 = vst.msk [vmem:[#allocation5] sm:$0xff] %vm9785, %v9762
    %9787 = vst.msk [vmem:[#allocation5 + $0x10] sm:$0xff] %vm9785, %v9764
    %9788 = vst.msk [vmem:[#allocation5 + $0x20] sm:$0xff] %vm9785, %v9766
    %9789 = vst.msk [vmem:[#allocation5 + $0x30] sm:$0xff] %vm9785, %v9768
    %9790 = vst.msk [vmem:[#allocation5 + $0x40] sm:$0xff] %vm9785, %v9770
    %9791 = vst.msk [vmem:[#allocation5 + $0x50] sm:$0xff] %vm9785, %v9772
    %9792 = vst.msk [vmem:[#allocation5 + $0x60] sm:$0xff] %vm9785, %v9774
    %9793 = vst.msk [vmem:[#allocation5 + $0x70] sm:$0xff] %vm9785, %v9776
    %v9794 = vld [vmem:[#allocation4 + $0x9] sm:$0xff]
    %v9795 = vld [vmem:[#allocation4 + $0x21] sm:$0xff]
    %v9796 = vld [vmem:[#allocation4 + $0x39] sm:$0xff]
    %v9797 = vld [vmem:[#allocation4 + $0x51] sm:$0xff]
    %v9798 = vld [vmem:[#allocation4 + $0x69] sm:$0xff]
    %v9799 = vld [vmem:[#allocation4 + $0x81] sm:$0xff]
    %v9800 = vld [vmem:[#allocation4 + $0x99] sm:$0xff]
    %v9801 = vld [vmem:[#allocation4 + $0xb1] sm:$0xff]
    %v9802 = vld [vmem:[#allocation4 + $0xf9] sm:$0xff]
    %v9803 = vld [vmem:[#allocation4 + $0x111] sm:$0xff]
    %v9804 = vld [vmem:[#allocation4 + $0x129] sm:$0xff]
    %v9805 = vld [vmem:[#allocation4 + $0x141] sm:$0xff]
    %v9806 = vld [vmem:[#allocation4 + $0x159] sm:$0xff]
    %v9807 = vld [vmem:[#allocation4 + $0x171] sm:$0xff]
    %v9808 = vld [vmem:[#allocation4 + $0x189] sm:$0xff]
    %v9809 = vld [vmem:[#allocation4 + $0x1a1] sm:$0xff]
    %v9810 = vpack.c.bf16 %v9795, %v9794
    %v9811 = vpack.c.bf16 %v9797, %v9796
    %v9812 = vpack.c.bf16 %v9799, %v9798
    %v9813 = vpack.c.bf16 %v9801, %v9800
    %v9814 = vpack.c.bf16 %v9803, %v9802
    %v9815 = vpack.c.bf16 %v9805, %v9804
    %v9816 = vpack.c.bf16 %v9807, %v9806
    %v9817 = vpack.c.bf16 %v9809, %v9808
    %9826 = vrot.lane.b32.xlu0 %v9810, 32
    %v9827 = vpop.permute.xlu0 %9826
    %9828 = vrot.lane.b32.xlu0 %v9811, 32
    %v9829 = vpop.permute.xlu0 %9828
    %9830 = vrot.lane.b32.xlu0 %v9812, 32
    %v9831 = vpop.permute.xlu0 %9830
    %9832 = vrot.lane.b32.xlu0 %v9813, 32
    %v9833 = vpop.permute.xlu0 %9832
    %9834 = vrot.lane.b32.xlu0 %v9814, 32
    %v9835 = vpop.permute.xlu0 %9834
    %9836 = vrot.lane.b32.xlu0 %v9815, 32
    %v9837 = vpop.permute.xlu0 %9836
    %9838 = vrot.lane.b32.xlu0 %v9816, 32
    %v9839 = vpop.permute.xlu0 %9838
    %9840 = vrot.lane.b32.xlu0 %v9817, 32
    %v9841 = vpop.permute.xlu0 %9840
    %vm9850 = vcmask 392448
    %9851 = vst.msk [vmem:[#allocation5] sm:$0xff] %vm9850, %v9827
    %9852 = vst.msk [vmem:[#allocation5 + $0x10] sm:$0xff] %vm9850, %v9829
    %9853 = vst.msk [vmem:[#allocation5 + $0x20] sm:$0xff] %vm9850, %v9831
    %9854 = vst.msk [vmem:[#allocation5 + $0x30] sm:$0xff] %vm9850, %v9833
    %9855 = vst.msk [vmem:[#allocation5 + $0x40] sm:$0xff] %vm9850, %v9835
    %9856 = vst.msk [vmem:[#allocation5 + $0x50] sm:$0xff] %vm9850, %v9837
    %9857 = vst.msk [vmem:[#allocation5 + $0x60] sm:$0xff] %vm9850, %v9839
    %9858 = vst.msk [vmem:[#allocation5 + $0x70] sm:$0xff] %vm9850, %v9841
    %v9859 = vld [vmem:[%s9680 + $0x7] sm:$0xff]
    %v9860 = vld [vmem:[%s9680 + $0x1f] sm:$0xff]
    %v9861 = vld [vmem:[%s9680 + $0x37] sm:$0xff]
    %v9862 = vld [vmem:[%s9680 + $0x4f] sm:$0xff]
    %v9863 = vld [vmem:[%s9680 + $0x67] sm:$0xff]
    %v9864 = vld [vmem:[%s9680 + $0x7f] sm:$0xff]
    %v9865 = vld [vmem:[%s9680 + $0x97] sm:$0xff]
    %v9866 = vld [vmem:[%s9680 + $0xaf] sm:$0xff]
    %v9867 = vld [vmem:[%s9680 + $0xf7] sm:$0xff]
    %v9868 = vld [vmem:[%s9680 + $0x10f] sm:$0xff]
    %v9869 = vld [vmem:[%s9680 + $0x127] sm:$0xff]
    %v9870 = vld [vmem:[%s9680 + $0x13f] sm:$0xff]
    %v9871 = vld [vmem:[%s9680 + $0x157] sm:$0xff]
    %v9872 = vld [vmem:[%s9680 + $0x16f] sm:$0xff]
    %v9873 = vld [vmem:[%s9680 + $0x187] sm:$0xff]
    %v9874 = vld [vmem:[%s9680 + $0x19f] sm:$0xff]
    %v9875 = vpack.c.bf16 %v9860, %v9859
    %v9876 = vpack.c.bf16 %v9862, %v9861
    %v9877 = vpack.c.bf16 %v9864, %v9863
    %v9878 = vpack.c.bf16 %v9866, %v9865
    %v9879 = vpack.c.bf16 %v9868, %v9867
    %v9880 = vpack.c.bf16 %v9870, %v9869
    %v9881 = vpack.c.bf16 %v9872, %v9871
    %v9882 = vpack.c.bf16 %v9874, %v9873
    %9891 = vrot.lane.b32.xlu0 %v9875, 48
    %v9892 = vpop.permute.xlu0 %9891
    %9893 = vrot.lane.b32.xlu0 %v9876, 48
    %v9894 = vpop.permute.xlu0 %9893
    %9895 = vrot.lane.b32.xlu0 %v9877, 48
    %v9896 = vpop.permute.xlu0 %9895
    %9897 = vrot.lane.b32.xlu0 %v9878, 48
    %v9898 = vpop.permute.xlu0 %9897
    %9899 = vrot.lane.b32.xlu0 %v9879, 48
    %v9900 = vpop.permute.xlu0 %9899
    %9901 = vrot.lane.b32.xlu0 %v9880, 48
    %v9902 = vpop.permute.xlu0 %9901
    %9903 = vrot.lane.b32.xlu0 %v9881, 48
    %v9904 = vpop.permute.xlu0 %9903
    %9905 = vrot.lane.b32.xlu0 %v9882, 48
    %v9906 = vpop.permute.xlu0 %9905
    %vm9915 = vcmask 523648
    %9916 = vst.msk [vmem:[#allocation5] sm:$0xff] %vm9915, %v9892
    %9917 = vst.msk [vmem:[#allocation5 + $0x10] sm:$0xff] %vm9915, %v9894
    %9918 = vst.msk [vmem:[#allocation5 + $0x20] sm:$0xff] %vm9915, %v9896
    %9919 = vst.msk [vmem:[#allocation5 + $0x30] sm:$0xff] %vm9915, %v9898
    %9920 = vst.msk [vmem:[#allocation5 + $0x40] sm:$0xff] %vm9915, %v9900
    %9921 = vst.msk [vmem:[#allocation5 + $0x50] sm:$0xff] %vm9915, %v9902
    %9922 = vst.msk [vmem:[#allocation5 + $0x60] sm:$0xff] %vm9915, %v9904
    %9923 = vst.msk [vmem:[#allocation5 + $0x70] sm:$0xff] %vm9915, %v9906
    %v9924 = vld [vmem:[%s9680 + $0x8] sm:$0xff]
    %v9925 = vld [vmem:[%s9680 + $0x20] sm:$0xff]
    %v9926 = vld [vmem:[%s9680 + $0x38] sm:$0xff]
    %v9927 = vld [vmem:[%s9680 + $0x50] sm:$0xff]
    %v9928 = vld [vmem:[%s9680 + $0x68] sm:$0xff]
    %v9929 = vld [vmem:[%s9680 + $0x80] sm:$0xff]
    %v9930 = vld [vmem:[%s9680 + $0x98] sm:$0xff]
    %v9931 = vld [vmem:[%s9680 + $0xb0] sm:$0xff]
    %v9932 = vld [vmem:[%s9680 + $0xf8] sm:$0xff]
    %v9933 = vld [vmem:[%s9680 + $0x110] sm:$0xff]
    %v9934 = vld [vmem:[%s9680 + $0x128] sm:$0xff]
    %v9935 = vld [vmem:[%s9680 + $0x140] sm:$0xff]
    %v9936 = vld [vmem:[%s9680 + $0x158] sm:$0xff]
    %v9937 = vld [vmem:[%s9680 + $0x170] sm:$0xff]
    %v9938 = vld [vmem:[%s9680 + $0x188] sm:$0xff]
    %v9939 = vld [vmem:[%s9680 + $0x1a0] sm:$0xff]
    %v9940 = vpack.c.bf16 %v9925, %v9924
    %v9941 = vpack.c.bf16 %v9927, %v9926
    %v9942 = vpack.c.bf16 %v9929, %v9928
    %v9943 = vpack.c.bf16 %v9931, %v9930
    %v9944 = vpack.c.bf16 %v9933, %v9932
    %v9945 = vpack.c.bf16 %v9935, %v9934
    %v9946 = vpack.c.bf16 %v9937, %v9936
    %v9947 = vpack.c.bf16 %v9939, %v9938
    %9956 = vrot.lane.b32.xlu0 %v9940, 64
    %v9957 = vpop.permute.xlu0 %9956
    %9958 = vrot.lane.b32.xlu0 %v9941, 64
    %v9959 = vpop.permute.xlu0 %9958
    %9960 = vrot.lane.b32.xlu0 %v9942, 64
    %v9961 = vpop.permute.xlu0 %9960
    %9962 = vrot.lane.b32.xlu0 %v9943, 64
    %v9963 = vpop.permute.xlu0 %9962
    %9964 = vrot.lane.b32.xlu0 %v9944, 64
    %v9965 = vpop.permute.xlu0 %9964
    %9966 = vrot.lane.b32.xlu0 %v9945, 64
    %v9967 = vpop.permute.xlu0 %9966
    %9968 = vrot.lane.b32.xlu0 %v9946, 64
    %v9969 = vpop.permute.xlu0 %9968
    %9970 = vrot.lane.b32.xlu0 %v9947, 64
    %v9971 = vpop.permute.xlu0 %9970
    %vm9980 = vcmask 654848
    %9981 = vst.msk [vmem:[#allocation5] sm:$0xff] %vm9980, %v9957
    %9982 = vst.msk [vmem:[#allocation5 + $0x10] sm:$0xff] %vm9980, %v9959
    %9983 = vst.msk [vmem:[#allocation5 + $0x20] sm:$0xff] %vm9980, %v9961
    %9984 = vst.msk [vmem:[#allocation5 + $0x30] sm:$0xff] %vm9980, %v9963
    %9985 = vst.msk [vmem:[#allocation5 + $0x40] sm:$0xff] %vm9980, %v9965
    %9986 = vst.msk [vmem:[#allocation5 + $0x50] sm:$0xff] %vm9980, %v9967
    %9987 = vst.msk [vmem:[#allocation5 + $0x60] sm:$0xff] %vm9980, %v9969
    %9988 = vst.msk [vmem:[#allocation5 + $0x70] sm:$0xff] %vm9980, %v9971
    %v9989 = vld [vmem:[%s9680 + $0x9] sm:$0xff]
    %v9990 = vld [vmem:[%s9680 + $0x21] sm:$0xff]
    %v9991 = vld [vmem:[%s9680 + $0x39] sm:$0xff]
    %v9992 = vld [vmem:[%s9680 + $0x51] sm:$0xff]
    %v9993 = vld [vmem:[%s9680 + $0x69] sm:$0xff]
    %v9994 = vld [vmem:[%s9680 + $0x81] sm:$0xff]
    %v9995 = vld [vmem:[%s9680 + $0x99] sm:$0xff]
    %v9996 = vld [vmem:[%s9680 + $0xb1] sm:$0xff]
    %v9997 = vld [vmem:[%s9680 + $0xf9] sm:$0xff]
    %v9998 = vld [vmem:[%s9680 + $0x111] sm:$0xff]
    %v9999 = vld [vmem:[%s9680 + $0x129] sm:$0xff]
    %v10000 = vld [vmem:[%s9680 + $0x141] sm:$0xff]
    %v10001 = vld [vmem:[%s9680 + $0x159] sm:$0xff]
    %v10002 = vld [vmem:[%s9680 + $0x171] sm:$0xff]
    %v10003 = vld [vmem:[%s9680 + $0x189] sm:$0xff]
    %v10004 = vld [vmem:[%s9680 + $0x1a1] sm:$0xff]
    %v10005 = vpack.c.bf16 %v9990, %v9989
    %v10006 = vpack.c.bf16 %v9992, %v9991
    %v10007 = vpack.c.bf16 %v9994, %v9993
    %v10008 = vpack.c.bf16 %v9996, %v9995
    %v10009 = vpack.c.bf16 %v9998, %v9997
    %v10010 = vpack.c.bf16 %v10000, %v9999
    %v10011 = vpack.c.bf16 %v10002, %v10001
    %v10012 = vpack.c.bf16 %v10004, %v10003
    %10021 = vrot.lane.b32.xlu0 %v10005, 80
    %v10022 = vpop.permute.xlu0 %10021
    %10023 = vrot.lane.b32.xlu0 %v10006, 80
    %v10024 = vpop.permute.xlu0 %10023
    %10025 = vrot.lane.b32.xlu0 %v10007, 80
    %v10026 = vpop.permute.xlu0 %10025
    %10027 = vrot.lane.b32.xlu0 %v10008, 80
    %v10028 = vpop.permute.xlu0 %10027
    %10029 = vrot.lane.b32.xlu0 %v10009, 80
    %v10030 = vpop.permute.xlu0 %10029
    %10031 = vrot.lane.b32.xlu0 %v10010, 80
    %v10032 = vpop.permute.xlu0 %10031
    %10033 = vrot.lane.b32.xlu0 %v10011, 80
    %v10034 = vpop.permute.xlu0 %10033
    %10035 = vrot.lane.b32.xlu0 %v10012, 80
    %v10036 = vpop.permute.xlu0 %10035
    %vm10045 = vcmask 786048
    %10046 = vst.msk [vmem:[#allocation5] sm:$0xff] %vm10045, %v10022
    %10047 = vst.msk [vmem:[#allocation5 + $0x10] sm:$0xff] %vm10045, %v10024
    %10048 = vst.msk [vmem:[#allocation5 + $0x20] sm:$0xff] %vm10045, %v10026
    %10049 = vst.msk [vmem:[#allocation5 + $0x30] sm:$0xff] %vm10045, %v10028
    %10050 = vst.msk [vmem:[#allocation5 + $0x40] sm:$0xff] %vm10045, %v10030
    %10051 = vst.msk [vmem:[#allocation5 + $0x50] sm:$0xff] %vm10045, %v10032
    %10052 = vst.msk [vmem:[#allocation5 + $0x60] sm:$0xff] %vm10045, %v10034
    %10053 = vst.msk [vmem:[#allocation5 + $0x70] sm:$0xff] %vm10045, %v10036
    %s10054 = scalar_lea.vmem [#allocation4], 48
    %v10055 = vld [vmem:[%s10054 + $0x7] sm:$0xff]
    %v10056 = vld [vmem:[%s10054 + $0x1f] sm:$0xff]
    %v10057 = vld [vmem:[%s10054 + $0x37] sm:$0xff]
    %v10058 = vld [vmem:[%s10054 + $0x4f] sm:$0xff]
    %v10059 = vld [vmem:[%s10054 + $0x67] sm:$0xff]
    %v10060 = vld [vmem:[%s10054 + $0x7f] sm:$0xff]
    %v10061 = vld [vmem:[%s10054 + $0x97] sm:$0xff]
    %v10062 = vld [vmem:[%s10054 + $0xaf] sm:$0xff]
    %v10063 = vld [vmem:[%s10054 + $0xf7] sm:$0xff]
    %v10064 = vld [vmem:[%s10054 + $0x10f] sm:$0xff]
    %v10065 = vld [vmem:[%s10054 + $0x127] sm:$0xff]
    %v10066 = vld [vmem:[%s10054 + $0x13f] sm:$0xff]
    %v10067 = vld [vmem:[%s10054 + $0x157] sm:$0xff]
    %v10068 = vld [vmem:[%s10054 + $0x16f] sm:$0xff]
    %v10069 = vld [vmem:[%s10054 + $0x187] sm:$0xff]
    %v10070 = vld [vmem:[%s10054 + $0x19f] sm:$0xff]
    %v10071 = vpack.c.bf16 %v10056, %v10055
    %v10072 = vpack.c.bf16 %v10058, %v10057
    %v10073 = vpack.c.bf16 %v10060, %v10059
    %v10074 = vpack.c.bf16 %v10062, %v10061
    %v10075 = vpack.c.bf16 %v10064, %v10063
    %v10076 = vpack.c.bf16 %v10066, %v10065
    %v10077 = vpack.c.bf16 %v10068, %v10067
    %v10078 = vpack.c.bf16 %v10070, %v10069
    %10087 = vrot.lane.b32.xlu0 %v10071, 96
    %v10088 = vpop.permute.xlu0 %10087
    %10089 = vrot.lane.b32.xlu0 %v10072, 96
    %v10090 = vpop.permute.xlu0 %10089
    %10091 = vrot.lane.b32.xlu0 %v10073, 96
    %v10092 = vpop.permute.xlu0 %10091
    %10093 = vrot.lane.b32.xlu0 %v10074, 96
    %v10094 = vpop.permute.xlu0 %10093
    %10095 = vrot.lane.b32.xlu0 %v10075, 96
    %v10096 = vpop.permute.xlu0 %10095
    %10097 = vrot.lane.b32.xlu0 %v10076, 96
    %v10098 = vpop.permute.xlu0 %10097
    %10099 = vrot.lane.b32.xlu0 %v10077, 96
    %v10100 = vpop.permute.xlu0 %10099
    %10101 = vrot.lane.b32.xlu0 %v10078, 96
    %v10102 = vpop.permute.xlu0 %10101
    %vm10111 = vcmask 917248
    %10112 = vst.msk [vmem:[#allocation5] sm:$0xff] %vm10111, %v10088
    %10113 = vst.msk [vmem:[#allocation5 + $0x10] sm:$0xff] %vm10111, %v10090
    %10114 = vst.msk [vmem:[#allocation5 + $0x20] sm:$0xff] %vm10111, %v10092
    %10115 = vst.msk [vmem:[#allocation5 + $0x30] sm:$0xff] %vm10111, %v10094
    %10116 = vst.msk [vmem:[#allocation5 + $0x40] sm:$0xff] %vm10111, %v10096
    %10117 = vst.msk [vmem:[#allocation5 + $0x50] sm:$0xff] %vm10111, %v10098
    %10118 = vst.msk [vmem:[#allocation5 + $0x60] sm:$0xff] %vm10111, %v10100
    %10119 = vst.msk [vmem:[#allocation5 + $0x70] sm:$0xff] %vm10111, %v10102
    %v10120 = vld [vmem:[%s10054 + $0x8] sm:$0xff]
    %v10121 = vld [vmem:[%s10054 + $0x20] sm:$0xff]
    %v10122 = vld [vmem:[%s10054 + $0x38] sm:$0xff]
    %v10123 = vld [vmem:[%s10054 + $0x50] sm:$0xff]
    %v10124 = vld [vmem:[%s10054 + $0x68] sm:$0xff]
    %v10125 = vld [vmem:[%s10054 + $0x80] sm:$0xff]
    %v10126 = vld [vmem:[%s10054 + $0x98] sm:$0xff]
    %v10127 = vld [vmem:[%s10054 + $0xb0] sm:$0xff]
    %v10128 = vld [vmem:[%s10054 + $0xf8] sm:$0xff]
    %v10129 = vld [vmem:[%s10054 + $0x110] sm:$0xff]
    %v10130 = vld [vmem:[%s10054 + $0x128] sm:$0xff]
    %v10131 = vld [vmem:[%s10054 + $0x140] sm:$0xff]
    %v10132 = vld [vmem:[%s10054 + $0x158] sm:$0xff]
    %v10133 = vld [vmem:[%s10054 + $0x170] sm:$0xff]
    %v10134 = vld [vmem:[%s10054 + $0x188] sm:$0xff]
    %v10135 = vld [vmem:[%s10054 + $0x1a0] sm:$0xff]
    %v10136 = vpack.c.bf16 %v10121, %v10120
    %v10137 = vpack.c.bf16 %v10123, %v10122
    %v10138 = vpack.c.bf16 %v10125, %v10124
    %v10139 = vpack.c.bf16 %v10127, %v10126
    %v10140 = vpack.c.bf16 %v10129, %v10128
    %v10141 = vpack.c.bf16 %v10131, %v10130
    %v10142 = vpack.c.bf16 %v10133, %v10132
    %v10143 = vpack.c.bf16 %v10135, %v10134
    %10152 = vrot.lane.b32.xlu0 %v10136, 112
    %v10153 = vpop.permute.xlu0 %10152
    %10154 = vrot.lane.b32.xlu0 %v10137, 112
    %v10155 = vpop.permute.xlu0 %10154
    %10156 = vrot.lane.b32.xlu0 %v10138, 112
    %v10157 = vpop.permute.xlu0 %10156
    %10158 = vrot.lane.b32.xlu0 %v10139, 112
    %v10159 = vpop.permute.xlu0 %10158
    %10160 = vrot.lane.b32.xlu0 %v10140, 112
    %v10161 = vpop.permute.xlu0 %10160
    %10162 = vrot.lane.b32.xlu0 %v10141, 112
    %v10163 = vpop.permute.xlu0 %10162
    %10164 = vrot.lane.b32.xlu0 %v10142, 112
    %v10165 = vpop.permute.xlu0 %10164
    %10166 = vrot.lane.b32.xlu0 %v10143, 112
    %v10167 = vpop.permute.xlu0 %10166
    %vm10176 = vcmask 1048448
    %10177 = vst.msk [vmem:[#allocation5] sm:$0xff] %vm10176, %v10153
    %10178 = vst.msk [vmem:[#allocation5 + $0x10] sm:$0xff] %vm10176, %v10155
    %10179 = vst.msk [vmem:[#allocation5 + $0x20] sm:$0xff] %vm10176, %v10157
    %10180 = vst.msk [vmem:[#allocation5 + $0x30] sm:$0xff] %vm10176, %v10159
    %10181 = vst.msk [vmem:[#allocation5 + $0x40] sm:$0xff] %vm10176, %v10161
    %10182 = vst.msk [vmem:[#allocation5 + $0x50] sm:$0xff] %vm10176, %v10163
    %10183 = vst.msk [vmem:[#allocation5 + $0x60] sm:$0xff] %vm10176, %v10165
    %10184 = vst.msk [vmem:[#allocation5 + $0x70] sm:$0xff] %vm10176, %v10167
    %v10185 = vld [vmem:[%s10054 + $0x9] sm:$0xff]
    %v10186 = vld [vmem:[%s10054 + $0x21] sm:$0xff]
    %v10187 = vld [vmem:[%s10054 + $0x39] sm:$0xff]
    %v10188 = vld [vmem:[%s10054 + $0x51] sm:$0xff]
    %v10189 = vld [vmem:[%s10054 + $0x69] sm:$0xff]
    %v10190 = vld [vmem:[%s10054 + $0x81] sm:$0xff]
    %v10191 = vld [vmem:[%s10054 + $0x99] sm:$0xff]
    %v10192 = vld [vmem:[%s10054 + $0xb1] sm:$0xff]
    %v10193 = vld [vmem:[%s10054 + $0xf9] sm:$0xff]
    %v10194 = vld [vmem:[%s10054 + $0x111] sm:$0xff]
    %v10195 = vld [vmem:[%s10054 + $0x129] sm:$0xff]
    %v10196 = vld [vmem:[%s10054 + $0x141] sm:$0xff]
    %v10197 = vld [vmem:[%s10054 + $0x159] sm:$0xff]
    %v10198 = vld [vmem:[%s10054 + $0x171] sm:$0xff]
    %v10199 = vld [vmem:[%s10054 + $0x189] sm:$0xff]
    %v10200 = vld [vmem:[%s10054 + $0x1a1] sm:$0xff]
    %v10201 = vpack.c.bf16 %v10186, %v10185
    %v10202 = vpack.c.bf16 %v10188, %v10187
    %v10203 = vpack.c.bf16 %v10190, %v10189
    %v10204 = vpack.c.bf16 %v10192, %v10191
    %v10205 = vpack.c.bf16 %v10194, %v10193
    %v10206 = vpack.c.bf16 %v10196, %v10195
    %v10207 = vpack.c.bf16 %v10198, %v10197
    %v10208 = vpack.c.bf16 %v10200, %v10199
    %10209 = vst.msk [vmem:[#allocation5 + $0x8] sm:$0xff] %vm9634, %v10201
    %10210 = vst.msk [vmem:[#allocation5 + $0x18] sm:$0xff] %vm9634, %v10202
    %10211 = vst.msk [vmem:[#allocation5 + $0x28] sm:$0xff] %vm9634, %v10203
    %10212 = vst.msk [vmem:[#allocation5 + $0x38] sm:$0xff] %vm9634, %v10204
    %10213 = vst.msk [vmem:[#allocation5 + $0x48] sm:$0xff] %vm9634, %v10205
    %10214 = vst.msk [vmem:[#allocation5 + $0x58] sm:$0xff] %vm9634, %v10206
    %10215 = vst.msk [vmem:[#allocation5 + $0x68] sm:$0xff] %vm9634, %v10207
    %10216 = vst.msk [vmem:[#allocation5 + $0x78] sm:$0xff] %vm9634, %v10208
    %v10217 = vld [vmem:[#allocation5] sm:$0xff]
    %v10218 = vld [vmem:[#allocation5 + $0x8] sm:$0xff]
    %v10219 = vld [vmem:[#allocation5 + $0x10] sm:$0xff]
    %v10220 = vld [vmem:[#allocation5 + $0x18] sm:$0xff]
    %v10221 = vld [vmem:[#allocation5 + $0x20] sm:$0xff]
    %v10222 = vld [vmem:[#allocation5 + $0x28] sm:$0xff]
    %v10223 = vld [vmem:[#allocation5 + $0x30] sm:$0xff]
    %v10224 = vld [vmem:[#allocation5 + $0x38] sm:$0xff]
    %v10225 = vld [vmem:[#allocation5 + $0x40] sm:$0xff]
    %v10226 = vld [vmem:[#allocation5 + $0x48] sm:$0xff]
    %v10227 = vld [vmem:[#allocation5 + $0x50] sm:$0xff]
    %v10228 = vld [vmem:[#allocation5 + $0x58] sm:$0xff]
    %v10229 = vld [vmem:[#allocation5 + $0x60] sm:$0xff]
    %v10230 = vld [vmem:[#allocation5 + $0x68] sm:$0xff]
    %v10231 = vld [vmem:[#allocation5 + $0x70] sm:$0xff]
    %v10232 = vld [vmem:[#allocation5 + $0x78] sm:$0xff]
    %v10233 = vld [vmem:[%s10] sm:$0xf]
    %v10234 = vld [vmem:[%s10 + $0x4] sm:$0xf]
    %v10235 = vld [vmem:[%s10 + $0x8] sm:$0xf]
    %v10236 = vld [vmem:[%s10 + $0xc] sm:$0xf]
    %v10237 = vld [vmem:[%s10 + $0x10] sm:$0xf]
    %v10238 = vld [vmem:[%s10 + $0x14] sm:$0xf]
    %v10239 = vld [vmem:[%s10 + $0x18] sm:$0xf]
    %v10240 = vld [vmem:[%s10 + $0x1c] sm:$0xf]
    %v10241 = vld [vmem:[%s10 + $0x20] sm:$0xf]
    %v10242 = vld [vmem:[%s10 + $0x24] sm:$0xf]
    %v10243 = vld [vmem:[%s10 + $0x28] sm:$0xf]
    %v10244 = vld [vmem:[%s10 + $0x2c] sm:$0xf]
    %v10245 = vld [vmem:[%s10 + $0x30] sm:$0xf]
    %v10246 = vld [vmem:[%s10 + $0x34] sm:$0xf]
    %v10247 = vld [vmem:[%s10 + $0x38] sm:$0xf]
    %v10248 = vld [vmem:[%s10 + $0x3c] sm:$0xf]
    %v10249 = vld [vmem:[%s10 + $0x40] sm:$0xf]
    %v10250 = vld [vmem:[%s10 + $0x44] sm:$0xf]
    %v10251 = vld [vmem:[%s11] sm:$0x1]
    %v10253 = vlaneseq
    %v10254 = vshrl.u32 %v10253, 7
    %v10255 = vsub.s32 0, %v10254
    %v10256 = vrot.slane %v10251, %v10255
    %v10276 = vunpack.c.l.b16 %v10233
    %v10277 = vunpack.c.l.b16 %v10234
    %v10278 = vunpack.c.l.b16 %v10235
    %v10279 = vunpack.c.l.b16 %v10236
    %v10280 = vunpack.c.l.b16 %v10237
    %v10281 = vunpack.c.l.b16 %v10238
    %v10282 = vunpack.c.l.b16 %v10239
    %v10283 = vunpack.c.l.b16 %v10240
    %v10284 = vunpack.c.l.b16 %v10241
    %v10285 = vunpack.c.l.b16 %v10242
    %v10286 = vunpack.c.l.b16 %v10243
    %v10287 = vunpack.c.l.b16 %v10244
    %v10288 = vunpack.c.l.b16 %v10245
    %v10289 = vunpack.c.l.b16 %v10246
    %v10290 = vunpack.c.l.b16 %v10247
    %v10291 = vunpack.c.l.b16 %v10248
    %v10292 = vunpack.c.l.b16 %v10249
    %v10293 = vunpack.c.l.b16 %v10250
    %v10294 = vpack.c.b16 %v10277, %v10276
    %v10295 = vpack.c.b16 %v10279, %v10278
    %v10296 = vpack.c.b16 %v10281, %v10280
    %v10297 = vpack.c.b16 %v10283, %v10282
    %v10298 = vpack.c.b16 %v10285, %v10284
    %v10299 = vpack.c.b16 %v10287, %v10286
    %v10300 = vpack.c.b16 %v10289, %v10288
    %v10301 = vpack.c.b16 %v10291, %v10290
    %v10302 = vpack.c.b16 %v10293, %v10292
    %v10313 = vsel %vm9634, %v10218, 0
    %v10316 = vsel %vm9634, %v10220, 0
    %v10319 = vsel %vm9634, %v10222, 0
    %v10322 = vsel %vm9634, %v10224, 0
    %v10325 = vsel %vm9634, %v10226, 0
    %v10328 = vsel %vm9634, %v10228, 0
    %v10331 = vsel %vm9634, %v10230, 0
    %v10334 = vsel %vm9634, %v10232, 0
    %10336 = vmatprep.subr.bf16.mxu0 0
    %10337 = vmatpush1.bf16.msra.mxu0 %v10294
    %10338 = vmatprep.subr.bf16.mxu0 0
    %10339 = vmatpush1.bf16.msra.mxu0 %v10295
    %10340 = vmatprep.subr.bf16.mxu0 0
    %10341 = vmatpush1.bf16.msra.mxu0 %v10296
    %10342 = vmatprep.subr.bf16.mxu0 0
    %10343 = vmatpush1.bf16.msra.mxu0 %v10297
    %10344 = vmatprep.subr.bf16.mxu0 0
    %10345 = vmatpush1.bf16.msra.mxu0 %v10298
    %10346 = vmatprep.subr.bf16.mxu0 0
    %10347 = vmatpush1.bf16.msra.mxu0 %v10299
    %10348 = vmatprep.subr.bf16.mxu0 0
    %10349 = vmatpush1.bf16.msra.mxu0 %v10300
    %10350 = vmatprep.subr.bf16.mxu0 0
    %10351 = vmatpush1.bf16.msra.mxu0 %v10301
    %10352 = vmatprep.subr.bf16.mxu0 0
    %10353 = vmatpush1.bf16.msra.mxu0 %v10302
    %10354 = vmatprep.subr.bf16.mxu0 0
    %10355 = vmatpush1.bf16.msra.mxu0 0
    %10356 = vmatprep.subr.bf16.mxu0 0
    %10357 = vmatpush1.bf16.msra.mxu0 0
    %10358 = vmatprep.subr.bf16.mxu0 0
    %10359 = vmatpush1.bf16.msra.mxu0 0
    %10360 = vmatprep.subr.bf16.mxu0 0
    %10361 = vmatpush1.bf16.msra.mxu0 0
    %10362 = vmatprep.subr.bf16.mxu0 0
    %10363 = vmatpush1.bf16.msra.mxu0 0
    %10364 = vmatprep.subr.bf16.mxu0 0
    %10365 = vmatpush1.bf16.msra.mxu0 0
    %10366 = vmatprep.subr.bf16.mxu0 0
    %10367 = vmatpush1.bf16.msra.mxu0 0
    %10368 = vmatprep.mubr.bf16.mxu0 %v10313
    %10369 = vmatmul.mubr.bf16.gmra.mrb[0].mxu0 %v10217
    %v10370 = vpop.f32.mrb[0].mxu0
    %v10371 = vadd.f32 %v10256, %v10370
    %v10372 = vpop.f32.mrb[0].mxu0
    %v10373 = vpop.f32.mrb[0].mxu0
    %v10374 = vadd.f32 %v10256, %v10373
    %v10375 = vpop.f32.mrb[0].mxu0
    %10376 = vmatprep.mubr.bf16.mxu0 %v10316
    %10377 = vmatmul.mubr.bf16.gmra.mrb[0].mxu0 %v10219
    %v10378 = vpop.f32.mrb[0].mxu0
    %v10379 = vadd.f32 %v10256, %v10378
    %v10380 = vpop.f32.mrb[0].mxu0
    %v10381 = vpop.f32.mrb[0].mxu0
    %v10382 = vadd.f32 %v10256, %v10381
    %v10383 = vpop.f32.mrb[0].mxu0
    %10384 = vmatprep.mubr.bf16.mxu0 %v10319
    %10385 = vmatmul.mubr.bf16.gmra.mrb[0].mxu0 %v10221
    %v10386 = vpop.f32.mrb[0].mxu0
    %v10387 = vadd.f32 %v10256, %v10386
    %v10388 = vpop.f32.mrb[0].mxu0
    %v10389 = vpop.f32.mrb[0].mxu0
    %v10390 = vadd.f32 %v10256, %v10389
    %v10391 = vpop.f32.mrb[0].mxu0
    %10392 = vmatprep.mubr.bf16.mxu0 %v10322
    %10393 = vmatmul.mubr.bf16.gmra.mrb[0].mxu0 %v10223
    %v10394 = vpop.f32.mrb[0].mxu0
    %v10395 = vadd.f32 %v10256, %v10394
    %v10396 = vpop.f32.mrb[0].mxu0
    %v10397 = vpop.f32.mrb[0].mxu0
    %v10398 = vadd.f32 %v10256, %v10397
    %v10399 = vpop.f32.mrb[0].mxu0
    %10400 = vmatprep.mubr.bf16.mxu0 %v10325
    %10401 = vmatmul.mubr.bf16.gmra.mrb[0].mxu0 %v10225
    %v10402 = vpop.f32.mrb[0].mxu0
    %v10403 = vadd.f32 %v10256, %v10402
    %v10404 = vpop.f32.mrb[0].mxu0
    %v10405 = vpop.f32.mrb[0].mxu0
    %v10406 = vadd.f32 %v10256, %v10405
    %v10407 = vpop.f32.mrb[0].mxu0
    %10408 = vmatprep.mubr.bf16.mxu0 %v10328
    %10409 = vmatmul.mubr.bf16.gmra.mrb[0].mxu0 %v10227
    %v10410 = vpop.f32.mrb[0].mxu0
    %v10411 = vadd.f32 %v10256, %v10410
    %v10412 = vpop.f32.mrb[0].mxu0
    %v10413 = vpop.f32.mrb[0].mxu0
    %v10414 = vadd.f32 %v10256, %v10413
    %v10415 = vpop.f32.mrb[0].mxu0
    %10416 = vmatprep.mubr.bf16.mxu0 %v10331
    %10417 = vmatmul.mubr.bf16.gmra.mrb[0].mxu0 %v10229
    %v10418 = vpop.f32.mrb[0].mxu0
    %v10419 = vadd.f32 %v10256, %v10418
    %v10420 = vpop.f32.mrb[0].mxu0
    %v10421 = vpop.f32.mrb[0].mxu0
    %v10422 = vadd.f32 %v10256, %v10421
    %v10423 = vpop.f32.mrb[0].mxu0
    %10424 = vmatprep.mubr.bf16.mxu0 %v10334
    %10425 = vmatmul.mubr.bf16.gmra.mrb[0].mxu0 %v10231
    %v10426 = vpop.f32.mrb[0].mxu0
    %v10427 = vadd.f32 %v10256, %v10426
    %v10428 = vpop.f32.mrb[0].mxu0
    %v10429 = vpop.f32.mrb[0].mxu0
    %v10430 = vadd.f32 %v10256, %v10429
    %v10431 = vpop.f32.mrb[0].mxu0
    %10432 = vdwg.mxu0
    %10449 = vrot.lane.b32.xlu0 %v9618, 112
    %v10450 = vpop.permute.xlu0 %10449
    %10451 = vrot.lane.b32.xlu0 %v9619, 112
    %v10452 = vpop.permute.xlu0 %10451
    %10453 = vrot.lane.b32.xlu0 %v9620, 112
    %v10454 = vpop.permute.xlu0 %10453
    %10455 = vrot.lane.b32.xlu0 %v9621, 112
    %v10456 = vpop.permute.xlu0 %10455
    %10457 = vrot.lane.b32.xlu0 %v9622, 112
    %v10458 = vpop.permute.xlu0 %10457
    %10459 = vrot.lane.b32.xlu0 %v9623, 112
    %v10460 = vpop.permute.xlu0 %10459
    %10461 = vrot.lane.b32.xlu0 %v9624, 112
    %v10462 = vpop.permute.xlu0 %10461
    %10463 = vrot.lane.b32.xlu0 %v9625, 112
    %v10464 = vpop.permute.xlu0 %10463
    %10465 = vrot.lane.b32.xlu0 %v9626, 112
    %v10466 = vpop.permute.xlu0 %10465
    %10467 = vrot.lane.b32.xlu0 %v9627, 112
    %v10468 = vpop.permute.xlu0 %10467
    %10469 = vrot.lane.b32.xlu0 %v9628, 112
    %v10470 = vpop.permute.xlu0 %10469
    %10471 = vrot.lane.b32.xlu0 %v9629, 112
    %v10472 = vpop.permute.xlu0 %10471
    %10473 = vrot.lane.b32.xlu0 %v9630, 112
    %v10474 = vpop.permute.xlu0 %10473
    %10475 = vrot.lane.b32.xlu0 %v9631, 112
    %v10476 = vpop.permute.xlu0 %10475
    %10477 = vrot.lane.b32.xlu0 %v9632, 112
    %v10478 = vpop.permute.xlu0 %10477
    %10479 = vrot.lane.b32.xlu0 %v9633, 112
    %v10480 = vpop.permute.xlu0 %10479
    %v10497 = vadd.f32 %v10371, %v10450
    %v10498 = vadd.f32 %v10374, %v10452
    %v10499 = vadd.f32 %v10379, %v10454
    %v10500 = vadd.f32 %v10382, %v10456
    %v10501 = vadd.f32 %v10387, %v10458
    %v10502 = vadd.f32 %v10390, %v10460
    %v10503 = vadd.f32 %v10395, %v10462
    %v10504 = vadd.f32 %v10398, %v10464
    %v10505 = vadd.f32 %v10403, %v10466
    %v10506 = vadd.f32 %v10406, %v10468
    %v10507 = vadd.f32 %v10411, %v10470
    %v10508 = vadd.f32 %v10414, %v10472
    %v10509 = vadd.f32 %v10419, %v10474
    %v10510 = vadd.f32 %v10422, %v10476
    %v10511 = vadd.f32 %v10427, %v10478
    %v10512 = vadd.f32 %v10430, %v10480
    %v10513 = vmax.f32 %v10497, 0.0
    %v10514 = vmax.f32 %v10498, 0.0
    %v10515 = vmax.f32 %v10499, 0.0
    %v10516 = vmax.f32 %v10500, 0.0
    %v10517 = vmax.f32 %v10501, 0.0
    %v10518 = vmax.f32 %v10502, 0.0
    %v10519 = vmax.f32 %v10503, 0.0
    %v10520 = vmax.f32 %v10504, 0.0
    %v10521 = vmax.f32 %v10505, 0.0
    %v10522 = vmax.f32 %v10506, 0.0
    %v10523 = vmax.f32 %v10507, 0.0
    %v10524 = vmax.f32 %v10508, 0.0
    %v10525 = vmax.f32 %v10509, 0.0
    %v10526 = vmax.f32 %v10510, 0.0
    %v10527 = vmax.f32 %v10511, 0.0
    %v10528 = vmax.f32 %v10512, 0.0
    %v10529 = vsel %vm9634, %v10513, 0.0
    %v10530 = vsel %vm9634, %v10514, 0.0
    %v10531 = vadd.f32 %v10529, %v10530
    %v10532 = vsel %vm9634, %v10515, 0.0
    %v10533 = vadd.f32 %v10531, %v10532
    %v10534 = vsel %vm9634, %v10516, 0.0
    %v10535 = vadd.f32 %v10533, %v10534
    %v10536 = vsel %vm9634, %v10517, 0.0
    %v10537 = vadd.f32 %v10535, %v10536
    %v10538 = vsel %vm9634, %v10518, 0.0
    %v10539 = vadd.f32 %v10537, %v10538
    %v10540 = vsel %vm9634, %v10519, 0.0
    %v10541 = vadd.f32 %v10539, %v10540
    %v10542 = vsel %vm9634, %v10520, 0.0
    %v10543 = vadd.f32 %v10541, %v10542
    %v10544 = vrot.slane %v10543, 4
    %v10545 = vadd.f32 %v10543, %v10544
    %v10546 = vrot.slane %v10545, 2
    %v10547 = vadd.f32 %v10545, %v10546
    %v10548 = vrot.slane %v10547, 1
    %v10549 = vadd.f32 %v10547, %v10548
    %v10550 = vsel %vm9634, %v10521, 0.0
    %v10551 = vsel %vm9634, %v10522, 0.0
    %v10552 = vadd.f32 %v10550, %v10551
    %v10553 = vsel %vm9634, %v10523, 0.0
    %v10554 = vadd.f32 %v10552, %v10553
    %v10555 = vsel %vm9634, %v10524, 0.0
    %v10556 = vadd.f32 %v10554, %v10555
    %v10557 = vsel %vm9634, %v10525, 0.0
    %v10558 = vadd.f32 %v10556, %v10557
    %v10559 = vsel %vm9634, %v10526, 0.0
    %v10560 = vadd.f32 %v10558, %v10559
    %v10561 = vsel %vm9634, %v10527, 0.0
    %v10562 = vadd.f32 %v10560, %v10561
    %v10563 = vsel %vm9634, %v10528, 0.0
    %v10564 = vadd.f32 %v10562, %v10563
    %v10565 = vrot.slane %v10564, 4
    %v10566 = vadd.f32 %v10564, %v10565
    %v10567 = vrot.slane %v10566, 2
    %v10568 = vadd.f32 %v10566, %v10567
    %v10569 = vrot.slane %v10568, 1
    %v10570 = vadd.f32 %v10568, %v10569
    %v10571 = vrcp.pop 64.0
    %v10572 = vmul.f32 %v10549, %v10571
    %v10573 = vmul.f32 %v10570, %v10571
    %v10574 = vpack.c.bf16 %v10572, %v10572
    %v10575 = vpack.c.bf16 %v10573, %v10573
    %v10576 = vld [vmem:[%s12] sm:$0xf]
    %v10577 = vld [vmem:[%s12 + $0x4] sm:$0xf]
    %v10578 = vld [vmem:[%s13] sm:$0x1]
    %v10580 = vlaneseq
    %v10581 = vshrl.u32 %v10580, 7
    %v10582 = vsub.s32 0, %v10581
    %v10583 = vrot.slane %v10578, %v10582
    %v10587 = vunpack.c.l.b16 %v10574
    %v10588 = vunpack.c.l.b16 %v10575
    %vm10589 = vcmask 1041409
    %v10590 = vsel %vm10589, %v10588, %v10587
    %v10591 = vpack.c.b16 %v10590, %v10590
    %v10594 = vunpack.c.l.b16 %v10576
    %v10595 = vunpack.c.l.b16 %v10577
    %v10596 = vpack.c.b16 %v10595, %v10594
    %v10599 = vsel %vm9634, %v10591, 0
    %10601 = vmatprep.subr.bf16.mxu0 0
    %10602 = vmatpush1.bf16.msra.mxu0 %v10596
    %10603 = vmatprep.subr.bf16.mxu0 0
    %10604 = vmatpush1.bf16.msra.mxu0 0
    %10605 = vmatprep.subr.bf16.mxu0 0
    %10606 = vmatpush1.bf16.msra.mxu0 0
    %10607 = vmatprep.subr.bf16.mxu0 0
    %10608 = vmatpush1.bf16.msra.mxu0 0
    %10609 = vmatprep.subr.bf16.mxu0 0
    %10610 = vmatpush1.bf16.msra.mxu0 0
    %10611 = vmatprep.subr.bf16.mxu0 0
    %10612 = vmatpush1.bf16.msra.mxu0 0
    %10613 = vmatprep.subr.bf16.mxu0 0
    %10614 = vmatpush1.bf16.msra.mxu0 0
    %10615 = vmatprep.subr.bf16.mxu0 0
    %10616 = vmatpush1.bf16.msra.mxu0 0
    %10617 = vmatprep.subr.bf16.mxu0 0
    %10618 = vmatpush1.bf16.msra.mxu0 0
    %10619 = vmatprep.subr.bf16.mxu0 0
    %10620 = vmatpush1.bf16.msra.mxu0 0
    %10621 = vmatprep.subr.bf16.mxu0 0
    %10622 = vmatpush1.bf16.msra.mxu0 0
    %10623 = vmatprep.subr.bf16.mxu0 0
    %10624 = vmatpush1.bf16.msra.mxu0 0
    %10625 = vmatprep.subr.bf16.mxu0 0
    %10626 = vmatpush1.bf16.msra.mxu0 0
    %10627 = vmatprep.subr.bf16.mxu0 0
    %10628 = vmatpush1.bf16.msra.mxu0 0
    %10629 = vmatprep.subr.bf16.mxu0 0
    %10630 = vmatpush1.bf16.msra.mxu0 0
    %10631 = vmatprep.subr.bf16.mxu0 0
    %10632 = vmatpush1.bf16.msra.mxu0 0
    %10633 = vmatprep.mubr.bf16.mxu0 0
    %10634 = vmatmul.mubr.bf16.gmra.mrb[0].mxu0 %v10599
    %v10635 = vpop.f32.mrb[0].mxu0
    %v10636 = vadd.f32 %v10583, %v10635
    %v10637 = vpop.f32.mrb[0].mxu0
    %v10638 = vpop.f32.mrb[0].mxu0
    %v10639 = vpop.f32.mrb[0].mxu0
    %10640 = vdwg.mxu0
    %v10641 = vsub.f32 0.0, %v10636
    %v10642 = vmul.f32 %v10641, 1.442695
    %v10643 = vpow.pop %v10642
    %v10644 = vadd.f32 %v10643, 1.0
    %v10645 = vrcp.pop %v10644
    %v10646 = vmul.f32 1.0, %v10645
    %vm10647 = vcmask 17408
    %10648 = vst.msk [vmem:[#allocation6] sm:$0x3] %vm10647, %v10646
    // Predicated region
    $region58: #{forward.1} parent=1 // pred_check
      _
    $region59: #{forward.1} parent=1 // pred_check_branch
      %10650 = sbr.rel (0) target = $region61
    $region60: #{forward.1} parent=1 // pred_region
      %s10652 = ssub.s32 32, 32
      %10653 = vsyncadd [#allocation7], %s10652
      %s10655 = sshll.u32 [#allocation6], 4
      %s10656 = int_to_ptr.vmem [resolvable:$true] %s10655
      %10658 = dma.vmem_to_hbm [thread:$0]  %s10656, 32, %s14, [#allocation7]
    $region61: #{forward.1} parent=1 // pred_fallthru
      _
    // Predicated region
    $region62: #{forward.1} parent=1 // pred_check
      _
    $region63: #{forward.1} parent=1 // pred_check_branch
      %10660 = sbr.rel (0) target = $region65
    $region64: #{forward.1} parent=1 // pred_region
      %10661 = dma.done [#allocation7], 32
    $region65: #{forward.1} parent=1 // pred_fallthru
      _
    %10662 = vsyncpa [#allocation7], 1

</llo_original>
